<compile_context>
chip_gen: v5e
topology: v5e:2x2
jax: 0.10.0
libtpu: 0.0.40
codegen_flags: <defaults>
</compile_context>

<pallas_src>
import functools
import math

import jax
import jax.numpy as jnp
from jax.experimental import pallas as pl
from jax.experimental.pallas import tpu as pltpu

EPS = 1e-5                      # nn.LayerNorm default eps
HEADS = 8                       # Attention(heads=8)
DIM_HEAD = 64                   # Attention default dim_head=64 -> inner = 64*dim
COMPUTE_DTYPE = jnp.bfloat16    # MXU operand dtype; accumulation stays float32
LANE = 128
VMEM_LIMIT = 48 * 1024 * 1024   # safe on v5e/v6e (128 MiB) and v7x (64 MiB)

_INV_SQRT2 = 0.7071067811865476

# rows of the packed (9, D_pad) per-layer vector array
(ROW_A0_G, ROW_M0_G, ROW_M0_B2, ROW_A1_G, ROW_A2_G,
 ROW_LN_G, ROW_M1_G, ROW_M1_B2, ROW_FINAL_G) = range(9)


def _round_up(v, m):
    return (v + m - 1) // m * m


# --------------------------------------------------------------------------
# in-kernel helpers (all operate on one (T, D_pad) f32 token slab)
# --------------------------------------------------------------------------
def _layernorm(x, gamma, d_true):
    # nn.LayerNorm(dim, elementwise_affine=False) followed by x * (gamma + 1).
    # Sums are divided by the true D so zero-padded lane columns do not perturb
    # mean/var; padded gamma entries are -1 so (gamma + 1) zeroes padded cols.
    inv_d = 1.0 / d_true
    mu = jnp.sum(x, axis=-1, keepdims=True) * inv_d
    ex2 = jnp.sum(x * x, axis=-1, keepdims=True) * inv_d
    var = jnp.maximum(ex2 - mu * mu, 0.0)
    return (x - mu) * jax.lax.rsqrt(var + EPS) * (gamma + 1.0)


def _erf(z):
    # Abramowitz & Stegun 7.1.26 polynomial erf (|err| <= 1.5e-7): built only
    # from exp/mul/add/where so it lowers cleanly in Mosaic while matching
    # nn.GELU()'s exact erf to well below bf16 noise.
    a1, a2, a3, a4, a5 = (0.254829592, -0.284496736, 1.421413741,
                          -1.453152027, 1.061405429)
    p = 0.3275911
    az = jnp.abs(z)
    t = 1.0 / (1.0 + p * az)
    poly = ((((a5 * t + a4) * t + a3) * t + a2) * t + a1) * t
    y = 1.0 - poly * jnp.exp(-az * az)
    return jnp.where(z >= 0.0, y, -y)


def _gelu(x):
    return 0.5 * x * (1.0 + _erf(x * _INV_SQRT2))


def _attention(x, gamma, wqkv, wo, *, heads, bb, n, d_true):
    # x: (T, D_pad) f32, T = bb * n
    # wqkv: (D_pad, 3*inner) bf16, [Wq*scale | Wk | Wv] (scale folded into Wq)
    # wo:   (inner, D_pad)   bf16
    cdt = wqkv.dtype
    inner = wo.shape[0]
    hd = inner // heads

    xn = _layernorm(x, gamma, d_true).astype(cdt)
    # one wide QKV projection (K = D_pad, N = 3*inner)
    qkv = jnp.dot(xn, wqkv, preferred_element_type=jnp.float32)   # (T, 3*inner)
    q = qkv[:, :inner].astype(cdt)
    k = qkv[:, inner:2 * inner].astype(cdt)
    v = qkv[:, 2 * inner:].astype(cdt)

    # Per-(sequence, head) scores / softmax / attend.  Statically unrolled at
    # tiny demo N; TODO(synk): flash-style KV-tiled online softmax at scale.
    o_rows = []
    for b in range(bb):
        r0 = b * n
        o_heads = []
        for h in range(heads):
            c0 = h * hd
            qbh = q[r0:r0 + n, c0:c0 + hd]                         # (n, hd)
            kbh = k[r0:r0 + n, c0:c0 + hd]
            vbh = v[r0:r0 + n, c0:c0 + hd]
            s = jax.lax.dot_general(qbh, kbh, (((1,), (1,)), ((), ())),
                                    preferred_element_type=jnp.float32)  # (n, n)
            s = s - jnp.max(s, axis=-1, keepdims=True)
            p = jnp.exp(s)
            p = p * pl.reciprocal(jnp.sum(p, axis=-1, keepdims=True),
                                  approx=True)
            o_heads.append(jnp.dot(p.astype(cdt), vbh,
                                   preferred_element_type=jnp.float32))  # (n, hd)
        o_rows.append(jnp.concatenate(o_heads, axis=-1))           # (n, inner)
    o_flat = o_rows[0] if bb == 1 else jnp.concatenate(o_rows, axis=0)

    # single fused output projection (K = inner, not per-head K = hd)
    return jnp.dot(o_flat.astype(cdt), wo, preferred_element_type=jnp.float32)


def _mlp(x, gamma, w1, b1, w2, b2, *, d_true):
    cdt = w1.dtype
    xn = _layernorm(x, gamma, d_true).astype(cdt)
    h = jnp.dot(xn, w1, preferred_element_type=jnp.float32) + b1
    h = _gelu(h)
    # TODO(synk): nn.Dropout(0.2) treated as identity (eval-mode semantics).
    return jnp.dot(h.astype(cdt), w2, preferred_element_type=jnp.float32) + b2


# --------------------------------------------------------------------------
# fused whole-layer kernel: attn0 + mlp0 + attn1 + attn2 + LN + mlp1 (+ final LN)
# --------------------------------------------------------------------------
def _layer_kernel(x_ref, vd_ref, vh_ref, wqkv_ref, wo_ref, w1_ref, w2_ref,
                  o_ref, *, heads, bb, n, d_true, apply_final):
    dp = x_ref.shape[-1]
    x = x_ref[...].reshape(bb * n, dp).astype(jnp.float32)        # token slab

    def vrow(ref, i):
        return ref[i:i + 1, :]                                    # (1, width) f32

    def attn(x, i, g_row):
        return _attention(x, vrow(vd_ref, g_row), wqkv_ref[i], wo_ref[i],
                          heads=heads, bb=bb, n=n, d_true=d_true)

    def mlp(x, i, g_row, b2_row):
        return _mlp(x, vrow(vd_ref, g_row), w1_ref[i], vrow(vh_ref, i),
                    w2_ref[i], vrow(vd_ref, b2_row), d_true=d_true)

    x = attn(x, 0, ROW_A0_G) + x
    x = mlp(x, 0, ROW_M0_G, ROW_M0_B2) + x
    x = attn(x, 1, ROW_A1_G) + x
    x = attn(x, 2, ROW_A2_G) + x
    x = _layernorm(x, vrow(vd_ref, ROW_LN_G), d_true)             # no residual
    x = mlp(x, 1, ROW_M1_G, ROW_M1_B2) + x
    if apply_final:                                               # fused final LN
        x = _layernorm(x, vrow(vd_ref, ROW_FINAL_G), d_true)
    o_ref[...] = x.reshape(bb, n, dp).astype(o_ref.dtype)


# --------------------------------------------------------------------------
# pallas_call wrapper (grid over batch blocks; weights resident via const maps)
# --------------------------------------------------------------------------
def _resident_spec(a):
    zeros = (0,) * a.ndim
    return pl.BlockSpec(a.shape, lambda i: zeros)


def transformer_layer(x_pad, L, *, d_true, apply_final, batch_block=None):
    B, N, Dp = x_pad.shape
    bb = B if batch_block is None else batch_block
    assert B % bb == 0
    grid = (B // bb,)

    kern = functools.partial(_layer_kernel, heads=HEADS, bb=bb, n=N,
                             d_true=d_true, apply_final=apply_final)
    tok_spec = pl.BlockSpec((bb, N, Dp), lambda i: (i, 0, 0))
    weights = [L["vec_d"], L["vec_h"], L["wqkv"], L["wo"], L["w1"], L["w2"]]

    return pl.pallas_call(
        kern,
        out_shape=jax.ShapeDtypeStruct((B, N, Dp), x_pad.dtype),
        grid=grid,
        in_specs=[tok_spec] + [_resident_spec(w) for w in weights],
        out_specs=tok_spec,
        compiler_params=pltpu.CompilerParams(
            dimension_semantics=("parallel",),
            vmem_limit_bytes=VMEM_LIMIT),
    )(x_pad, *weights)


def transformer_forward(x, packed):
    B, N, D = x.shape
    dp = packed["d_pad"]
    x_pad = jnp.pad(x, ((0, 0), (0, 0), (0, dp - D))) if dp != D else x
    n_layers = len(packed["layers"])
    for i, L in enumerate(packed["layers"]):
        x_pad = transformer_layer(x_pad, L, d_true=D,
                                  apply_final=(i == n_layers - 1))
    return x_pad[..., :D]


# --------------------------------------------------------------------------
# host-side parameter packing (done once): fused QKV, lane padding, bf16
# --------------------------------------------------------------------------
def pack_params(params, dim, hidden_dim):
    dp = _round_up(dim, LANE)
    hp = _round_up(hidden_dim, LANE)
    scale = DIM_HEAD ** (-0.5)

    def pad_last(a, width, fill=0.0):
        extra = width - a.shape[-1]
        if extra == 0:
            return a
        return jnp.pad(a, [(0, 0)] * (a.ndim - 1) + [(0, extra)],
                       constant_values=fill)

    def pad_first(a, height, fill=0.0):
        extra = height - a.shape[0]
        if extra == 0:
            return a
        return jnp.pad(a, [(0, extra)] + [(0, 0)] * (a.ndim - 1),
                       constant_values=fill)

    def gamma_row(g):                      # pad with -1 so (gamma+1)==0 in pads
        return pad_last(g.astype(jnp.float32), dp, fill=-1.0)

    def bias_row(b, width):
        return pad_last(b.astype(jnp.float32), width, fill=0.0)

    def attn_wqkv(p):                      # (D_pad, 3*inner), scale folded in Wq
        w = jnp.concatenate([p["wq"] * scale, p["wk"], p["wv"]], axis=1)
        return pad_first(w, dp).astype(COMPUTE_DTYPE)

    def attn_wo(p):                        # (inner, D_pad)
        return pad_last(p["wo"], dp).astype(COMPUTE_DTYPE)

    def mlp_w1(p):                         # (D_pad, H_pad)
        return pad_last(pad_first(p["w1"], dp), hp).astype(COMPUTE_DTYPE)

    def mlp_w2(p):                         # (H_pad, D_pad)
        return pad_last(pad_first(p["w2"], hp), dp).astype(COMPUTE_DTYPE)

    final_row = gamma_row(params["final_gamma"])

    layers = []
    for L in params["layers"]:
        a0, m0, a1, a2, m1 = (L["attn0"], L["mlp0"], L["attn1"],
                              L["attn2"], L["mlp1"])
        vec_d = jnp.concatenate([
            gamma_row(a0["gamma"]), gamma_row(m0["gamma"]), bias_row(m0["b2"], dp),
            gamma_row(a1["gamma"]), gamma_row(a2["gamma"]),
            gamma_row(L["ln_gamma"]), gamma_row(m1["gamma"]),
            bias_row(m1["b2"], dp), final_row], axis=0)            # (9, D_pad)
        vec_h = jnp.concatenate([bias_row(m0["b1"], hp),
                                 bias_row(m1["b1"], hp)], axis=0)  # (2, H_pad)
        layers.append(dict(
            vec_d=vec_d, vec_h=vec_h,
            wqkv=jnp.stack([attn_wqkv(a0), attn_wqkv(a1), attn_wqkv(a2)]),
            wo=jnp.stack([attn_wo(a0), attn_wo(a1), attn_wo(a2)]),
            w1=jnp.stack([mlp_w1(m0), mlp_w1(m1)]),
            w2=jnp.stack([mlp_w2(m0), mlp_w2(m1)]),
        ))
    return dict(layers=layers, d_pad=dp, h_pad=hp)


# --------------------------------------------------------------------------
# deterministic parameter construction (shapes from the module's __init__)
# --------------------------------------------------------------------------
def init_params(key, dim, hidden_dim, depth):
    inner = DIM_HEAD * dim          # note: inner_dim = dim_head * dim (spec)

    def attn_params(k):
        ks = jax.random.split(k, 5)
        return dict(
            gamma=0.1 * jax.random.normal(ks[0], (1, dim), jnp.float32),
            wq=jax.random.normal(ks[1], (dim, inner), jnp.float32) / math.sqrt(dim),
            wk=jax.random.normal(ks[2], (dim, inner), jnp.float32) / math.sqrt(dim),
            wv=jax.random.normal(ks[3], (dim, inner), jnp.float32) / math.sqrt(dim),
            wo=jax.random.normal(ks[4], (inner, dim), jnp.float32) / math.sqrt(inner),
        )

    def mlp_params(k):
        ks = jax.random.split(k, 5)
        return dict(
            gamma=0.1 * jax.random.normal(ks[0], (1, dim), jnp.float32),
            w1=jax.random.normal(ks[1], (dim, hidden_dim), jnp.float32) / math.sqrt(dim),
            b1=0.01 * jax.random.normal(ks[2], (1, hidden_dim), jnp.float32),
            w2=jax.random.normal(ks[3], (hidden_dim, dim), jnp.float32) / math.sqrt(hidden_dim),
            b2=0.01 * jax.random.normal(ks[4], (1, dim), jnp.float32),
        )

    layers = []
    for i in range(depth):
        k = jax.random.fold_in(key, i)
        ks = jax.random.split(k, 6)
        layers.append(dict(
            attn0=attn_params(ks[0]),
            mlp0=mlp_params(ks[1]),
            attn1=attn_params(ks[2]),
            attn2=attn_params(ks[3]),
            ln_gamma=0.1 * jax.random.normal(ks[4], (1, dim), jnp.float32),
            mlp1=mlp_params(ks[5]),
        ))
    final_gamma = 0.1 * jax.random.normal(jax.random.fold_in(key, depth + 1),
                                          (1, dim), jnp.float32)
    return dict(layers=layers, final_gamma=final_gamma)


# --------------------------------------------------------------------------
# pure-JAX f32 reference (mirrors the PyTorch forward exactly)
# --------------------------------------------------------------------------
def _ref_ln(x, gamma):
    mu = x.mean(-1, keepdims=True)
    var = ((x - mu) ** 2).mean(-1, keepdims=True)
    return (x - mu) / jnp.sqrt(var + EPS) * (gamma + 1.0)


def _ref_attn(x, p):
    xn = _ref_ln(x, p["gamma"])
    q, k, v = xn @ p["wq"], xn @ p["wk"], xn @ p["wv"]
    B, N, inner = q.shape
    hd = inner // HEADS
    q = q.reshape(B, N, HEADS, hd).transpose(0, 2, 1, 3) * (DIM_HEAD ** -0.5)
    k = k.reshape(B, N, HEADS, hd).transpose(0, 2, 1, 3)
    v = v.reshape(B, N, HEADS, hd).transpose(0, 2, 1, 3)
    s = q @ jnp.swapaxes(k, -1, -2)
    pr = jax.nn.softmax(s, axis=-1)
    o = (pr @ v).transpose(0, 2, 1, 3).reshape(B, N, inner)
    return o @ p["wo"] + x


def _ref_mlp(x, p):
    xn = _ref_ln(x, p["gamma"])
    h = xn @ p["w1"] + p["b1"]
    h = 0.5 * h * (1.0 + jax.lax.erf(h / math.sqrt(2.0)))
    return h @ p["w2"] + p["b2"] + x


def ref_transformer(x, params):
    for L in params["layers"]:
        x = _ref_attn(x, L["attn0"])
        x = _ref_mlp(x, L["mlp0"])
        x = _ref_attn(x, L["attn1"])
        x = _ref_attn(x, L["attn2"])
        x = _ref_ln(x, L["ln_gamma"])
        x = _ref_mlp(x, L["mlp1"])
    return _ref_ln(x, params["final_gamma"])


# --------------------------------------------------------------------------
if __name__ == "__main__":
    B, N, DIM, HIDDEN, DEPTH = 2, 8, 16, 32, 2   # small demo shapes

    key = jax.random.PRNGKey(0)
    kx, kp = jax.random.split(key)
    x = jax.random.normal(kx, (B, N, DIM), jnp.float32)
    params = init_params(kp, DIM, HIDDEN, DEPTH)
    packed = pack_params(params, DIM, HIDDEN)     # lane-padded, fused QKV, bf16

    out = transformer_forward(x, packed)
    out = jax.block_until_ready(out)

    ref = ref_transformer(x, params)
    assert out.shape == (B, N, DIM)
    # bf16 MXU operands (f32 accumulation), approx softmax reciprocal and the
    # softmax scale folded into bf16 Wq loosen the tolerance vs the f32 ref.
    max_err = float(jnp.max(jnp.abs(out - ref)))
    assert bool(jnp.allclose(out, ref, atol=1e-1, rtol=1e-1)), max_err

    print("KERNEL_OK")
</pallas_src>

<mosaic_0001>
module attributes {stable_mosaic.version = 11 : i64} {
  func.func @_layer_kernel(%arg0: i32, %arg1: memref<2x8x128xf32, #tpu.memory_space<vmem>>, %arg2: memref<9x128xf32, #tpu.memory_space<vmem>>, %arg3: memref<2x128xf32, #tpu.memory_space<vmem>>, %arg4: memref<3x128x3072xbf16, #tpu.memory_space<vmem>>, %arg5: memref<3x1024x128xbf16, #tpu.memory_space<vmem>>, %arg6: memref<2x128x128xbf16, #tpu.memory_space<vmem>>, %arg7: memref<2x128x128xbf16, #tpu.memory_space<vmem>>, %arg8: memref<2x8x128xf32, #tpu.memory_space<vmem>>) attributes {dimension_semantics = [#tpu.dimension_semantics<parallel>], iteration_bounds = array<i64: 1>, scalar_prefetch = 0 : i64, scratch_operands = 0 : i64, tpu.core_type = #tpu.core_type<tc>, window_params = [{transform_indices = @transform_0, window_bounds = array<i64: 2, 8, 128>}, {pipeline_mode = #tpu.pipeline_mode<synchronous>, transform_indices = @transform_1, window_bounds = array<i64: 9, 128>}, {pipeline_mode = #tpu.pipeline_mode<synchronous>, transform_indices = @transform_2, window_bounds = array<i64: 2, 128>}, {pipeline_mode = #tpu.pipeline_mode<synchronous>, transform_indices = @transform_3, window_bounds = array<i64: 3, 128, 3072>}, {pipeline_mode = #tpu.pipeline_mode<synchronous>, transform_indices = @transform_4, window_bounds = array<i64: 3, 1024, 128>}, {pipeline_mode = #tpu.pipeline_mode<synchronous>, transform_indices = @transform_5, window_bounds = array<i64: 2, 128, 128>}, {pipeline_mode = #tpu.pipeline_mode<synchronous>, transform_indices = @transform_6, window_bounds = array<i64: 2, 128, 128>}, {transform_indices = @transform_7, window_bounds = array<i64: 2, 8, 128>}]} {
    %c0 = arith.constant 0 : index
    %c0_0 = arith.constant 0 : index
    %c0_1 = arith.constant 0 : index
    %0 = vector.load %arg1[%c0, %c0_0, %c0_1] : memref<2x8x128xf32, #tpu.memory_space<vmem>>, vector<2x8x128xf32>
    %1 = vector.shape_cast %0 : vector<2x8x128xf32> to vector<16x128xf32>
    %c0_2 = arith.constant 0 : index
    %c0_3 = arith.constant 0 : index
    %2 = vector.load %arg2[%c0_2, %c0_3] : memref<9x128xf32, #tpu.memory_space<vmem>>, vector<1x128xf32>
    %c0_4 = arith.constant 0 : index
    %c0_5 = arith.constant 0 : index
    %c0_6 = arith.constant 0 : index
    %3 = vector.load %arg4[%c0_4, %c0_5, %c0_6] : memref<3x128x3072xbf16, #tpu.memory_space<vmem>>, vector<1x128x3072xbf16>
    %4 = vector.shape_cast %3 : vector<1x128x3072xbf16> to vector<128x3072xbf16>
    %c0_7 = arith.constant 0 : index
    %c0_8 = arith.constant 0 : index
    %c0_9 = arith.constant 0 : index
    %5 = vector.load %arg5[%c0_7, %c0_8, %c0_9] : memref<3x1024x128xbf16, #tpu.memory_space<vmem>>, vector<1x1024x128xbf16>
    %6 = vector.shape_cast %5 : vector<1x1024x128xbf16> to vector<1024x128xbf16>
    %cst = arith.constant dense<0.000000e+00> : vector<16xf32>
    %7 = vector.multi_reduction <add>, %1, %cst [1] : vector<16x128xf32> to vector<16xf32>
    %8 = vector.shape_cast %7 : vector<16xf32> to vector<16x1xf32>
    %cst_10 = arith.constant 6.250000e-02 : f32
    %9 = vector.broadcast %cst_10 : f32 to vector<16x1xf32>
    %10 = arith.mulf %8, %9 : vector<16x1xf32>
    %11 = arith.mulf %1, %1 : vector<16x128xf32>
    %cst_11 = arith.constant dense<0.000000e+00> : vector<16xf32>
    %12 = vector.multi_reduction <add>, %11, %cst_11 [1] : vector<16x128xf32> to vector<16xf32>
    %13 = vector.shape_cast %12 : vector<16xf32> to vector<16x1xf32>
    %cst_12 = arith.constant 6.250000e-02 : f32
    %14 = vector.broadcast %cst_12 : f32 to vector<16x1xf32>
    %15 = arith.mulf %13, %14 : vector<16x1xf32>
    %16 = arith.mulf %10, %10 : vector<16x1xf32>
    %17 = arith.subf %15, %16 : vector<16x1xf32>
    %cst_13 = arith.constant 0.000000e+00 : f32
    %18 = vector.broadcast %cst_13 : f32 to vector<16x1xf32>
    %19 = arith.maximumf %17, %18 : vector<16x1xf32>
    %20 = vector.broadcast %10 : vector<16x1xf32> to vector<16x128xf32>
    %21 = arith.subf %1, %20 : vector<16x128xf32>
    %cst_14 = arith.constant 9.99999974E-6 : f32
    %22 = vector.broadcast %cst_14 : f32 to vector<16x1xf32>
    %23 = arith.addf %19, %22 : vector<16x1xf32>
    %24 = math.rsqrt %23 : vector<16x1xf32>
    %25 = vector.broadcast %24 : vector<16x1xf32> to vector<16x128xf32>
    %26 = arith.mulf %21, %25 : vector<16x128xf32>
    %cst_15 = arith.constant 1.000000e+00 : f32
    %27 = vector.broadcast %cst_15 : f32 to vector<1x128xf32>
    %28 = arith.addf %2, %27 : vector<1x128xf32>
    %29 = vector.broadcast %28 : vector<1x128xf32> to vector<16x128xf32>
    %30 = arith.mulf %26, %29 : vector<16x128xf32>
    %31 = arith.truncf %30 : vector<16x128xf32> to vector<16x128xbf16>
    %cst_16 = arith.constant dense<0.000000e+00> : vector<16x3072xf32>
    %32 = tpu.matmul %31, %4, %cst_16 {dimension_numbers = #tpu.dot_dimension_numbers<[1], [0], [0], [1], [0, 0, 1, 1], [], []>} : vector<16x128xbf16>, vector<128x3072xbf16>, vector<16x3072xf32> -> vector<16x3072xf32>
    %33 = vector.extract_strided_slice %32 {offsets = [0, 0], sizes = [16, 1024], strides = [1, 1]} : vector<16x3072xf32> to vector<16x1024xf32>
    %34 = arith.truncf %33 : vector<16x1024xf32> to vector<16x1024xbf16>
    %35 = vector.extract_strided_slice %32 {offsets = [0, 1024], sizes = [16, 1024], strides = [1, 1]} : vector<16x3072xf32> to vector<16x1024xf32>
    %36 = arith.truncf %35 : vector<16x1024xf32> to vector<16x1024xbf16>
    %37 = vector.extract_strided_slice %32 {offsets = [0, 2048], sizes = [16, 1024], strides = [1, 1]} : vector<16x3072xf32> to vector<16x1024xf32>
    %38 = arith.truncf %37 : vector<16x1024xf32> to vector<16x1024xbf16>
    %39 = vector.extract_strided_slice %34 {offsets = [0, 0], sizes = [8, 128], strides = [1, 1]} : vector<16x1024xbf16> to vector<8x128xbf16>
    %40 = vector.extract_strided_slice %36 {offsets = [0, 0], sizes = [8, 128], strides = [1, 1]} : vector<16x1024xbf16> to vector<8x128xbf16>
    %41 = vector.extract_strided_slice %38 {offsets = [0, 0], sizes = [8, 128], strides = [1, 1]} : vector<16x1024xbf16> to vector<8x128xbf16>
    %cst_17 = arith.constant dense<0.000000e+00> : vector<8x8xf32>
    %42 = tpu.matmul %39, %40, %cst_17 {dimension_numbers = #tpu.dot_dimension_numbers<[1], [1], [0], [0], [0, 0, 1, 0], [], []>} : vector<8x128xbf16>, vector<8x128xbf16>, vector<8x8xf32> -> vector<8x8xf32>
    %cst_18 = arith.constant dense<0xFF800000> : vector<8xf32>
    %43 = vector.multi_reduction <maximumf>, %42, %cst_18 [1] : vector<8x8xf32> to vector<8xf32>
    %44 = vector.shape_cast %43 : vector<8xf32> to vector<8x1xf32>
    %45 = vector.broadcast %44 : vector<8x1xf32> to vector<8x8xf32>
    %46 = arith.subf %42, %45 : vector<8x8xf32>
    %47 = math.exp %46 : vector<8x8xf32>
    %cst_19 = arith.constant dense<0.000000e+00> : vector<8xf32>
    %48 = vector.multi_reduction <add>, %47, %cst_19 [1] : vector<8x8xf32> to vector<8xf32>
    %49 = vector.shape_cast %48 : vector<8xf32> to vector<8x1xf32>
    %50 = tpu.reciprocal %49 {approx = true} : vector<8x1xf32> -> vector<8x1xf32>
    %51 = vector.broadcast %50 : vector<8x1xf32> to vector<8x8xf32>
    %52 = arith.mulf %47, %51 : vector<8x8xf32>
    %53 = arith.truncf %52 : vector<8x8xf32> to vector<8x8xbf16>
    %cst_20 = arith.constant dense<0.000000e+00> : vector<8x128xf32>
    %54 = tpu.matmul %53, %41, %cst_20 {dimension_numbers = #tpu.dot_dimension_numbers<[1], [0], [0], [1], [0, 0, 1, 1], [], []>} : vector<8x8xbf16>, vector<8x128xbf16>, vector<8x128xf32> -> vector<8x128xf32>
    %55 = vector.extract_strided_slice %34 {offsets = [0, 128], sizes = [8, 128], strides = [1, 1]} : vector<16x1024xbf16> to vector<8x128xbf16>
    %56 = vector.extract_strided_slice %36 {offsets = [0, 128], sizes = [8, 128], strides = [1, 1]} : vector<16x1024xbf16> to vector<8x128xbf16>
    %57 = vector.extract_strided_slice %38 {offsets = [0, 128], sizes = [8, 128], strides = [1, 1]} : vector<16x1024xbf16> to vector<8x128xbf16>
    %cst_21 = arith.constant dense<0.000000e+00> : vector<8x8xf32>
    %58 = tpu.matmul %55, %56, %cst_21 {dimension_numbers = #tpu.dot_dimension_numbers<[1], [1], [0], [0], [0, 0, 1, 0], [], []>} : vector<8x128xbf16>, vector<8x128xbf16>, vector<8x8xf32> -> vector<8x8xf32>
    %cst_22 = arith.constant dense<0xFF800000> : vector<8xf32>
    %59 = vector.multi_reduction <maximumf>, %58, %cst_22 [1] : vector<8x8xf32> to vector<8xf32>
    %60 = vector.shape_cast %59 : vector<8xf32> to vector<8x1xf32>
    %61 = vector.broadcast %60 : vector<8x1xf32> to vector<8x8xf32>
    %62 = arith.subf %58, %61 : vector<8x8xf32>
    %63 = math.exp %62 : vector<8x8xf32>
    %cst_23 = arith.constant dense<0.000000e+00> : vector<8xf32>
    %64 = vector.multi_reduction <add>, %63, %cst_23 [1] : vector<8x8xf32> to vector<8xf32>
    %65 = vector.shape_cast %64 : vector<8xf32> to vector<8x1xf32>
    %66 = tpu.reciprocal %65 {approx = true} : vector<8x1xf32> -> vector<8x1xf32>
    %67 = vector.broadcast %66 : vector<8x1xf32> to vector<8x8xf32>
    %68 = arith.mulf %63, %67 : vector<8x8xf32>
    %69 = arith.truncf %68 : vector<8x8xf32> to vector<8x8xbf16>
    %cst_24 = arith.constant dense<0.000000e+00> : vector<8x128xf32>
    %70 = tpu.matmul %69, %57, %cst_24 {dimension_numbers = #tpu.dot_dimension_numbers<[1], [0], [0], [1], [0, 0, 1, 1], [], []>} : vector<8x8xbf16>, vector<8x128xbf16>, vector<8x128xf32> -> vector<8x128xf32>
    %71 = vector.extract_strided_slice %34 {offsets = [0, 256], sizes = [8, 128], strides = [1, 1]} : vector<16x1024xbf16> to vector<8x128xbf16>
    %72 = vector.extract_strided_slice %36 {offsets = [0, 256], sizes = [8, 128], strides = [1, 1]} : vector<16x1024xbf16> to vector<8x128xbf16>
    %73 = vector.extract_strided_slice %38 {offsets = [0, 256], sizes = [8, 128], strides = [1, 1]} : vector<16x1024xbf16> to vector<8x128xbf16>
    %cst_25 = arith.constant dense<0.000000e+00> : vector<8x8xf32>
    %74 = tpu.matmul %71, %72, %cst_25 {dimension_numbers = #tpu.dot_dimension_numbers<[1], [1], [0], [0], [0, 0, 1, 0], [], []>} : vector<8x128xbf16>, vector<8x128xbf16>, vector<8x8xf32> -> vector<8x8xf32>
    %cst_26 = arith.constant dense<0xFF800000> : vector<8xf32>
    %75 = vector.multi_reduction <maximumf>, %74, %cst_26 [1] : vector<8x8xf32> to vector<8xf32>
    %76 = vector.shape_cast %75 : vector<8xf32> to vector<8x1xf32>
    %77 = vector.broadcast %76 : vector<8x1xf32> to vector<8x8xf32>
    %78 = arith.subf %74, %77 : vector<8x8xf32>
    %79 = math.exp %78 : vector<8x8xf32>
    %cst_27 = arith.constant dense<0.000000e+00> : vector<8xf32>
    %80 = vector.multi_reduction <add>, %79, %cst_27 [1] : vector<8x8xf32> to vector<8xf32>
    %81 = vector.shape_cast %80 : vector<8xf32> to vector<8x1xf32>
    %82 = tpu.reciprocal %81 {approx = true} : vector<8x1xf32> -> vector<8x1xf32>
    %83 = vector.broadcast %82 : vector<8x1xf32> to vector<8x8xf32>
    %84 = arith.mulf %79, %83 : vector<8x8xf32>
    %85 = arith.truncf %84 : vector<8x8xf32> to vector<8x8xbf16>
    %cst_28 = arith.constant dense<0.000000e+00> : vector<8x128xf32>
    %86 = tpu.matmul %85, %73, %cst_28 {dimension_numbers = #tpu.dot_dimension_numbers<[1], [0], [0], [1], [0, 0, 1, 1], [], []>} : vector<8x8xbf16>, vector<8x128xbf16>, vector<8x128xf32> -> vector<8x128xf32>
    %87 = vector.extract_strided_slice %34 {offsets = [0, 384], sizes = [8, 128], strides = [1, 1]} : vector<16x1024xbf16> to vector<8x128xbf16>
    %88 = vector.extract_strided_slice %36 {offsets = [0, 384], sizes = [8, 128], strides = [1, 1]} : vector<16x1024xbf16> to vector<8x128xbf16>
    %89 = vector.extract_strided_slice %38 {offsets = [0, 384], sizes = [8, 128], strides = [1, 1]} : vector<16x1024xbf16> to vector<8x128xbf16>
    %cst_29 = arith.constant dense<0.000000e+00> : vector<8x8xf32>
    %90 = tpu.matmul %87, %88, %cst_29 {dimension_numbers = #tpu.dot_dimension_numbers<[1], [1], [0], [0], [0, 0, 1, 0], [], []>} : vector<8x128xbf16>, vector<8x128xbf16>, vector<8x8xf32> -> vector<8x8xf32>
    %cst_30 = arith.constant dense<0xFF800000> : vector<8xf32>
    %91 = vector.multi_reduction <maximumf>, %90, %cst_30 [1] : vector<8x8xf32> to vector<8xf32>
    %92 = vector.shape_cast %91 : vector<8xf32> to vector<8x1xf32>
    %93 = vector.broadcast %92 : vector<8x1xf32> to vector<8x8xf32>
    %94 = arith.subf %90, %93 : vector<8x8xf32>
    %95 = math.exp %94 : vector<8x8xf32>
    %cst_31 = arith.constant dense<0.000000e+00> : vector<8xf32>
    %96 = vector.multi_reduction <add>, %95, %cst_31 [1] : vector<8x8xf32> to vector<8xf32>
    %97 = vector.shape_cast %96 : vector<8xf32> to vector<8x1xf32>
    %98 = tpu.reciprocal %97 {approx = true} : vector<8x1xf32> -> vector<8x1xf32>
    %99 = vector.broadcast %98 : vector<8x1xf32> to vector<8x8xf32>
    %100 = arith.mulf %95, %99 : vector<8x8xf32>
    %101 = arith.truncf %100 : vector<8x8xf32> to vector<8x8xbf16>
    %cst_32 = arith.constant dense<0.000000e+00> : vector<8x128xf32>
    %102 = tpu.matmul %101, %89, %cst_32 {dimension_numbers = #tpu.dot_dimension_numbers<[1], [0], [0], [1], [0, 0, 1, 1], [], []>} : vector<8x8xbf16>, vector<8x128xbf16>, vector<8x128xf32> -> vector<8x128xf32>
    %103 = vector.extract_strided_slice %34 {offsets = [0, 512], sizes = [8, 128], strides = [1, 1]} : vector<16x1024xbf16> to vector<8x128xbf16>
    %104 = vector.extract_strided_slice %36 {offsets = [0, 512], sizes = [8, 128], strides = [1, 1]} : vector<16x1024xbf16> to vector<8x128xbf16>
    %105 = vector.extract_strided_slice %38 {offsets = [0, 512], sizes = [8, 128], strides = [1, 1]} : vector<16x1024xbf16> to vector<8x128xbf16>
    %cst_33 = arith.constant dense<0.000000e+00> : vector<8x8xf32>
    %106 = tpu.matmul %103, %104, %cst_33 {dimension_numbers = #tpu.dot_dimension_numbers<[1], [1], [0], [0], [0, 0, 1, 0], [], []>} : vector<8x128xbf16>, vector<8x128xbf16>, vector<8x8xf32> -> vector<8x8xf32>
    %cst_34 = arith.constant dense<0xFF800000> : vector<8xf32>
    %107 = vector.multi_reduction <maximumf>, %106, %cst_34 [1] : vector<8x8xf32> to vector<8xf32>
    %108 = vector.shape_cast %107 : vector<8xf32> to vector<8x1xf32>
    %109 = vector.broadcast %108 : vector<8x1xf32> to vector<8x8xf32>
    %110 = arith.subf %106, %109 : vector<8x8xf32>
    %111 = math.exp %110 : vector<8x8xf32>
    %cst_35 = arith.constant dense<0.000000e+00> : vector<8xf32>
    %112 = vector.multi_reduction <add>, %111, %cst_35 [1] : vector<8x8xf32> to vector<8xf32>
    %113 = vector.shape_cast %112 : vector<8xf32> to vector<8x1xf32>
    %114 = tpu.reciprocal %113 {approx = true} : vector<8x1xf32> -> vector<8x1xf32>
    %115 = vector.broadcast %114 : vector<8x1xf32> to vector<8x8xf32>
    %116 = arith.mulf %111, %115 : vector<8x8xf32>
    %117 = arith.truncf %116 : vector<8x8xf32> to vector<8x8xbf16>
    %cst_36 = arith.constant dense<0.000000e+00> : vector<8x128xf32>
    %118 = tpu.matmul %117, %105, %cst_36 {dimension_numbers = #tpu.dot_dimension_numbers<[1], [0], [0], [1], [0, 0, 1, 1], [], []>} : vector<8x8xbf16>, vector<8x128xbf16>, vector<8x128xf32> -> vector<8x128xf32>
    %119 = vector.extract_strided_slice %34 {offsets = [0, 640], sizes = [8, 128], strides = [1, 1]} : vector<16x1024xbf16> to vector<8x128xbf16>
    %120 = vector.extract_strided_slice %36 {offsets = [0, 640], sizes = [8, 128], strides = [1, 1]} : vector<16x1024xbf16> to vector<8x128xbf16>
    %121 = vector.extract_strided_slice %38 {offsets = [0, 640], sizes = [8, 128], strides = [1, 1]} : vector<16x1024xbf16> to vector<8x128xbf16>
    %cst_37 = arith.constant dense<0.000000e+00> : vector<8x8xf32>
    %122 = tpu.matmul %119, %120, %cst_37 {dimension_numbers = #tpu.dot_dimension_numbers<[1], [1], [0], [0], [0, 0, 1, 0], [], []>} : vector<8x128xbf16>, vector<8x128xbf16>, vector<8x8xf32> -> vector<8x8xf32>
    %cst_38 = arith.constant dense<0xFF800000> : vector<8xf32>
    %123 = vector.multi_reduction <maximumf>, %122, %cst_38 [1] : vector<8x8xf32> to vector<8xf32>
    %124 = vector.shape_cast %123 : vector<8xf32> to vector<8x1xf32>
    %125 = vector.broadcast %124 : vector<8x1xf32> to vector<8x8xf32>
    %126 = arith.subf %122, %125 : vector<8x8xf32>
    %127 = math.exp %126 : vector<8x8xf32>
    %cst_39 = arith.constant dense<0.000000e+00> : vector<8xf32>
    %128 = vector.multi_reduction <add>, %127, %cst_39 [1] : vector<8x8xf32> to vector<8xf32>
    %129 = vector.shape_cast %128 : vector<8xf32> to vector<8x1xf32>
    %130 = tpu.reciprocal %129 {approx = true} : vector<8x1xf32> -> vector<8x1xf32>
    %131 = vector.broadcast %130 : vector<8x1xf32> to vector<8x8xf32>
    %132 = arith.mulf %127, %131 : vector<8x8xf32>
    %133 = arith.truncf %132 : vector<8x8xf32> to vector<8x8xbf16>
    %cst_40 = arith.constant dense<0.000000e+00> : vector<8x128xf32>
    %134 = tpu.matmul %133, %121, %cst_40 {dimension_numbers = #tpu.dot_dimension_numbers<[1], [0], [0], [1], [0, 0, 1, 1], [], []>} : vector<8x8xbf16>, vector<8x128xbf16>, vector<8x128xf32> -> vector<8x128xf32>
    %135 = vector.extract_strided_slice %34 {offsets = [0, 768], sizes = [8, 128], strides = [1, 1]} : vector<16x1024xbf16> to vector<8x128xbf16>
    %136 = vector.extract_strided_slice %36 {offsets = [0, 768], sizes = [8, 128], strides = [1, 1]} : vector<16x1024xbf16> to vector<8x128xbf16>
    %137 = vector.extract_strided_slice %38 {offsets = [0, 768], sizes = [8, 128], strides = [1, 1]} : vector<16x1024xbf16> to vector<8x128xbf16>
    %cst_41 = arith.constant dense<0.000000e+00> : vector<8x8xf32>
    %138 = tpu.matmul %135, %136, %cst_41 {dimension_numbers = #tpu.dot_dimension_numbers<[1], [1], [0], [0], [0, 0, 1, 0], [], []>} : vector<8x128xbf16>, vector<8x128xbf16>, vector<8x8xf32> -> vector<8x8xf32>
    %cst_42 = arith.constant dense<0xFF800000> : vector<8xf32>
    %139 = vector.multi_reduction <maximumf>, %138, %cst_42 [1] : vector<8x8xf32> to vector<8xf32>
    %140 = vector.shape_cast %139 : vector<8xf32> to vector<8x1xf32>
    %141 = vector.broadcast %140 : vector<8x1xf32> to vector<8x8xf32>
    %142 = arith.subf %138, %141 : vector<8x8xf32>
    %143 = math.exp %142 : vector<8x8xf32>
    %cst_43 = arith.constant dense<0.000000e+00> : vector<8xf32>
    %144 = vector.multi_reduction <add>, %143, %cst_43 [1] : vector<8x8xf32> to vector<8xf32>
    %145 = vector.shape_cast %144 : vector<8xf32> to vector<8x1xf32>
    %146 = tpu.reciprocal %145 {approx = true} : vector<8x1xf32> -> vector<8x1xf32>
    %147 = vector.broadcast %146 : vector<8x1xf32> to vector<8x8xf32>
    %148 = arith.mulf %143, %147 : vector<8x8xf32>
    %149 = arith.truncf %148 : vector<8x8xf32> to vector<8x8xbf16>
    %cst_44 = arith.constant dense<0.000000e+00> : vector<8x128xf32>
    %150 = tpu.matmul %149, %137, %cst_44 {dimension_numbers = #tpu.dot_dimension_numbers<[1], [0], [0], [1], [0, 0, 1, 1], [], []>} : vector<8x8xbf16>, vector<8x128xbf16>, vector<8x128xf32> -> vector<8x128xf32>
    %151 = vector.extract_strided_slice %34 {offsets = [0, 896], sizes = [8, 128], strides = [1, 1]} : vector<16x1024xbf16> to vector<8x128xbf16>
    %152 = vector.extract_strided_slice %36 {offsets = [0, 896], sizes = [8, 128], strides = [1, 1]} : vector<16x1024xbf16> to vector<8x128xbf16>
    %153 = vector.extract_strided_slice %38 {offsets = [0, 896], sizes = [8, 128], strides = [1, 1]} : vector<16x1024xbf16> to vector<8x128xbf16>
    %cst_45 = arith.constant dense<0.000000e+00> : vector<8x8xf32>
    %154 = tpu.matmul %151, %152, %cst_45 {dimension_numbers = #tpu.dot_dimension_numbers<[1], [1], [0], [0], [0, 0, 1, 0], [], []>} : vector<8x128xbf16>, vector<8x128xbf16>, vector<8x8xf32> -> vector<8x8xf32>
    %cst_46 = arith.constant dense<0xFF800000> : vector<8xf32>
    %155 = vector.multi_reduction <maximumf>, %154, %cst_46 [1] : vector<8x8xf32> to vector<8xf32>
    %156 = vector.shape_cast %155 : vector<8xf32> to vector<8x1xf32>
    %157 = vector.broadcast %156 : vector<8x1xf32> to vector<8x8xf32>
    %158 = arith.subf %154, %157 : vector<8x8xf32>
    %159 = math.exp %158 : vector<8x8xf32>
    %cst_47 = arith.constant dense<0.000000e+00> : vector<8xf32>
    %160 = vector.multi_reduction <add>, %159, %cst_47 [1] : vector<8x8xf32> to vector<8xf32>
    %161 = vector.shape_cast %160 : vector<8xf32> to vector<8x1xf32>
    %162 = tpu.reciprocal %161 {approx = true} : vector<8x1xf32> -> vector<8x1xf32>
    %163 = vector.broadcast %162 : vector<8x1xf32> to vector<8x8xf32>
    %164 = arith.mulf %159, %163 : vector<8x8xf32>
    %165 = arith.truncf %164 : vector<8x8xf32> to vector<8x8xbf16>
    %cst_48 = arith.constant dense<0.000000e+00> : vector<8x128xf32>
    %166 = tpu.matmul %165, %153, %cst_48 {dimension_numbers = #tpu.dot_dimension_numbers<[1], [0], [0], [1], [0, 0, 1, 1], [], []>} : vector<8x8xbf16>, vector<8x128xbf16>, vector<8x128xf32> -> vector<8x128xf32>
    %167 = tpu.concatenate %54, %70, %86, %102, %118, %134, %150, %166 in 1 : vector<8x128xf32>, vector<8x128xf32>, vector<8x128xf32>, vector<8x128xf32>, vector<8x128xf32>, vector<8x128xf32>, vector<8x128xf32>, vector<8x128xf32> -> vector<8x1024xf32>
    %168 = vector.extract_strided_slice %34 {offsets = [8, 0], sizes = [8, 128], strides = [1, 1]} : vector<16x1024xbf16> to vector<8x128xbf16>
    %169 = vector.extract_strided_slice %36 {offsets = [8, 0], sizes = [8, 128], strides = [1, 1]} : vector<16x1024xbf16> to vector<8x128xbf16>
    %170 = vector.extract_strided_slice %38 {offsets = [8, 0], sizes = [8, 128], strides = [1, 1]} : vector<16x1024xbf16> to vector<8x128xbf16>
    %cst_49 = arith.constant dense<0.000000e+00> : vector<8x8xf32>
    %171 = tpu.matmul %168, %169, %cst_49 {dimension_numbers = #tpu.dot_dimension_numbers<[1], [1], [0], [0], [0, 0, 1, 0], [], []>} : vector<8x128xbf16>, vector<8x128xbf16>, vector<8x8xf32> -> vector<8x8xf32>
    %cst_50 = arith.constant dense<0xFF800000> : vector<8xf32>
    %172 = vector.multi_reduction <maximumf>, %171, %cst_50 [1] : vector<8x8xf32> to vector<8xf32>
    %173 = vector.shape_cast %172 : vector<8xf32> to vector<8x1xf32>
    %174 = vector.broadcast %173 : vector<8x1xf32> to vector<8x8xf32>
    %175 = arith.subf %171, %174 : vector<8x8xf32>
    %176 = math.exp %175 : vector<8x8xf32>
    %cst_51 = arith.constant dense<0.000000e+00> : vector<8xf32>
    %177 = vector.multi_reduction <add>, %176, %cst_51 [1] : vector<8x8xf32> to vector<8xf32>
    %178 = vector.shape_cast %177 : vector<8xf32> to vector<8x1xf32>
    %179 = tpu.reciprocal %178 {approx = true} : vector<8x1xf32> -> vector<8x1xf32>
    %180 = vector.broadcast %179 : vector<8x1xf32> to vector<8x8xf32>
    %181 = arith.mulf %176, %180 : vector<8x8xf32>
    %182 = arith.truncf %181 : vector<8x8xf32> to vector<8x8xbf16>
    %cst_52 = arith.constant dense<0.000000e+00> : vector<8x128xf32>
    %183 = tpu.matmul %182, %170, %cst_52 {dimension_numbers = #tpu.dot_dimension_numbers<[1], [0], [0], [1], [0, 0, 1, 1], [], []>} : vector<8x8xbf16>, vector<8x128xbf16>, vector<8x128xf32> -> vector<8x128xf32>
    %184 = vector.extract_strided_slice %34 {offsets = [8, 128], sizes = [8, 128], strides = [1, 1]} : vector<16x1024xbf16> to vector<8x128xbf16>
    %185 = vector.extract_strided_slice %36 {offsets = [8, 128], sizes = [8, 128], strides = [1, 1]} : vector<16x1024xbf16> to vector<8x128xbf16>
    %186 = vector.extract_strided_slice %38 {offsets = [8, 128], sizes = [8, 128], strides = [1, 1]} : vector<16x1024xbf16> to vector<8x128xbf16>
    %cst_53 = arith.constant dense<0.000000e+00> : vector<8x8xf32>
    %187 = tpu.matmul %184, %185, %cst_53 {dimension_numbers = #tpu.dot_dimension_numbers<[1], [1], [0], [0], [0, 0, 1, 0], [], []>} : vector<8x128xbf16>, vector<8x128xbf16>, vector<8x8xf32> -> vector<8x8xf32>
    %cst_54 = arith.constant dense<0xFF800000> : vector<8xf32>
    %188 = vector.multi_reduction <maximumf>, %187, %cst_54 [1] : vector<8x8xf32> to vector<8xf32>
    %189 = vector.shape_cast %188 : vector<8xf32> to vector<8x1xf32>
    %190 = vector.broadcast %189 : vector<8x1xf32> to vector<8x8xf32>
    %191 = arith.subf %187, %190 : vector<8x8xf32>
    %192 = math.exp %191 : vector<8x8xf32>
    %cst_55 = arith.constant dense<0.000000e+00> : vector<8xf32>
    %193 = vector.multi_reduction <add>, %192, %cst_55 [1] : vector<8x8xf32> to vector<8xf32>
    %194 = vector.shape_cast %193 : vector<8xf32> to vector<8x1xf32>
    %195 = tpu.reciprocal %194 {approx = true} : vector<8x1xf32> -> vector<8x1xf32>
    %196 = vector.broadcast %195 : vector<8x1xf32> to vector<8x8xf32>
    %197 = arith.mulf %192, %196 : vector<8x8xf32>
    %198 = arith.truncf %197 : vector<8x8xf32> to vector<8x8xbf16>
    %cst_56 = arith.constant dense<0.000000e+00> : vector<8x128xf32>
    %199 = tpu.matmul %198, %186, %cst_56 {dimension_numbers = #tpu.dot_dimension_numbers<[1], [0], [0], [1], [0, 0, 1, 1], [], []>} : vector<8x8xbf16>, vector<8x128xbf16>, vector<8x128xf32> -> vector<8x128xf32>
    %200 = vector.extract_strided_slice %34 {offsets = [8, 256], sizes = [8, 128], strides = [1, 1]} : vector<16x1024xbf16> to vector<8x128xbf16>
    %201 = vector.extract_strided_slice %36 {offsets = [8, 256], sizes = [8, 128], strides = [1, 1]} : vector<16x1024xbf16> to vector<8x128xbf16>
    %202 = vector.extract_strided_slice %38 {offsets = [8, 256], sizes = [8, 128], strides = [1, 1]} : vector<16x1024xbf16> to vector<8x128xbf16>
    %cst_57 = arith.constant dense<0.000000e+00> : vector<8x8xf32>
    %203 = tpu.matmul %200, %201, %cst_57 {dimension_numbers = #tpu.dot_dimension_numbers<[1], [1], [0], [0], [0, 0, 1, 0], [], []>} : vector<8x128xbf16>, vector<8x128xbf16>, vector<8x8xf32> -> vector<8x8xf32>
    %cst_58 = arith.constant dense<0xFF800000> : vector<8xf32>
    %204 = vector.multi_reduction <maximumf>, %203, %cst_58 [1] : vector<8x8xf32> to vector<8xf32>
    %205 = vector.shape_cast %204 : vector<8xf32> to vector<8x1xf32>
    %206 = vector.broadcast %205 : vector<8x1xf32> to vector<8x8xf32>
    %207 = arith.subf %203, %206 : vector<8x8xf32>
    %208 = math.exp %207 : vector<8x8xf32>
    %cst_59 = arith.constant dense<0.000000e+00> : vector<8xf32>
    %209 = vector.multi_reduction <add>, %208, %cst_59 [1] : vector<8x8xf32> to vector<8xf32>
    %210 = vector.shape_cast %209 : vector<8xf32> to vector<8x1xf32>
    %211 = tpu.reciprocal %210 {approx = true} : vector<8x1xf32> -> vector<8x1xf32>
    %212 = vector.broadcast %211 : vector<8x1xf32> to vector<8x8xf32>
    %213 = arith.mulf %208, %212 : vector<8x8xf32>
    %214 = arith.truncf %213 : vector<8x8xf32> to vector<8x8xbf16>
    %cst_60 = arith.constant dense<0.000000e+00> : vector<8x128xf32>
    %215 = tpu.matmul %214, %202, %cst_60 {dimension_numbers = #tpu.dot_dimension_numbers<[1], [0], [0], [1], [0, 0, 1, 1], [], []>} : vector<8x8xbf16>, vector<8x128xbf16>, vector<8x128xf32> -> vector<8x128xf32>
    %216 = vector.extract_strided_slice %34 {offsets = [8, 384], sizes = [8, 128], strides = [1, 1]} : vector<16x1024xbf16> to vector<8x128xbf16>
    %217 = vector.extract_strided_slice %36 {offsets = [8, 384], sizes = [8, 128], strides = [1, 1]} : vector<16x1024xbf16> to vector<8x128xbf16>
    %218 = vector.extract_strided_slice %38 {offsets = [8, 384], sizes = [8, 128], strides = [1, 1]} : vector<16x1024xbf16> to vector<8x128xbf16>
    %cst_61 = arith.constant dense<0.000000e+00> : vector<8x8xf32>
    %219 = tpu.matmul %216, %217, %cst_61 {dimension_numbers = #tpu.dot_dimension_numbers<[1], [1], [0], [0], [0, 0, 1, 0], [], []>} : vector<8x128xbf16>, vector<8x128xbf16>, vector<8x8xf32> -> vector<8x8xf32>
    %cst_62 = arith.constant dense<0xFF800000> : vector<8xf32>
    %220 = vector.multi_reduction <maximumf>, %219, %cst_62 [1] : vector<8x8xf32> to vector<8xf32>
    %221 = vector.shape_cast %220 : vector<8xf32> to vector<8x1xf32>
    %222 = vector.broadcast %221 : vector<8x1xf32> to vector<8x8xf32>
    %223 = arith.subf %219, %222 : vector<8x8xf32>
    %224 = math.exp %223 : vector<8x8xf32>
    %cst_63 = arith.constant dense<0.000000e+00> : vector<8xf32>
    %225 = vector.multi_reduction <add>, %224, %cst_63 [1] : vector<8x8xf32> to vector<8xf32>
    %226 = vector.shape_cast %225 : vector<8xf32> to vector<8x1xf32>
    %227 = tpu.reciprocal %226 {approx = true} : vector<8x1xf32> -> vector<8x1xf32>
    %228 = vector.broadcast %227 : vector<8x1xf32> to vector<8x8xf32>
    %229 = arith.mulf %224, %228 : vector<8x8xf32>
    %230 = arith.truncf %229 : vector<8x8xf32> to vector<8x8xbf16>
    %cst_64 = arith.constant dense<0.000000e+00> : vector<8x128xf32>
    %231 = tpu.matmul %230, %218, %cst_64 {dimension_numbers = #tpu.dot_dimension_numbers<[1], [0], [0], [1], [0, 0, 1, 1], [], []>} : vector<8x8xbf16>, vector<8x128xbf16>, vector<8x128xf32> -> vector<8x128xf32>
    %232 = vector.extract_strided_slice %34 {offsets = [8, 512], sizes = [8, 128], strides = [1, 1]} : vector<16x1024xbf16> to vector<8x128xbf16>
    %233 = vector.extract_strided_slice %36 {offsets = [8, 512], sizes = [8, 128], strides = [1, 1]} : vector<16x1024xbf16> to vector<8x128xbf16>
    %234 = vector.extract_strided_slice %38 {offsets = [8, 512], sizes = [8, 128], strides = [1, 1]} : vector<16x1024xbf16> to vector<8x128xbf16>
    %cst_65 = arith.constant dense<0.000000e+00> : vector<8x8xf32>
    %235 = tpu.matmul %232, %233, %cst_65 {dimension_numbers = #tpu.dot_dimension_numbers<[1], [1], [0], [0], [0, 0, 1, 0], [], []>} : vector<8x128xbf16>, vector<8x128xbf16>, vector<8x8xf32> -> vector<8x8xf32>
    %cst_66 = arith.constant dense<0xFF800000> : vector<8xf32>
    %236 = vector.multi_reduction <maximumf>, %235, %cst_66 [1] : vector<8x8xf32> to vector<8xf32>
    %237 = vector.shape_cast %236 : vector<8xf32> to vector<8x1xf32>
    %238 = vector.broadcast %237 : vector<8x1xf32> to vector<8x8xf32>
    %239 = arith.subf %235, %238 : vector<8x8xf32>
    %240 = math.exp %239 : vector<8x8xf32>
    %cst_67 = arith.constant dense<0.000000e+00> : vector<8xf32>
    %241 = vector.multi_reduction <add>, %240, %cst_67 [1] : vector<8x8xf32> to vector<8xf32>
    %242 = vector.shape_cast %241 : vector<8xf32> to vector<8x1xf32>
    %243 = tpu.reciprocal %242 {approx = true} : vector<8x1xf32> -> vector<8x1xf32>
    %244 = vector.broadcast %243 : vector<8x1xf32> to vector<8x8xf32>
    %245 = arith.mulf %240, %244 : vector<8x8xf32>
    %246 = arith.truncf %245 : vector<8x8xf32> to vector<8x8xbf16>
    %cst_68 = arith.constant dense<0.000000e+00> : vector<8x128xf32>
    %247 = tpu.matmul %246, %234, %cst_68 {dimension_numbers = #tpu.dot_dimension_numbers<[1], [0], [0], [1], [0, 0, 1, 1], [], []>} : vector<8x8xbf16>, vector<8x128xbf16>, vector<8x128xf32> -> vector<8x128xf32>
    %248 = vector.extract_strided_slice %34 {offsets = [8, 640], sizes = [8, 128], strides = [1, 1]} : vector<16x1024xbf16> to vector<8x128xbf16>
    %249 = vector.extract_strided_slice %36 {offsets = [8, 640], sizes = [8, 128], strides = [1, 1]} : vector<16x1024xbf16> to vector<8x128xbf16>
    %250 = vector.extract_strided_slice %38 {offsets = [8, 640], sizes = [8, 128], strides = [1, 1]} : vector<16x1024xbf16> to vector<8x128xbf16>
    %cst_69 = arith.constant dense<0.000000e+00> : vector<8x8xf32>
    %251 = tpu.matmul %248, %249, %cst_69 {dimension_numbers = #tpu.dot_dimension_numbers<[1], [1], [0], [0], [0, 0, 1, 0], [], []>} : vector<8x128xbf16>, vector<8x128xbf16>, vector<8x8xf32> -> vector<8x8xf32>
    %cst_70 = arith.constant dense<0xFF800000> : vector<8xf32>
    %252 = vector.multi_reduction <maximumf>, %251, %cst_70 [1] : vector<8x8xf32> to vector<8xf32>
    %253 = vector.shape_cast %252 : vector<8xf32> to vector<8x1xf32>
    %254 = vector.broadcast %253 : vector<8x1xf32> to vector<8x8xf32>
    %255 = arith.subf %251, %254 : vector<8x8xf32>
    %256 = math.exp %255 : vector<8x8xf32>
    %cst_71 = arith.constant dense<0.000000e+00> : vector<8xf32>
    %257 = vector.multi_reduction <add>, %256, %cst_71 [1] : vector<8x8xf32> to vector<8xf32>
    %258 = vector.shape_cast %257 : vector<8xf32> to vector<8x1xf32>
    %259 = tpu.reciprocal %258 {approx = true} : vector<8x1xf32> -> vector<8x1xf32>
    %260 = vector.broadcast %259 : vector<8x1xf32> to vector<8x8xf32>
    %261 = arith.mulf %256, %260 : vector<8x8xf32>
    %262 = arith.truncf %261 : vector<8x8xf32> to vector<8x8xbf16>
    %cst_72 = arith.constant dense<0.000000e+00> : vector<8x128xf32>
    %263 = tpu.matmul %262, %250, %cst_72 {dimension_numbers = #tpu.dot_dimension_numbers<[1], [0], [0], [1], [0, 0, 1, 1], [], []>} : vector<8x8xbf16>, vector<8x128xbf16>, vector<8x128xf32> -> vector<8x128xf32>
    %264 = vector.extract_strided_slice %34 {offsets = [8, 768], sizes = [8, 128], strides = [1, 1]} : vector<16x1024xbf16> to vector<8x128xbf16>
    %265 = vector.extract_strided_slice %36 {offsets = [8, 768], sizes = [8, 128], strides = [1, 1]} : vector<16x1024xbf16> to vector<8x128xbf16>
    %266 = vector.extract_strided_slice %38 {offsets = [8, 768], sizes = [8, 128], strides = [1, 1]} : vector<16x1024xbf16> to vector<8x128xbf16>
    %cst_73 = arith.constant dense<0.000000e+00> : vector<8x8xf32>
    %267 = tpu.matmul %264, %265, %cst_73 {dimension_numbers = #tpu.dot_dimension_numbers<[1], [1], [0], [0], [0, 0, 1, 0], [], []>} : vector<8x128xbf16>, vector<8x128xbf16>, vector<8x8xf32> -> vector<8x8xf32>
    %cst_74 = arith.constant dense<0xFF800000> : vector<8xf32>
    %268 = vector.multi_reduction <maximumf>, %267, %cst_74 [1] : vector<8x8xf32> to vector<8xf32>
    %269 = vector.shape_cast %268 : vector<8xf32> to vector<8x1xf32>
    %270 = vector.broadcast %269 : vector<8x1xf32> to vector<8x8xf32>
    %271 = arith.subf %267, %270 : vector<8x8xf32>
    %272 = math.exp %271 : vector<8x8xf32>
    %cst_75 = arith.constant dense<0.000000e+00> : vector<8xf32>
    %273 = vector.multi_reduction <add>, %272, %cst_75 [1] : vector<8x8xf32> to vector<8xf32>
    %274 = vector.shape_cast %273 : vector<8xf32> to vector<8x1xf32>
    %275 = tpu.reciprocal %274 {approx = true} : vector<8x1xf32> -> vector<8x1xf32>
    %276 = vector.broadcast %275 : vector<8x1xf32> to vector<8x8xf32>
    %277 = arith.mulf %272, %276 : vector<8x8xf32>
    %278 = arith.truncf %277 : vector<8x8xf32> to vector<8x8xbf16>
    %cst_76 = arith.constant dense<0.000000e+00> : vector<8x128xf32>
    %279 = tpu.matmul %278, %266, %cst_76 {dimension_numbers = #tpu.dot_dimension_numbers<[1], [0], [0], [1], [0, 0, 1, 1], [], []>} : vector<8x8xbf16>, vector<8x128xbf16>, vector<8x128xf32> -> vector<8x128xf32>
    %280 = vector.extract_strided_slice %34 {offsets = [8, 896], sizes = [8, 128], strides = [1, 1]} : vector<16x1024xbf16> to vector<8x128xbf16>
    %281 = vector.extract_strided_slice %36 {offsets = [8, 896], sizes = [8, 128], strides = [1, 1]} : vector<16x1024xbf16> to vector<8x128xbf16>
    %282 = vector.extract_strided_slice %38 {offsets = [8, 896], sizes = [8, 128], strides = [1, 1]} : vector<16x1024xbf16> to vector<8x128xbf16>
    %cst_77 = arith.constant dense<0.000000e+00> : vector<8x8xf32>
    %283 = tpu.matmul %280, %281, %cst_77 {dimension_numbers = #tpu.dot_dimension_numbers<[1], [1], [0], [0], [0, 0, 1, 0], [], []>} : vector<8x128xbf16>, vector<8x128xbf16>, vector<8x8xf32> -> vector<8x8xf32>
    %cst_78 = arith.constant dense<0xFF800000> : vector<8xf32>
    %284 = vector.multi_reduction <maximumf>, %283, %cst_78 [1] : vector<8x8xf32> to vector<8xf32>
    %285 = vector.shape_cast %284 : vector<8xf32> to vector<8x1xf32>
    %286 = vector.broadcast %285 : vector<8x1xf32> to vector<8x8xf32>
    %287 = arith.subf %283, %286 : vector<8x8xf32>
    %288 = math.exp %287 : vector<8x8xf32>
    %cst_79 = arith.constant dense<0.000000e+00> : vector<8xf32>
    %289 = vector.multi_reduction <add>, %288, %cst_79 [1] : vector<8x8xf32> to vector<8xf32>
    %290 = vector.shape_cast %289 : vector<8xf32> to vector<8x1xf32>
    %291 = tpu.reciprocal %290 {approx = true} : vector<8x1xf32> -> vector<8x1xf32>
    %292 = vector.broadcast %291 : vector<8x1xf32> to vector<8x8xf32>
    %293 = arith.mulf %288, %292 : vector<8x8xf32>
    %294 = arith.truncf %293 : vector<8x8xf32> to vector<8x8xbf16>
    %cst_80 = arith.constant dense<0.000000e+00> : vector<8x128xf32>
    %295 = tpu.matmul %294, %282, %cst_80 {dimension_numbers = #tpu.dot_dimension_numbers<[1], [0], [0], [1], [0, 0, 1, 1], [], []>} : vector<8x8xbf16>, vector<8x128xbf16>, vector<8x128xf32> -> vector<8x128xf32>
    %296 = tpu.concatenate %183, %199, %215, %231, %247, %263, %279, %295 in 1 : vector<8x128xf32>, vector<8x128xf32>, vector<8x128xf32>, vector<8x128xf32>, vector<8x128xf32>, vector<8x128xf32>, vector<8x128xf32>, vector<8x128xf32> -> vector<8x1024xf32>
    %297 = tpu.concatenate %167, %296 in 0 : vector<8x1024xf32>, vector<8x1024xf32> -> vector<16x1024xf32>
    %298 = arith.truncf %297 : vector<16x1024xf32> to vector<16x1024xbf16>
    %cst_81 = arith.constant dense<0.000000e+00> : vector<16x128xf32>
    %299 = tpu.matmul %298, %6, %cst_81 {dimension_numbers = #tpu.dot_dimension_numbers<[1], [0], [0], [1], [0, 0, 1, 1], [], []>} : vector<16x1024xbf16>, vector<1024x128xbf16>, vector<16x128xf32> -> vector<16x128xf32>
    %300 = arith.addf %299, %1 : vector<16x128xf32>
    %c1 = arith.constant 1 : index
    %c0_82 = arith.constant 0 : index
    %301 = vector.load %arg2[%c1, %c0_82] : memref<9x128xf32, #tpu.memory_space<vmem>>, vector<1x128xf32>
    %c0_83 = arith.constant 0 : index
    %c0_84 = arith.constant 0 : index
    %c0_85 = arith.constant 0 : index
    %302 = vector.load %arg6[%c0_83, %c0_84, %c0_85] : memref<2x128x128xbf16, #tpu.memory_space<vmem>>, vector<1x128x128xbf16>
    %303 = vector.shape_cast %302 : vector<1x128x128xbf16> to vector<128x128xbf16>
    %c0_86 = arith.constant 0 : index
    %c0_87 = arith.constant 0 : index
    %304 = vector.load %arg3[%c0_86, %c0_87] : memref<2x128xf32, #tpu.memory_space<vmem>>, vector<1x128xf32>
    %c0_88 = arith.constant 0 : index
    %c0_89 = arith.constant 0 : index
    %c0_90 = arith.constant 0 : index
    %305 = vector.load %arg7[%c0_88, %c0_89, %c0_90] : memref<2x128x128xbf16, #tpu.memory_space<vmem>>, vector<1x128x128xbf16>
    %306 = vector.shape_cast %305 : vector<1x128x128xbf16> to vector<128x128xbf16>
    %c2 = arith.constant 2 : index
    %c0_91 = arith.constant 0 : index
    %307 = vector.load %arg2[%c2, %c0_91] : memref<9x128xf32, #tpu.memory_space<vmem>>, vector<1x128xf32>
    %cst_92 = arith.constant dense<0.000000e+00> : vector<16xf32>
    %308 = vector.multi_reduction <add>, %300, %cst_92 [1] : vector<16x128xf32> to vector<16xf32>
    %309 = vector.shape_cast %308 : vector<16xf32> to vector<16x1xf32>
    %cst_93 = arith.constant 6.250000e-02 : f32
    %310 = vector.broadcast %cst_93 : f32 to vector<16x1xf32>
    %311 = arith.mulf %309, %310 : vector<16x1xf32>
    %312 = arith.mulf %300, %300 : vector<16x128xf32>
    %cst_94 = arith.constant dense<0.000000e+00> : vector<16xf32>
    %313 = vector.multi_reduction <add>, %312, %cst_94 [1] : vector<16x128xf32> to vector<16xf32>
    %314 = vector.shape_cast %313 : vector<16xf32> to vector<16x1xf32>
    %cst_95 = arith.constant 6.250000e-02 : f32
    %315 = vector.broadcast %cst_95 : f32 to vector<16x1xf32>
    %316 = arith.mulf %314, %315 : vector<16x1xf32>
    %317 = arith.mulf %311, %311 : vector<16x1xf32>
    %318 = arith.subf %316, %317 : vector<16x1xf32>
    %cst_96 = arith.constant 0.000000e+00 : f32
    %319 = vector.broadcast %cst_96 : f32 to vector<16x1xf32>
    %320 = arith.maximumf %318, %319 : vector<16x1xf32>
    %321 = vector.broadcast %311 : vector<16x1xf32> to vector<16x128xf32>
    %322 = arith.subf %300, %321 : vector<16x128xf32>
    %cst_97 = arith.constant 9.99999974E-6 : f32
    %323 = vector.broadcast %cst_97 : f32 to vector<16x1xf32>
    %324 = arith.addf %320, %323 : vector<16x1xf32>
    %325 = math.rsqrt %324 : vector<16x1xf32>
    %326 = vector.broadcast %325 : vector<16x1xf32> to vector<16x128xf32>
    %327 = arith.mulf %322, %326 : vector<16x128xf32>
    %cst_98 = arith.constant 1.000000e+00 : f32
    %328 = vector.broadcast %cst_98 : f32 to vector<1x128xf32>
    %329 = arith.addf %301, %328 : vector<1x128xf32>
    %330 = vector.broadcast %329 : vector<1x128xf32> to vector<16x128xf32>
    %331 = arith.mulf %327, %330 : vector<16x128xf32>
    %332 = arith.truncf %331 : vector<16x128xf32> to vector<16x128xbf16>
    %cst_99 = arith.constant dense<0.000000e+00> : vector<16x128xf32>
    %333 = tpu.matmul %332, %303, %cst_99 {dimension_numbers = #tpu.dot_dimension_numbers<[1], [0], [0], [1], [0, 0, 1, 1], [], []>} : vector<16x128xbf16>, vector<128x128xbf16>, vector<16x128xf32> -> vector<16x128xf32>
    %334 = vector.broadcast %304 : vector<1x128xf32> to vector<16x128xf32>
    %335 = arith.addf %333, %334 : vector<16x128xf32>
    %cst_100 = arith.constant 5.000000e-01 : f32
    %336 = vector.broadcast %cst_100 : f32 to vector<16x128xf32>
    %337 = arith.mulf %336, %335 : vector<16x128xf32>
    %cst_101 = arith.constant 0.707106769 : f32
    %338 = vector.broadcast %cst_101 : f32 to vector<16x128xf32>
    %339 = arith.mulf %335, %338 : vector<16x128xf32>
    %340 = math.absf %339 : vector<16x128xf32>
    %cst_102 = arith.constant 0.327591091 : f32
    %341 = vector.broadcast %cst_102 : f32 to vector<16x128xf32>
    %342 = arith.mulf %341, %340 : vector<16x128xf32>
    %cst_103 = arith.constant 1.000000e+00 : f32
    %343 = vector.broadcast %cst_103 : f32 to vector<16x128xf32>
    %344 = arith.addf %343, %342 : vector<16x128xf32>
    %cst_104 = arith.constant 1.000000e+00 : f32
    %345 = vector.broadcast %cst_104 : f32 to vector<16x128xf32>
    %346 = arith.divf %345, %344 : vector<16x128xf32>
    %cst_105 = arith.constant 1.06140542 : f32
    %347 = vector.broadcast %cst_105 : f32 to vector<16x128xf32>
    %348 = arith.mulf %347, %346 : vector<16x128xf32>
    %cst_106 = arith.constant -1.45315206 : f32
    %349 = vector.broadcast %cst_106 : f32 to vector<16x128xf32>
    %350 = arith.addf %348, %349 : vector<16x128xf32>
    %351 = arith.mulf %350, %346 : vector<16x128xf32>
    %cst_107 = arith.constant 1.42141378 : f32
    %352 = vector.broadcast %cst_107 : f32 to vector<16x128xf32>
    %353 = arith.addf %351, %352 : vector<16x128xf32>
    %354 = arith.mulf %353, %346 : vector<16x128xf32>
    %cst_108 = arith.constant -0.284496725 : f32
    %355 = vector.broadcast %cst_108 : f32 to vector<16x128xf32>
    %356 = arith.addf %354, %355 : vector<16x128xf32>
    %357 = arith.mulf %356, %346 : vector<16x128xf32>
    %cst_109 = arith.constant 0.254829586 : f32
    %358 = vector.broadcast %cst_109 : f32 to vector<16x128xf32>
    %359 = arith.addf %357, %358 : vector<16x128xf32>
    %360 = arith.mulf %359, %346 : vector<16x128xf32>
    %cst_110 = arith.constant 0.000000e+00 : f32
    %361 = vector.broadcast %cst_110 : f32 to vector<16x128xf32>
    %362 = arith.subf %361, %340 : vector<16x128xf32>
    %363 = arith.mulf %362, %340 : vector<16x128xf32>
    %364 = math.exp %363 : vector<16x128xf32>
    %365 = arith.mulf %360, %364 : vector<16x128xf32>
    %cst_111 = arith.constant 1.000000e+00 : f32
    %366 = vector.broadcast %cst_111 : f32 to vector<16x128xf32>
    %367 = arith.subf %366, %365 : vector<16x128xf32>
    %cst_112 = arith.constant 0.000000e+00 : f32
    %368 = vector.broadcast %cst_112 : f32 to vector<16x128xf32>
    %369 = arith.cmpf oge, %339, %368 : vector<16x128xf32>
    %cst_113 = arith.constant 0.000000e+00 : f32
    %370 = vector.broadcast %cst_113 : f32 to vector<16x128xf32>
    %371 = arith.subf %370, %367 : vector<16x128xf32>
    %372 = arith.select %369, %367, %371 : vector<16x128xi1>, vector<16x128xf32>
    %cst_114 = arith.constant 1.000000e+00 : f32
    %373 = vector.broadcast %cst_114 : f32 to vector<16x128xf32>
    %374 = arith.addf %373, %372 : vector<16x128xf32>
    %375 = arith.mulf %337, %374 : vector<16x128xf32>
    %376 = arith.truncf %375 : vector<16x128xf32> to vector<16x128xbf16>
    %cst_115 = arith.constant dense<0.000000e+00> : vector<16x128xf32>
    %377 = tpu.matmul %376, %306, %cst_115 {dimension_numbers = #tpu.dot_dimension_numbers<[1], [0], [0], [1], [0, 0, 1, 1], [], []>} : vector<16x128xbf16>, vector<128x128xbf16>, vector<16x128xf32> -> vector<16x128xf32>
    %378 = vector.broadcast %307 : vector<1x128xf32> to vector<16x128xf32>
    %379 = arith.addf %377, %378 : vector<16x128xf32>
    %380 = arith.addf %379, %300 : vector<16x128xf32>
    %c3 = arith.constant 3 : index
    %c0_116 = arith.constant 0 : index
    %381 = vector.load %arg2[%c3, %c0_116] : memref<9x128xf32, #tpu.memory_space<vmem>>, vector<1x128xf32>
    %c1_117 = arith.constant 1 : index
    %c0_118 = arith.constant 0 : index
    %c0_119 = arith.constant 0 : index
    %382 = vector.load %arg4[%c1_117, %c0_118, %c0_119] : memref<3x128x3072xbf16, #tpu.memory_space<vmem>>, vector<1x128x3072xbf16>
    %383 = vector.shape_cast %382 : vector<1x128x3072xbf16> to vector<128x3072xbf16>
    %c1_120 = arith.constant 1 : index
    %c0_121 = arith.constant 0 : index
    %c0_122 = arith.constant 0 : index
    %384 = vector.load %arg5[%c1_120, %c0_121, %c0_122] : memref<3x1024x128xbf16, #tpu.memory_space<vmem>>, vector<1x1024x128xbf16>
    %385 = vector.shape_cast %384 : vector<1x1024x128xbf16> to vector<1024x128xbf16>
    %cst_123 = arith.constant dense<0.000000e+00> : vector<16xf32>
    %386 = vector.multi_reduction <add>, %380, %cst_123 [1] : vector<16x128xf32> to vector<16xf32>
    %387 = vector.shape_cast %386 : vector<16xf32> to vector<16x1xf32>
    %cst_124 = arith.constant 6.250000e-02 : f32
    %388 = vector.broadcast %cst_124 : f32 to vector<16x1xf32>
    %389 = arith.mulf %387, %388 : vector<16x1xf32>
    %390 = arith.mulf %380, %380 : vector<16x128xf32>
    %cst_125 = arith.constant dense<0.000000e+00> : vector<16xf32>
    %391 = vector.multi_reduction <add>, %390, %cst_125 [1] : vector<16x128xf32> to vector<16xf32>
    %392 = vector.shape_cast %391 : vector<16xf32> to vector<16x1xf32>
    %cst_126 = arith.constant 6.250000e-02 : f32
    %393 = vector.broadcast %cst_126 : f32 to vector<16x1xf32>
    %394 = arith.mulf %392, %393 : vector<16x1xf32>
    %395 = arith.mulf %389, %389 : vector<16x1xf32>
    %396 = arith.subf %394, %395 : vector<16x1xf32>
    %cst_127 = arith.constant 0.000000e+00 : f32
    %397 = vector.broadcast %cst_127 : f32 to vector<16x1xf32>
    %398 = arith.maximumf %396, %397 : vector<16x1xf32>
    %399 = vector.broadcast %389 : vector<16x1xf32> to vector<16x128xf32>
    %400 = arith.subf %380, %399 : vector<16x128xf32>
    %cst_128 = arith.constant 9.99999974E-6 : f32
    %401 = vector.broadcast %cst_128 : f32 to vector<16x1xf32>
    %402 = arith.addf %398, %401 : vector<16x1xf32>
    %403 = math.rsqrt %402 : vector<16x1xf32>
    %404 = vector.broadcast %403 : vector<16x1xf32> to vector<16x128xf32>
    %405 = arith.mulf %400, %404 : vector<16x128xf32>
    %cst_129 = arith.constant 1.000000e+00 : f32
    %406 = vector.broadcast %cst_129 : f32 to vector<1x128xf32>
    %407 = arith.addf %381, %406 : vector<1x128xf32>
    %408 = vector.broadcast %407 : vector<1x128xf32> to vector<16x128xf32>
    %409 = arith.mulf %405, %408 : vector<16x128xf32>
    %410 = arith.truncf %409 : vector<16x128xf32> to vector<16x128xbf16>
    %cst_130 = arith.constant dense<0.000000e+00> : vector<16x3072xf32>
    %411 = tpu.matmul %410, %383, %cst_130 {dimension_numbers = #tpu.dot_dimension_numbers<[1], [0], [0], [1], [0, 0, 1, 1], [], []>} : vector<16x128xbf16>, vector<128x3072xbf16>, vector<16x3072xf32> -> vector<16x3072xf32>
    %412 = vector.extract_strided_slice %411 {offsets = [0, 0], sizes = [16, 1024], strides = [1, 1]} : vector<16x3072xf32> to vector<16x1024xf32>
    %413 = arith.truncf %412 : vector<16x1024xf32> to vector<16x1024xbf16>
    %414 = vector.extract_strided_slice %411 {offsets = [0, 1024], sizes = [16, 1024], strides = [1, 1]} : vector<16x3072xf32> to vector<16x1024xf32>
    %415 = arith.truncf %414 : vector<16x1024xf32> to vector<16x1024xbf16>
    %416 = vector.extract_strided_slice %411 {offsets = [0, 2048], sizes = [16, 1024], strides = [1, 1]} : vector<16x3072xf32> to vector<16x1024xf32>
    %417 = arith.truncf %416 : vector<16x1024xf32> to vector<16x1024xbf16>
    %418 = vector.extract_strided_slice %413 {offsets = [0, 0], sizes = [8, 128], strides = [1, 1]} : vector<16x1024xbf16> to vector<8x128xbf16>
    %419 = vector.extract_strided_slice %415 {offsets = [0, 0], sizes = [8, 128], strides = [1, 1]} : vector<16x1024xbf16> to vector<8x128xbf16>
    %420 = vector.extract_strided_slice %417 {offsets = [0, 0], sizes = [8, 128], strides = [1, 1]} : vector<16x1024xbf16> to vector<8x128xbf16>
    %cst_131 = arith.constant dense<0.000000e+00> : vector<8x8xf32>
    %421 = tpu.matmul %418, %419, %cst_131 {dimension_numbers = #tpu.dot_dimension_numbers<[1], [1], [0], [0], [0, 0, 1, 0], [], []>} : vector<8x128xbf16>, vector<8x128xbf16>, vector<8x8xf32> -> vector<8x8xf32>
    %cst_132 = arith.constant dense<0xFF800000> : vector<8xf32>
    %422 = vector.multi_reduction <maximumf>, %421, %cst_132 [1] : vector<8x8xf32> to vector<8xf32>
    %423 = vector.shape_cast %422 : vector<8xf32> to vector<8x1xf32>
    %424 = vector.broadcast %423 : vector<8x1xf32> to vector<8x8xf32>
    %425 = arith.subf %421, %424 : vector<8x8xf32>
    %426 = math.exp %425 : vector<8x8xf32>
    %cst_133 = arith.constant dense<0.000000e+00> : vector<8xf32>
    %427 = vector.multi_reduction <add>, %426, %cst_133 [1] : vector<8x8xf32> to vector<8xf32>
    %428 = vector.shape_cast %427 : vector<8xf32> to vector<8x1xf32>
    %429 = tpu.reciprocal %428 {approx = true} : vector<8x1xf32> -> vector<8x1xf32>
    %430 = vector.broadcast %429 : vector<8x1xf32> to vector<8x8xf32>
    %431 = arith.mulf %426, %430 : vector<8x8xf32>
    %432 = arith.truncf %431 : vector<8x8xf32> to vector<8x8xbf16>
    %cst_134 = arith.constant dense<0.000000e+00> : vector<8x128xf32>
    %433 = tpu.matmul %432, %420, %cst_134 {dimension_numbers = #tpu.dot_dimension_numbers<[1], [0], [0], [1], [0, 0, 1, 1], [], []>} : vector<8x8xbf16>, vector<8x128xbf16>, vector<8x128xf32> -> vector<8x128xf32>
    %434 = vector.extract_strided_slice %413 {offsets = [0, 128], sizes = [8, 128], strides = [1, 1]} : vector<16x1024xbf16> to vector<8x128xbf16>
    %435 = vector.extract_strided_slice %415 {offsets = [0, 128], sizes = [8, 128], strides = [1, 1]} : vector<16x1024xbf16> to vector<8x128xbf16>
    %436 = vector.extract_strided_slice %417 {offsets = [0, 128], sizes = [8, 128], strides = [1, 1]} : vector<16x1024xbf16> to vector<8x128xbf16>
    %cst_135 = arith.constant dense<0.000000e+00> : vector<8x8xf32>
    %437 = tpu.matmul %434, %435, %cst_135 {dimension_numbers = #tpu.dot_dimension_numbers<[1], [1], [0], [0], [0, 0, 1, 0], [], []>} : vector<8x128xbf16>, vector<8x128xbf16>, vector<8x8xf32> -> vector<8x8xf32>
    %cst_136 = arith.constant dense<0xFF800000> : vector<8xf32>
    %438 = vector.multi_reduction <maximumf>, %437, %cst_136 [1] : vector<8x8xf32> to vector<8xf32>
    %439 = vector.shape_cast %438 : vector<8xf32> to vector<8x1xf32>
    %440 = vector.broadcast %439 : vector<8x1xf32> to vector<8x8xf32>
    %441 = arith.subf %437, %440 : vector<8x8xf32>
    %442 = math.exp %441 : vector<8x8xf32>
    %cst_137 = arith.constant dense<0.000000e+00> : vector<8xf32>
    %443 = vector.multi_reduction <add>, %442, %cst_137 [1] : vector<8x8xf32> to vector<8xf32>
    %444 = vector.shape_cast %443 : vector<8xf32> to vector<8x1xf32>
    %445 = tpu.reciprocal %444 {approx = true} : vector<8x1xf32> -> vector<8x1xf32>
    %446 = vector.broadcast %445 : vector<8x1xf32> to vector<8x8xf32>
    %447 = arith.mulf %442, %446 : vector<8x8xf32>
    %448 = arith.truncf %447 : vector<8x8xf32> to vector<8x8xbf16>
    %cst_138 = arith.constant dense<0.000000e+00> : vector<8x128xf32>
    %449 = tpu.matmul %448, %436, %cst_138 {dimension_numbers = #tpu.dot_dimension_numbers<[1], [0], [0], [1], [0, 0, 1, 1], [], []>} : vector<8x8xbf16>, vector<8x128xbf16>, vector<8x128xf32> -> vector<8x128xf32>
    %450 = vector.extract_strided_slice %413 {offsets = [0, 256], sizes = [8, 128], strides = [1, 1]} : vector<16x1024xbf16> to vector<8x128xbf16>
    %451 = vector.extract_strided_slice %415 {offsets = [0, 256], sizes = [8, 128], strides = [1, 1]} : vector<16x1024xbf16> to vector<8x128xbf16>
    %452 = vector.extract_strided_slice %417 {offsets = [0, 256], sizes = [8, 128], strides = [1, 1]} : vector<16x1024xbf16> to vector<8x128xbf16>
    %cst_139 = arith.constant dense<0.000000e+00> : vector<8x8xf32>
    %453 = tpu.matmul %450, %451, %cst_139 {dimension_numbers = #tpu.dot_dimension_numbers<[1], [1], [0], [0], [0, 0, 1, 0], [], []>} : vector<8x128xbf16>, vector<8x128xbf16>, vector<8x8xf32> -> vector<8x8xf32>
    %cst_140 = arith.constant dense<0xFF800000> : vector<8xf32>
    %454 = vector.multi_reduction <maximumf>, %453, %cst_140 [1] : vector<8x8xf32> to vector<8xf32>
    %455 = vector.shape_cast %454 : vector<8xf32> to vector<8x1xf32>
    %456 = vector.broadcast %455 : vector<8x1xf32> to vector<8x8xf32>
    %457 = arith.subf %453, %456 : vector<8x8xf32>
    %458 = math.exp %457 : vector<8x8xf32>
    %cst_141 = arith.constant dense<0.000000e+00> : vector<8xf32>
    %459 = vector.multi_reduction <add>, %458, %cst_141 [1] : vector<8x8xf32> to vector<8xf32>
    %460 = vector.shape_cast %459 : vector<8xf32> to vector<8x1xf32>
    %461 = tpu.reciprocal %460 {approx = true} : vector<8x1xf32> -> vector<8x1xf32>
    %462 = vector.broadcast %461 : vector<8x1xf32> to vector<8x8xf32>
    %463 = arith.mulf %458, %462 : vector<8x8xf32>
    %464 = arith.truncf %463 : vector<8x8xf32> to vector<8x8xbf16>
    %cst_142 = arith.constant dense<0.000000e+00> : vector<8x128xf32>
    %465 = tpu.matmul %464, %452, %cst_142 {dimension_numbers = #tpu.dot_dimension_numbers<[1], [0], [0], [1], [0, 0, 1, 1], [], []>} : vector<8x8xbf16>, vector<8x128xbf16>, vector<8x128xf32> -> vector<8x128xf32>
    %466 = vector.extract_strided_slice %413 {offsets = [0, 384], sizes = [8, 128], strides = [1, 1]} : vector<16x1024xbf16> to vector<8x128xbf16>
    %467 = vector.extract_strided_slice %415 {offsets = [0, 384], sizes = [8, 128], strides = [1, 1]} : vector<16x1024xbf16> to vector<8x128xbf16>
    %468 = vector.extract_strided_slice %417 {offsets = [0, 384], sizes = [8, 128], strides = [1, 1]} : vector<16x1024xbf16> to vector<8x128xbf16>
    %cst_143 = arith.constant dense<0.000000e+00> : vector<8x8xf32>
    %469 = tpu.matmul %466, %467, %cst_143 {dimension_numbers = #tpu.dot_dimension_numbers<[1], [1], [0], [0], [0, 0, 1, 0], [], []>} : vector<8x128xbf16>, vector<8x128xbf16>, vector<8x8xf32> -> vector<8x8xf32>
    %cst_144 = arith.constant dense<0xFF800000> : vector<8xf32>
    %470 = vector.multi_reduction <maximumf>, %469, %cst_144 [1] : vector<8x8xf32> to vector<8xf32>
    %471 = vector.shape_cast %470 : vector<8xf32> to vector<8x1xf32>
    %472 = vector.broadcast %471 : vector<8x1xf32> to vector<8x8xf32>
    %473 = arith.subf %469, %472 : vector<8x8xf32>
    %474 = math.exp %473 : vector<8x8xf32>
    %cst_145 = arith.constant dense<0.000000e+00> : vector<8xf32>
    %475 = vector.multi_reduction <add>, %474, %cst_145 [1] : vector<8x8xf32> to vector<8xf32>
    %476 = vector.shape_cast %475 : vector<8xf32> to vector<8x1xf32>
    %477 = tpu.reciprocal %476 {approx = true} : vector<8x1xf32> -> vector<8x1xf32>
    %478 = vector.broadcast %477 : vector<8x1xf32> to vector<8x8xf32>
    %479 = arith.mulf %474, %478 : vector<8x8xf32>
    %480 = arith.truncf %479 : vector<8x8xf32> to vector<8x8xbf16>
    %cst_146 = arith.constant dense<0.000000e+00> : vector<8x128xf32>
    %481 = tpu.matmul %480, %468, %cst_146 {dimension_numbers = #tpu.dot_dimension_numbers<[1], [0], [0], [1], [0, 0, 1, 1], [], []>} : vector<8x8xbf16>, vector<8x128xbf16>, vector<8x128xf32> -> vector<8x128xf32>
    %482 = vector.extract_strided_slice %413 {offsets = [0, 512], sizes = [8, 128], strides = [1, 1]} : vector<16x1024xbf16> to vector<8x128xbf16>
    %483 = vector.extract_strided_slice %415 {offsets = [0, 512], sizes = [8, 128], strides = [1, 1]} : vector<16x1024xbf16> to vector<8x128xbf16>
    %484 = vector.extract_strided_slice %417 {offsets = [0, 512], sizes = [8, 128], strides = [1, 1]} : vector<16x1024xbf16> to vector<8x128xbf16>
    %cst_147 = arith.constant dense<0.000000e+00> : vector<8x8xf32>
    %485 = tpu.matmul %482, %483, %cst_147 {dimension_numbers = #tpu.dot_dimension_numbers<[1], [1], [0], [0], [0, 0, 1, 0], [], []>} : vector<8x128xbf16>, vector<8x128xbf16>, vector<8x8xf32> -> vector<8x8xf32>
    %cst_148 = arith.constant dense<0xFF800000> : vector<8xf32>
    %486 = vector.multi_reduction <maximumf>, %485, %cst_148 [1] : vector<8x8xf32> to vector<8xf32>
    %487 = vector.shape_cast %486 : vector<8xf32> to vector<8x1xf32>
    %488 = vector.broadcast %487 : vector<8x1xf32> to vector<8x8xf32>
    %489 = arith.subf %485, %488 : vector<8x8xf32>
    %490 = math.exp %489 : vector<8x8xf32>
    %cst_149 = arith.constant dense<0.000000e+00> : vector<8xf32>
    %491 = vector.multi_reduction <add>, %490, %cst_149 [1] : vector<8x8xf32> to vector<8xf32>
    %492 = vector.shape_cast %491 : vector<8xf32> to vector<8x1xf32>
    %493 = tpu.reciprocal %492 {approx = true} : vector<8x1xf32> -> vector<8x1xf32>
    %494 = vector.broadcast %493 : vector<8x1xf32> to vector<8x8xf32>
    %495 = arith.mulf %490, %494 : vector<8x8xf32>
    %496 = arith.truncf %495 : vector<8x8xf32> to vector<8x8xbf16>
    %cst_150 = arith.constant dense<0.000000e+00> : vector<8x128xf32>
    %497 = tpu.matmul %496, %484, %cst_150 {dimension_numbers = #tpu.dot_dimension_numbers<[1], [0], [0], [1], [0, 0, 1, 1], [], []>} : vector<8x8xbf16>, vector<8x128xbf16>, vector<8x128xf32> -> vector<8x128xf32>
    %498 = vector.extract_strided_slice %413 {offsets = [0, 640], sizes = [8, 128], strides = [1, 1]} : vector<16x1024xbf16> to vector<8x128xbf16>
    %499 = vector.extract_strided_slice %415 {offsets = [0, 640], sizes = [8, 128], strides = [1, 1]} : vector<16x1024xbf16> to vector<8x128xbf16>
    %500 = vector.extract_strided_slice %417 {offsets = [0, 640], sizes = [8, 128], strides = [1, 1]} : vector<16x1024xbf16> to vector<8x128xbf16>
    %cst_151 = arith.constant dense<0.000000e+00> : vector<8x8xf32>
    %501 = tpu.matmul %498, %499, %cst_151 {dimension_numbers = #tpu.dot_dimension_numbers<[1], [1], [0], [0], [0, 0, 1, 0], [], []>} : vector<8x128xbf16>, vector<8x128xbf16>, vector<8x8xf32> -> vector<8x8xf32>
    %cst_152 = arith.constant dense<0xFF800000> : vector<8xf32>
    %502 = vector.multi_reduction <maximumf>, %501, %cst_152 [1] : vector<8x8xf32> to vector<8xf32>
    %503 = vector.shape_cast %502 : vector<8xf32> to vector<8x1xf32>
    %504 = vector.broadcast %503 : vector<8x1xf32> to vector<8x8xf32>
    %505 = arith.subf %501, %504 : vector<8x8xf32>
    %506 = math.exp %505 : vector<8x8xf32>
    %cst_153 = arith.constant dense<0.000000e+00> : vector<8xf32>
    %507 = vector.multi_reduction <add>, %506, %cst_153 [1] : vector<8x8xf32> to vector<8xf32>
    %508 = vector.shape_cast %507 : vector<8xf32> to vector<8x1xf32>
    %509 = tpu.reciprocal %508 {approx = true} : vector<8x1xf32> -> vector<8x1xf32>
    %510 = vector.broadcast %509 : vector<8x1xf32> to vector<8x8xf32>
    %511 = arith.mulf %506, %510 : vector<8x8xf32>
    %512 = arith.truncf %511 : vector<8x8xf32> to vector<8x8xbf16>
    %cst_154 = arith.constant dense<0.000000e+00> : vector<8x128xf32>
    %513 = tpu.matmul %512, %500, %cst_154 {dimension_numbers = #tpu.dot_dimension_numbers<[1], [0], [0], [1], [0, 0, 1, 1], [], []>} : vector<8x8xbf16>, vector<8x128xbf16>, vector<8x128xf32> -> vector<8x128xf32>
    %514 = vector.extract_strided_slice %413 {offsets = [0, 768], sizes = [8, 128], strides = [1, 1]} : vector<16x1024xbf16> to vector<8x128xbf16>
    %515 = vector.extract_strided_slice %415 {offsets = [0, 768], sizes = [8, 128], strides = [1, 1]} : vector<16x1024xbf16> to vector<8x128xbf16>
    %516 = vector.extract_strided_slice %417 {offsets = [0, 768], sizes = [8, 128], strides = [1, 1]} : vector<16x1024xbf16> to vector<8x128xbf16>
    %cst_155 = arith.constant dense<0.000000e+00> : vector<8x8xf32>
    %517 = tpu.matmul %514, %515, %cst_155 {dimension_numbers = #tpu.dot_dimension_numbers<[1], [1], [0], [0], [0, 0, 1, 0], [], []>} : vector<8x128xbf16>, vector<8x128xbf16>, vector<8x8xf32> -> vector<8x8xf32>
    %cst_156 = arith.constant dense<0xFF800000> : vector<8xf32>
    %518 = vector.multi_reduction <maximumf>, %517, %cst_156 [1] : vector<8x8xf32> to vector<8xf32>
    %519 = vector.shape_cast %518 : vector<8xf32> to vector<8x1xf32>
    %520 = vector.broadcast %519 : vector<8x1xf32> to vector<8x8xf32>
    %521 = arith.subf %517, %520 : vector<8x8xf32>
    %522 = math.exp %521 : vector<8x8xf32>
    %cst_157 = arith.constant dense<0.000000e+00> : vector<8xf32>
    %523 = vector.multi_reduction <add>, %522, %cst_157 [1] : vector<8x8xf32> to vector<8xf32>
    %524 = vector.shape_cast %523 : vector<8xf32> to vector<8x1xf32>
    %525 = tpu.reciprocal %524 {approx = true} : vector<8x1xf32> -> vector<8x1xf32>
    %526 = vector.broadcast %525 : vector<8x1xf32> to vector<8x8xf32>
    %527 = arith.mulf %522, %526 : vector<8x8xf32>
    %528 = arith.truncf %527 : vector<8x8xf32> to vector<8x8xbf16>
    %cst_158 = arith.constant dense<0.000000e+00> : vector<8x128xf32>
    %529 = tpu.matmul %528, %516, %cst_158 {dimension_numbers = #tpu.dot_dimension_numbers<[1], [0], [0], [1], [0, 0, 1, 1], [], []>} : vector<8x8xbf16>, vector<8x128xbf16>, vector<8x128xf32> -> vector<8x128xf32>
    %530 = vector.extract_strided_slice %413 {offsets = [0, 896], sizes = [8, 128], strides = [1, 1]} : vector<16x1024xbf16> to vector<8x128xbf16>
    %531 = vector.extract_strided_slice %415 {offsets = [0, 896], sizes = [8, 128], strides = [1, 1]} : vector<16x1024xbf16> to vector<8x128xbf16>
    %532 = vector.extract_strided_slice %417 {offsets = [0, 896], sizes = [8, 128], strides = [1, 1]} : vector<16x1024xbf16> to vector<8x128xbf16>
    %cst_159 = arith.constant dense<0.000000e+00> : vector<8x8xf32>
    %533 = tpu.matmul %530, %531, %cst_159 {dimension_numbers = #tpu.dot_dimension_numbers<[1], [1], [0], [0], [0, 0, 1, 0], [], []>} : vector<8x128xbf16>, vector<8x128xbf16>, vector<8x8xf32> -> vector<8x8xf32>
    %cst_160 = arith.constant dense<0xFF800000> : vector<8xf32>
    %534 = vector.multi_reduction <maximumf>, %533, %cst_160 [1] : vector<8x8xf32> to vector<8xf32>
    %535 = vector.shape_cast %534 : vector<8xf32> to vector<8x1xf32>
    %536 = vector.broadcast %535 : vector<8x1xf32> to vector<8x8xf32>
    %537 = arith.subf %533, %536 : vector<8x8xf32>
    %538 = math.exp %537 : vector<8x8xf32>
    %cst_161 = arith.constant dense<0.000000e+00> : vector<8xf32>
    %539 = vector.multi_reduction <add>, %538, %cst_161 [1] : vector<8x8xf32> to vector<8xf32>
    %540 = vector.shape_cast %539 : vector<8xf32> to vector<8x1xf32>
    %541 = tpu.reciprocal %540 {approx = true} : vector<8x1xf32> -> vector<8x1xf32>
    %542 = vector.broadcast %541 : vector<8x1xf32> to vector<8x8xf32>
    %543 = arith.mulf %538, %542 : vector<8x8xf32>
    %544 = arith.truncf %543 : vector<8x8xf32> to vector<8x8xbf16>
    %cst_162 = arith.constant dense<0.000000e+00> : vector<8x128xf32>
    %545 = tpu.matmul %544, %532, %cst_162 {dimension_numbers = #tpu.dot_dimension_numbers<[1], [0], [0], [1], [0, 0, 1, 1], [], []>} : vector<8x8xbf16>, vector<8x128xbf16>, vector<8x128xf32> -> vector<8x128xf32>
    %546 = tpu.concatenate %433, %449, %465, %481, %497, %513, %529, %545 in 1 : vector<8x128xf32>, vector<8x128xf32>, vector<8x128xf32>, vector<8x128xf32>, vector<8x128xf32>, vector<8x128xf32>, vector<8x128xf32>, vector<8x128xf32> -> vector<8x1024xf32>
    %547 = vector.extract_strided_slice %413 {offsets = [8, 0], sizes = [8, 128], strides = [1, 1]} : vector<16x1024xbf16> to vector<8x128xbf16>
    %548 = vector.extract_strided_slice %415 {offsets = [8, 0], sizes = [8, 128], strides = [1, 1]} : vector<16x1024xbf16> to vector<8x128xbf16>
    %549 = vector.extract_strided_slice %417 {offsets = [8, 0], sizes = [8, 128], strides = [1, 1]} : vector<16x1024xbf16> to vector<8x128xbf16>
    %cst_163 = arith.constant dense<0.000000e+00> : vector<8x8xf32>
    %550 = tpu.matmul %547, %548, %cst_163 {dimension_numbers = #tpu.dot_dimension_numbers<[1], [1], [0], [0], [0, 0, 1, 0], [], []>} : vector<8x128xbf16>, vector<8x128xbf16>, vector<8x8xf32> -> vector<8x8xf32>
    %cst_164 = arith.constant dense<0xFF800000> : vector<8xf32>
    %551 = vector.multi_reduction <maximumf>, %550, %cst_164 [1] : vector<8x8xf32> to vector<8xf32>
    %552 = vector.shape_cast %551 : vector<8xf32> to vector<8x1xf32>
    %553 = vector.broadcast %552 : vector<8x1xf32> to vector<8x8xf32>
    %554 = arith.subf %550, %553 : vector<8x8xf32>
    %555 = math.exp %554 : vector<8x8xf32>
    %cst_165 = arith.constant dense<0.000000e+00> : vector<8xf32>
    %556 = vector.multi_reduction <add>, %555, %cst_165 [1] : vector<8x8xf32> to vector<8xf32>
    %557 = vector.shape_cast %556 : vector<8xf32> to vector<8x1xf32>
    %558 = tpu.reciprocal %557 {approx = true} : vector<8x1xf32> -> vector<8x1xf32>
    %559 = vector.broadcast %558 : vector<8x1xf32> to vector<8x8xf32>
    %560 = arith.mulf %555, %559 : vector<8x8xf32>
    %561 = arith.truncf %560 : vector<8x8xf32> to vector<8x8xbf16>
    %cst_166 = arith.constant dense<0.000000e+00> : vector<8x128xf32>
    %562 = tpu.matmul %561, %549, %cst_166 {dimension_numbers = #tpu.dot_dimension_numbers<[1], [0], [0], [1], [0, 0, 1, 1], [], []>} : vector<8x8xbf16>, vector<8x128xbf16>, vector<8x128xf32> -> vector<8x128xf32>
    %563 = vector.extract_strided_slice %413 {offsets = [8, 128], sizes = [8, 128], strides = [1, 1]} : vector<16x1024xbf16> to vector<8x128xbf16>
    %564 = vector.extract_strided_slice %415 {offsets = [8, 128], sizes = [8, 128], strides = [1, 1]} : vector<16x1024xbf16> to vector<8x128xbf16>
    %565 = vector.extract_strided_slice %417 {offsets = [8, 128], sizes = [8, 128], strides = [1, 1]} : vector<16x1024xbf16> to vector<8x128xbf16>
    %cst_167 = arith.constant dense<0.000000e+00> : vector<8x8xf32>
    %566 = tpu.matmul %563, %564, %cst_167 {dimension_numbers = #tpu.dot_dimension_numbers<[1], [1], [0], [0], [0, 0, 1, 0], [], []>} : vector<8x128xbf16>, vector<8x128xbf16>, vector<8x8xf32> -> vector<8x8xf32>
    %cst_168 = arith.constant dense<0xFF800000> : vector<8xf32>
    %567 = vector.multi_reduction <maximumf>, %566, %cst_168 [1] : vector<8x8xf32> to vector<8xf32>
    %568 = vector.shape_cast %567 : vector<8xf32> to vector<8x1xf32>
    %569 = vector.broadcast %568 : vector<8x1xf32> to vector<8x8xf32>
    %570 = arith.subf %566, %569 : vector<8x8xf32>
    %571 = math.exp %570 : vector<8x8xf32>
    %cst_169 = arith.constant dense<0.000000e+00> : vector<8xf32>
    %572 = vector.multi_reduction <add>, %571, %cst_169 [1] : vector<8x8xf32> to vector<8xf32>
    %573 = vector.shape_cast %572 : vector<8xf32> to vector<8x1xf32>
    %574 = tpu.reciprocal %573 {approx = true} : vector<8x1xf32> -> vector<8x1xf32>
    %575 = vector.broadcast %574 : vector<8x1xf32> to vector<8x8xf32>
    %576 = arith.mulf %571, %575 : vector<8x8xf32>
    %577 = arith.truncf %576 : vector<8x8xf32> to vector<8x8xbf16>
    %cst_170 = arith.constant dense<0.000000e+00> : vector<8x128xf32>
    %578 = tpu.matmul %577, %565, %cst_170 {dimension_numbers = #tpu.dot_dimension_numbers<[1], [0], [0], [1], [0, 0, 1, 1], [], []>} : vector<8x8xbf16>, vector<8x128xbf16>, vector<8x128xf32> -> vector<8x128xf32>
    %579 = vector.extract_strided_slice %413 {offsets = [8, 256], sizes = [8, 128], strides = [1, 1]} : vector<16x1024xbf16> to vector<8x128xbf16>
    %580 = vector.extract_strided_slice %415 {offsets = [8, 256], sizes = [8, 128], strides = [1, 1]} : vector<16x1024xbf16> to vector<8x128xbf16>
    %581 = vector.extract_strided_slice %417 {offsets = [8, 256], sizes = [8, 128], strides = [1, 1]} : vector<16x1024xbf16> to vector<8x128xbf16>
    %cst_171 = arith.constant dense<0.000000e+00> : vector<8x8xf32>
    %582 = tpu.matmul %579, %580, %cst_171 {dimension_numbers = #tpu.dot_dimension_numbers<[1], [1], [0], [0], [0, 0, 1, 0], [], []>} : vector<8x128xbf16>, vector<8x128xbf16>, vector<8x8xf32> -> vector<8x8xf32>
    %cst_172 = arith.constant dense<0xFF800000> : vector<8xf32>
    %583 = vector.multi_reduction <maximumf>, %582, %cst_172 [1] : vector<8x8xf32> to vector<8xf32>
    %584 = vector.shape_cast %583 : vector<8xf32> to vector<8x1xf32>
    %585 = vector.broadcast %584 : vector<8x1xf32> to vector<8x8xf32>
    %586 = arith.subf %582, %585 : vector<8x8xf32>
    %587 = math.exp %586 : vector<8x8xf32>
    %cst_173 = arith.constant dense<0.000000e+00> : vector<8xf32>
    %588 = vector.multi_reduction <add>, %587, %cst_173 [1] : vector<8x8xf32> to vector<8xf32>
    %589 = vector.shape_cast %588 : vector<8xf32> to vector<8x1xf32>
    %590 = tpu.reciprocal %589 {approx = true} : vector<8x1xf32> -> vector<8x1xf32>
    %591 = vector.broadcast %590 : vector<8x1xf32> to vector<8x8xf32>
    %592 = arith.mulf %587, %591 : vector<8x8xf32>
    %593 = arith.truncf %592 : vector<8x8xf32> to vector<8x8xbf16>
    %cst_174 = arith.constant dense<0.000000e+00> : vector<8x128xf32>
    %594 = tpu.matmul %593, %581, %cst_174 {dimension_numbers = #tpu.dot_dimension_numbers<[1], [0], [0], [1], [0, 0, 1, 1], [], []>} : vector<8x8xbf16>, vector<8x128xbf16>, vector<8x128xf32> -> vector<8x128xf32>
    %595 = vector.extract_strided_slice %413 {offsets = [8, 384], sizes = [8, 128], strides = [1, 1]} : vector<16x1024xbf16> to vector<8x128xbf16>
    %596 = vector.extract_strided_slice %415 {offsets = [8, 384], sizes = [8, 128], strides = [1, 1]} : vector<16x1024xbf16> to vector<8x128xbf16>
    %597 = vector.extract_strided_slice %417 {offsets = [8, 384], sizes = [8, 128], strides = [1, 1]} : vector<16x1024xbf16> to vector<8x128xbf16>
    %cst_175 = arith.constant dense<0.000000e+00> : vector<8x8xf32>
    %598 = tpu.matmul %595, %596, %cst_175 {dimension_numbers = #tpu.dot_dimension_numbers<[1], [1], [0], [0], [0, 0, 1, 0], [], []>} : vector<8x128xbf16>, vector<8x128xbf16>, vector<8x8xf32> -> vector<8x8xf32>
    %cst_176 = arith.constant dense<0xFF800000> : vector<8xf32>
    %599 = vector.multi_reduction <maximumf>, %598, %cst_176 [1] : vector<8x8xf32> to vector<8xf32>
    %600 = vector.shape_cast %599 : vector<8xf32> to vector<8x1xf32>
    %601 = vector.broadcast %600 : vector<8x1xf32> to vector<8x8xf32>
    %602 = arith.subf %598, %601 : vector<8x8xf32>
    %603 = math.exp %602 : vector<8x8xf32>
    %cst_177 = arith.constant dense<0.000000e+00> : vector<8xf32>
    %604 = vector.multi_reduction <add>, %603, %cst_177 [1] : vector<8x8xf32> to vector<8xf32>
    %605 = vector.shape_cast %604 : vector<8xf32> to vector<8x1xf32>
    %606 = tpu.reciprocal %605 {approx = true} : vector<8x1xf32> -> vector<8x1xf32>
    %607 = vector.broadcast %606 : vector<8x1xf32> to vector<8x8xf32>
    %608 = arith.mulf %603, %607 : vector<8x8xf32>
    %609 = arith.truncf %608 : vector<8x8xf32> to vector<8x8xbf16>
    %cst_178 = arith.constant dense<0.000000e+00> : vector<8x128xf32>
    %610 = tpu.matmul %609, %597, %cst_178 {dimension_numbers = #tpu.dot_dimension_numbers<[1], [0], [0], [1], [0, 0, 1, 1], [], []>} : vector<8x8xbf16>, vector<8x128xbf16>, vector<8x128xf32> -> vector<8x128xf32>
    %611 = vector.extract_strided_slice %413 {offsets = [8, 512], sizes = [8, 128], strides = [1, 1]} : vector<16x1024xbf16> to vector<8x128xbf16>
    %612 = vector.extract_strided_slice %415 {offsets = [8, 512], sizes = [8, 128], strides = [1, 1]} : vector<16x1024xbf16> to vector<8x128xbf16>
    %613 = vector.extract_strided_slice %417 {offsets = [8, 512], sizes = [8, 128], strides = [1, 1]} : vector<16x1024xbf16> to vector<8x128xbf16>
    %cst_179 = arith.constant dense<0.000000e+00> : vector<8x8xf32>
    %614 = tpu.matmul %611, %612, %cst_179 {dimension_numbers = #tpu.dot_dimension_numbers<[1], [1], [0], [0], [0, 0, 1, 0], [], []>} : vector<8x128xbf16>, vector<8x128xbf16>, vector<8x8xf32> -> vector<8x8xf32>
    %cst_180 = arith.constant dense<0xFF800000> : vector<8xf32>
    %615 = vector.multi_reduction <maximumf>, %614, %cst_180 [1] : vector<8x8xf32> to vector<8xf32>
    %616 = vector.shape_cast %615 : vector<8xf32> to vector<8x1xf32>
    %617 = vector.broadcast %616 : vector<8x1xf32> to vector<8x8xf32>
    %618 = arith.subf %614, %617 : vector<8x8xf32>
    %619 = math.exp %618 : vector<8x8xf32>
    %cst_181 = arith.constant dense<0.000000e+00> : vector<8xf32>
    %620 = vector.multi_reduction <add>, %619, %cst_181 [1] : vector<8x8xf32> to vector<8xf32>
    %621 = vector.shape_cast %620 : vector<8xf32> to vector<8x1xf32>
    %622 = tpu.reciprocal %621 {approx = true} : vector<8x1xf32> -> vector<8x1xf32>
    %623 = vector.broadcast %622 : vector<8x1xf32> to vector<8x8xf32>
    %624 = arith.mulf %619, %623 : vector<8x8xf32>
    %625 = arith.truncf %624 : vector<8x8xf32> to vector<8x8xbf16>
    %cst_182 = arith.constant dense<0.000000e+00> : vector<8x128xf32>
    %626 = tpu.matmul %625, %613, %cst_182 {dimension_numbers = #tpu.dot_dimension_numbers<[1], [0], [0], [1], [0, 0, 1, 1], [], []>} : vector<8x8xbf16>, vector<8x128xbf16>, vector<8x128xf32> -> vector<8x128xf32>
    %627 = vector.extract_strided_slice %413 {offsets = [8, 640], sizes = [8, 128], strides = [1, 1]} : vector<16x1024xbf16> to vector<8x128xbf16>
    %628 = vector.extract_strided_slice %415 {offsets = [8, 640], sizes = [8, 128], strides = [1, 1]} : vector<16x1024xbf16> to vector<8x128xbf16>
    %629 = vector.extract_strided_slice %417 {offsets = [8, 640], sizes = [8, 128], strides = [1, 1]} : vector<16x1024xbf16> to vector<8x128xbf16>
    %cst_183 = arith.constant dense<0.000000e+00> : vector<8x8xf32>
    %630 = tpu.matmul %627, %628, %cst_183 {dimension_numbers = #tpu.dot_dimension_numbers<[1], [1], [0], [0], [0, 0, 1, 0], [], []>} : vector<8x128xbf16>, vector<8x128xbf16>, vector<8x8xf32> -> vector<8x8xf32>
    %cst_184 = arith.constant dense<0xFF800000> : vector<8xf32>
    %631 = vector.multi_reduction <maximumf>, %630, %cst_184 [1] : vector<8x8xf32> to vector<8xf32>
    %632 = vector.shape_cast %631 : vector<8xf32> to vector<8x1xf32>
    %633 = vector.broadcast %632 : vector<8x1xf32> to vector<8x8xf32>
    %634 = arith.subf %630, %633 : vector<8x8xf32>
    %635 = math.exp %634 : vector<8x8xf32>
    %cst_185 = arith.constant dense<0.000000e+00> : vector<8xf32>
    %636 = vector.multi_reduction <add>, %635, %cst_185 [1] : vector<8x8xf32> to vector<8xf32>
    %637 = vector.shape_cast %636 : vector<8xf32> to vector<8x1xf32>
    %638 = tpu.reciprocal %637 {approx = true} : vector<8x1xf32> -> vector<8x1xf32>
    %639 = vector.broadcast %638 : vector<8x1xf32> to vector<8x8xf32>
    %640 = arith.mulf %635, %639 : vector<8x8xf32>
    %641 = arith.truncf %640 : vector<8x8xf32> to vector<8x8xbf16>
    %cst_186 = arith.constant dense<0.000000e+00> : vector<8x128xf32>
    %642 = tpu.matmul %641, %629, %cst_186 {dimension_numbers = #tpu.dot_dimension_numbers<[1], [0], [0], [1], [0, 0, 1, 1], [], []>} : vector<8x8xbf16>, vector<8x128xbf16>, vector<8x128xf32> -> vector<8x128xf32>
    %643 = vector.extract_strided_slice %413 {offsets = [8, 768], sizes = [8, 128], strides = [1, 1]} : vector<16x1024xbf16> to vector<8x128xbf16>
    %644 = vector.extract_strided_slice %415 {offsets = [8, 768], sizes = [8, 128], strides = [1, 1]} : vector<16x1024xbf16> to vector<8x128xbf16>
    %645 = vector.extract_strided_slice %417 {offsets = [8, 768], sizes = [8, 128], strides = [1, 1]} : vector<16x1024xbf16> to vector<8x128xbf16>
    %cst_187 = arith.constant dense<0.000000e+00> : vector<8x8xf32>
    %646 = tpu.matmul %643, %644, %cst_187 {dimension_numbers = #tpu.dot_dimension_numbers<[1], [1], [0], [0], [0, 0, 1, 0], [], []>} : vector<8x128xbf16>, vector<8x128xbf16>, vector<8x8xf32> -> vector<8x8xf32>
    %cst_188 = arith.constant dense<0xFF800000> : vector<8xf32>
    %647 = vector.multi_reduction <maximumf>, %646, %cst_188 [1] : vector<8x8xf32> to vector<8xf32>
    %648 = vector.shape_cast %647 : vector<8xf32> to vector<8x1xf32>
    %649 = vector.broadcast %648 : vector<8x1xf32> to vector<8x8xf32>
    %650 = arith.subf %646, %649 : vector<8x8xf32>
    %651 = math.exp %650 : vector<8x8xf32>
    %cst_189 = arith.constant dense<0.000000e+00> : vector<8xf32>
    %652 = vector.multi_reduction <add>, %651, %cst_189 [1] : vector<8x8xf32> to vector<8xf32>
    %653 = vector.shape_cast %652 : vector<8xf32> to vector<8x1xf32>
    %654 = tpu.reciprocal %653 {approx = true} : vector<8x1xf32> -> vector<8x1xf32>
    %655 = vector.broadcast %654 : vector<8x1xf32> to vector<8x8xf32>
    %656 = arith.mulf %651, %655 : vector<8x8xf32>
    %657 = arith.truncf %656 : vector<8x8xf32> to vector<8x8xbf16>
    %cst_190 = arith.constant dense<0.000000e+00> : vector<8x128xf32>
    %658 = tpu.matmul %657, %645, %cst_190 {dimension_numbers = #tpu.dot_dimension_numbers<[1], [0], [0], [1], [0, 0, 1, 1], [], []>} : vector<8x8xbf16>, vector<8x128xbf16>, vector<8x128xf32> -> vector<8x128xf32>
    %659 = vector.extract_strided_slice %413 {offsets = [8, 896], sizes = [8, 128], strides = [1, 1]} : vector<16x1024xbf16> to vector<8x128xbf16>
    %660 = vector.extract_strided_slice %415 {offsets = [8, 896], sizes = [8, 128], strides = [1, 1]} : vector<16x1024xbf16> to vector<8x128xbf16>
    %661 = vector.extract_strided_slice %417 {offsets = [8, 896], sizes = [8, 128], strides = [1, 1]} : vector<16x1024xbf16> to vector<8x128xbf16>
    %cst_191 = arith.constant dense<0.000000e+00> : vector<8x8xf32>
    %662 = tpu.matmul %659, %660, %cst_191 {dimension_numbers = #tpu.dot_dimension_numbers<[1], [1], [0], [0], [0, 0, 1, 0], [], []>} : vector<8x128xbf16>, vector<8x128xbf16>, vector<8x8xf32> -> vector<8x8xf32>
    %cst_192 = arith.constant dense<0xFF800000> : vector<8xf32>
    %663 = vector.multi_reduction <maximumf>, %662, %cst_192 [1] : vector<8x8xf32> to vector<8xf32>
    %664 = vector.shape_cast %663 : vector<8xf32> to vector<8x1xf32>
    %665 = vector.broadcast %664 : vector<8x1xf32> to vector<8x8xf32>
    %666 = arith.subf %662, %665 : vector<8x8xf32>
    %667 = math.exp %666 : vector<8x8xf32>
    %cst_193 = arith.constant dense<0.000000e+00> : vector<8xf32>
    %668 = vector.multi_reduction <add>, %667, %cst_193 [1] : vector<8x8xf32> to vector<8xf32>
    %669 = vector.shape_cast %668 : vector<8xf32> to vector<8x1xf32>
    %670 = tpu.reciprocal %669 {approx = true} : vector<8x1xf32> -> vector<8x1xf32>
    %671 = vector.broadcast %670 : vector<8x1xf32> to vector<8x8xf32>
    %672 = arith.mulf %667, %671 : vector<8x8xf32>
    %673 = arith.truncf %672 : vector<8x8xf32> to vector<8x8xbf16>
    %cst_194 = arith.constant dense<0.000000e+00> : vector<8x128xf32>
    %674 = tpu.matmul %673, %661, %cst_194 {dimension_numbers = #tpu.dot_dimension_numbers<[1], [0], [0], [1], [0, 0, 1, 1], [], []>} : vector<8x8xbf16>, vector<8x128xbf16>, vector<8x128xf32> -> vector<8x128xf32>
    %675 = tpu.concatenate %562, %578, %594, %610, %626, %642, %658, %674 in 1 : vector<8x128xf32>, vector<8x128xf32>, vector<8x128xf32>, vector<8x128xf32>, vector<8x128xf32>, vector<8x128xf32>, vector<8x128xf32>, vector<8x128xf32> -> vector<8x1024xf32>
    %676 = tpu.concatenate %546, %675 in 0 : vector<8x1024xf32>, vector<8x1024xf32> -> vector<16x1024xf32>
    %677 = arith.truncf %676 : vector<16x1024xf32> to vector<16x1024xbf16>
    %cst_195 = arith.constant dense<0.000000e+00> : vector<16x128xf32>
    %678 = tpu.matmul %677, %385, %cst_195 {dimension_numbers = #tpu.dot_dimension_numbers<[1], [0], [0], [1], [0, 0, 1, 1], [], []>} : vector<16x1024xbf16>, vector<1024x128xbf16>, vector<16x128xf32> -> vector<16x128xf32>
    %679 = arith.addf %678, %380 : vector<16x128xf32>
    %c4 = arith.constant 4 : index
    %c0_196 = arith.constant 0 : index
    %680 = vector.load %arg2[%c4, %c0_196] : memref<9x128xf32, #tpu.memory_space<vmem>>, vector<1x128xf32>
    %c2_197 = arith.constant 2 : index
    %c0_198 = arith.constant 0 : index
    %c0_199 = arith.constant 0 : index
    %681 = vector.load %arg4[%c2_197, %c0_198, %c0_199] : memref<3x128x3072xbf16, #tpu.memory_space<vmem>>, vector<1x128x3072xbf16>
    %682 = vector.shape_cast %681 : vector<1x128x3072xbf16> to vector<128x3072xbf16>
    %c2_200 = arith.constant 2 : index
    %c0_201 = arith.constant 0 : index
    %c0_202 = arith.constant 0 : index
    %683 = vector.load %arg5[%c2_200, %c0_201, %c0_202] : memref<3x1024x128xbf16, #tpu.memory_space<vmem>>, vector<1x1024x128xbf16>
    %684 = vector.shape_cast %683 : vector<1x1024x128xbf16> to vector<1024x128xbf16>
    %cst_203 = arith.constant dense<0.000000e+00> : vector<16xf32>
    %685 = vector.multi_reduction <add>, %679, %cst_203 [1] : vector<16x128xf32> to vector<16xf32>
    %686 = vector.shape_cast %685 : vector<16xf32> to vector<16x1xf32>
    %cst_204 = arith.constant 6.250000e-02 : f32
    %687 = vector.broadcast %cst_204 : f32 to vector<16x1xf32>
    %688 = arith.mulf %686, %687 : vector<16x1xf32>
    %689 = arith.mulf %679, %679 : vector<16x128xf32>
    %cst_205 = arith.constant dense<0.000000e+00> : vector<16xf32>
    %690 = vector.multi_reduction <add>, %689, %cst_205 [1] : vector<16x128xf32> to vector<16xf32>
    %691 = vector.shape_cast %690 : vector<16xf32> to vector<16x1xf32>
    %cst_206 = arith.constant 6.250000e-02 : f32
    %692 = vector.broadcast %cst_206 : f32 to vector<16x1xf32>
    %693 = arith.mulf %691, %692 : vector<16x1xf32>
    %694 = arith.mulf %688, %688 : vector<16x1xf32>
    %695 = arith.subf %693, %694 : vector<16x1xf32>
    %cst_207 = arith.constant 0.000000e+00 : f32
    %696 = vector.broadcast %cst_207 : f32 to vector<16x1xf32>
    %697 = arith.maximumf %695, %696 : vector<16x1xf32>
    %698 = vector.broadcast %688 : vector<16x1xf32> to vector<16x128xf32>
    %699 = arith.subf %679, %698 : vector<16x128xf32>
    %cst_208 = arith.constant 9.99999974E-6 : f32
    %700 = vector.broadcast %cst_208 : f32 to vector<16x1xf32>
    %701 = arith.addf %697, %700 : vector<16x1xf32>
    %702 = math.rsqrt %701 : vector<16x1xf32>
    %703 = vector.broadcast %702 : vector<16x1xf32> to vector<16x128xf32>
    %704 = arith.mulf %699, %703 : vector<16x128xf32>
    %cst_209 = arith.constant 1.000000e+00 : f32
    %705 = vector.broadcast %cst_209 : f32 to vector<1x128xf32>
    %706 = arith.addf %680, %705 : vector<1x128xf32>
    %707 = vector.broadcast %706 : vector<1x128xf32> to vector<16x128xf32>
    %708 = arith.mulf %704, %707 : vector<16x128xf32>
    %709 = arith.truncf %708 : vector<16x128xf32> to vector<16x128xbf16>
    %cst_210 = arith.constant dense<0.000000e+00> : vector<16x3072xf32>
    %710 = tpu.matmul %709, %682, %cst_210 {dimension_numbers = #tpu.dot_dimension_numbers<[1], [0], [0], [1], [0, 0, 1, 1], [], []>} : vector<16x128xbf16>, vector<128x3072xbf16>, vector<16x3072xf32> -> vector<16x3072xf32>
    %711 = vector.extract_strided_slice %710 {offsets = [0, 0], sizes = [16, 1024], strides = [1, 1]} : vector<16x3072xf32> to vector<16x1024xf32>
    %712 = arith.truncf %711 : vector<16x1024xf32> to vector<16x1024xbf16>
    %713 = vector.extract_strided_slice %710 {offsets = [0, 1024], sizes = [16, 1024], strides = [1, 1]} : vector<16x3072xf32> to vector<16x1024xf32>
    %714 = arith.truncf %713 : vector<16x1024xf32> to vector<16x1024xbf16>
    %715 = vector.extract_strided_slice %710 {offsets = [0, 2048], sizes = [16, 1024], strides = [1, 1]} : vector<16x3072xf32> to vector<16x1024xf32>
    %716 = arith.truncf %715 : vector<16x1024xf32> to vector<16x1024xbf16>
    %717 = vector.extract_strided_slice %712 {offsets = [0, 0], sizes = [8, 128], strides = [1, 1]} : vector<16x1024xbf16> to vector<8x128xbf16>
    %718 = vector.extract_strided_slice %714 {offsets = [0, 0], sizes = [8, 128], strides = [1, 1]} : vector<16x1024xbf16> to vector<8x128xbf16>
    %719 = vector.extract_strided_slice %716 {offsets = [0, 0], sizes = [8, 128], strides = [1, 1]} : vector<16x1024xbf16> to vector<8x128xbf16>
    %cst_211 = arith.constant dense<0.000000e+00> : vector<8x8xf32>
    %720 = tpu.matmul %717, %718, %cst_211 {dimension_numbers = #tpu.dot_dimension_numbers<[1], [1], [0], [0], [0, 0, 1, 0], [], []>} : vector<8x128xbf16>, vector<8x128xbf16>, vector<8x8xf32> -> vector<8x8xf32>
    %cst_212 = arith.constant dense<0xFF800000> : vector<8xf32>
    %721 = vector.multi_reduction <maximumf>, %720, %cst_212 [1] : vector<8x8xf32> to vector<8xf32>
    %722 = vector.shape_cast %721 : vector<8xf32> to vector<8x1xf32>
    %723 = vector.broadcast %722 : vector<8x1xf32> to vector<8x8xf32>
    %724 = arith.subf %720, %723 : vector<8x8xf32>
    %725 = math.exp %724 : vector<8x8xf32>
    %cst_213 = arith.constant dense<0.000000e+00> : vector<8xf32>
    %726 = vector.multi_reduction <add>, %725, %cst_213 [1] : vector<8x8xf32> to vector<8xf32>
    %727 = vector.shape_cast %726 : vector<8xf32> to vector<8x1xf32>
    %728 = tpu.reciprocal %727 {approx = true} : vector<8x1xf32> -> vector<8x1xf32>
    %729 = vector.broadcast %728 : vector<8x1xf32> to vector<8x8xf32>
    %730 = arith.mulf %725, %729 : vector<8x8xf32>
    %731 = arith.truncf %730 : vector<8x8xf32> to vector<8x8xbf16>
    %cst_214 = arith.constant dense<0.000000e+00> : vector<8x128xf32>
    %732 = tpu.matmul %731, %719, %cst_214 {dimension_numbers = #tpu.dot_dimension_numbers<[1], [0], [0], [1], [0, 0, 1, 1], [], []>} : vector<8x8xbf16>, vector<8x128xbf16>, vector<8x128xf32> -> vector<8x128xf32>
    %733 = vector.extract_strided_slice %712 {offsets = [0, 128], sizes = [8, 128], strides = [1, 1]} : vector<16x1024xbf16> to vector<8x128xbf16>
    %734 = vector.extract_strided_slice %714 {offsets = [0, 128], sizes = [8, 128], strides = [1, 1]} : vector<16x1024xbf16> to vector<8x128xbf16>
    %735 = vector.extract_strided_slice %716 {offsets = [0, 128], sizes = [8, 128], strides = [1, 1]} : vector<16x1024xbf16> to vector<8x128xbf16>
    %cst_215 = arith.constant dense<0.000000e+00> : vector<8x8xf32>
    %736 = tpu.matmul %733, %734, %cst_215 {dimension_numbers = #tpu.dot_dimension_numbers<[1], [1], [0], [0], [0, 0, 1, 0], [], []>} : vector<8x128xbf16>, vector<8x128xbf16>, vector<8x8xf32> -> vector<8x8xf32>
    %cst_216 = arith.constant dense<0xFF800000> : vector<8xf32>
    %737 = vector.multi_reduction <maximumf>, %736, %cst_216 [1] : vector<8x8xf32> to vector<8xf32>
    %738 = vector.shape_cast %737 : vector<8xf32> to vector<8x1xf32>
    %739 = vector.broadcast %738 : vector<8x1xf32> to vector<8x8xf32>
    %740 = arith.subf %736, %739 : vector<8x8xf32>
    %741 = math.exp %740 : vector<8x8xf32>
    %cst_217 = arith.constant dense<0.000000e+00> : vector<8xf32>
    %742 = vector.multi_reduction <add>, %741, %cst_217 [1] : vector<8x8xf32> to vector<8xf32>
    %743 = vector.shape_cast %742 : vector<8xf32> to vector<8x1xf32>
    %744 = tpu.reciprocal %743 {approx = true} : vector<8x1xf32> -> vector<8x1xf32>
    %745 = vector.broadcast %744 : vector<8x1xf32> to vector<8x8xf32>
    %746 = arith.mulf %741, %745 : vector<8x8xf32>
    %747 = arith.truncf %746 : vector<8x8xf32> to vector<8x8xbf16>
    %cst_218 = arith.constant dense<0.000000e+00> : vector<8x128xf32>
    %748 = tpu.matmul %747, %735, %cst_218 {dimension_numbers = #tpu.dot_dimension_numbers<[1], [0], [0], [1], [0, 0, 1, 1], [], []>} : vector<8x8xbf16>, vector<8x128xbf16>, vector<8x128xf32> -> vector<8x128xf32>
    %749 = vector.extract_strided_slice %712 {offsets = [0, 256], sizes = [8, 128], strides = [1, 1]} : vector<16x1024xbf16> to vector<8x128xbf16>
    %750 = vector.extract_strided_slice %714 {offsets = [0, 256], sizes = [8, 128], strides = [1, 1]} : vector<16x1024xbf16> to vector<8x128xbf16>
    %751 = vector.extract_strided_slice %716 {offsets = [0, 256], sizes = [8, 128], strides = [1, 1]} : vector<16x1024xbf16> to vector<8x128xbf16>
    %cst_219 = arith.constant dense<0.000000e+00> : vector<8x8xf32>
    %752 = tpu.matmul %749, %750, %cst_219 {dimension_numbers = #tpu.dot_dimension_numbers<[1], [1], [0], [0], [0, 0, 1, 0], [], []>} : vector<8x128xbf16>, vector<8x128xbf16>, vector<8x8xf32> -> vector<8x8xf32>
    %cst_220 = arith.constant dense<0xFF800000> : vector<8xf32>
    %753 = vector.multi_reduction <maximumf>, %752, %cst_220 [1] : vector<8x8xf32> to vector<8xf32>
    %754 = vector.shape_cast %753 : vector<8xf32> to vector<8x1xf32>
    %755 = vector.broadcast %754 : vector<8x1xf32> to vector<8x8xf32>
    %756 = arith.subf %752, %755 : vector<8x8xf32>
    %757 = math.exp %756 : vector<8x8xf32>
    %cst_221 = arith.constant dense<0.000000e+00> : vector<8xf32>
    %758 = vector.multi_reduction <add>, %757, %cst_221 [1] : vector<8x8xf32> to vector<8xf32>
    %759 = vector.shape_cast %758 : vector<8xf32> to vector<8x1xf32>
    %760 = tpu.reciprocal %759 {approx = true} : vector<8x1xf32> -> vector<8x1xf32>
    %761 = vector.broadcast %760 : vector<8x1xf32> to vector<8x8xf32>
    %762 = arith.mulf %757, %761 : vector<8x8xf32>
    %763 = arith.truncf %762 : vector<8x8xf32> to vector<8x8xbf16>
    %cst_222 = arith.constant dense<0.000000e+00> : vector<8x128xf32>
    %764 = tpu.matmul %763, %751, %cst_222 {dimension_numbers = #tpu.dot_dimension_numbers<[1], [0], [0], [1], [0, 0, 1, 1], [], []>} : vector<8x8xbf16>, vector<8x128xbf16>, vector<8x128xf32> -> vector<8x128xf32>
    %765 = vector.extract_strided_slice %712 {offsets = [0, 384], sizes = [8, 128], strides = [1, 1]} : vector<16x1024xbf16> to vector<8x128xbf16>
    %766 = vector.extract_strided_slice %714 {offsets = [0, 384], sizes = [8, 128], strides = [1, 1]} : vector<16x1024xbf16> to vector<8x128xbf16>
    %767 = vector.extract_strided_slice %716 {offsets = [0, 384], sizes = [8, 128], strides = [1, 1]} : vector<16x1024xbf16> to vector<8x128xbf16>
    %cst_223 = arith.constant dense<0.000000e+00> : vector<8x8xf32>
    %768 = tpu.matmul %765, %766, %cst_223 {dimension_numbers = #tpu.dot_dimension_numbers<[1], [1], [0], [0], [0, 0, 1, 0], [], []>} : vector<8x128xbf16>, vector<8x128xbf16>, vector<8x8xf32> -> vector<8x8xf32>
    %cst_224 = arith.constant dense<0xFF800000> : vector<8xf32>
    %769 = vector.multi_reduction <maximumf>, %768, %cst_224 [1] : vector<8x8xf32> to vector<8xf32>
    %770 = vector.shape_cast %769 : vector<8xf32> to vector<8x1xf32>
    %771 = vector.broadcast %770 : vector<8x1xf32> to vector<8x8xf32>
    %772 = arith.subf %768, %771 : vector<8x8xf32>
    %773 = math.exp %772 : vector<8x8xf32>
    %cst_225 = arith.constant dense<0.000000e+00> : vector<8xf32>
    %774 = vector.multi_reduction <add>, %773, %cst_225 [1] : vector<8x8xf32> to vector<8xf32>
    %775 = vector.shape_cast %774 : vector<8xf32> to vector<8x1xf32>
    %776 = tpu.reciprocal %775 {approx = true} : vector<8x1xf32> -> vector<8x1xf32>
    %777 = vector.broadcast %776 : vector<8x1xf32> to vector<8x8xf32>
    %778 = arith.mulf %773, %777 : vector<8x8xf32>
    %779 = arith.truncf %778 : vector<8x8xf32> to vector<8x8xbf16>
    %cst_226 = arith.constant dense<0.000000e+00> : vector<8x128xf32>
    %780 = tpu.matmul %779, %767, %cst_226 {dimension_numbers = #tpu.dot_dimension_numbers<[1], [0], [0], [1], [0, 0, 1, 1], [], []>} : vector<8x8xbf16>, vector<8x128xbf16>, vector<8x128xf32> -> vector<8x128xf32>
    %781 = vector.extract_strided_slice %712 {offsets = [0, 512], sizes = [8, 128], strides = [1, 1]} : vector<16x1024xbf16> to vector<8x128xbf16>
    %782 = vector.extract_strided_slice %714 {offsets = [0, 512], sizes = [8, 128], strides = [1, 1]} : vector<16x1024xbf16> to vector<8x128xbf16>
    %783 = vector.extract_strided_slice %716 {offsets = [0, 512], sizes = [8, 128], strides = [1, 1]} : vector<16x1024xbf16> to vector<8x128xbf16>
    %cst_227 = arith.constant dense<0.000000e+00> : vector<8x8xf32>
    %784 = tpu.matmul %781, %782, %cst_227 {dimension_numbers = #tpu.dot_dimension_numbers<[1], [1], [0], [0], [0, 0, 1, 0], [], []>} : vector<8x128xbf16>, vector<8x128xbf16>, vector<8x8xf32> -> vector<8x8xf32>
    %cst_228 = arith.constant dense<0xFF800000> : vector<8xf32>
    %785 = vector.multi_reduction <maximumf>, %784, %cst_228 [1] : vector<8x8xf32> to vector<8xf32>
    %786 = vector.shape_cast %785 : vector<8xf32> to vector<8x1xf32>
    %787 = vector.broadcast %786 : vector<8x1xf32> to vector<8x8xf32>
    %788 = arith.subf %784, %787 : vector<8x8xf32>
    %789 = math.exp %788 : vector<8x8xf32>
    %cst_229 = arith.constant dense<0.000000e+00> : vector<8xf32>
    %790 = vector.multi_reduction <add>, %789, %cst_229 [1] : vector<8x8xf32> to vector<8xf32>
    %791 = vector.shape_cast %790 : vector<8xf32> to vector<8x1xf32>
    %792 = tpu.reciprocal %791 {approx = true} : vector<8x1xf32> -> vector<8x1xf32>
    %793 = vector.broadcast %792 : vector<8x1xf32> to vector<8x8xf32>
    %794 = arith.mulf %789, %793 : vector<8x8xf32>
    %795 = arith.truncf %794 : vector<8x8xf32> to vector<8x8xbf16>
    %cst_230 = arith.constant dense<0.000000e+00> : vector<8x128xf32>
    %796 = tpu.matmul %795, %783, %cst_230 {dimension_numbers = #tpu.dot_dimension_numbers<[1], [0], [0], [1], [0, 0, 1, 1], [], []>} : vector<8x8xbf16>, vector<8x128xbf16>, vector<8x128xf32> -> vector<8x128xf32>
    %797 = vector.extract_strided_slice %712 {offsets = [0, 640], sizes = [8, 128], strides = [1, 1]} : vector<16x1024xbf16> to vector<8x128xbf16>
    %798 = vector.extract_strided_slice %714 {offsets = [0, 640], sizes = [8, 128], strides = [1, 1]} : vector<16x1024xbf16> to vector<8x128xbf16>
    %799 = vector.extract_strided_slice %716 {offsets = [0, 640], sizes = [8, 128], strides = [1, 1]} : vector<16x1024xbf16> to vector<8x128xbf16>
    %cst_231 = arith.constant dense<0.000000e+00> : vector<8x8xf32>
    %800 = tpu.matmul %797, %798, %cst_231 {dimension_numbers = #tpu.dot_dimension_numbers<[1], [1], [0], [0], [0, 0, 1, 0], [], []>} : vector<8x128xbf16>, vector<8x128xbf16>, vector<8x8xf32> -> vector<8x8xf32>
    %cst_232 = arith.constant dense<0xFF800000> : vector<8xf32>
    %801 = vector.multi_reduction <maximumf>, %800, %cst_232 [1] : vector<8x8xf32> to vector<8xf32>
    %802 = vector.shape_cast %801 : vector<8xf32> to vector<8x1xf32>
    %803 = vector.broadcast %802 : vector<8x1xf32> to vector<8x8xf32>
    %804 = arith.subf %800, %803 : vector<8x8xf32>
    %805 = math.exp %804 : vector<8x8xf32>
    %cst_233 = arith.constant dense<0.000000e+00> : vector<8xf32>
    %806 = vector.multi_reduction <add>, %805, %cst_233 [1] : vector<8x8xf32> to vector<8xf32>
    %807 = vector.shape_cast %806 : vector<8xf32> to vector<8x1xf32>
    %808 = tpu.reciprocal %807 {approx = true} : vector<8x1xf32> -> vector<8x1xf32>
    %809 = vector.broadcast %808 : vector<8x1xf32> to vector<8x8xf32>
    %810 = arith.mulf %805, %809 : vector<8x8xf32>
    %811 = arith.truncf %810 : vector<8x8xf32> to vector<8x8xbf16>
    %cst_234 = arith.constant dense<0.000000e+00> : vector<8x128xf32>
    %812 = tpu.matmul %811, %799, %cst_234 {dimension_numbers = #tpu.dot_dimension_numbers<[1], [0], [0], [1], [0, 0, 1, 1], [], []>} : vector<8x8xbf16>, vector<8x128xbf16>, vector<8x128xf32> -> vector<8x128xf32>
    %813 = vector.extract_strided_slice %712 {offsets = [0, 768], sizes = [8, 128], strides = [1, 1]} : vector<16x1024xbf16> to vector<8x128xbf16>
    %814 = vector.extract_strided_slice %714 {offsets = [0, 768], sizes = [8, 128], strides = [1, 1]} : vector<16x1024xbf16> to vector<8x128xbf16>
    %815 = vector.extract_strided_slice %716 {offsets = [0, 768], sizes = [8, 128], strides = [1, 1]} : vector<16x1024xbf16> to vector<8x128xbf16>
    %cst_235 = arith.constant dense<0.000000e+00> : vector<8x8xf32>
    %816 = tpu.matmul %813, %814, %cst_235 {dimension_numbers = #tpu.dot_dimension_numbers<[1], [1], [0], [0], [0, 0, 1, 0], [], []>} : vector<8x128xbf16>, vector<8x128xbf16>, vector<8x8xf32> -> vector<8x8xf32>
    %cst_236 = arith.constant dense<0xFF800000> : vector<8xf32>
    %817 = vector.multi_reduction <maximumf>, %816, %cst_236 [1] : vector<8x8xf32> to vector<8xf32>
    %818 = vector.shape_cast %817 : vector<8xf32> to vector<8x1xf32>
    %819 = vector.broadcast %818 : vector<8x1xf32> to vector<8x8xf32>
    %820 = arith.subf %816, %819 : vector<8x8xf32>
    %821 = math.exp %820 : vector<8x8xf32>
    %cst_237 = arith.constant dense<0.000000e+00> : vector<8xf32>
    %822 = vector.multi_reduction <add>, %821, %cst_237 [1] : vector<8x8xf32> to vector<8xf32>
    %823 = vector.shape_cast %822 : vector<8xf32> to vector<8x1xf32>
    %824 = tpu.reciprocal %823 {approx = true} : vector<8x1xf32> -> vector<8x1xf32>
    %825 = vector.broadcast %824 : vector<8x1xf32> to vector<8x8xf32>
    %826 = arith.mulf %821, %825 : vector<8x8xf32>
    %827 = arith.truncf %826 : vector<8x8xf32> to vector<8x8xbf16>
    %cst_238 = arith.constant dense<0.000000e+00> : vector<8x128xf32>
    %828 = tpu.matmul %827, %815, %cst_238 {dimension_numbers = #tpu.dot_dimension_numbers<[1], [0], [0], [1], [0, 0, 1, 1], [], []>} : vector<8x8xbf16>, vector<8x128xbf16>, vector<8x128xf32> -> vector<8x128xf32>
    %829 = vector.extract_strided_slice %712 {offsets = [0, 896], sizes = [8, 128], strides = [1, 1]} : vector<16x1024xbf16> to vector<8x128xbf16>
    %830 = vector.extract_strided_slice %714 {offsets = [0, 896], sizes = [8, 128], strides = [1, 1]} : vector<16x1024xbf16> to vector<8x128xbf16>
    %831 = vector.extract_strided_slice %716 {offsets = [0, 896], sizes = [8, 128], strides = [1, 1]} : vector<16x1024xbf16> to vector<8x128xbf16>
    %cst_239 = arith.constant dense<0.000000e+00> : vector<8x8xf32>
    %832 = tpu.matmul %829, %830, %cst_239 {dimension_numbers = #tpu.dot_dimension_numbers<[1], [1], [0], [0], [0, 0, 1, 0], [], []>} : vector<8x128xbf16>, vector<8x128xbf16>, vector<8x8xf32> -> vector<8x8xf32>
    %cst_240 = arith.constant dense<0xFF800000> : vector<8xf32>
    %833 = vector.multi_reduction <maximumf>, %832, %cst_240 [1] : vector<8x8xf32> to vector<8xf32>
    %834 = vector.shape_cast %833 : vector<8xf32> to vector<8x1xf32>
    %835 = vector.broadcast %834 : vector<8x1xf32> to vector<8x8xf32>
    %836 = arith.subf %832, %835 : vector<8x8xf32>
    %837 = math.exp %836 : vector<8x8xf32>
    %cst_241 = arith.constant dense<0.000000e+00> : vector<8xf32>
    %838 = vector.multi_reduction <add>, %837, %cst_241 [1] : vector<8x8xf32> to vector<8xf32>
    %839 = vector.shape_cast %838 : vector<8xf32> to vector<8x1xf32>
    %840 = tpu.reciprocal %839 {approx = true} : vector<8x1xf32> -> vector<8x1xf32>
    %841 = vector.broadcast %840 : vector<8x1xf32> to vector<8x8xf32>
    %842 = arith.mulf %837, %841 : vector<8x8xf32>
    %843 = arith.truncf %842 : vector<8x8xf32> to vector<8x8xbf16>
    %cst_242 = arith.constant dense<0.000000e+00> : vector<8x128xf32>
    %844 = tpu.matmul %843, %831, %cst_242 {dimension_numbers = #tpu.dot_dimension_numbers<[1], [0], [0], [1], [0, 0, 1, 1], [], []>} : vector<8x8xbf16>, vector<8x128xbf16>, vector<8x128xf32> -> vector<8x128xf32>
    %845 = tpu.concatenate %732, %748, %764, %780, %796, %812, %828, %844 in 1 : vector<8x128xf32>, vector<8x128xf32>, vector<8x128xf32>, vector<8x128xf32>, vector<8x128xf32>, vector<8x128xf32>, vector<8x128xf32>, vector<8x128xf32> -> vector<8x1024xf32>
    %846 = vector.extract_strided_slice %712 {offsets = [8, 0], sizes = [8, 128], strides = [1, 1]} : vector<16x1024xbf16> to vector<8x128xbf16>
    %847 = vector.extract_strided_slice %714 {offsets = [8, 0], sizes = [8, 128], strides = [1, 1]} : vector<16x1024xbf16> to vector<8x128xbf16>
    %848 = vector.extract_strided_slice %716 {offsets = [8, 0], sizes = [8, 128], strides = [1, 1]} : vector<16x1024xbf16> to vector<8x128xbf16>
    %cst_243 = arith.constant dense<0.000000e+00> : vector<8x8xf32>
    %849 = tpu.matmul %846, %847, %cst_243 {dimension_numbers = #tpu.dot_dimension_numbers<[1], [1], [0], [0], [0, 0, 1, 0], [], []>} : vector<8x128xbf16>, vector<8x128xbf16>, vector<8x8xf32> -> vector<8x8xf32>
    %cst_244 = arith.constant dense<0xFF800000> : vector<8xf32>
    %850 = vector.multi_reduction <maximumf>, %849, %cst_244 [1] : vector<8x8xf32> to vector<8xf32>
    %851 = vector.shape_cast %850 : vector<8xf32> to vector<8x1xf32>
    %852 = vector.broadcast %851 : vector<8x1xf32> to vector<8x8xf32>
    %853 = arith.subf %849, %852 : vector<8x8xf32>
    %854 = math.exp %853 : vector<8x8xf32>
    %cst_245 = arith.constant dense<0.000000e+00> : vector<8xf32>
    %855 = vector.multi_reduction <add>, %854, %cst_245 [1] : vector<8x8xf32> to vector<8xf32>
    %856 = vector.shape_cast %855 : vector<8xf32> to vector<8x1xf32>
    %857 = tpu.reciprocal %856 {approx = true} : vector<8x1xf32> -> vector<8x1xf32>
    %858 = vector.broadcast %857 : vector<8x1xf32> to vector<8x8xf32>
    %859 = arith.mulf %854, %858 : vector<8x8xf32>
    %860 = arith.truncf %859 : vector<8x8xf32> to vector<8x8xbf16>
    %cst_246 = arith.constant dense<0.000000e+00> : vector<8x128xf32>
    %861 = tpu.matmul %860, %848, %cst_246 {dimension_numbers = #tpu.dot_dimension_numbers<[1], [0], [0], [1], [0, 0, 1, 1], [], []>} : vector<8x8xbf16>, vector<8x128xbf16>, vector<8x128xf32> -> vector<8x128xf32>
    %862 = vector.extract_strided_slice %712 {offsets = [8, 128], sizes = [8, 128], strides = [1, 1]} : vector<16x1024xbf16> to vector<8x128xbf16>
    %863 = vector.extract_strided_slice %714 {offsets = [8, 128], sizes = [8, 128], strides = [1, 1]} : vector<16x1024xbf16> to vector<8x128xbf16>
    %864 = vector.extract_strided_slice %716 {offsets = [8, 128], sizes = [8, 128], strides = [1, 1]} : vector<16x1024xbf16> to vector<8x128xbf16>
    %cst_247 = arith.constant dense<0.000000e+00> : vector<8x8xf32>
    %865 = tpu.matmul %862, %863, %cst_247 {dimension_numbers = #tpu.dot_dimension_numbers<[1], [1], [0], [0], [0, 0, 1, 0], [], []>} : vector<8x128xbf16>, vector<8x128xbf16>, vector<8x8xf32> -> vector<8x8xf32>
    %cst_248 = arith.constant dense<0xFF800000> : vector<8xf32>
    %866 = vector.multi_reduction <maximumf>, %865, %cst_248 [1] : vector<8x8xf32> to vector<8xf32>
    %867 = vector.shape_cast %866 : vector<8xf32> to vector<8x1xf32>
    %868 = vector.broadcast %867 : vector<8x1xf32> to vector<8x8xf32>
    %869 = arith.subf %865, %868 : vector<8x8xf32>
    %870 = math.exp %869 : vector<8x8xf32>
    %cst_249 = arith.constant dense<0.000000e+00> : vector<8xf32>
    %871 = vector.multi_reduction <add>, %870, %cst_249 [1] : vector<8x8xf32> to vector<8xf32>
    %872 = vector.shape_cast %871 : vector<8xf32> to vector<8x1xf32>
    %873 = tpu.reciprocal %872 {approx = true} : vector<8x1xf32> -> vector<8x1xf32>
    %874 = vector.broadcast %873 : vector<8x1xf32> to vector<8x8xf32>
    %875 = arith.mulf %870, %874 : vector<8x8xf32>
    %876 = arith.truncf %875 : vector<8x8xf32> to vector<8x8xbf16>
    %cst_250 = arith.constant dense<0.000000e+00> : vector<8x128xf32>
    %877 = tpu.matmul %876, %864, %cst_250 {dimension_numbers = #tpu.dot_dimension_numbers<[1], [0], [0], [1], [0, 0, 1, 1], [], []>} : vector<8x8xbf16>, vector<8x128xbf16>, vector<8x128xf32> -> vector<8x128xf32>
    %878 = vector.extract_strided_slice %712 {offsets = [8, 256], sizes = [8, 128], strides = [1, 1]} : vector<16x1024xbf16> to vector<8x128xbf16>
    %879 = vector.extract_strided_slice %714 {offsets = [8, 256], sizes = [8, 128], strides = [1, 1]} : vector<16x1024xbf16> to vector<8x128xbf16>
    %880 = vector.extract_strided_slice %716 {offsets = [8, 256], sizes = [8, 128], strides = [1, 1]} : vector<16x1024xbf16> to vector<8x128xbf16>
    %cst_251 = arith.constant dense<0.000000e+00> : vector<8x8xf32>
    %881 = tpu.matmul %878, %879, %cst_251 {dimension_numbers = #tpu.dot_dimension_numbers<[1], [1], [0], [0], [0, 0, 1, 0], [], []>} : vector<8x128xbf16>, vector<8x128xbf16>, vector<8x8xf32> -> vector<8x8xf32>
    %cst_252 = arith.constant dense<0xFF800000> : vector<8xf32>
    %882 = vector.multi_reduction <maximumf>, %881, %cst_252 [1] : vector<8x8xf32> to vector<8xf32>
    %883 = vector.shape_cast %882 : vector<8xf32> to vector<8x1xf32>
    %884 = vector.broadcast %883 : vector<8x1xf32> to vector<8x8xf32>
    %885 = arith.subf %881, %884 : vector<8x8xf32>
    %886 = math.exp %885 : vector<8x8xf32>
    %cst_253 = arith.constant dense<0.000000e+00> : vector<8xf32>
    %887 = vector.multi_reduction <add>, %886, %cst_253 [1] : vector<8x8xf32> to vector<8xf32>
    %888 = vector.shape_cast %887 : vector<8xf32> to vector<8x1xf32>
    %889 = tpu.reciprocal %888 {approx = true} : vector<8x1xf32> -> vector<8x1xf32>
    %890 = vector.broadcast %889 : vector<8x1xf32> to vector<8x8xf32>
    %891 = arith.mulf %886, %890 : vector<8x8xf32>
    %892 = arith.truncf %891 : vector<8x8xf32> to vector<8x8xbf16>
    %cst_254 = arith.constant dense<0.000000e+00> : vector<8x128xf32>
    %893 = tpu.matmul %892, %880, %cst_254 {dimension_numbers = #tpu.dot_dimension_numbers<[1], [0], [0], [1], [0, 0, 1, 1], [], []>} : vector<8x8xbf16>, vector<8x128xbf16>, vector<8x128xf32> -> vector<8x128xf32>
    %894 = vector.extract_strided_slice %712 {offsets = [8, 384], sizes = [8, 128], strides = [1, 1]} : vector<16x1024xbf16> to vector<8x128xbf16>
    %895 = vector.extract_strided_slice %714 {offsets = [8, 384], sizes = [8, 128], strides = [1, 1]} : vector<16x1024xbf16> to vector<8x128xbf16>
    %896 = vector.extract_strided_slice %716 {offsets = [8, 384], sizes = [8, 128], strides = [1, 1]} : vector<16x1024xbf16> to vector<8x128xbf16>
    %cst_255 = arith.constant dense<0.000000e+00> : vector<8x8xf32>
    %897 = tpu.matmul %894, %895, %cst_255 {dimension_numbers = #tpu.dot_dimension_numbers<[1], [1], [0], [0], [0, 0, 1, 0], [], []>} : vector<8x128xbf16>, vector<8x128xbf16>, vector<8x8xf32> -> vector<8x8xf32>
    %cst_256 = arith.constant dense<0xFF800000> : vector<8xf32>
    %898 = vector.multi_reduction <maximumf>, %897, %cst_256 [1] : vector<8x8xf32> to vector<8xf32>
    %899 = vector.shape_cast %898 : vector<8xf32> to vector<8x1xf32>
    %900 = vector.broadcast %899 : vector<8x1xf32> to vector<8x8xf32>
    %901 = arith.subf %897, %900 : vector<8x8xf32>
    %902 = math.exp %901 : vector<8x8xf32>
    %cst_257 = arith.constant dense<0.000000e+00> : vector<8xf32>
    %903 = vector.multi_reduction <add>, %902, %cst_257 [1] : vector<8x8xf32> to vector<8xf32>
    %904 = vector.shape_cast %903 : vector<8xf32> to vector<8x1xf32>
    %905 = tpu.reciprocal %904 {approx = true} : vector<8x1xf32> -> vector<8x1xf32>
    %906 = vector.broadcast %905 : vector<8x1xf32> to vector<8x8xf32>
    %907 = arith.mulf %902, %906 : vector<8x8xf32>
    %908 = arith.truncf %907 : vector<8x8xf32> to vector<8x8xbf16>
    %cst_258 = arith.constant dense<0.000000e+00> : vector<8x128xf32>
    %909 = tpu.matmul %908, %896, %cst_258 {dimension_numbers = #tpu.dot_dimension_numbers<[1], [0], [0], [1], [0, 0, 1, 1], [], []>} : vector<8x8xbf16>, vector<8x128xbf16>, vector<8x128xf32> -> vector<8x128xf32>
    %910 = vector.extract_strided_slice %712 {offsets = [8, 512], sizes = [8, 128], strides = [1, 1]} : vector<16x1024xbf16> to vector<8x128xbf16>
    %911 = vector.extract_strided_slice %714 {offsets = [8, 512], sizes = [8, 128], strides = [1, 1]} : vector<16x1024xbf16> to vector<8x128xbf16>
    %912 = vector.extract_strided_slice %716 {offsets = [8, 512], sizes = [8, 128], strides = [1, 1]} : vector<16x1024xbf16> to vector<8x128xbf16>
    %cst_259 = arith.constant dense<0.000000e+00> : vector<8x8xf32>
    %913 = tpu.matmul %910, %911, %cst_259 {dimension_numbers = #tpu.dot_dimension_numbers<[1], [1], [0], [0], [0, 0, 1, 0], [], []>} : vector<8x128xbf16>, vector<8x128xbf16>, vector<8x8xf32> -> vector<8x8xf32>
    %cst_260 = arith.constant dense<0xFF800000> : vector<8xf32>
    %914 = vector.multi_reduction <maximumf>, %913, %cst_260 [1] : vector<8x8xf32> to vector<8xf32>
    %915 = vector.shape_cast %914 : vector<8xf32> to vector<8x1xf32>
    %916 = vector.broadcast %915 : vector<8x1xf32> to vector<8x8xf32>
    %917 = arith.subf %913, %916 : vector<8x8xf32>
    %918 = math.exp %917 : vector<8x8xf32>
    %cst_261 = arith.constant dense<0.000000e+00> : vector<8xf32>
    %919 = vector.multi_reduction <add>, %918, %cst_261 [1] : vector<8x8xf32> to vector<8xf32>
    %920 = vector.shape_cast %919 : vector<8xf32> to vector<8x1xf32>
    %921 = tpu.reciprocal %920 {approx = true} : vector<8x1xf32> -> vector<8x1xf32>
    %922 = vector.broadcast %921 : vector<8x1xf32> to vector<8x8xf32>
    %923 = arith.mulf %918, %922 : vector<8x8xf32>
    %924 = arith.truncf %923 : vector<8x8xf32> to vector<8x8xbf16>
    %cst_262 = arith.constant dense<0.000000e+00> : vector<8x128xf32>
    %925 = tpu.matmul %924, %912, %cst_262 {dimension_numbers = #tpu.dot_dimension_numbers<[1], [0], [0], [1], [0, 0, 1, 1], [], []>} : vector<8x8xbf16>, vector<8x128xbf16>, vector<8x128xf32> -> vector<8x128xf32>
    %926 = vector.extract_strided_slice %712 {offsets = [8, 640], sizes = [8, 128], strides = [1, 1]} : vector<16x1024xbf16> to vector<8x128xbf16>
    %927 = vector.extract_strided_slice %714 {offsets = [8, 640], sizes = [8, 128], strides = [1, 1]} : vector<16x1024xbf16> to vector<8x128xbf16>
    %928 = vector.extract_strided_slice %716 {offsets = [8, 640], sizes = [8, 128], strides = [1, 1]} : vector<16x1024xbf16> to vector<8x128xbf16>
    %cst_263 = arith.constant dense<0.000000e+00> : vector<8x8xf32>
    %929 = tpu.matmul %926, %927, %cst_263 {dimension_numbers = #tpu.dot_dimension_numbers<[1], [1], [0], [0], [0, 0, 1, 0], [], []>} : vector<8x128xbf16>, vector<8x128xbf16>, vector<8x8xf32> -> vector<8x8xf32>
    %cst_264 = arith.constant dense<0xFF800000> : vector<8xf32>
    %930 = vector.multi_reduction <maximumf>, %929, %cst_264 [1] : vector<8x8xf32> to vector<8xf32>
    %931 = vector.shape_cast %930 : vector<8xf32> to vector<8x1xf32>
    %932 = vector.broadcast %931 : vector<8x1xf32> to vector<8x8xf32>
    %933 = arith.subf %929, %932 : vector<8x8xf32>
    %934 = math.exp %933 : vector<8x8xf32>
    %cst_265 = arith.constant dense<0.000000e+00> : vector<8xf32>
    %935 = vector.multi_reduction <add>, %934, %cst_265 [1] : vector<8x8xf32> to vector<8xf32>
    %936 = vector.shape_cast %935 : vector<8xf32> to vector<8x1xf32>
    %937 = tpu.reciprocal %936 {approx = true} : vector<8x1xf32> -> vector<8x1xf32>
    %938 = vector.broadcast %937 : vector<8x1xf32> to vector<8x8xf32>
    %939 = arith.mulf %934, %938 : vector<8x8xf32>
    %940 = arith.truncf %939 : vector<8x8xf32> to vector<8x8xbf16>
    %cst_266 = arith.constant dense<0.000000e+00> : vector<8x128xf32>
    %941 = tpu.matmul %940, %928, %cst_266 {dimension_numbers = #tpu.dot_dimension_numbers<[1], [0], [0], [1], [0, 0, 1, 1], [], []>} : vector<8x8xbf16>, vector<8x128xbf16>, vector<8x128xf32> -> vector<8x128xf32>
    %942 = vector.extract_strided_slice %712 {offsets = [8, 768], sizes = [8, 128], strides = [1, 1]} : vector<16x1024xbf16> to vector<8x128xbf16>
    %943 = vector.extract_strided_slice %714 {offsets = [8, 768], sizes = [8, 128], strides = [1, 1]} : vector<16x1024xbf16> to vector<8x128xbf16>
    %944 = vector.extract_strided_slice %716 {offsets = [8, 768], sizes = [8, 128], strides = [1, 1]} : vector<16x1024xbf16> to vector<8x128xbf16>
    %cst_267 = arith.constant dense<0.000000e+00> : vector<8x8xf32>
    %945 = tpu.matmul %942, %943, %cst_267 {dimension_numbers = #tpu.dot_dimension_numbers<[1], [1], [0], [0], [0, 0, 1, 0], [], []>} : vector<8x128xbf16>, vector<8x128xbf16>, vector<8x8xf32> -> vector<8x8xf32>
    %cst_268 = arith.constant dense<0xFF800000> : vector<8xf32>
    %946 = vector.multi_reduction <maximumf>, %945, %cst_268 [1] : vector<8x8xf32> to vector<8xf32>
    %947 = vector.shape_cast %946 : vector<8xf32> to vector<8x1xf32>
    %948 = vector.broadcast %947 : vector<8x1xf32> to vector<8x8xf32>
    %949 = arith.subf %945, %948 : vector<8x8xf32>
    %950 = math.exp %949 : vector<8x8xf32>
    %cst_269 = arith.constant dense<0.000000e+00> : vector<8xf32>
    %951 = vector.multi_reduction <add>, %950, %cst_269 [1] : vector<8x8xf32> to vector<8xf32>
    %952 = vector.shape_cast %951 : vector<8xf32> to vector<8x1xf32>
    %953 = tpu.reciprocal %952 {approx = true} : vector<8x1xf32> -> vector<8x1xf32>
    %954 = vector.broadcast %953 : vector<8x1xf32> to vector<8x8xf32>
    %955 = arith.mulf %950, %954 : vector<8x8xf32>
    %956 = arith.truncf %955 : vector<8x8xf32> to vector<8x8xbf16>
    %cst_270 = arith.constant dense<0.000000e+00> : vector<8x128xf32>
    %957 = tpu.matmul %956, %944, %cst_270 {dimension_numbers = #tpu.dot_dimension_numbers<[1], [0], [0], [1], [0, 0, 1, 1], [], []>} : vector<8x8xbf16>, vector<8x128xbf16>, vector<8x128xf32> -> vector<8x128xf32>
    %958 = vector.extract_strided_slice %712 {offsets = [8, 896], sizes = [8, 128], strides = [1, 1]} : vector<16x1024xbf16> to vector<8x128xbf16>
    %959 = vector.extract_strided_slice %714 {offsets = [8, 896], sizes = [8, 128], strides = [1, 1]} : vector<16x1024xbf16> to vector<8x128xbf16>
    %960 = vector.extract_strided_slice %716 {offsets = [8, 896], sizes = [8, 128], strides = [1, 1]} : vector<16x1024xbf16> to vector<8x128xbf16>
    %cst_271 = arith.constant dense<0.000000e+00> : vector<8x8xf32>
    %961 = tpu.matmul %958, %959, %cst_271 {dimension_numbers = #tpu.dot_dimension_numbers<[1], [1], [0], [0], [0, 0, 1, 0], [], []>} : vector<8x128xbf16>, vector<8x128xbf16>, vector<8x8xf32> -> vector<8x8xf32>
    %cst_272 = arith.constant dense<0xFF800000> : vector<8xf32>
    %962 = vector.multi_reduction <maximumf>, %961, %cst_272 [1] : vector<8x8xf32> to vector<8xf32>
    %963 = vector.shape_cast %962 : vector<8xf32> to vector<8x1xf32>
    %964 = vector.broadcast %963 : vector<8x1xf32> to vector<8x8xf32>
    %965 = arith.subf %961, %964 : vector<8x8xf32>
    %966 = math.exp %965 : vector<8x8xf32>
    %cst_273 = arith.constant dense<0.000000e+00> : vector<8xf32>
    %967 = vector.multi_reduction <add>, %966, %cst_273 [1] : vector<8x8xf32> to vector<8xf32>
    %968 = vector.shape_cast %967 : vector<8xf32> to vector<8x1xf32>
    %969 = tpu.reciprocal %968 {approx = true} : vector<8x1xf32> -> vector<8x1xf32>
    %970 = vector.broadcast %969 : vector<8x1xf32> to vector<8x8xf32>
    %971 = arith.mulf %966, %970 : vector<8x8xf32>
    %972 = arith.truncf %971 : vector<8x8xf32> to vector<8x8xbf16>
    %cst_274 = arith.constant dense<0.000000e+00> : vector<8x128xf32>
    %973 = tpu.matmul %972, %960, %cst_274 {dimension_numbers = #tpu.dot_dimension_numbers<[1], [0], [0], [1], [0, 0, 1, 1], [], []>} : vector<8x8xbf16>, vector<8x128xbf16>, vector<8x128xf32> -> vector<8x128xf32>
    %974 = tpu.concatenate %861, %877, %893, %909, %925, %941, %957, %973 in 1 : vector<8x128xf32>, vector<8x128xf32>, vector<8x128xf32>, vector<8x128xf32>, vector<8x128xf32>, vector<8x128xf32>, vector<8x128xf32>, vector<8x128xf32> -> vector<8x1024xf32>
    %975 = tpu.concatenate %845, %974 in 0 : vector<8x1024xf32>, vector<8x1024xf32> -> vector<16x1024xf32>
    %976 = arith.truncf %975 : vector<16x1024xf32> to vector<16x1024xbf16>
    %cst_275 = arith.constant dense<0.000000e+00> : vector<16x128xf32>
    %977 = tpu.matmul %976, %684, %cst_275 {dimension_numbers = #tpu.dot_dimension_numbers<[1], [0], [0], [1], [0, 0, 1, 1], [], []>} : vector<16x1024xbf16>, vector<1024x128xbf16>, vector<16x128xf32> -> vector<16x128xf32>
    %978 = arith.addf %977, %679 : vector<16x128xf32>
    %c5 = arith.constant 5 : index
    %c0_276 = arith.constant 0 : index
    %979 = vector.load %arg2[%c5, %c0_276] : memref<9x128xf32, #tpu.memory_space<vmem>>, vector<1x128xf32>
    %cst_277 = arith.constant dense<0.000000e+00> : vector<16xf32>
    %980 = vector.multi_reduction <add>, %978, %cst_277 [1] : vector<16x128xf32> to vector<16xf32>
    %981 = vector.shape_cast %980 : vector<16xf32> to vector<16x1xf32>
    %cst_278 = arith.constant 6.250000e-02 : f32
    %982 = vector.broadcast %cst_278 : f32 to vector<16x1xf32>
    %983 = arith.mulf %981, %982 : vector<16x1xf32>
    %984 = arith.mulf %978, %978 : vector<16x128xf32>
    %cst_279 = arith.constant dense<0.000000e+00> : vector<16xf32>
    %985 = vector.multi_reduction <add>, %984, %cst_279 [1] : vector<16x128xf32> to vector<16xf32>
    %986 = vector.shape_cast %985 : vector<16xf32> to vector<16x1xf32>
    %cst_280 = arith.constant 6.250000e-02 : f32
    %987 = vector.broadcast %cst_280 : f32 to vector<16x1xf32>
    %988 = arith.mulf %986, %987 : vector<16x1xf32>
    %989 = arith.mulf %983, %983 : vector<16x1xf32>
    %990 = arith.subf %988, %989 : vector<16x1xf32>
    %cst_281 = arith.constant 0.000000e+00 : f32
    %991 = vector.broadcast %cst_281 : f32 to vector<16x1xf32>
    %992 = arith.maximumf %990, %991 : vector<16x1xf32>
    %993 = vector.broadcast %983 : vector<16x1xf32> to vector<16x128xf32>
    %994 = arith.subf %978, %993 : vector<16x128xf32>
    %cst_282 = arith.constant 9.99999974E-6 : f32
    %995 = vector.broadcast %cst_282 : f32 to vector<16x1xf32>
    %996 = arith.addf %992, %995 : vector<16x1xf32>
    %997 = math.rsqrt %996 : vector<16x1xf32>
    %998 = vector.broadcast %997 : vector<16x1xf32> to vector<16x128xf32>
    %999 = arith.mulf %994, %998 : vector<16x128xf32>
    %cst_283 = arith.constant 1.000000e+00 : f32
    %1000 = vector.broadcast %cst_283 : f32 to vector<1x128xf32>
    %1001 = arith.addf %979, %1000 : vector<1x128xf32>
    %1002 = vector.broadcast %1001 : vector<1x128xf32> to vector<16x128xf32>
    %1003 = arith.mulf %999, %1002 : vector<16x128xf32>
    %c6 = arith.constant 6 : index
    %c0_284 = arith.constant 0 : index
    %1004 = vector.load %arg2[%c6, %c0_284] : memref<9x128xf32, #tpu.memory_space<vmem>>, vector<1x128xf32>
    %c1_285 = arith.constant 1 : index
    %c0_286 = arith.constant 0 : index
    %c0_287 = arith.constant 0 : index
    %1005 = vector.load %arg6[%c1_285, %c0_286, %c0_287] : memref<2x128x128xbf16, #tpu.memory_space<vmem>>, vector<1x128x128xbf16>
    %1006 = vector.shape_cast %1005 : vector<1x128x128xbf16> to vector<128x128xbf16>
    %c1_288 = arith.constant 1 : index
    %c0_289 = arith.constant 0 : index
    %1007 = vector.load %arg3[%c1_288, %c0_289] : memref<2x128xf32, #tpu.memory_space<vmem>>, vector<1x128xf32>
    %c1_290 = arith.constant 1 : index
    %c0_291 = arith.constant 0 : index
    %c0_292 = arith.constant 0 : index
    %1008 = vector.load %arg7[%c1_290, %c0_291, %c0_292] : memref<2x128x128xbf16, #tpu.memory_space<vmem>>, vector<1x128x128xbf16>
    %1009 = vector.shape_cast %1008 : vector<1x128x128xbf16> to vector<128x128xbf16>
    %c7 = arith.constant 7 : index
    %c0_293 = arith.constant 0 : index
    %1010 = vector.load %arg2[%c7, %c0_293] : memref<9x128xf32, #tpu.memory_space<vmem>>, vector<1x128xf32>
    %cst_294 = arith.constant dense<0.000000e+00> : vector<16xf32>
    %1011 = vector.multi_reduction <add>, %1003, %cst_294 [1] : vector<16x128xf32> to vector<16xf32>
    %1012 = vector.shape_cast %1011 : vector<16xf32> to vector<16x1xf32>
    %cst_295 = arith.constant 6.250000e-02 : f32
    %1013 = vector.broadcast %cst_295 : f32 to vector<16x1xf32>
    %1014 = arith.mulf %1012, %1013 : vector<16x1xf32>
    %1015 = arith.mulf %1003, %1003 : vector<16x128xf32>
    %cst_296 = arith.constant dense<0.000000e+00> : vector<16xf32>
    %1016 = vector.multi_reduction <add>, %1015, %cst_296 [1] : vector<16x128xf32> to vector<16xf32>
    %1017 = vector.shape_cast %1016 : vector<16xf32> to vector<16x1xf32>
    %cst_297 = arith.constant 6.250000e-02 : f32
    %1018 = vector.broadcast %cst_297 : f32 to vector<16x1xf32>
    %1019 = arith.mulf %1017, %1018 : vector<16x1xf32>
    %1020 = arith.mulf %1014, %1014 : vector<16x1xf32>
    %1021 = arith.subf %1019, %1020 : vector<16x1xf32>
    %cst_298 = arith.constant 0.000000e+00 : f32
    %1022 = vector.broadcast %cst_298 : f32 to vector<16x1xf32>
    %1023 = arith.maximumf %1021, %1022 : vector<16x1xf32>
    %1024 = vector.broadcast %1014 : vector<16x1xf32> to vector<16x128xf32>
    %1025 = arith.subf %1003, %1024 : vector<16x128xf32>
    %cst_299 = arith.constant 9.99999974E-6 : f32
    %1026 = vector.broadcast %cst_299 : f32 to vector<16x1xf32>
    %1027 = arith.addf %1023, %1026 : vector<16x1xf32>
    %1028 = math.rsqrt %1027 : vector<16x1xf32>
    %1029 = vector.broadcast %1028 : vector<16x1xf32> to vector<16x128xf32>
    %1030 = arith.mulf %1025, %1029 : vector<16x128xf32>
    %cst_300 = arith.constant 1.000000e+00 : f32
    %1031 = vector.broadcast %cst_300 : f32 to vector<1x128xf32>
    %1032 = arith.addf %1004, %1031 : vector<1x128xf32>
    %1033 = vector.broadcast %1032 : vector<1x128xf32> to vector<16x128xf32>
    %1034 = arith.mulf %1030, %1033 : vector<16x128xf32>
    %1035 = arith.truncf %1034 : vector<16x128xf32> to vector<16x128xbf16>
    %cst_301 = arith.constant dense<0.000000e+00> : vector<16x128xf32>
    %1036 = tpu.matmul %1035, %1006, %cst_301 {dimension_numbers = #tpu.dot_dimension_numbers<[1], [0], [0], [1], [0, 0, 1, 1], [], []>} : vector<16x128xbf16>, vector<128x128xbf16>, vector<16x128xf32> -> vector<16x128xf32>
    %1037 = vector.broadcast %1007 : vector<1x128xf32> to vector<16x128xf32>
    %1038 = arith.addf %1036, %1037 : vector<16x128xf32>
    %cst_302 = arith.constant 5.000000e-01 : f32
    %1039 = vector.broadcast %cst_302 : f32 to vector<16x128xf32>
    %1040 = arith.mulf %1039, %1038 : vector<16x128xf32>
    %cst_303 = arith.constant 0.707106769 : f32
    %1041 = vector.broadcast %cst_303 : f32 to vector<16x128xf32>
    %1042 = arith.mulf %1038, %1041 : vector<16x128xf32>
    %1043 = math.absf %1042 : vector<16x128xf32>
    %cst_304 = arith.constant 0.327591091 : f32
    %1044 = vector.broadcast %cst_304 : f32 to vector<16x128xf32>
    %1045 = arith.mulf %1044, %1043 : vector<16x128xf32>
    %cst_305 = arith.constant 1.000000e+00 : f32
    %1046 = vector.broadcast %cst_305 : f32 to vector<16x128xf32>
    %1047 = arith.addf %1046, %1045 : vector<16x128xf32>
    %cst_306 = arith.constant 1.000000e+00 : f32
    %1048 = vector.broadcast %cst_306 : f32 to vector<16x128xf32>
    %1049 = arith.divf %1048, %1047 : vector<16x128xf32>
    %cst_307 = arith.constant 1.06140542 : f32
    %1050 = vector.broadcast %cst_307 : f32 to vector<16x128xf32>
    %1051 = arith.mulf %1050, %1049 : vector<16x128xf32>
    %cst_308 = arith.constant -1.45315206 : f32
    %1052 = vector.broadcast %cst_308 : f32 to vector<16x128xf32>
    %1053 = arith.addf %1051, %1052 : vector<16x128xf32>
    %1054 = arith.mulf %1053, %1049 : vector<16x128xf32>
    %cst_309 = arith.constant 1.42141378 : f32
    %1055 = vector.broadcast %cst_309 : f32 to vector<16x128xf32>
    %1056 = arith.addf %1054, %1055 : vector<16x128xf32>
    %1057 = arith.mulf %1056, %1049 : vector<16x128xf32>
    %cst_310 = arith.constant -0.284496725 : f32
    %1058 = vector.broadcast %cst_310 : f32 to vector<16x128xf32>
    %1059 = arith.addf %1057, %1058 : vector<16x128xf32>
    %1060 = arith.mulf %1059, %1049 : vector<16x128xf32>
    %cst_311 = arith.constant 0.254829586 : f32
    %1061 = vector.broadcast %cst_311 : f32 to vector<16x128xf32>
    %1062 = arith.addf %1060, %1061 : vector<16x128xf32>
    %1063 = arith.mulf %1062, %1049 : vector<16x128xf32>
    %cst_312 = arith.constant 0.000000e+00 : f32
    %1064 = vector.broadcast %cst_312 : f32 to vector<16x128xf32>
    %1065 = arith.subf %1064, %1043 : vector<16x128xf32>
    %1066 = arith.mulf %1065, %1043 : vector<16x128xf32>
    %1067 = math.exp %1066 : vector<16x128xf32>
    %1068 = arith.mulf %1063, %1067 : vector<16x128xf32>
    %cst_313 = arith.constant 1.000000e+00 : f32
    %1069 = vector.broadcast %cst_313 : f32 to vector<16x128xf32>
    %1070 = arith.subf %1069, %1068 : vector<16x128xf32>
    %cst_314 = arith.constant 0.000000e+00 : f32
    %1071 = vector.broadcast %cst_314 : f32 to vector<16x128xf32>
    %1072 = arith.cmpf oge, %1042, %1071 : vector<16x128xf32>
    %cst_315 = arith.constant 0.000000e+00 : f32
    %1073 = vector.broadcast %cst_315 : f32 to vector<16x128xf32>
    %1074 = arith.subf %1073, %1070 : vector<16x128xf32>
    %1075 = arith.select %1072, %1070, %1074 : vector<16x128xi1>, vector<16x128xf32>
    %cst_316 = arith.constant 1.000000e+00 : f32
    %1076 = vector.broadcast %cst_316 : f32 to vector<16x128xf32>
    %1077 = arith.addf %1076, %1075 : vector<16x128xf32>
    %1078 = arith.mulf %1040, %1077 : vector<16x128xf32>
    %1079 = arith.truncf %1078 : vector<16x128xf32> to vector<16x128xbf16>
    %cst_317 = arith.constant dense<0.000000e+00> : vector<16x128xf32>
    %1080 = tpu.matmul %1079, %1009, %cst_317 {dimension_numbers = #tpu.dot_dimension_numbers<[1], [0], [0], [1], [0, 0, 1, 1], [], []>} : vector<16x128xbf16>, vector<128x128xbf16>, vector<16x128xf32> -> vector<16x128xf32>
    %1081 = vector.broadcast %1010 : vector<1x128xf32> to vector<16x128xf32>
    %1082 = arith.addf %1080, %1081 : vector<16x128xf32>
    %1083 = arith.addf %1082, %1003 : vector<16x128xf32>
    %1084 = vector.shape_cast %1083 : vector<16x128xf32> to vector<2x8x128xf32>
    %c0_318 = arith.constant 0 : index
    %c0_319 = arith.constant 0 : index
    %c0_320 = arith.constant 0 : index
    %1085 = vector.load %arg8[%c0_318, %c0_319, %c0_320] : memref<2x8x128xf32, #tpu.memory_space<vmem>>, vector<2x8x128xf32>
    tpu.vector_store %arg8[%c0_318, %c0_319, %c0_320], %1084 {strides = array<i32>} : memref<2x8x128xf32, #tpu.memory_space<vmem>>, vector<2x8x128xf32>,
    return
  }
  func.func @transform_0(%arg0: i32) -> (i32, i32, i32) {
    %c0_i32 = arith.constant 0 : i32
    %c0_i32_0 = arith.constant 0 : i32
    %c0_i32_1 = arith.constant 0 : i32
    return %arg0, %c0_i32, %c0_i32_0 : i32, i32, i32
  }
  func.func @transform_1(%arg0: i32) -> (i32, i32) {
    %c0_i32 = arith.constant 0 : i32
    %c0_i32_0 = arith.constant 0 : i32
    %c0_i32_1 = arith.constant 0 : i32
    return %c0_i32, %c0_i32_0 : i32, i32
  }
  func.func @transform_2(%arg0: i32) -> (i32, i32) {
    %c0_i32 = arith.constant 0 : i32
    %c0_i32_0 = arith.constant 0 : i32
    %c0_i32_1 = arith.constant 0 : i32
    return %c0_i32, %c0_i32_0 : i32, i32
  }
  func.func @transform_3(%arg0: i32) -> (i32, i32, i32) {
    %c0_i32 = arith.constant 0 : i32
    %c0_i32_0 = arith.constant 0 : i32
    %c0_i32_1 = arith.constant 0 : i32
    %c0_i32_2 = arith.constant 0 : i32
    return %c0_i32, %c0_i32_0, %c0_i32_1 : i32, i32, i32
  }
  func.func @transform_4(%arg0: i32) -> (i32, i32, i32) {
    %c0_i32 = arith.constant 0 : i32
    %c0_i32_0 = arith.constant 0 : i32
    %c0_i32_1 = arith.constant 0 : i32
    %c0_i32_2 = arith.constant 0 : i32
    return %c0_i32, %c0_i32_0, %c0_i32_1 : i32, i32, i32
  }
  func.func @transform_5(%arg0: i32) -> (i32, i32, i32) {
    %c0_i32 = arith.constant 0 : i32
    %c0_i32_0 = arith.constant 0 : i32
    %c0_i32_1 = arith.constant 0 : i32
    %c0_i32_2 = arith.constant 0 : i32
    return %c0_i32, %c0_i32_0, %c0_i32_1 : i32, i32, i32
  }
  func.func @transform_6(%arg0: i32) -> (i32, i32, i32) {
    %c0_i32 = arith.constant 0 : i32
    %c0_i32_0 = arith.constant 0 : i32
    %c0_i32_1 = arith.constant 0 : i32
    %c0_i32_2 = arith.constant 0 : i32
    return %c0_i32, %c0_i32_0, %c0_i32_1 : i32, i32, i32
  }
  func.func @transform_7(%arg0: i32) -> (i32, i32, i32) {
    %c0_i32 = arith.constant 0 : i32
    %c0_i32_0 = arith.constant 0 : i32
    %c0_i32_1 = arith.constant 0 : i32
    return %arg0, %c0_i32, %c0_i32_0 : i32, i32, i32
  }
}

</mosaic_0001>

<llo_original>
// kernel: tpu_custom_call.1
$region0: #{tpu_custom_call.1}
  #allocation0 [shape = 'u32[]', space=smem, size = 0x4, offset = 0x4, fixed_abs, tag = 'smem constant byte address 0x4 - core index']
  #allocation1 [shape = 'u32[72,128]{1,0:T(1,128)}', space=vmem, size = 0x9000, scoped, tag = 'internal scratch']
  %s0 = inlined_call_operand.hbm [shape: f32[2,8,128], index: 0, kind: input, shape index: {}]
  %s1 = inlined_call_operand.hbm [shape: f32[9,128], index: 1, kind: input, shape index: {}]
  %s2 = inlined_call_operand.hbm [shape: f32[2,128], index: 2, kind: input, shape index: {}]
  %s3 = inlined_call_operand.hbm [shape: bf16[3,128,3072], index: 3, kind: input, shape index: {}]
  %s4 = inlined_call_operand.hbm [shape: bf16[3,1024,128], index: 4, kind: input, shape index: {}]
  %s5 = inlined_call_operand.hbm [shape: bf16[2,128,128], index: 5, kind: input, shape index: {}]
  %s6 = inlined_call_operand.hbm [shape: bf16[2,128,128], index: 6, kind: input, shape index: {}]
  %s7 = inlined_call_operand.hbm [shape: f32[2,8,128], index: 7, kind: output, shape index: {}]
  %s8 = sld [smem:[#allocation0]]
  $region66: #{tpu_custom_call.1} parent=0
    _
  %s10 = ssub.s32 1, %s8
  %s11 = scalar_select 0, %s10, %s8
  $region1: #{tpu_custom_call.1} parent=0
    #allocation2 [shape = 'u8[8192]{0}', space=vmem, size = 0x2000, scoped, tag = 'input window, operand 0, single buffered']
    #allocation3 [shape = 's32[1]{0}', space=sflag, size = 0x4, scoped, tag = 'scoped memory for tpu_custom_call.1']
    #allocation4 [shape = 's32[1]{0}', space=sflag, size = 0x4, scoped, tag = 'scoped memory for tpu_custom_call.1']
    #allocation5 [shape = 'u8[8192]{0}', space=vmem, size = 0x2000, scoped, tag = 'input window, operand 1, single buffered']
    #allocation6 [shape = 's32[1]{0}', space=sflag, size = 0x4, scoped, tag = 'scoped memory for tpu_custom_call.1']
    #allocation7 [shape = 'u8[1024]{0}', space=vmem, size = 0x400, scoped, tag = 'input window, operand 2, single buffered']
    #allocation8 [shape = 'u8[2359296]{0}', space=vmem, size = 0x240000, scoped, tag = 'input window, operand 3, single buffered']
    #allocation9 [shape = 's32[1]{0}', space=sflag, size = 0x4, scoped, tag = 'scoped memory for tpu_custom_call.1']
    #allocation10 [shape = 'u8[786432]{0}', space=vmem, size = 0xc0000, scoped, tag = 'input window, operand 4, single buffered']
    #allocation11 [shape = 'u8[65536]{0}', space=vmem, size = 0x10000, scoped, tag = 'input window, operand 5, single buffered']
    #allocation12 [shape = 's32[1]{0}', space=sflag, size = 0x4, scoped, tag = 'scoped memory for tpu_custom_call.1']
    #allocation13 [shape = 'u8[65536]{0}', space=vmem, size = 0x10000, scoped, tag = 'input window, operand 6, single buffered']
    #allocation14 [shape = 'u8[8192]{0}', space=vmem, size = 0x2000, scoped, tag = 'output window, operand 0, single buffered']
    %12 = vsyncpa [#allocation3], 0
    %13 = vsyncpa [#allocation6], 0
    %14 = vsyncpa [#allocation9], 0
    %15 = vsyncpa [#allocation12], 0
    %16 = vsyncpa [#allocation4], 0
    // Predicated region
    $region2: #{tpu_custom_call.1} parent=1 // pred_check
      _
    $region3: #{tpu_custom_call.1} parent=1 // pred_check_branch
      %18 = sbr.rel (0) target = $region5
    $region4: #{tpu_custom_call.1} parent=1 // pred_region
      %20 = vsyncadd [#allocation3], 0
      %s21 = sshll.u32 %s0, 4
      %s22 = int_to_ptr.hbm [resolvable:$true] %s21
      %s23 = sshll.u32 [#allocation2], 4
      %s24 = int_to_ptr.vmem [resolvable:$true] %s23
      %29 = dma.hbm_to_vmem [thread:$0]  %s22, 256, %s24, [#allocation3], 128, 128, 8
    $region5: #{tpu_custom_call.1} parent=1 // pred_fallthru
      _
    // Predicated region
    $region6: #{tpu_custom_call.1} parent=1 // pred_check
      _
    $region7: #{tpu_custom_call.1} parent=1 // pred_check_branch
      %31 = sbr.rel (0) target = $region9
    $region8: #{tpu_custom_call.1} parent=1 // pred_region
      %33 = vsyncadd [#allocation6], 0
      %s34 = sshll.u32 %s1, 4
      %s35 = int_to_ptr.hbm [resolvable:$true] %s34
      %s36 = sshll.u32 [#allocation5], 4
      %s37 = int_to_ptr.vmem [resolvable:$true] %s36
      %42 = dma.hbm_to_vmem [thread:$0]  %s35, 256, %s37, [#allocation6], 128, 128, 8
    $region9: #{tpu_custom_call.1} parent=1 // pred_fallthru
      _
    // Predicated region
    $region10: #{tpu_custom_call.1} parent=1 // pred_check
      _
    $region11: #{tpu_custom_call.1} parent=1 // pred_check_branch
      %44 = sbr.rel (0) target = $region13
    $region12: #{tpu_custom_call.1} parent=1 // pred_region
      %46 = vsyncadd [#allocation6], 0
      %s48 = sshll.u32 %s2, 4
      %s49 = int_to_ptr.hbm [resolvable:$true] %s48
      %s50 = sshll.u32 [#allocation7], 4
      %s51 = int_to_ptr.vmem [resolvable:$true] %s50
      %53 = dma.hbm_to_vmem [thread:$0]  %s49, 32, %s51, [#allocation6]
    $region13: #{tpu_custom_call.1} parent=1 // pred_fallthru
      _
    // Predicated region
    $region14: #{tpu_custom_call.1} parent=1 // pred_check
      _
    $region15: #{tpu_custom_call.1} parent=1 // pred_check_branch
      %55 = sbr.rel (0) target = $region17
    $region16: #{tpu_custom_call.1} parent=1 // pred_region
      %57 = vsyncadd [#allocation9], 0
      %s58 = sshll.u32 %s3, 4
      %s59 = int_to_ptr.hbm [resolvable:$true] %s58
      %s60 = sshll.u32 [#allocation8], 4
      %s61 = int_to_ptr.vmem [resolvable:$true] %s60
      %66 = dma.hbm_to_vmem [thread:$0]  %s59, 73728, %s61, [#allocation9], 1536, 1536, 96
    $region17: #{tpu_custom_call.1} parent=1 // pred_fallthru
      _
    // Predicated region
    $region18: #{tpu_custom_call.1} parent=1 // pred_check
      _
    $region19: #{tpu_custom_call.1} parent=1 // pred_check_branch
      %68 = sbr.rel (0) target = $region21
    $region20: #{tpu_custom_call.1} parent=1 // pred_region
      %70 = vsyncadd [#allocation9], 0
      %s71 = sshll.u32 %s4, 4
      %s72 = int_to_ptr.hbm [resolvable:$true] %s71
      %s73 = sshll.u32 [#allocation10], 4
      %s74 = int_to_ptr.vmem [resolvable:$true] %s73
      %79 = dma.hbm_to_vmem [thread:$0]  %s72, 24576, %s74, [#allocation9], 64, 64, 4
    $region21: #{tpu_custom_call.1} parent=1 // pred_fallthru
      _
    // Predicated region
    $region22: #{tpu_custom_call.1} parent=1 // pred_check
      _
    $region23: #{tpu_custom_call.1} parent=1 // pred_check_branch
      %81 = sbr.rel (0) target = $region25
    $region24: #{tpu_custom_call.1} parent=1 // pred_region
      %83 = vsyncadd [#allocation12], 0
      %s84 = sshll.u32 %s5, 4
      %s85 = int_to_ptr.hbm [resolvable:$true] %s84
      %s86 = sshll.u32 [#allocation11], 4
      %s87 = int_to_ptr.vmem [resolvable:$true] %s86
      %92 = dma.hbm_to_vmem [thread:$0]  %s85, 2048, %s87, [#allocation12], 64, 64, 4
    $region25: #{tpu_custom_call.1} parent=1 // pred_fallthru
      _
    // Predicated region
    $region26: #{tpu_custom_call.1} parent=1 // pred_check
      _
    $region27: #{tpu_custom_call.1} parent=1 // pred_check_branch
      %94 = sbr.rel (0) target = $region29
    $region28: #{tpu_custom_call.1} parent=1 // pred_region
      %96 = vsyncadd [#allocation12], 0
      %s97 = sshll.u32 %s6, 4
      %s98 = int_to_ptr.hbm [resolvable:$true] %s97
      %s99 = sshll.u32 [#allocation13], 4
      %s100 = int_to_ptr.vmem [resolvable:$true] %s99
      %105 = dma.hbm_to_vmem [thread:$0]  %s98, 2048, %s100, [#allocation12], 64, 64, 4
    $region29: #{tpu_custom_call.1} parent=1 // pred_fallthru
      _
    // Predicated region
    $region30: #{tpu_custom_call.1} parent=1 // pred_check
      _
    $region31: #{tpu_custom_call.1} parent=1 // pred_check_branch
      %107 = sbr.rel (0) target = $region33
    $region32: #{tpu_custom_call.1} parent=1 // pred_region
      %109 = dma.done [#allocation3], 256
    $region33: #{tpu_custom_call.1} parent=1 // pred_fallthru
      _
    // Predicated region
    $region34: #{tpu_custom_call.1} parent=1 // pred_check
      _
    $region35: #{tpu_custom_call.1} parent=1 // pred_check_branch
      %111 = sbr.rel (0) target = $region37
    $region36: #{tpu_custom_call.1} parent=1 // pred_region
      %113 = dma.done [#allocation6], 256
    $region37: #{tpu_custom_call.1} parent=1 // pred_fallthru
      _
    // Predicated region
    $region38: #{tpu_custom_call.1} parent=1 // pred_check
      _
    $region39: #{tpu_custom_call.1} parent=1 // pred_check_branch
      %115 = sbr.rel (0) target = $region41
    $region40: #{tpu_custom_call.1} parent=1 // pred_region
      %117 = dma.done [#allocation6], 32
    $region41: #{tpu_custom_call.1} parent=1 // pred_fallthru
      _
    // Predicated region
    $region42: #{tpu_custom_call.1} parent=1 // pred_check
      _
    $region43: #{tpu_custom_call.1} parent=1 // pred_check_branch
      %119 = sbr.rel (0) target = $region45
    $region44: #{tpu_custom_call.1} parent=1 // pred_region
      %121 = dma.done [#allocation9], 73728
    $region45: #{tpu_custom_call.1} parent=1 // pred_fallthru
      _
    // Predicated region
    $region46: #{tpu_custom_call.1} parent=1 // pred_check
      _
    $region47: #{tpu_custom_call.1} parent=1 // pred_check_branch
      %123 = sbr.rel (0) target = $region49
    $region48: #{tpu_custom_call.1} parent=1 // pred_region
      %125 = dma.done [#allocation9], 24576
    $region49: #{tpu_custom_call.1} parent=1 // pred_fallthru
      _
    // Predicated region
    $region50: #{tpu_custom_call.1} parent=1 // pred_check
      _
    $region51: #{tpu_custom_call.1} parent=1 // pred_check_branch
      %127 = sbr.rel (0) target = $region53
    $region52: #{tpu_custom_call.1} parent=1 // pred_region
      %129 = dma.done [#allocation12], 2048
    $region53: #{tpu_custom_call.1} parent=1 // pred_fallthru
      _
    // Predicated region
    $region54: #{tpu_custom_call.1} parent=1 // pred_check
      _
    $region55: #{tpu_custom_call.1} parent=1 // pred_check_branch
      %131 = sbr.rel (0) target = $region57
    $region56: #{tpu_custom_call.1} parent=1 // pred_region
      %133 = dma.done [#allocation12], 2048
    $region57: #{tpu_custom_call.1} parent=1 // pred_fallthru
      _
    %v135 = vld [vmem:[#allocation2] sm:$0xff]
    %v136 = vld [vmem:[#allocation2 + $0x8] sm:$0xff]
    %v137 = vld [vmem:[#allocation5] sm:$0x1]
    %v138 = vld [vmem:[#allocation8] sm:$0xff]
    %v139 = vld [vmem:[#allocation8 + $0x8] sm:$0xff]
    %v140 = vld [vmem:[#allocation8 + $0x10] sm:$0xff]
    %v141 = vld [vmem:[#allocation8 + $0x18] sm:$0xff]
    %v142 = vld [vmem:[#allocation8 + $0x20] sm:$0xff]
    %v143 = vld [vmem:[#allocation8 + $0x28] sm:$0xff]
    %v144 = vld [vmem:[#allocation8 + $0x30] sm:$0xff]
    %v145 = vld [vmem:[#allocation8 + $0x38] sm:$0xff]
    %v146 = vld [vmem:[#allocation8 + $0x40] sm:$0xff]
    %v147 = vld [vmem:[#allocation8 + $0x48] sm:$0xff]
    %v148 = vld [vmem:[#allocation8 + $0x50] sm:$0xff]
    %v149 = vld [vmem:[#allocation8 + $0x58] sm:$0xff]
    %v150 = vld [vmem:[#allocation8 + $0x60] sm:$0xff]
    %v151 = vld [vmem:[#allocation8 + $0x68] sm:$0xff]
    %v152 = vld [vmem:[#allocation8 + $0x70] sm:$0xff]
    %v153 = vld [vmem:[#allocation8 + $0x78] sm:$0xff]
    %v154 = vld [vmem:[#allocation8 + $0x80] sm:$0xff]
    %v155 = vld [vmem:[#allocation8 + $0x88] sm:$0xff]
    %v156 = vld [vmem:[#allocation8 + $0x90] sm:$0xff]
    %v157 = vld [vmem:[#allocation8 + $0x98] sm:$0xff]
    %v158 = vld [vmem:[#allocation8 + $0xa0] sm:$0xff]
    %v159 = vld [vmem:[#allocation8 + $0xa8] sm:$0xff]
    %v160 = vld [vmem:[#allocation8 + $0xb0] sm:$0xff]
    %v161 = vld [vmem:[#allocation8 + $0xb8] sm:$0xff]
    %v162 = vld [vmem:[#allocation8 + $0xc0] sm:$0xff]
    %v163 = vld [vmem:[#allocation8 + $0xc8] sm:$0xff]
    %v164 = vld [vmem:[#allocation8 + $0xd0] sm:$0xff]
    %v165 = vld [vmem:[#allocation8 + $0xd8] sm:$0xff]
    %v166 = vld [vmem:[#allocation8 + $0xe0] sm:$0xff]
    %v167 = vld [vmem:[#allocation8 + $0xe8] sm:$0xff]
    %v168 = vld [vmem:[#allocation8 + $0xf0] sm:$0xff]
    %v169 = vld [vmem:[#allocation8 + $0xf8] sm:$0xff]
    %v170 = vld [vmem:[#allocation8 + $0x100] sm:$0xff]
    %v171 = vld [vmem:[#allocation8 + $0x108] sm:$0xff]
    %v172 = vld [vmem:[#allocation8 + $0x110] sm:$0xff]
    %v173 = vld [vmem:[#allocation8 + $0x118] sm:$0xff]
    %v174 = vld [vmem:[#allocation8 + $0x120] sm:$0xff]
    %v175 = vld [vmem:[#allocation8 + $0x128] sm:$0xff]
    %v176 = vld [vmem:[#allocation8 + $0x130] sm:$0xff]
    %v177 = vld [vmem:[#allocation8 + $0x138] sm:$0xff]
    %v178 = vld [vmem:[#allocation8 + $0x140] sm:$0xff]
    %v179 = vld [vmem:[#allocation8 + $0x148] sm:$0xff]
    %v180 = vld [vmem:[#allocation8 + $0x150] sm:$0xff]
    %v181 = vld [vmem:[#allocation8 + $0x158] sm:$0xff]
    %v182 = vld [vmem:[#allocation8 + $0x160] sm:$0xff]
    %v183 = vld [vmem:[#allocation8 + $0x168] sm:$0xff]
    %v184 = vld [vmem:[#allocation8 + $0x170] sm:$0xff]
    %v185 = vld [vmem:[#allocation8 + $0x178] sm:$0xff]
    %v186 = vld [vmem:[#allocation8 + $0x180] sm:$0xff]
    %v187 = vld [vmem:[#allocation8 + $0x188] sm:$0xff]
    %v188 = vld [vmem:[#allocation8 + $0x190] sm:$0xff]
    %v189 = vld [vmem:[#allocation8 + $0x198] sm:$0xff]
    %v190 = vld [vmem:[#allocation8 + $0x1a0] sm:$0xff]
    %v191 = vld [vmem:[#allocation8 + $0x1a8] sm:$0xff]
    %v192 = vld [vmem:[#allocation8 + $0x1b0] sm:$0xff]
    %v193 = vld [vmem:[#allocation8 + $0x1b8] sm:$0xff]
    %v194 = vld [vmem:[#allocation8 + $0x1c0] sm:$0xff]
    %v195 = vld [vmem:[#allocation8 + $0x1c8] sm:$0xff]
    %v196 = vld [vmem:[#allocation8 + $0x1d0] sm:$0xff]
    %v197 = vld [vmem:[#allocation8 + $0x1d8] sm:$0xff]
    %v198 = vld [vmem:[#allocation8 + $0x1e0] sm:$0xff]
    %v199 = vld [vmem:[#allocation8 + $0x1e8] sm:$0xff]
    %v200 = vld [vmem:[#allocation8 + $0x1f0] sm:$0xff]
    %v201 = vld [vmem:[#allocation8 + $0x1f8] sm:$0xff]
    %v202 = vld [vmem:[#allocation8 + $0x200] sm:$0xff]
    %v203 = vld [vmem:[#allocation8 + $0x208] sm:$0xff]
    %v204 = vld [vmem:[#allocation8 + $0x210] sm:$0xff]
    %v205 = vld [vmem:[#allocation8 + $0x218] sm:$0xff]
    %v206 = vld [vmem:[#allocation8 + $0x220] sm:$0xff]
    %v207 = vld [vmem:[#allocation8 + $0x228] sm:$0xff]
    %v208 = vld [vmem:[#allocation8 + $0x230] sm:$0xff]
    %v209 = vld [vmem:[#allocation8 + $0x238] sm:$0xff]
    %v210 = vld [vmem:[#allocation8 + $0x240] sm:$0xff]
    %v211 = vld [vmem:[#allocation8 + $0x248] sm:$0xff]
    %v212 = vld [vmem:[#allocation8 + $0x250] sm:$0xff]
    %v213 = vld [vmem:[#allocation8 + $0x258] sm:$0xff]
    %v214 = vld [vmem:[#allocation8 + $0x260] sm:$0xff]
    %v215 = vld [vmem:[#allocation8 + $0x268] sm:$0xff]
    %v216 = vld [vmem:[#allocation8 + $0x270] sm:$0xff]
    %v217 = vld [vmem:[#allocation8 + $0x278] sm:$0xff]
    %v218 = vld [vmem:[#allocation8 + $0x280] sm:$0xff]
    %v219 = vld [vmem:[#allocation8 + $0x288] sm:$0xff]
    %v220 = vld [vmem:[#allocation8 + $0x290] sm:$0xff]
    %v221 = vld [vmem:[#allocation8 + $0x298] sm:$0xff]
    %v222 = vld [vmem:[#allocation8 + $0x2a0] sm:$0xff]
    %v223 = vld [vmem:[#allocation8 + $0x2a8] sm:$0xff]
    %v224 = vld [vmem:[#allocation8 + $0x2b0] sm:$0xff]
    %v225 = vld [vmem:[#allocation8 + $0x2b8] sm:$0xff]
    %v226 = vld [vmem:[#allocation8 + $0x2c0] sm:$0xff]
    %v227 = vld [vmem:[#allocation8 + $0x2c8] sm:$0xff]
    %v228 = vld [vmem:[#allocation8 + $0x2d0] sm:$0xff]
    %v229 = vld [vmem:[#allocation8 + $0x2d8] sm:$0xff]
    %v230 = vld [vmem:[#allocation8 + $0x2e0] sm:$0xff]
    %v231 = vld [vmem:[#allocation8 + $0x2e8] sm:$0xff]
    %v232 = vld [vmem:[#allocation8 + $0x2f0] sm:$0xff]
    %v233 = vld [vmem:[#allocation8 + $0x2f8] sm:$0xff]
    %v234 = vld [vmem:[#allocation8 + $0x300] sm:$0xff]
    %v235 = vld [vmem:[#allocation8 + $0x308] sm:$0xff]
    %v236 = vld [vmem:[#allocation8 + $0x310] sm:$0xff]
    %v237 = vld [vmem:[#allocation8 + $0x318] sm:$0xff]
    %v238 = vld [vmem:[#allocation8 + $0x320] sm:$0xff]
    %v239 = vld [vmem:[#allocation8 + $0x328] sm:$0xff]
    %v240 = vld [vmem:[#allocation8 + $0x330] sm:$0xff]
    %v241 = vld [vmem:[#allocation8 + $0x338] sm:$0xff]
    %v242 = vld [vmem:[#allocation8 + $0x340] sm:$0xff]
    %v243 = vld [vmem:[#allocation8 + $0x348] sm:$0xff]
    %v244 = vld [vmem:[#allocation8 + $0x350] sm:$0xff]
    %v245 = vld [vmem:[#allocation8 + $0x358] sm:$0xff]
    %v246 = vld [vmem:[#allocation8 + $0x360] sm:$0xff]
    %v247 = vld [vmem:[#allocation8 + $0x368] sm:$0xff]
    %v248 = vld [vmem:[#allocation8 + $0x370] sm:$0xff]
    %v249 = vld [vmem:[#allocation8 + $0x378] sm:$0xff]
    %v250 = vld [vmem:[#allocation8 + $0x380] sm:$0xff]
    %v251 = vld [vmem:[#allocation8 + $0x388] sm:$0xff]
    %v252 = vld [vmem:[#allocation8 + $0x390] sm:$0xff]
    %v253 = vld [vmem:[#allocation8 + $0x398] sm:$0xff]
    %v254 = vld [vmem:[#allocation8 + $0x3a0] sm:$0xff]
    %v255 = vld [vmem:[#allocation8 + $0x3a8] sm:$0xff]
    %v256 = vld [vmem:[#allocation8 + $0x3b0] sm:$0xff]
    %v257 = vld [vmem:[#allocation8 + $0x3b8] sm:$0xff]
    %v258 = vld [vmem:[#allocation8 + $0x3c0] sm:$0xff]
    %v259 = vld [vmem:[#allocation8 + $0x3c8] sm:$0xff]
    %v260 = vld [vmem:[#allocation8 + $0x3d0] sm:$0xff]
    %v261 = vld [vmem:[#allocation8 + $0x3d8] sm:$0xff]
    %v262 = vld [vmem:[#allocation8 + $0x3e0] sm:$0xff]
    %v263 = vld [vmem:[#allocation8 + $0x3e8] sm:$0xff]
    %v264 = vld [vmem:[#allocation8 + $0x3f0] sm:$0xff]
    %v265 = vld [vmem:[#allocation8 + $0x3f8] sm:$0xff]
    %v266 = vld [vmem:[#allocation8 + $0x400] sm:$0xff]
    %v267 = vld [vmem:[#allocation8 + $0x408] sm:$0xff]
    %v268 = vld [vmem:[#allocation8 + $0x410] sm:$0xff]
    %v269 = vld [vmem:[#allocation8 + $0x418] sm:$0xff]
    %v270 = vld [vmem:[#allocation8 + $0x420] sm:$0xff]
    %v271 = vld [vmem:[#allocation8 + $0x428] sm:$0xff]
    %v272 = vld [vmem:[#allocation8 + $0x430] sm:$0xff]
    %v273 = vld [vmem:[#allocation8 + $0x438] sm:$0xff]
    %v274 = vld [vmem:[#allocation8 + $0x440] sm:$0xff]
    %v275 = vld [vmem:[#allocation8 + $0x448] sm:$0xff]
    %v276 = vld [vmem:[#allocation8 + $0x450] sm:$0xff]
    %v277 = vld [vmem:[#allocation8 + $0x458] sm:$0xff]
    %v278 = vld [vmem:[#allocation8 + $0x460] sm:$0xff]
    %v279 = vld [vmem:[#allocation8 + $0x468] sm:$0xff]
    %v280 = vld [vmem:[#allocation8 + $0x470] sm:$0xff]
    %v281 = vld [vmem:[#allocation8 + $0x478] sm:$0xff]
    %v282 = vld [vmem:[#allocation8 + $0x480] sm:$0xff]
    %v283 = vld [vmem:[#allocation8 + $0x488] sm:$0xff]
    %v284 = vld [vmem:[#allocation8 + $0x490] sm:$0xff]
    %v285 = vld [vmem:[#allocation8 + $0x498] sm:$0xff]
    %v286 = vld [vmem:[#allocation8 + $0x4a0] sm:$0xff]
    %v287 = vld [vmem:[#allocation8 + $0x4a8] sm:$0xff]
    %v288 = vld [vmem:[#allocation8 + $0x4b0] sm:$0xff]
    %v289 = vld [vmem:[#allocation8 + $0x4b8] sm:$0xff]
    %v290 = vld [vmem:[#allocation8 + $0x4c0] sm:$0xff]
    %v291 = vld [vmem:[#allocation8 + $0x4c8] sm:$0xff]
    %v292 = vld [vmem:[#allocation8 + $0x4d0] sm:$0xff]
    %v293 = vld [vmem:[#allocation8 + $0x4d8] sm:$0xff]
    %v294 = vld [vmem:[#allocation8 + $0x4e0] sm:$0xff]
    %v295 = vld [vmem:[#allocation8 + $0x4e8] sm:$0xff]
    %v296 = vld [vmem:[#allocation8 + $0x4f0] sm:$0xff]
    %v297 = vld [vmem:[#allocation8 + $0x4f8] sm:$0xff]
    %v298 = vld [vmem:[#allocation8 + $0x500] sm:$0xff]
    %v299 = vld [vmem:[#allocation8 + $0x508] sm:$0xff]
    %v300 = vld [vmem:[#allocation8 + $0x510] sm:$0xff]
    %v301 = vld [vmem:[#allocation8 + $0x518] sm:$0xff]
    %v302 = vld [vmem:[#allocation8 + $0x520] sm:$0xff]
    %v303 = vld [vmem:[#allocation8 + $0x528] sm:$0xff]
    %v304 = vld [vmem:[#allocation8 + $0x530] sm:$0xff]
    %v305 = vld [vmem:[#allocation8 + $0x538] sm:$0xff]
    %v306 = vld [vmem:[#allocation8 + $0x540] sm:$0xff]
    %v307 = vld [vmem:[#allocation8 + $0x548] sm:$0xff]
    %v308 = vld [vmem:[#allocation8 + $0x550] sm:$0xff]
    %v309 = vld [vmem:[#allocation8 + $0x558] sm:$0xff]
    %v310 = vld [vmem:[#allocation8 + $0x560] sm:$0xff]
    %v311 = vld [vmem:[#allocation8 + $0x568] sm:$0xff]
    %v312 = vld [vmem:[#allocation8 + $0x570] sm:$0xff]
    %v313 = vld [vmem:[#allocation8 + $0x578] sm:$0xff]
    %v314 = vld [vmem:[#allocation8 + $0x580] sm:$0xff]
    %v315 = vld [vmem:[#allocation8 + $0x588] sm:$0xff]
    %v316 = vld [vmem:[#allocation8 + $0x590] sm:$0xff]
    %v317 = vld [vmem:[#allocation8 + $0x598] sm:$0xff]
    %v318 = vld [vmem:[#allocation8 + $0x5a0] sm:$0xff]
    %v319 = vld [vmem:[#allocation8 + $0x5a8] sm:$0xff]
    %v320 = vld [vmem:[#allocation8 + $0x5b0] sm:$0xff]
    %v321 = vld [vmem:[#allocation8 + $0x5b8] sm:$0xff]
    %v322 = vld [vmem:[#allocation8 + $0x5c0] sm:$0xff]
    %v323 = vld [vmem:[#allocation8 + $0x5c8] sm:$0xff]
    %v324 = vld [vmem:[#allocation8 + $0x5d0] sm:$0xff]
    %v325 = vld [vmem:[#allocation8 + $0x5d8] sm:$0xff]
    %v326 = vld [vmem:[#allocation8 + $0x5e0] sm:$0xff]
    %v327 = vld [vmem:[#allocation8 + $0x5e8] sm:$0xff]
    %v328 = vld [vmem:[#allocation8 + $0x5f0] sm:$0xff]
    %v329 = vld [vmem:[#allocation8 + $0x5f8] sm:$0xff]
    %v330 = vld [vmem:[#allocation10] sm:$0xf]
    %v331 = vld [vmem:[#allocation10 + $0x4] sm:$0xf]
    %v332 = vld [vmem:[#allocation10 + $0x8] sm:$0xf]
    %v333 = vld [vmem:[#allocation10 + $0xc] sm:$0xf]
    %v334 = vld [vmem:[#allocation10 + $0x10] sm:$0xf]
    %v335 = vld [vmem:[#allocation10 + $0x14] sm:$0xf]
    %v336 = vld [vmem:[#allocation10 + $0x18] sm:$0xf]
    %v337 = vld [vmem:[#allocation10 + $0x1c] sm:$0xf]
    %v338 = vld [vmem:[#allocation10 + $0x20] sm:$0xf]
    %v339 = vld [vmem:[#allocation10 + $0x24] sm:$0xf]
    %v340 = vld [vmem:[#allocation10 + $0x28] sm:$0xf]
    %v341 = vld [vmem:[#allocation10 + $0x2c] sm:$0xf]
    %v342 = vld [vmem:[#allocation10 + $0x30] sm:$0xf]
    %v343 = vld [vmem:[#allocation10 + $0x34] sm:$0xf]
    %v344 = vld [vmem:[#allocation10 + $0x38] sm:$0xf]
    %v345 = vld [vmem:[#allocation10 + $0x3c] sm:$0xf]
    %v346 = vld [vmem:[#allocation10 + $0x40] sm:$0xf]
    %v347 = vld [vmem:[#allocation10 + $0x44] sm:$0xf]
    %v348 = vld [vmem:[#allocation10 + $0x48] sm:$0xf]
    %v349 = vld [vmem:[#allocation10 + $0x4c] sm:$0xf]
    %v350 = vld [vmem:[#allocation10 + $0x50] sm:$0xf]
    %v351 = vld [vmem:[#allocation10 + $0x54] sm:$0xf]
    %v352 = vld [vmem:[#allocation10 + $0x58] sm:$0xf]
    %v353 = vld [vmem:[#allocation10 + $0x5c] sm:$0xf]
    %v354 = vld [vmem:[#allocation10 + $0x60] sm:$0xf]
    %v355 = vld [vmem:[#allocation10 + $0x64] sm:$0xf]
    %v356 = vld [vmem:[#allocation10 + $0x68] sm:$0xf]
    %v357 = vld [vmem:[#allocation10 + $0x6c] sm:$0xf]
    %v358 = vld [vmem:[#allocation10 + $0x70] sm:$0xf]
    %v359 = vld [vmem:[#allocation10 + $0x74] sm:$0xf]
    %v360 = vld [vmem:[#allocation10 + $0x78] sm:$0xf]
    %v361 = vld [vmem:[#allocation10 + $0x7c] sm:$0xf]
    %v362 = vld [vmem:[#allocation10 + $0x80] sm:$0xf]
    %v363 = vld [vmem:[#allocation10 + $0x84] sm:$0xf]
    %v364 = vld [vmem:[#allocation10 + $0x88] sm:$0xf]
    %v365 = vld [vmem:[#allocation10 + $0x8c] sm:$0xf]
    %v366 = vld [vmem:[#allocation10 + $0x90] sm:$0xf]
    %v367 = vld [vmem:[#allocation10 + $0x94] sm:$0xf]
    %v368 = vld [vmem:[#allocation10 + $0x98] sm:$0xf]
    %v369 = vld [vmem:[#allocation10 + $0x9c] sm:$0xf]
    %v370 = vld [vmem:[#allocation10 + $0xa0] sm:$0xf]
    %v371 = vld [vmem:[#allocation10 + $0xa4] sm:$0xf]
    %v372 = vld [vmem:[#allocation10 + $0xa8] sm:$0xf]
    %v373 = vld [vmem:[#allocation10 + $0xac] sm:$0xf]
    %v374 = vld [vmem:[#allocation10 + $0xb0] sm:$0xf]
    %v375 = vld [vmem:[#allocation10 + $0xb4] sm:$0xf]
    %v376 = vld [vmem:[#allocation10 + $0xb8] sm:$0xf]
    %v377 = vld [vmem:[#allocation10 + $0xbc] sm:$0xf]
    %v378 = vld [vmem:[#allocation10 + $0xc0] sm:$0xf]
    %v379 = vld [vmem:[#allocation10 + $0xc4] sm:$0xf]
    %v380 = vld [vmem:[#allocation10 + $0xc8] sm:$0xf]
    %v381 = vld [vmem:[#allocation10 + $0xcc] sm:$0xf]
    %v382 = vld [vmem:[#allocation10 + $0xd0] sm:$0xf]
    %v383 = vld [vmem:[#allocation10 + $0xd4] sm:$0xf]
    %v384 = vld [vmem:[#allocation10 + $0xd8] sm:$0xf]
    %v385 = vld [vmem:[#allocation10 + $0xdc] sm:$0xf]
    %v386 = vld [vmem:[#allocation10 + $0xe0] sm:$0xf]
    %v387 = vld [vmem:[#allocation10 + $0xe4] sm:$0xf]
    %v388 = vld [vmem:[#allocation10 + $0xe8] sm:$0xf]
    %v389 = vld [vmem:[#allocation10 + $0xec] sm:$0xf]
    %v390 = vld [vmem:[#allocation10 + $0xf0] sm:$0xf]
    %v391 = vld [vmem:[#allocation10 + $0xf4] sm:$0xf]
    %v392 = vld [vmem:[#allocation10 + $0xf8] sm:$0xf]
    %v393 = vld [vmem:[#allocation10 + $0xfc] sm:$0xf]
    %v394 = vld [vmem:[#allocation10 + $0x100] sm:$0xf]
    %v395 = vld [vmem:[#allocation10 + $0x104] sm:$0xf]
    %v396 = vld [vmem:[#allocation10 + $0x108] sm:$0xf]
    %v397 = vld [vmem:[#allocation10 + $0x10c] sm:$0xf]
    %v398 = vld [vmem:[#allocation10 + $0x110] sm:$0xf]
    %v399 = vld [vmem:[#allocation10 + $0x114] sm:$0xf]
    %v400 = vld [vmem:[#allocation10 + $0x118] sm:$0xf]
    %v401 = vld [vmem:[#allocation10 + $0x11c] sm:$0xf]
    %v402 = vld [vmem:[#allocation10 + $0x120] sm:$0xf]
    %v403 = vld [vmem:[#allocation10 + $0x124] sm:$0xf]
    %v404 = vld [vmem:[#allocation10 + $0x128] sm:$0xf]
    %v405 = vld [vmem:[#allocation10 + $0x12c] sm:$0xf]
    %v406 = vld [vmem:[#allocation10 + $0x130] sm:$0xf]
    %v407 = vld [vmem:[#allocation10 + $0x134] sm:$0xf]
    %v408 = vld [vmem:[#allocation10 + $0x138] sm:$0xf]
    %v409 = vld [vmem:[#allocation10 + $0x13c] sm:$0xf]
    %v410 = vld [vmem:[#allocation10 + $0x140] sm:$0xf]
    %v411 = vld [vmem:[#allocation10 + $0x144] sm:$0xf]
    %v412 = vld [vmem:[#allocation10 + $0x148] sm:$0xf]
    %v413 = vld [vmem:[#allocation10 + $0x14c] sm:$0xf]
    %v414 = vld [vmem:[#allocation10 + $0x150] sm:$0xf]
    %v415 = vld [vmem:[#allocation10 + $0x154] sm:$0xf]
    %v416 = vld [vmem:[#allocation10 + $0x158] sm:$0xf]
    %v417 = vld [vmem:[#allocation10 + $0x15c] sm:$0xf]
    %v418 = vld [vmem:[#allocation10 + $0x160] sm:$0xf]
    %v419 = vld [vmem:[#allocation10 + $0x164] sm:$0xf]
    %v420 = vld [vmem:[#allocation10 + $0x168] sm:$0xf]
    %v421 = vld [vmem:[#allocation10 + $0x16c] sm:$0xf]
    %v422 = vld [vmem:[#allocation10 + $0x170] sm:$0xf]
    %v423 = vld [vmem:[#allocation10 + $0x174] sm:$0xf]
    %v424 = vld [vmem:[#allocation10 + $0x178] sm:$0xf]
    %v425 = vld [vmem:[#allocation10 + $0x17c] sm:$0xf]
    %v426 = vld [vmem:[#allocation10 + $0x180] sm:$0xf]
    %v427 = vld [vmem:[#allocation10 + $0x184] sm:$0xf]
    %v428 = vld [vmem:[#allocation10 + $0x188] sm:$0xf]
    %v429 = vld [vmem:[#allocation10 + $0x18c] sm:$0xf]
    %v430 = vld [vmem:[#allocation10 + $0x190] sm:$0xf]
    %v431 = vld [vmem:[#allocation10 + $0x194] sm:$0xf]
    %v432 = vld [vmem:[#allocation10 + $0x198] sm:$0xf]
    %v433 = vld [vmem:[#allocation10 + $0x19c] sm:$0xf]
    %v434 = vld [vmem:[#allocation10 + $0x1a0] sm:$0xf]
    %v435 = vld [vmem:[#allocation10 + $0x1a4] sm:$0xf]
    %v436 = vld [vmem:[#allocation10 + $0x1a8] sm:$0xf]
    %v437 = vld [vmem:[#allocation10 + $0x1ac] sm:$0xf]
    %v438 = vld [vmem:[#allocation10 + $0x1b0] sm:$0xf]
    %v439 = vld [vmem:[#allocation10 + $0x1b4] sm:$0xf]
    %v440 = vld [vmem:[#allocation10 + $0x1b8] sm:$0xf]
    %v441 = vld [vmem:[#allocation10 + $0x1bc] sm:$0xf]
    %v442 = vld [vmem:[#allocation10 + $0x1c0] sm:$0xf]
    %v443 = vld [vmem:[#allocation10 + $0x1c4] sm:$0xf]
    %v444 = vld [vmem:[#allocation10 + $0x1c8] sm:$0xf]
    %v445 = vld [vmem:[#allocation10 + $0x1cc] sm:$0xf]
    %v446 = vld [vmem:[#allocation10 + $0x1d0] sm:$0xf]
    %v447 = vld [vmem:[#allocation10 + $0x1d4] sm:$0xf]
    %v448 = vld [vmem:[#allocation10 + $0x1d8] sm:$0xf]
    %v449 = vld [vmem:[#allocation10 + $0x1dc] sm:$0xf]
    %v450 = vld [vmem:[#allocation10 + $0x1e0] sm:$0xf]
    %v451 = vld [vmem:[#allocation10 + $0x1e4] sm:$0xf]
    %v452 = vld [vmem:[#allocation10 + $0x1e8] sm:$0xf]
    %v453 = vld [vmem:[#allocation10 + $0x1ec] sm:$0xf]
    %v454 = vld [vmem:[#allocation10 + $0x1f0] sm:$0xf]
    %v455 = vld [vmem:[#allocation10 + $0x1f4] sm:$0xf]
    %v456 = vld [vmem:[#allocation10 + $0x1f8] sm:$0xf]
    %v457 = vld [vmem:[#allocation10 + $0x1fc] sm:$0xf]
    %458 = vadd.xlane.f32.xlu0 %v135
    %v459 = vpop.xlane.xlu0 %458
    %460 = vadd.xlane.f32.xlu0 %v136
    %v461 = vpop.xlane.xlu0 %460
    %v462 = vmul.f32 %v459, 0.0625
    %v463 = vmul.f32 %v461, 0.0625
    %v464 = vmul.f32 %v135, %v135
    %v465 = vmul.f32 %v136, %v136
    %466 = vadd.xlane.f32.xlu0 %v464
    %v467 = vpop.xlane.xlu0 %466
    %468 = vadd.xlane.f32.xlu0 %v465
    %v469 = vpop.xlane.xlu0 %468
    %v470 = vmul.f32 %v467, 0.0625
    %v471 = vmul.f32 %v469, 0.0625
    %v472 = vmul.f32 %v462, %v462
    %v473 = vmul.f32 %v463, %v463
    %v474 = vsub.f32 %v470, %v472
    %v475 = vsub.f32 %v471, %v473
    %v476 = vmax.f32 %v474, 0.0
    %v477 = vmax.f32 %v475, 0.0
    %v478 = vsub.f32 %v135, %v462
    %v479 = vsub.f32 %v136, %v463
    %v480 = vadd.f32 %v476, 1e-05
    %v481 = vadd.f32 %v477, 1e-05
    %v482 = vrsqrt.pop %v480
    %v483 = vmul.f32 %v482, %v480
    %v484 = vmul.f32 %v483, %v482
    %v485 = vmul.f32 0.5, %v484
    %v486 = vsub.f32 1.5, %v485
    %v487 = vmul.f32 %v482, %v486
    %vm488 = vweird.f32 %v480
    %vm489 = vweird.f32 %v482
    %vm490 = vmor %vm488, %vm489
    %v491 = vsel %vm490, %v482, %v487
    %v492 = vrsqrt.pop %v481
    %v493 = vmul.f32 %v492, %v481
    %v494 = vmul.f32 %v493, %v492
    %v495 = vmul.f32 0.5, %v494
    %v496 = vsub.f32 1.5, %v495
    %v497 = vmul.f32 %v492, %v496
    %vm498 = vweird.f32 %v481
    %vm499 = vweird.f32 %v492
    %vm500 = vmor %vm498, %vm499
    %v501 = vsel %vm500, %v492, %v497
    %v502 = vmul.f32 %v478, %v491
    %v503 = vmul.f32 %v479, %v501
    %v504 = vadd.f32 %v137, 1.0
    %v505 = vperm.slane %v504, 0
    %v506 = vmul.f32 %v502, %v505
    %v507 = vmul.f32 %v503, %v505
    %v508 = vpack.c.bf16 %v507, %v506
    %v701 = vunpack.c.l.b16 %v138
    %v702 = vunpack.c.h.b16 %v138
    %v703 = vunpack.c.l.b16 %v139
    %v704 = vunpack.c.h.b16 %v139
    %v705 = vunpack.c.l.b16 %v140
    %v706 = vunpack.c.h.b16 %v140
    %v707 = vunpack.c.l.b16 %v141
    %v708 = vunpack.c.h.b16 %v141
    %v709 = vunpack.c.l.b16 %v142
    %v710 = vunpack.c.h.b16 %v142
    %v711 = vunpack.c.l.b16 %v143
    %v712 = vunpack.c.h.b16 %v143
    %v713 = vunpack.c.l.b16 %v144
    %v714 = vunpack.c.h.b16 %v144
    %v715 = vunpack.c.l.b16 %v145
    %v716 = vunpack.c.h.b16 %v145
    %v717 = vunpack.c.l.b16 %v146
    %v718 = vunpack.c.h.b16 %v146
    %v719 = vunpack.c.l.b16 %v147
    %v720 = vunpack.c.h.b16 %v147
    %v721 = vunpack.c.l.b16 %v148
    %v722 = vunpack.c.h.b16 %v148
    %v723 = vunpack.c.l.b16 %v149
    %v724 = vunpack.c.h.b16 %v149
    %v725 = vunpack.c.l.b16 %v150
    %v726 = vunpack.c.h.b16 %v150
    %v727 = vunpack.c.l.b16 %v151
    %v728 = vunpack.c.h.b16 %v151
    %v729 = vunpack.c.l.b16 %v152
    %v730 = vunpack.c.h.b16 %v152
    %v731 = vunpack.c.l.b16 %v153
    %v732 = vunpack.c.h.b16 %v153
    %v733 = vunpack.c.l.b16 %v154
    %v734 = vunpack.c.h.b16 %v154
    %v735 = vunpack.c.l.b16 %v155
    %v736 = vunpack.c.h.b16 %v155
    %v737 = vunpack.c.l.b16 %v156
    %v738 = vunpack.c.h.b16 %v156
    %v739 = vunpack.c.l.b16 %v157
    %v740 = vunpack.c.h.b16 %v157
    %v741 = vunpack.c.l.b16 %v158
    %v742 = vunpack.c.h.b16 %v158
    %v743 = vunpack.c.l.b16 %v159
    %v744 = vunpack.c.h.b16 %v159
    %v745 = vunpack.c.l.b16 %v160
    %v746 = vunpack.c.h.b16 %v160
    %v747 = vunpack.c.l.b16 %v161
    %v748 = vunpack.c.h.b16 %v161
    %v749 = vunpack.c.l.b16 %v162
    %v750 = vunpack.c.h.b16 %v162
    %v751 = vunpack.c.l.b16 %v163
    %v752 = vunpack.c.h.b16 %v163
    %v753 = vunpack.c.l.b16 %v164
    %v754 = vunpack.c.h.b16 %v164
    %v755 = vunpack.c.l.b16 %v165
    %v756 = vunpack.c.h.b16 %v165
    %v757 = vunpack.c.l.b16 %v166
    %v758 = vunpack.c.h.b16 %v166
    %v759 = vunpack.c.l.b16 %v167
    %v760 = vunpack.c.h.b16 %v167
    %v761 = vunpack.c.l.b16 %v168
    %v762 = vunpack.c.h.b16 %v168
    %v763 = vunpack.c.l.b16 %v169
    %v764 = vunpack.c.h.b16 %v169
    %v765 = vunpack.c.l.b16 %v170
    %v766 = vunpack.c.h.b16 %v170
    %v767 = vunpack.c.l.b16 %v171
    %v768 = vunpack.c.h.b16 %v171
    %v769 = vunpack.c.l.b16 %v172
    %v770 = vunpack.c.h.b16 %v172
    %v771 = vunpack.c.l.b16 %v173
    %v772 = vunpack.c.h.b16 %v173
    %v773 = vunpack.c.l.b16 %v174
    %v774 = vunpack.c.h.b16 %v174
    %v775 = vunpack.c.l.b16 %v175
    %v776 = vunpack.c.h.b16 %v175
    %v777 = vunpack.c.l.b16 %v176
    %v778 = vunpack.c.h.b16 %v176
    %v779 = vunpack.c.l.b16 %v177
    %v780 = vunpack.c.h.b16 %v177
    %v781 = vunpack.c.l.b16 %v178
    %v782 = vunpack.c.h.b16 %v178
    %v783 = vunpack.c.l.b16 %v179
    %v784 = vunpack.c.h.b16 %v179
    %v785 = vunpack.c.l.b16 %v180
    %v786 = vunpack.c.h.b16 %v180
    %v787 = vunpack.c.l.b16 %v181
    %v788 = vunpack.c.h.b16 %v181
    %v789 = vunpack.c.l.b16 %v182
    %v790 = vunpack.c.h.b16 %v182
    %v791 = vunpack.c.l.b16 %v183
    %v792 = vunpack.c.h.b16 %v183
    %v793 = vunpack.c.l.b16 %v184
    %v794 = vunpack.c.h.b16 %v184
    %v795 = vunpack.c.l.b16 %v185
    %v796 = vunpack.c.h.b16 %v185
    %v797 = vunpack.c.l.b16 %v186
    %v798 = vunpack.c.h.b16 %v186
    %v799 = vunpack.c.l.b16 %v187
    %v800 = vunpack.c.h.b16 %v187
    %v801 = vunpack.c.l.b16 %v188
    %v802 = vunpack.c.h.b16 %v188
    %v803 = vunpack.c.l.b16 %v189
    %v804 = vunpack.c.h.b16 %v189
    %v805 = vunpack.c.l.b16 %v190
    %v806 = vunpack.c.h.b16 %v190
    %v807 = vunpack.c.l.b16 %v191
    %v808 = vunpack.c.h.b16 %v191
    %v809 = vunpack.c.l.b16 %v192
    %v810 = vunpack.c.h.b16 %v192
    %v811 = vunpack.c.l.b16 %v193
    %v812 = vunpack.c.h.b16 %v193
    %v813 = vunpack.c.l.b16 %v194
    %v814 = vunpack.c.h.b16 %v194
    %v815 = vunpack.c.l.b16 %v195
    %v816 = vunpack.c.h.b16 %v195
    %v817 = vunpack.c.l.b16 %v196
    %v818 = vunpack.c.h.b16 %v196
    %v819 = vunpack.c.l.b16 %v197
    %v820 = vunpack.c.h.b16 %v197
    %v821 = vunpack.c.l.b16 %v198
    %v822 = vunpack.c.h.b16 %v198
    %v823 = vunpack.c.l.b16 %v199
    %v824 = vunpack.c.h.b16 %v199
    %v825 = vunpack.c.l.b16 %v200
    %v826 = vunpack.c.h.b16 %v200
    %v827 = vunpack.c.l.b16 %v201
    %v828 = vunpack.c.h.b16 %v201
    %v829 = vunpack.c.l.b16 %v202
    %v830 = vunpack.c.h.b16 %v202
    %v831 = vunpack.c.l.b16 %v203
    %v832 = vunpack.c.h.b16 %v203
    %v833 = vunpack.c.l.b16 %v204
    %v834 = vunpack.c.h.b16 %v204
    %v835 = vunpack.c.l.b16 %v205
    %v836 = vunpack.c.h.b16 %v205
    %v837 = vunpack.c.l.b16 %v206
    %v838 = vunpack.c.h.b16 %v206
    %v839 = vunpack.c.l.b16 %v207
    %v840 = vunpack.c.h.b16 %v207
    %v841 = vunpack.c.l.b16 %v208
    %v842 = vunpack.c.h.b16 %v208
    %v843 = vunpack.c.l.b16 %v209
    %v844 = vunpack.c.h.b16 %v209
    %v845 = vunpack.c.l.b16 %v210
    %v846 = vunpack.c.h.b16 %v210
    %v847 = vunpack.c.l.b16 %v211
    %v848 = vunpack.c.h.b16 %v211
    %v849 = vunpack.c.l.b16 %v212
    %v850 = vunpack.c.h.b16 %v212
    %v851 = vunpack.c.l.b16 %v213
    %v852 = vunpack.c.h.b16 %v213
    %v853 = vunpack.c.l.b16 %v214
    %v854 = vunpack.c.h.b16 %v214
    %v855 = vunpack.c.l.b16 %v215
    %v856 = vunpack.c.h.b16 %v215
    %v857 = vunpack.c.l.b16 %v216
    %v858 = vunpack.c.h.b16 %v216
    %v859 = vunpack.c.l.b16 %v217
    %v860 = vunpack.c.h.b16 %v217
    %v861 = vunpack.c.l.b16 %v218
    %v862 = vunpack.c.h.b16 %v218
    %v863 = vunpack.c.l.b16 %v219
    %v864 = vunpack.c.h.b16 %v219
    %v865 = vunpack.c.l.b16 %v220
    %v866 = vunpack.c.h.b16 %v220
    %v867 = vunpack.c.l.b16 %v221
    %v868 = vunpack.c.h.b16 %v221
    %v869 = vunpack.c.l.b16 %v222
    %v870 = vunpack.c.h.b16 %v222
    %v871 = vunpack.c.l.b16 %v223
    %v872 = vunpack.c.h.b16 %v223
    %v873 = vunpack.c.l.b16 %v224
    %v874 = vunpack.c.h.b16 %v224
    %v875 = vunpack.c.l.b16 %v225
    %v876 = vunpack.c.h.b16 %v225
    %v877 = vunpack.c.l.b16 %v226
    %v878 = vunpack.c.h.b16 %v226
    %v879 = vunpack.c.l.b16 %v227
    %v880 = vunpack.c.h.b16 %v227
    %v881 = vunpack.c.l.b16 %v228
    %v882 = vunpack.c.h.b16 %v228
    %v883 = vunpack.c.l.b16 %v229
    %v884 = vunpack.c.h.b16 %v229
    %v885 = vunpack.c.l.b16 %v230
    %v886 = vunpack.c.h.b16 %v230
    %v887 = vunpack.c.l.b16 %v231
    %v888 = vunpack.c.h.b16 %v231
    %v889 = vunpack.c.l.b16 %v232
    %v890 = vunpack.c.h.b16 %v232
    %v891 = vunpack.c.l.b16 %v233
    %v892 = vunpack.c.h.b16 %v233
    %v893 = vunpack.c.l.b16 %v234
    %v894 = vunpack.c.h.b16 %v234
    %v895 = vunpack.c.l.b16 %v235
    %v896 = vunpack.c.h.b16 %v235
    %v897 = vunpack.c.l.b16 %v236
    %v898 = vunpack.c.h.b16 %v236
    %v899 = vunpack.c.l.b16 %v237
    %v900 = vunpack.c.h.b16 %v237
    %v901 = vunpack.c.l.b16 %v238
    %v902 = vunpack.c.h.b16 %v238
    %v903 = vunpack.c.l.b16 %v239
    %v904 = vunpack.c.h.b16 %v239
    %v905 = vunpack.c.l.b16 %v240
    %v906 = vunpack.c.h.b16 %v240
    %v907 = vunpack.c.l.b16 %v241
    %v908 = vunpack.c.h.b16 %v241
    %v909 = vunpack.c.l.b16 %v242
    %v910 = vunpack.c.h.b16 %v242
    %v911 = vunpack.c.l.b16 %v243
    %v912 = vunpack.c.h.b16 %v243
    %v913 = vunpack.c.l.b16 %v244
    %v914 = vunpack.c.h.b16 %v244
    %v915 = vunpack.c.l.b16 %v245
    %v916 = vunpack.c.h.b16 %v245
    %v917 = vunpack.c.l.b16 %v246
    %v918 = vunpack.c.h.b16 %v246
    %v919 = vunpack.c.l.b16 %v247
    %v920 = vunpack.c.h.b16 %v247
    %v921 = vunpack.c.l.b16 %v248
    %v922 = vunpack.c.h.b16 %v248
    %v923 = vunpack.c.l.b16 %v249
    %v924 = vunpack.c.h.b16 %v249
    %v925 = vunpack.c.l.b16 %v250
    %v926 = vunpack.c.h.b16 %v250
    %v927 = vunpack.c.l.b16 %v251
    %v928 = vunpack.c.h.b16 %v251
    %v929 = vunpack.c.l.b16 %v252
    %v930 = vunpack.c.h.b16 %v252
    %v931 = vunpack.c.l.b16 %v253
    %v932 = vunpack.c.h.b16 %v253
    %v933 = vunpack.c.l.b16 %v254
    %v934 = vunpack.c.h.b16 %v254
    %v935 = vunpack.c.l.b16 %v255
    %v936 = vunpack.c.h.b16 %v255
    %v937 = vunpack.c.l.b16 %v256
    %v938 = vunpack.c.h.b16 %v256
    %v939 = vunpack.c.l.b16 %v257
    %v940 = vunpack.c.h.b16 %v257
    %v941 = vunpack.c.l.b16 %v258
    %v942 = vunpack.c.h.b16 %v258
    %v943 = vunpack.c.l.b16 %v259
    %v944 = vunpack.c.h.b16 %v259
    %v945 = vunpack.c.l.b16 %v260
    %v946 = vunpack.c.h.b16 %v260
    %v947 = vunpack.c.l.b16 %v261
    %v948 = vunpack.c.h.b16 %v261
    %v949 = vunpack.c.l.b16 %v262
    %v950 = vunpack.c.h.b16 %v262
    %v951 = vunpack.c.l.b16 %v263
    %v952 = vunpack.c.h.b16 %v263
    %v953 = vunpack.c.l.b16 %v264
    %v954 = vunpack.c.h.b16 %v264
    %v955 = vunpack.c.l.b16 %v265
    %v956 = vunpack.c.h.b16 %v265
    %v957 = vunpack.c.l.b16 %v266
    %v958 = vunpack.c.h.b16 %v266
    %v959 = vunpack.c.l.b16 %v267
    %v960 = vunpack.c.h.b16 %v267
    %v961 = vunpack.c.l.b16 %v268
    %v962 = vunpack.c.h.b16 %v268
    %v963 = vunpack.c.l.b16 %v269
    %v964 = vunpack.c.h.b16 %v269
    %v965 = vunpack.c.l.b16 %v270
    %v966 = vunpack.c.h.b16 %v270
    %v967 = vunpack.c.l.b16 %v271
    %v968 = vunpack.c.h.b16 %v271
    %v969 = vunpack.c.l.b16 %v272
    %v970 = vunpack.c.h.b16 %v272
    %v971 = vunpack.c.l.b16 %v273
    %v972 = vunpack.c.h.b16 %v273
    %v973 = vunpack.c.l.b16 %v274
    %v974 = vunpack.c.h.b16 %v274
    %v975 = vunpack.c.l.b16 %v275
    %v976 = vunpack.c.h.b16 %v275
    %v977 = vunpack.c.l.b16 %v276
    %v978 = vunpack.c.h.b16 %v276
    %v979 = vunpack.c.l.b16 %v277
    %v980 = vunpack.c.h.b16 %v277
    %v981 = vunpack.c.l.b16 %v278
    %v982 = vunpack.c.h.b16 %v278
    %v983 = vunpack.c.l.b16 %v279
    %v984 = vunpack.c.h.b16 %v279
    %v985 = vunpack.c.l.b16 %v280
    %v986 = vunpack.c.h.b16 %v280
    %v987 = vunpack.c.l.b16 %v281
    %v988 = vunpack.c.h.b16 %v281
    %v989 = vunpack.c.l.b16 %v282
    %v990 = vunpack.c.h.b16 %v282
    %v991 = vunpack.c.l.b16 %v283
    %v992 = vunpack.c.h.b16 %v283
    %v993 = vunpack.c.l.b16 %v284
    %v994 = vunpack.c.h.b16 %v284
    %v995 = vunpack.c.l.b16 %v285
    %v996 = vunpack.c.h.b16 %v285
    %v997 = vunpack.c.l.b16 %v286
    %v998 = vunpack.c.h.b16 %v286
    %v999 = vunpack.c.l.b16 %v287
    %v1000 = vunpack.c.h.b16 %v287
    %v1001 = vunpack.c.l.b16 %v288
    %v1002 = vunpack.c.h.b16 %v288
    %v1003 = vunpack.c.l.b16 %v289
    %v1004 = vunpack.c.h.b16 %v289
    %v1005 = vunpack.c.l.b16 %v290
    %v1006 = vunpack.c.h.b16 %v290
    %v1007 = vunpack.c.l.b16 %v291
    %v1008 = vunpack.c.h.b16 %v291
    %v1009 = vunpack.c.l.b16 %v292
    %v1010 = vunpack.c.h.b16 %v292
    %v1011 = vunpack.c.l.b16 %v293
    %v1012 = vunpack.c.h.b16 %v293
    %v1013 = vunpack.c.l.b16 %v294
    %v1014 = vunpack.c.h.b16 %v294
    %v1015 = vunpack.c.l.b16 %v295
    %v1016 = vunpack.c.h.b16 %v295
    %v1017 = vunpack.c.l.b16 %v296
    %v1018 = vunpack.c.h.b16 %v296
    %v1019 = vunpack.c.l.b16 %v297
    %v1020 = vunpack.c.h.b16 %v297
    %v1021 = vunpack.c.l.b16 %v298
    %v1022 = vunpack.c.h.b16 %v298
    %v1023 = vunpack.c.l.b16 %v299
    %v1024 = vunpack.c.h.b16 %v299
    %v1025 = vunpack.c.l.b16 %v300
    %v1026 = vunpack.c.h.b16 %v300
    %v1027 = vunpack.c.l.b16 %v301
    %v1028 = vunpack.c.h.b16 %v301
    %v1029 = vunpack.c.l.b16 %v302
    %v1030 = vunpack.c.h.b16 %v302
    %v1031 = vunpack.c.l.b16 %v303
    %v1032 = vunpack.c.h.b16 %v303
    %v1033 = vunpack.c.l.b16 %v304
    %v1034 = vunpack.c.h.b16 %v304
    %v1035 = vunpack.c.l.b16 %v305
    %v1036 = vunpack.c.h.b16 %v305
    %v1037 = vunpack.c.l.b16 %v306
    %v1038 = vunpack.c.h.b16 %v306
    %v1039 = vunpack.c.l.b16 %v307
    %v1040 = vunpack.c.h.b16 %v307
    %v1041 = vunpack.c.l.b16 %v308
    %v1042 = vunpack.c.h.b16 %v308
    %v1043 = vunpack.c.l.b16 %v309
    %v1044 = vunpack.c.h.b16 %v309
    %v1045 = vunpack.c.l.b16 %v310
    %v1046 = vunpack.c.h.b16 %v310
    %v1047 = vunpack.c.l.b16 %v311
    %v1048 = vunpack.c.h.b16 %v311
    %v1049 = vunpack.c.l.b16 %v312
    %v1050 = vunpack.c.h.b16 %v312
    %v1051 = vunpack.c.l.b16 %v313
    %v1052 = vunpack.c.h.b16 %v313
    %v1053 = vunpack.c.l.b16 %v314
    %v1054 = vunpack.c.h.b16 %v314
    %v1055 = vunpack.c.l.b16 %v315
    %v1056 = vunpack.c.h.b16 %v315
    %v1057 = vunpack.c.l.b16 %v316
    %v1058 = vunpack.c.h.b16 %v316
    %v1059 = vunpack.c.l.b16 %v317
    %v1060 = vunpack.c.h.b16 %v317
    %v1061 = vunpack.c.l.b16 %v318
    %v1062 = vunpack.c.h.b16 %v318
    %v1063 = vunpack.c.l.b16 %v319
    %v1064 = vunpack.c.h.b16 %v319
    %v1065 = vunpack.c.l.b16 %v320
    %v1066 = vunpack.c.h.b16 %v320
    %v1067 = vunpack.c.l.b16 %v321
    %v1068 = vunpack.c.h.b16 %v321
    %v1069 = vunpack.c.l.b16 %v322
    %v1070 = vunpack.c.h.b16 %v322
    %v1071 = vunpack.c.l.b16 %v323
    %v1072 = vunpack.c.h.b16 %v323
    %v1073 = vunpack.c.l.b16 %v324
    %v1074 = vunpack.c.h.b16 %v324
    %v1075 = vunpack.c.l.b16 %v325
    %v1076 = vunpack.c.h.b16 %v325
    %v1077 = vunpack.c.l.b16 %v326
    %v1078 = vunpack.c.h.b16 %v326
    %v1079 = vunpack.c.l.b16 %v327
    %v1080 = vunpack.c.h.b16 %v327
    %v1081 = vunpack.c.l.b16 %v328
    %v1082 = vunpack.c.h.b16 %v328
    %v1083 = vunpack.c.l.b16 %v329
    %v1084 = vunpack.c.h.b16 %v329
    %v1085 = vpack.c.b16 %v725, %v701
    %v1086 = vpack.c.b16 %v726, %v702
    %v1087 = vpack.c.b16 %v727, %v703
    %v1088 = vpack.c.b16 %v728, %v704
    %v1089 = vpack.c.b16 %v729, %v705
    %v1090 = vpack.c.b16 %v730, %v706
    %v1091 = vpack.c.b16 %v731, %v707
    %v1092 = vpack.c.b16 %v732, %v708
    %v1093 = vpack.c.b16 %v733, %v709
    %v1094 = vpack.c.b16 %v734, %v710
    %v1095 = vpack.c.b16 %v735, %v711
    %v1096 = vpack.c.b16 %v736, %v712
    %v1097 = vpack.c.b16 %v737, %v713
    %v1098 = vpack.c.b16 %v738, %v714
    %v1099 = vpack.c.b16 %v739, %v715
    %v1100 = vpack.c.b16 %v740, %v716
    %v1101 = vpack.c.b16 %v741, %v717
    %v1102 = vpack.c.b16 %v742, %v718
    %v1103 = vpack.c.b16 %v743, %v719
    %v1104 = vpack.c.b16 %v744, %v720
    %v1105 = vpack.c.b16 %v745, %v721
    %v1106 = vpack.c.b16 %v746, %v722
    %v1107 = vpack.c.b16 %v747, %v723
    %v1108 = vpack.c.b16 %v748, %v724
    %v1109 = vpack.c.b16 %v773, %v749
    %v1110 = vpack.c.b16 %v774, %v750
    %v1111 = vpack.c.b16 %v775, %v751
    %v1112 = vpack.c.b16 %v776, %v752
    %v1113 = vpack.c.b16 %v777, %v753
    %v1114 = vpack.c.b16 %v778, %v754
    %v1115 = vpack.c.b16 %v779, %v755
    %v1116 = vpack.c.b16 %v780, %v756
    %v1117 = vpack.c.b16 %v781, %v757
    %v1118 = vpack.c.b16 %v782, %v758
    %v1119 = vpack.c.b16 %v783, %v759
    %v1120 = vpack.c.b16 %v784, %v760
    %v1121 = vpack.c.b16 %v785, %v761
    %v1122 = vpack.c.b16 %v786, %v762
    %v1123 = vpack.c.b16 %v787, %v763
    %v1124 = vpack.c.b16 %v788, %v764
    %v1125 = vpack.c.b16 %v789, %v765
    %v1126 = vpack.c.b16 %v790, %v766
    %v1127 = vpack.c.b16 %v791, %v767
    %v1128 = vpack.c.b16 %v792, %v768
    %v1129 = vpack.c.b16 %v793, %v769
    %v1130 = vpack.c.b16 %v794, %v770
    %v1131 = vpack.c.b16 %v795, %v771
    %v1132 = vpack.c.b16 %v796, %v772
    %v1133 = vpack.c.b16 %v821, %v797
    %v1134 = vpack.c.b16 %v822, %v798
    %v1135 = vpack.c.b16 %v823, %v799
    %v1136 = vpack.c.b16 %v824, %v800
    %v1137 = vpack.c.b16 %v825, %v801
    %v1138 = vpack.c.b16 %v826, %v802
    %v1139 = vpack.c.b16 %v827, %v803
    %v1140 = vpack.c.b16 %v828, %v804
    %v1141 = vpack.c.b16 %v829, %v805
    %v1142 = vpack.c.b16 %v830, %v806
    %v1143 = vpack.c.b16 %v831, %v807
    %v1144 = vpack.c.b16 %v832, %v808
    %v1145 = vpack.c.b16 %v833, %v809
    %v1146 = vpack.c.b16 %v834, %v810
    %v1147 = vpack.c.b16 %v835, %v811
    %v1148 = vpack.c.b16 %v836, %v812
    %v1149 = vpack.c.b16 %v837, %v813
    %v1150 = vpack.c.b16 %v838, %v814
    %v1151 = vpack.c.b16 %v839, %v815
    %v1152 = vpack.c.b16 %v840, %v816
    %v1153 = vpack.c.b16 %v841, %v817
    %v1154 = vpack.c.b16 %v842, %v818
    %v1155 = vpack.c.b16 %v843, %v819
    %v1156 = vpack.c.b16 %v844, %v820
    %v1157 = vpack.c.b16 %v869, %v845
    %v1158 = vpack.c.b16 %v870, %v846
    %v1159 = vpack.c.b16 %v871, %v847
    %v1160 = vpack.c.b16 %v872, %v848
    %v1161 = vpack.c.b16 %v873, %v849
    %v1162 = vpack.c.b16 %v874, %v850
    %v1163 = vpack.c.b16 %v875, %v851
    %v1164 = vpack.c.b16 %v876, %v852
    %v1165 = vpack.c.b16 %v877, %v853
    %v1166 = vpack.c.b16 %v878, %v854
    %v1167 = vpack.c.b16 %v879, %v855
    %v1168 = vpack.c.b16 %v880, %v856
    %v1169 = vpack.c.b16 %v881, %v857
    %v1170 = vpack.c.b16 %v882, %v858
    %v1171 = vpack.c.b16 %v883, %v859
    %v1172 = vpack.c.b16 %v884, %v860
    %v1173 = vpack.c.b16 %v885, %v861
    %v1174 = vpack.c.b16 %v886, %v862
    %v1175 = vpack.c.b16 %v887, %v863
    %v1176 = vpack.c.b16 %v888, %v864
    %v1177 = vpack.c.b16 %v889, %v865
    %v1178 = vpack.c.b16 %v890, %v866
    %v1179 = vpack.c.b16 %v891, %v867
    %v1180 = vpack.c.b16 %v892, %v868
    %v1181 = vpack.c.b16 %v917, %v893
    %v1182 = vpack.c.b16 %v918, %v894
    %v1183 = vpack.c.b16 %v919, %v895
    %v1184 = vpack.c.b16 %v920, %v896
    %v1185 = vpack.c.b16 %v921, %v897
    %v1186 = vpack.c.b16 %v922, %v898
    %v1187 = vpack.c.b16 %v923, %v899
    %v1188 = vpack.c.b16 %v924, %v900
    %v1189 = vpack.c.b16 %v925, %v901
    %v1190 = vpack.c.b16 %v926, %v902
    %v1191 = vpack.c.b16 %v927, %v903
    %v1192 = vpack.c.b16 %v928, %v904
    %v1193 = vpack.c.b16 %v929, %v905
    %v1194 = vpack.c.b16 %v930, %v906
    %v1195 = vpack.c.b16 %v931, %v907
    %v1196 = vpack.c.b16 %v932, %v908
    %v1197 = vpack.c.b16 %v933, %v909
    %v1198 = vpack.c.b16 %v934, %v910
    %v1199 = vpack.c.b16 %v935, %v911
    %v1200 = vpack.c.b16 %v936, %v912
    %v1201 = vpack.c.b16 %v937, %v913
    %v1202 = vpack.c.b16 %v938, %v914
    %v1203 = vpack.c.b16 %v939, %v915
    %v1204 = vpack.c.b16 %v940, %v916
    %v1205 = vpack.c.b16 %v965, %v941
    %v1206 = vpack.c.b16 %v966, %v942
    %v1207 = vpack.c.b16 %v967, %v943
    %v1208 = vpack.c.b16 %v968, %v944
    %v1209 = vpack.c.b16 %v969, %v945
    %v1210 = vpack.c.b16 %v970, %v946
    %v1211 = vpack.c.b16 %v971, %v947
    %v1212 = vpack.c.b16 %v972, %v948
    %v1213 = vpack.c.b16 %v973, %v949
    %v1214 = vpack.c.b16 %v974, %v950
    %v1215 = vpack.c.b16 %v975, %v951
    %v1216 = vpack.c.b16 %v976, %v952
    %v1217 = vpack.c.b16 %v977, %v953
    %v1218 = vpack.c.b16 %v978, %v954
    %v1219 = vpack.c.b16 %v979, %v955
    %v1220 = vpack.c.b16 %v980, %v956
    %v1221 = vpack.c.b16 %v981, %v957
    %v1222 = vpack.c.b16 %v982, %v958
    %v1223 = vpack.c.b16 %v983, %v959
    %v1224 = vpack.c.b16 %v984, %v960
    %v1225 = vpack.c.b16 %v985, %v961
    %v1226 = vpack.c.b16 %v986, %v962
    %v1227 = vpack.c.b16 %v987, %v963
    %v1228 = vpack.c.b16 %v988, %v964
    %v1229 = vpack.c.b16 %v1013, %v989
    %v1230 = vpack.c.b16 %v1014, %v990
    %v1231 = vpack.c.b16 %v1015, %v991
    %v1232 = vpack.c.b16 %v1016, %v992
    %v1233 = vpack.c.b16 %v1017, %v993
    %v1234 = vpack.c.b16 %v1018, %v994
    %v1235 = vpack.c.b16 %v1019, %v995
    %v1236 = vpack.c.b16 %v1020, %v996
    %v1237 = vpack.c.b16 %v1021, %v997
    %v1238 = vpack.c.b16 %v1022, %v998
    %v1239 = vpack.c.b16 %v1023, %v999
    %v1240 = vpack.c.b16 %v1024, %v1000
    %v1241 = vpack.c.b16 %v1025, %v1001
    %v1242 = vpack.c.b16 %v1026, %v1002
    %v1243 = vpack.c.b16 %v1027, %v1003
    %v1244 = vpack.c.b16 %v1028, %v1004
    %v1245 = vpack.c.b16 %v1029, %v1005
    %v1246 = vpack.c.b16 %v1030, %v1006
    %v1247 = vpack.c.b16 %v1031, %v1007
    %v1248 = vpack.c.b16 %v1032, %v1008
    %v1249 = vpack.c.b16 %v1033, %v1009
    %v1250 = vpack.c.b16 %v1034, %v1010
    %v1251 = vpack.c.b16 %v1035, %v1011
    %v1252 = vpack.c.b16 %v1036, %v1012
    %v1253 = vpack.c.b16 %v1061, %v1037
    %v1254 = vpack.c.b16 %v1062, %v1038
    %v1255 = vpack.c.b16 %v1063, %v1039
    %v1256 = vpack.c.b16 %v1064, %v1040
    %v1257 = vpack.c.b16 %v1065, %v1041
    %v1258 = vpack.c.b16 %v1066, %v1042
    %v1259 = vpack.c.b16 %v1067, %v1043
    %v1260 = vpack.c.b16 %v1068, %v1044
    %v1261 = vpack.c.b16 %v1069, %v1045
    %v1262 = vpack.c.b16 %v1070, %v1046
    %v1263 = vpack.c.b16 %v1071, %v1047
    %v1264 = vpack.c.b16 %v1072, %v1048
    %v1265 = vpack.c.b16 %v1073, %v1049
    %v1266 = vpack.c.b16 %v1074, %v1050
    %v1267 = vpack.c.b16 %v1075, %v1051
    %v1268 = vpack.c.b16 %v1076, %v1052
    %v1269 = vpack.c.b16 %v1077, %v1053
    %v1270 = vpack.c.b16 %v1078, %v1054
    %v1271 = vpack.c.b16 %v1079, %v1055
    %v1272 = vpack.c.b16 %v1080, %v1056
    %v1273 = vpack.c.b16 %v1081, %v1057
    %v1274 = vpack.c.b16 %v1082, %v1058
    %v1275 = vpack.c.b16 %v1083, %v1059
    %v1276 = vpack.c.b16 %v1084, %v1060
    %1469 = vmatpush.bf16.msra.mxu0 %v1253
    %1470 = vmatpush.bf16.msra.mxu0 %v1229
    %1471 = vmatpush.bf16.msra.mxu0 %v1205
    %1472 = vmatpush.bf16.msra.mxu0 %v1181
    %1473 = vmatpush.bf16.msra.mxu0 %v1157
    %1474 = vmatpush.bf16.msra.mxu0 %v1133
    %1475 = vmatpush.bf16.msra.mxu0 %v1109
    %1476 = vmatpush.bf16.msra.mxu0 %v1085
    %1477 = vmatmul.bf16.gmra.mxu0 %v508
    %v1478 = vpop.f32.mrf.mxu0
    %v1479 = vadd.f32 0.0, %v1478
    %v1480 = vpop.f32.mrf.mxu0
    %v1481 = vadd.f32 0.0, %v1480
    %1482 = vdwg.mxu0
    %1483 = vmatpush.bf16.msra.mxu0 %v1254
    %1484 = vmatpush.bf16.msra.mxu0 %v1230
    %1485 = vmatpush.bf16.msra.mxu0 %v1206
    %1486 = vmatpush.bf16.msra.mxu0 %v1182
    %1487 = vmatpush.bf16.msra.mxu0 %v1158
    %1488 = vmatpush.bf16.msra.mxu0 %v1134
    %1489 = vmatpush.bf16.msra.mxu0 %v1110
    %1490 = vmatpush.bf16.msra.mxu0 %v1086
    %1491 = vmatmul.bf16.gmra.mxu0 %v508
    %v1492 = vpop.f32.mrf.mxu0
    %v1493 = vadd.f32 0.0, %v1492
    %v1494 = vpop.f32.mrf.mxu0
    %v1495 = vadd.f32 0.0, %v1494
    %1496 = vdwg.mxu0
    %1497 = vmatpush.bf16.msra.mxu0 %v1255
    %1498 = vmatpush.bf16.msra.mxu0 %v1231
    %1499 = vmatpush.bf16.msra.mxu0 %v1207
    %1500 = vmatpush.bf16.msra.mxu0 %v1183
    %1501 = vmatpush.bf16.msra.mxu0 %v1159
    %1502 = vmatpush.bf16.msra.mxu0 %v1135
    %1503 = vmatpush.bf16.msra.mxu0 %v1111
    %1504 = vmatpush.bf16.msra.mxu0 %v1087
    %1505 = vmatmul.bf16.gmra.mxu0 %v508
    %v1506 = vpop.f32.mrf.mxu0
    %v1507 = vadd.f32 0.0, %v1506
    %v1508 = vpop.f32.mrf.mxu0
    %v1509 = vadd.f32 0.0, %v1508
    %1510 = vdwg.mxu0
    %1511 = vmatpush.bf16.msra.mxu0 %v1256
    %1512 = vmatpush.bf16.msra.mxu0 %v1232
    %1513 = vmatpush.bf16.msra.mxu0 %v1208
    %1514 = vmatpush.bf16.msra.mxu0 %v1184
    %1515 = vmatpush.bf16.msra.mxu0 %v1160
    %1516 = vmatpush.bf16.msra.mxu0 %v1136
    %1517 = vmatpush.bf16.msra.mxu0 %v1112
    %1518 = vmatpush.bf16.msra.mxu0 %v1088
    %1519 = vmatmul.bf16.gmra.mxu0 %v508
    %v1520 = vpop.f32.mrf.mxu0
    %v1521 = vadd.f32 0.0, %v1520
    %v1522 = vpop.f32.mrf.mxu0
    %v1523 = vadd.f32 0.0, %v1522
    %1524 = vdwg.mxu0
    %1525 = vmatpush.bf16.msra.mxu0 %v1257
    %1526 = vmatpush.bf16.msra.mxu0 %v1233
    %1527 = vmatpush.bf16.msra.mxu0 %v1209
    %1528 = vmatpush.bf16.msra.mxu0 %v1185
    %1529 = vmatpush.bf16.msra.mxu0 %v1161
    %1530 = vmatpush.bf16.msra.mxu0 %v1137
    %1531 = vmatpush.bf16.msra.mxu0 %v1113
    %1532 = vmatpush.bf16.msra.mxu0 %v1089
    %1533 = vmatmul.bf16.gmra.mxu0 %v508
    %v1534 = vpop.f32.mrf.mxu0
    %v1535 = vadd.f32 0.0, %v1534
    %v1536 = vpop.f32.mrf.mxu0
    %v1537 = vadd.f32 0.0, %v1536
    %1538 = vdwg.mxu0
    %1539 = vmatpush.bf16.msra.mxu0 %v1258
    %1540 = vmatpush.bf16.msra.mxu0 %v1234
    %1541 = vmatpush.bf16.msra.mxu0 %v1210
    %1542 = vmatpush.bf16.msra.mxu0 %v1186
    %1543 = vmatpush.bf16.msra.mxu0 %v1162
    %1544 = vmatpush.bf16.msra.mxu0 %v1138
    %1545 = vmatpush.bf16.msra.mxu0 %v1114
    %1546 = vmatpush.bf16.msra.mxu0 %v1090
    %1547 = vmatmul.bf16.gmra.mxu0 %v508
    %v1548 = vpop.f32.mrf.mxu0
    %v1549 = vadd.f32 0.0, %v1548
    %v1550 = vpop.f32.mrf.mxu0
    %v1551 = vadd.f32 0.0, %v1550
    %1552 = vdwg.mxu0
    %1553 = vmatpush.bf16.msra.mxu0 %v1259
    %1554 = vmatpush.bf16.msra.mxu0 %v1235
    %1555 = vmatpush.bf16.msra.mxu0 %v1211
    %1556 = vmatpush.bf16.msra.mxu0 %v1187
    %1557 = vmatpush.bf16.msra.mxu0 %v1163
    %1558 = vmatpush.bf16.msra.mxu0 %v1139
    %1559 = vmatpush.bf16.msra.mxu0 %v1115
    %1560 = vmatpush.bf16.msra.mxu0 %v1091
    %1561 = vmatmul.bf16.gmra.mxu0 %v508
    %v1562 = vpop.f32.mrf.mxu0
    %v1563 = vadd.f32 0.0, %v1562
    %v1564 = vpop.f32.mrf.mxu0
    %v1565 = vadd.f32 0.0, %v1564
    %1566 = vdwg.mxu0
    %1567 = vmatpush.bf16.msra.mxu0 %v1260
    %1568 = vmatpush.bf16.msra.mxu0 %v1236
    %1569 = vmatpush.bf16.msra.mxu0 %v1212
    %1570 = vmatpush.bf16.msra.mxu0 %v1188
    %1571 = vmatpush.bf16.msra.mxu0 %v1164
    %1572 = vmatpush.bf16.msra.mxu0 %v1140
    %1573 = vmatpush.bf16.msra.mxu0 %v1116
    %1574 = vmatpush.bf16.msra.mxu0 %v1092
    %1575 = vmatmul.bf16.gmra.mxu0 %v508
    %v1576 = vpop.f32.mrf.mxu0
    %v1577 = vadd.f32 0.0, %v1576
    %v1578 = vpop.f32.mrf.mxu0
    %v1579 = vadd.f32 0.0, %v1578
    %1580 = vdwg.mxu0
    %1581 = vmatpush.bf16.msra.mxu0 %v1261
    %1582 = vmatpush.bf16.msra.mxu0 %v1237
    %1583 = vmatpush.bf16.msra.mxu0 %v1213
    %1584 = vmatpush.bf16.msra.mxu0 %v1189
    %1585 = vmatpush.bf16.msra.mxu0 %v1165
    %1586 = vmatpush.bf16.msra.mxu0 %v1141
    %1587 = vmatpush.bf16.msra.mxu0 %v1117
    %1588 = vmatpush.bf16.msra.mxu0 %v1093
    %1589 = vmatmul.bf16.gmra.mxu0 %v508
    %v1590 = vpop.f32.mrf.mxu0
    %v1591 = vadd.f32 0.0, %v1590
    %v1592 = vpop.f32.mrf.mxu0
    %v1593 = vadd.f32 0.0, %v1592
    %1594 = vdwg.mxu0
    %1595 = vmatpush.bf16.msra.mxu0 %v1262
    %1596 = vmatpush.bf16.msra.mxu0 %v1238
    %1597 = vmatpush.bf16.msra.mxu0 %v1214
    %1598 = vmatpush.bf16.msra.mxu0 %v1190
    %1599 = vmatpush.bf16.msra.mxu0 %v1166
    %1600 = vmatpush.bf16.msra.mxu0 %v1142
    %1601 = vmatpush.bf16.msra.mxu0 %v1118
    %1602 = vmatpush.bf16.msra.mxu0 %v1094
    %1603 = vmatmul.bf16.gmra.mxu0 %v508
    %v1604 = vpop.f32.mrf.mxu0
    %v1605 = vadd.f32 0.0, %v1604
    %v1606 = vpop.f32.mrf.mxu0
    %v1607 = vadd.f32 0.0, %v1606
    %1608 = vdwg.mxu0
    %1609 = vmatpush.bf16.msra.mxu0 %v1263
    %1610 = vmatpush.bf16.msra.mxu0 %v1239
    %1611 = vmatpush.bf16.msra.mxu0 %v1215
    %1612 = vmatpush.bf16.msra.mxu0 %v1191
    %1613 = vmatpush.bf16.msra.mxu0 %v1167
    %1614 = vmatpush.bf16.msra.mxu0 %v1143
    %1615 = vmatpush.bf16.msra.mxu0 %v1119
    %1616 = vmatpush.bf16.msra.mxu0 %v1095
    %1617 = vmatmul.bf16.gmra.mxu0 %v508
    %v1618 = vpop.f32.mrf.mxu0
    %v1619 = vadd.f32 0.0, %v1618
    %v1620 = vpop.f32.mrf.mxu0
    %v1621 = vadd.f32 0.0, %v1620
    %1622 = vdwg.mxu0
    %1623 = vmatpush.bf16.msra.mxu0 %v1264
    %1624 = vmatpush.bf16.msra.mxu0 %v1240
    %1625 = vmatpush.bf16.msra.mxu0 %v1216
    %1626 = vmatpush.bf16.msra.mxu0 %v1192
    %1627 = vmatpush.bf16.msra.mxu0 %v1168
    %1628 = vmatpush.bf16.msra.mxu0 %v1144
    %1629 = vmatpush.bf16.msra.mxu0 %v1120
    %1630 = vmatpush.bf16.msra.mxu0 %v1096
    %1631 = vmatmul.bf16.gmra.mxu0 %v508
    %v1632 = vpop.f32.mrf.mxu0
    %v1633 = vadd.f32 0.0, %v1632
    %v1634 = vpop.f32.mrf.mxu0
    %v1635 = vadd.f32 0.0, %v1634
    %1636 = vdwg.mxu0
    %1637 = vmatpush.bf16.msra.mxu0 %v1265
    %1638 = vmatpush.bf16.msra.mxu0 %v1241
    %1639 = vmatpush.bf16.msra.mxu0 %v1217
    %1640 = vmatpush.bf16.msra.mxu0 %v1193
    %1641 = vmatpush.bf16.msra.mxu0 %v1169
    %1642 = vmatpush.bf16.msra.mxu0 %v1145
    %1643 = vmatpush.bf16.msra.mxu0 %v1121
    %1644 = vmatpush.bf16.msra.mxu0 %v1097
    %1645 = vmatmul.bf16.gmra.mxu0 %v508
    %v1646 = vpop.f32.mrf.mxu0
    %v1647 = vadd.f32 0.0, %v1646
    %v1648 = vpop.f32.mrf.mxu0
    %v1649 = vadd.f32 0.0, %v1648
    %1650 = vdwg.mxu0
    %1651 = vmatpush.bf16.msra.mxu0 %v1266
    %1652 = vmatpush.bf16.msra.mxu0 %v1242
    %1653 = vmatpush.bf16.msra.mxu0 %v1218
    %1654 = vmatpush.bf16.msra.mxu0 %v1194
    %1655 = vmatpush.bf16.msra.mxu0 %v1170
    %1656 = vmatpush.bf16.msra.mxu0 %v1146
    %1657 = vmatpush.bf16.msra.mxu0 %v1122
    %1658 = vmatpush.bf16.msra.mxu0 %v1098
    %1659 = vmatmul.bf16.gmra.mxu0 %v508
    %v1660 = vpop.f32.mrf.mxu0
    %v1661 = vadd.f32 0.0, %v1660
    %v1662 = vpop.f32.mrf.mxu0
    %v1663 = vadd.f32 0.0, %v1662
    %1664 = vdwg.mxu0
    %1665 = vmatpush.bf16.msra.mxu0 %v1267
    %1666 = vmatpush.bf16.msra.mxu0 %v1243
    %1667 = vmatpush.bf16.msra.mxu0 %v1219
    %1668 = vmatpush.bf16.msra.mxu0 %v1195
    %1669 = vmatpush.bf16.msra.mxu0 %v1171
    %1670 = vmatpush.bf16.msra.mxu0 %v1147
    %1671 = vmatpush.bf16.msra.mxu0 %v1123
    %1672 = vmatpush.bf16.msra.mxu0 %v1099
    %1673 = vmatmul.bf16.gmra.mxu0 %v508
    %v1674 = vpop.f32.mrf.mxu0
    %v1675 = vadd.f32 0.0, %v1674
    %v1676 = vpop.f32.mrf.mxu0
    %v1677 = vadd.f32 0.0, %v1676
    %1678 = vdwg.mxu0
    %1679 = vmatpush.bf16.msra.mxu0 %v1268
    %1680 = vmatpush.bf16.msra.mxu0 %v1244
    %1681 = vmatpush.bf16.msra.mxu0 %v1220
    %1682 = vmatpush.bf16.msra.mxu0 %v1196
    %1683 = vmatpush.bf16.msra.mxu0 %v1172
    %1684 = vmatpush.bf16.msra.mxu0 %v1148
    %1685 = vmatpush.bf16.msra.mxu0 %v1124
    %1686 = vmatpush.bf16.msra.mxu0 %v1100
    %1687 = vmatmul.bf16.gmra.mxu0 %v508
    %v1688 = vpop.f32.mrf.mxu0
    %v1689 = vadd.f32 0.0, %v1688
    %v1690 = vpop.f32.mrf.mxu0
    %v1691 = vadd.f32 0.0, %v1690
    %1692 = vdwg.mxu0
    %1693 = vmatpush.bf16.msra.mxu0 %v1269
    %1694 = vmatpush.bf16.msra.mxu0 %v1245
    %1695 = vmatpush.bf16.msra.mxu0 %v1221
    %1696 = vmatpush.bf16.msra.mxu0 %v1197
    %1697 = vmatpush.bf16.msra.mxu0 %v1173
    %1698 = vmatpush.bf16.msra.mxu0 %v1149
    %1699 = vmatpush.bf16.msra.mxu0 %v1125
    %1700 = vmatpush.bf16.msra.mxu0 %v1101
    %1701 = vmatmul.bf16.gmra.mxu0 %v508
    %v1702 = vpop.f32.mrf.mxu0
    %v1703 = vadd.f32 0.0, %v1702
    %v1704 = vpop.f32.mrf.mxu0
    %v1705 = vadd.f32 0.0, %v1704
    %1706 = vdwg.mxu0
    %1707 = vmatpush.bf16.msra.mxu0 %v1270
    %1708 = vmatpush.bf16.msra.mxu0 %v1246
    %1709 = vmatpush.bf16.msra.mxu0 %v1222
    %1710 = vmatpush.bf16.msra.mxu0 %v1198
    %1711 = vmatpush.bf16.msra.mxu0 %v1174
    %1712 = vmatpush.bf16.msra.mxu0 %v1150
    %1713 = vmatpush.bf16.msra.mxu0 %v1126
    %1714 = vmatpush.bf16.msra.mxu0 %v1102
    %1715 = vmatmul.bf16.gmra.mxu0 %v508
    %v1716 = vpop.f32.mrf.mxu0
    %v1717 = vadd.f32 0.0, %v1716
    %v1718 = vpop.f32.mrf.mxu0
    %v1719 = vadd.f32 0.0, %v1718
    %1720 = vdwg.mxu0
    %1721 = vmatpush.bf16.msra.mxu0 %v1271
    %1722 = vmatpush.bf16.msra.mxu0 %v1247
    %1723 = vmatpush.bf16.msra.mxu0 %v1223
    %1724 = vmatpush.bf16.msra.mxu0 %v1199
    %1725 = vmatpush.bf16.msra.mxu0 %v1175
    %1726 = vmatpush.bf16.msra.mxu0 %v1151
    %1727 = vmatpush.bf16.msra.mxu0 %v1127
    %1728 = vmatpush.bf16.msra.mxu0 %v1103
    %1729 = vmatmul.bf16.gmra.mxu0 %v508
    %v1730 = vpop.f32.mrf.mxu0
    %v1731 = vadd.f32 0.0, %v1730
    %v1732 = vpop.f32.mrf.mxu0
    %v1733 = vadd.f32 0.0, %v1732
    %1734 = vdwg.mxu0
    %1735 = vmatpush.bf16.msra.mxu0 %v1272
    %1736 = vmatpush.bf16.msra.mxu0 %v1248
    %1737 = vmatpush.bf16.msra.mxu0 %v1224
    %1738 = vmatpush.bf16.msra.mxu0 %v1200
    %1739 = vmatpush.bf16.msra.mxu0 %v1176
    %1740 = vmatpush.bf16.msra.mxu0 %v1152
    %1741 = vmatpush.bf16.msra.mxu0 %v1128
    %1742 = vmatpush.bf16.msra.mxu0 %v1104
    %1743 = vmatmul.bf16.gmra.mxu0 %v508
    %v1744 = vpop.f32.mrf.mxu0
    %v1745 = vadd.f32 0.0, %v1744
    %v1746 = vpop.f32.mrf.mxu0
    %v1747 = vadd.f32 0.0, %v1746
    %1748 = vdwg.mxu0
    %1749 = vmatpush.bf16.msra.mxu0 %v1273
    %1750 = vmatpush.bf16.msra.mxu0 %v1249
    %1751 = vmatpush.bf16.msra.mxu0 %v1225
    %1752 = vmatpush.bf16.msra.mxu0 %v1201
    %1753 = vmatpush.bf16.msra.mxu0 %v1177
    %1754 = vmatpush.bf16.msra.mxu0 %v1153
    %1755 = vmatpush.bf16.msra.mxu0 %v1129
    %1756 = vmatpush.bf16.msra.mxu0 %v1105
    %1757 = vmatmul.bf16.gmra.mxu0 %v508
    %v1758 = vpop.f32.mrf.mxu0
    %v1759 = vadd.f32 0.0, %v1758
    %v1760 = vpop.f32.mrf.mxu0
    %v1761 = vadd.f32 0.0, %v1760
    %1762 = vdwg.mxu0
    %1763 = vmatpush.bf16.msra.mxu0 %v1274
    %1764 = vmatpush.bf16.msra.mxu0 %v1250
    %1765 = vmatpush.bf16.msra.mxu0 %v1226
    %1766 = vmatpush.bf16.msra.mxu0 %v1202
    %1767 = vmatpush.bf16.msra.mxu0 %v1178
    %1768 = vmatpush.bf16.msra.mxu0 %v1154
    %1769 = vmatpush.bf16.msra.mxu0 %v1130
    %1770 = vmatpush.bf16.msra.mxu0 %v1106
    %1771 = vmatmul.bf16.gmra.mxu0 %v508
    %v1772 = vpop.f32.mrf.mxu0
    %v1773 = vadd.f32 0.0, %v1772
    %v1774 = vpop.f32.mrf.mxu0
    %v1775 = vadd.f32 0.0, %v1774
    %1776 = vdwg.mxu0
    %1777 = vmatpush.bf16.msra.mxu0 %v1275
    %1778 = vmatpush.bf16.msra.mxu0 %v1251
    %1779 = vmatpush.bf16.msra.mxu0 %v1227
    %1780 = vmatpush.bf16.msra.mxu0 %v1203
    %1781 = vmatpush.bf16.msra.mxu0 %v1179
    %1782 = vmatpush.bf16.msra.mxu0 %v1155
    %1783 = vmatpush.bf16.msra.mxu0 %v1131
    %1784 = vmatpush.bf16.msra.mxu0 %v1107
    %1785 = vmatmul.bf16.gmra.mxu0 %v508
    %v1786 = vpop.f32.mrf.mxu0
    %v1787 = vadd.f32 0.0, %v1786
    %v1788 = vpop.f32.mrf.mxu0
    %v1789 = vadd.f32 0.0, %v1788
    %1790 = vdwg.mxu0
    %1791 = vmatpush.bf16.msra.mxu0 %v1276
    %1792 = vmatpush.bf16.msra.mxu0 %v1252
    %1793 = vmatpush.bf16.msra.mxu0 %v1228
    %1794 = vmatpush.bf16.msra.mxu0 %v1204
    %1795 = vmatpush.bf16.msra.mxu0 %v1180
    %1796 = vmatpush.bf16.msra.mxu0 %v1156
    %1797 = vmatpush.bf16.msra.mxu0 %v1132
    %1798 = vmatpush.bf16.msra.mxu0 %v1108
    %1799 = vmatmul.bf16.gmra.mxu0 %v508
    %v1800 = vpop.f32.mrf.mxu0
    %v1801 = vadd.f32 0.0, %v1800
    %v1802 = vpop.f32.mrf.mxu0
    %v1803 = vadd.f32 0.0, %v1802
    %1804 = vdwg.mxu0
    %v1805 = vpack.c.bf16 %v1493, %v1479
    %v1806 = vpack.c.bf16 %v1521, %v1507
    %v1807 = vpack.c.bf16 %v1549, %v1535
    %v1808 = vpack.c.bf16 %v1577, %v1563
    %v1809 = vpack.c.bf16 %v1495, %v1481
    %v1810 = vpack.c.bf16 %v1523, %v1509
    %v1811 = vpack.c.bf16 %v1551, %v1537
    %v1812 = vpack.c.bf16 %v1579, %v1565
    %v1813 = vpack.c.bf16 %v1605, %v1591
    %v1814 = vpack.c.bf16 %v1633, %v1619
    %v1815 = vpack.c.bf16 %v1661, %v1647
    %v1816 = vpack.c.bf16 %v1689, %v1675
    %v1817 = vpack.c.bf16 %v1607, %v1593
    %v1818 = vpack.c.bf16 %v1635, %v1621
    %v1819 = vpack.c.bf16 %v1663, %v1649
    %v1820 = vpack.c.bf16 %v1691, %v1677
    %v1821 = vpack.c.bf16 %v1717, %v1703
    %v1822 = vpack.c.bf16 %v1745, %v1731
    %v1823 = vpack.c.bf16 %v1773, %v1759
    %v1824 = vpack.c.bf16 %v1801, %v1787
    %v1825 = vpack.c.bf16 %v1719, %v1705
    %v1826 = vpack.c.bf16 %v1747, %v1733
    %v1827 = vpack.c.bf16 %v1775, %v1761
    %v1828 = vpack.c.bf16 %v1803, %v1789
    %1829 = vmatpush.bf16.xpose.msra.mxu0 0
    %1830 = vmatpush.bf16.xpose.msra.mxu0 0
    %1831 = vmatpush.bf16.xpose.msra.mxu0 0
    %1832 = vmatpush.bf16.xpose.msra.mxu0 0
    %1833 = vmatpush.bf16.xpose.msra.mxu0 0
    %1834 = vmatpush.bf16.xpose.msra.mxu0 0
    %1835 = vmatpush.bf16.xpose.msra.mxu0 0
    %1836 = vmatpush.bf16.xpose.msra.mxu0 %v1813
    %1837 = vmatmul.bf16.gmra.mxu0 %v1805
    %v1838 = vpop.f32.mrf.mxu0
    %v1839 = vadd.f32 0.0, %v1838
    %v1840 = vpop.f32.mrf.mxu0
    %1841 = vdwg.mxu0
    %vm1842 = vcmask 64512
    %v1843 = vsel %vm1842, %v1839, -inf
    %1844 = vmax.xlane.f32.xlu0 %v1843
    %v1845 = vpop.xlane.xlu0 %1844
    %v1846 = vsub.f32 %v1839, %v1845
    %v1847 = vmul.f32 %v1846, 1.442695
    %v1848 = vpow.pop %v1847
    %v1849 = vsel %vm1842, %v1848, 0.0
    %1850 = vadd.xlane.f32.xlu0 %v1849
    %v1851 = vpop.xlane.xlu0 %1850
    %v1852 = vrcp.pop %v1851
    %v1853 = vmul.f32 %v1848, %v1852
    %v1854 = vpack.c.bf16 %v1853, %v1853
    %v1856 = vsel %vm1842, %v1854, 0
    %vm1858 = vcmask 1043456
    %v1860 = vsel %vm1858, %v1821, 0
    %1862 = vmatpush.bf16.msra.mxu0 0
    %1863 = vmatpush.bf16.msra.mxu0 0
    %1864 = vmatpush.bf16.msra.mxu0 0
    %1865 = vmatpush.bf16.msra.mxu0 0
    %1866 = vmatpush.bf16.msra.mxu0 0
    %1867 = vmatpush.bf16.msra.mxu0 0
    %1868 = vmatpush.bf16.msra.mxu0 0
    %1869 = vmatpush.bf16.msra.mxu0 %v1860
    %1870 = vmatmul.bf16.gmra.mxu0 %v1856
    %v1871 = vpop.f32.mrf.mxu0
    %v1872 = vadd.f32 0.0, %v1871
    %v1873 = vpop.f32.mrf.mxu0
    %1874 = vdwg.mxu0
    %v1876 = vunpack.c.h.b16 %v1805
    %v1877 = vpack.c.b16 %v1876, %v1876
    %v1880 = vunpack.c.h.b16 %v1813
    %v1881 = vpack.c.b16 %v1880, %v1880
    %1883 = vmatpush.bf16.xpose.msra.mxu0 0
    %1884 = vmatpush.bf16.xpose.msra.mxu0 0
    %1885 = vmatpush.bf16.xpose.msra.mxu0 0
    %1886 = vmatpush.bf16.xpose.msra.mxu0 0
    %1887 = vmatpush.bf16.xpose.msra.mxu0 0
    %1888 = vmatpush.bf16.xpose.msra.mxu0 0
    %1889 = vmatpush.bf16.xpose.msra.mxu0 0
    %1890 = vmatpush.bf16.xpose.msra.mxu0 %v1881
    %1891 = vmatmul.bf16.gmra.mxu0 %v1877
    %v1892 = vpop.f32.mrf.mxu0
    %v1893 = vadd.f32 0.0, %v1892
    %v1894 = vpop.f32.mrf.mxu0
    %1895 = vdwg.mxu0
    %v1896 = vsel %vm1842, %v1893, -inf
    %1897 = vmax.xlane.f32.xlu0 %v1896
    %v1898 = vpop.xlane.xlu0 %1897
    %v1899 = vsub.f32 %v1893, %v1898
    %v1900 = vmul.f32 %v1899, 1.442695
    %v1901 = vpow.pop %v1900
    %v1902 = vsel %vm1842, %v1901, 0.0
    %1903 = vadd.xlane.f32.xlu0 %v1902
    %v1904 = vpop.xlane.xlu0 %1903
    %v1905 = vrcp.pop %v1904
    %v1906 = vmul.f32 %v1901, %v1905
    %v1907 = vpack.c.bf16 %v1906, %v1906
    %v1909 = vunpack.c.h.b16 %v1821
    %v1910 = vpack.c.b16 %v1909, %v1909
    %v1912 = vsel %vm1842, %v1907, 0
    %v1915 = vsel %vm1858, %v1910, 0
    %1917 = vmatpush.bf16.msra.mxu0 0
    %1918 = vmatpush.bf16.msra.mxu0 0
    %1919 = vmatpush.bf16.msra.mxu0 0
    %1920 = vmatpush.bf16.msra.mxu0 0
    %1921 = vmatpush.bf16.msra.mxu0 0
    %1922 = vmatpush.bf16.msra.mxu0 0
    %1923 = vmatpush.bf16.msra.mxu0 0
    %1924 = vmatpush.bf16.msra.mxu0 %v1915
    %1925 = vmatmul.bf16.gmra.mxu0 %v1912
    %v1926 = vpop.f32.mrf.mxu0
    %v1927 = vadd.f32 0.0, %v1926
    %v1928 = vpop.f32.mrf.mxu0
    %1929 = vdwg.mxu0
    %1930 = vmatpush.bf16.xpose.msra.mxu0 0
    %1931 = vmatpush.bf16.xpose.msra.mxu0 0
    %1932 = vmatpush.bf16.xpose.msra.mxu0 0
    %1933 = vmatpush.bf16.xpose.msra.mxu0 0
    %1934 = vmatpush.bf16.xpose.msra.mxu0 0
    %1935 = vmatpush.bf16.xpose.msra.mxu0 0
    %1936 = vmatpush.bf16.xpose.msra.mxu0 0
    %1937 = vmatpush.bf16.xpose.msra.mxu0 %v1814
    %1938 = vmatmul.bf16.gmra.mxu0 %v1806
    %v1939 = vpop.f32.mrf.mxu0
    %v1940 = vadd.f32 0.0, %v1939
    %v1941 = vpop.f32.mrf.mxu0
    %1942 = vdwg.mxu0
    %v1943 = vsel %vm1842, %v1940, -inf
    %1944 = vmax.xlane.f32.xlu0 %v1943
    %v1945 = vpop.xlane.xlu0 %1944
    %v1946 = vsub.f32 %v1940, %v1945
    %v1947 = vmul.f32 %v1946, 1.442695
    %v1948 = vpow.pop %v1947
    %v1949 = vsel %vm1842, %v1948, 0.0
    %1950 = vadd.xlane.f32.xlu0 %v1949
    %v1951 = vpop.xlane.xlu0 %1950
    %v1952 = vrcp.pop %v1951
    %v1953 = vmul.f32 %v1948, %v1952
    %v1954 = vpack.c.bf16 %v1953, %v1953
    %v1956 = vsel %vm1842, %v1954, 0
    %v1959 = vsel %vm1858, %v1822, 0
    %1961 = vmatpush.bf16.msra.mxu0 0
    %1962 = vmatpush.bf16.msra.mxu0 0
    %1963 = vmatpush.bf16.msra.mxu0 0
    %1964 = vmatpush.bf16.msra.mxu0 0
    %1965 = vmatpush.bf16.msra.mxu0 0
    %1966 = vmatpush.bf16.msra.mxu0 0
    %1967 = vmatpush.bf16.msra.mxu0 0
    %1968 = vmatpush.bf16.msra.mxu0 %v1959
    %1969 = vmatmul.bf16.gmra.mxu0 %v1956
    %v1970 = vpop.f32.mrf.mxu0
    %v1971 = vadd.f32 0.0, %v1970
    %v1972 = vpop.f32.mrf.mxu0
    %1973 = vdwg.mxu0
    %v1975 = vunpack.c.h.b16 %v1806
    %v1976 = vpack.c.b16 %v1975, %v1975
    %v1979 = vunpack.c.h.b16 %v1814
    %v1980 = vpack.c.b16 %v1979, %v1979
    %1982 = vmatpush.bf16.xpose.msra.mxu0 0
    %1983 = vmatpush.bf16.xpose.msra.mxu0 0
    %1984 = vmatpush.bf16.xpose.msra.mxu0 0
    %1985 = vmatpush.bf16.xpose.msra.mxu0 0
    %1986 = vmatpush.bf16.xpose.msra.mxu0 0
    %1987 = vmatpush.bf16.xpose.msra.mxu0 0
    %1988 = vmatpush.bf16.xpose.msra.mxu0 0
    %1989 = vmatpush.bf16.xpose.msra.mxu0 %v1980
    %1990 = vmatmul.bf16.gmra.mxu0 %v1976
    %v1991 = vpop.f32.mrf.mxu0
    %v1992 = vadd.f32 0.0, %v1991
    %v1993 = vpop.f32.mrf.mxu0
    %1994 = vdwg.mxu0
    %v1995 = vsel %vm1842, %v1992, -inf
    %1996 = vmax.xlane.f32.xlu0 %v1995
    %v1997 = vpop.xlane.xlu0 %1996
    %v1998 = vsub.f32 %v1992, %v1997
    %v1999 = vmul.f32 %v1998, 1.442695
    %v2000 = vpow.pop %v1999
    %v2001 = vsel %vm1842, %v2000, 0.0
    %2002 = vadd.xlane.f32.xlu0 %v2001
    %v2003 = vpop.xlane.xlu0 %2002
    %v2004 = vrcp.pop %v2003
    %v2005 = vmul.f32 %v2000, %v2004
    %v2006 = vpack.c.bf16 %v2005, %v2005
    %v2008 = vunpack.c.h.b16 %v1822
    %v2009 = vpack.c.b16 %v2008, %v2008
    %v2011 = vsel %vm1842, %v2006, 0
    %v2014 = vsel %vm1858, %v2009, 0
    %2016 = vmatpush.bf16.msra.mxu0 0
    %2017 = vmatpush.bf16.msra.mxu0 0
    %2018 = vmatpush.bf16.msra.mxu0 0
    %2019 = vmatpush.bf16.msra.mxu0 0
    %2020 = vmatpush.bf16.msra.mxu0 0
    %2021 = vmatpush.bf16.msra.mxu0 0
    %2022 = vmatpush.bf16.msra.mxu0 0
    %2023 = vmatpush.bf16.msra.mxu0 %v2014
    %2024 = vmatmul.bf16.gmra.mxu0 %v2011
    %v2025 = vpop.f32.mrf.mxu0
    %v2026 = vadd.f32 0.0, %v2025
    %v2027 = vpop.f32.mrf.mxu0
    %2028 = vdwg.mxu0
    %2029 = vmatpush.bf16.xpose.msra.mxu0 0
    %2030 = vmatpush.bf16.xpose.msra.mxu0 0
    %2031 = vmatpush.bf16.xpose.msra.mxu0 0
    %2032 = vmatpush.bf16.xpose.msra.mxu0 0
    %2033 = vmatpush.bf16.xpose.msra.mxu0 0
    %2034 = vmatpush.bf16.xpose.msra.mxu0 0
    %2035 = vmatpush.bf16.xpose.msra.mxu0 0
    %2036 = vmatpush.bf16.xpose.msra.mxu0 %v1815
    %2037 = vmatmul.bf16.gmra.mxu0 %v1807
    %v2038 = vpop.f32.mrf.mxu0
    %v2039 = vadd.f32 0.0, %v2038
    %v2040 = vpop.f32.mrf.mxu0
    %2041 = vdwg.mxu0
    %v2042 = vsel %vm1842, %v2039, -inf
    %2043 = vmax.xlane.f32.xlu0 %v2042
    %v2044 = vpop.xlane.xlu0 %2043
    %v2045 = vsub.f32 %v2039, %v2044
    %v2046 = vmul.f32 %v2045, 1.442695
    %v2047 = vpow.pop %v2046
    %v2048 = vsel %vm1842, %v2047, 0.0
    %2049 = vadd.xlane.f32.xlu0 %v2048
    %v2050 = vpop.xlane.xlu0 %2049
    %v2051 = vrcp.pop %v2050
    %v2052 = vmul.f32 %v2047, %v2051
    %v2053 = vpack.c.bf16 %v2052, %v2052
    %v2055 = vsel %vm1842, %v2053, 0
    %v2058 = vsel %vm1858, %v1823, 0
    %2060 = vmatpush.bf16.msra.mxu0 0
    %2061 = vmatpush.bf16.msra.mxu0 0
    %2062 = vmatpush.bf16.msra.mxu0 0
    %2063 = vmatpush.bf16.msra.mxu0 0
    %2064 = vmatpush.bf16.msra.mxu0 0
    %2065 = vmatpush.bf16.msra.mxu0 0
    %2066 = vmatpush.bf16.msra.mxu0 0
    %2067 = vmatpush.bf16.msra.mxu0 %v2058
    %2068 = vmatmul.bf16.gmra.mxu0 %v2055
    %v2069 = vpop.f32.mrf.mxu0
    %v2070 = vadd.f32 0.0, %v2069
    %v2071 = vpop.f32.mrf.mxu0
    %2072 = vdwg.mxu0
    %v2074 = vunpack.c.h.b16 %v1807
    %v2075 = vpack.c.b16 %v2074, %v2074
    %v2078 = vunpack.c.h.b16 %v1815
    %v2079 = vpack.c.b16 %v2078, %v2078
    %2081 = vmatpush.bf16.xpose.msra.mxu0 0
    %2082 = vmatpush.bf16.xpose.msra.mxu0 0
    %2083 = vmatpush.bf16.xpose.msra.mxu0 0
    %2084 = vmatpush.bf16.xpose.msra.mxu0 0
    %2085 = vmatpush.bf16.xpose.msra.mxu0 0
    %2086 = vmatpush.bf16.xpose.msra.mxu0 0
    %2087 = vmatpush.bf16.xpose.msra.mxu0 0
    %2088 = vmatpush.bf16.xpose.msra.mxu0 %v2079
    %2089 = vmatmul.bf16.gmra.mxu0 %v2075
    %v2090 = vpop.f32.mrf.mxu0
    %v2091 = vadd.f32 0.0, %v2090
    %v2092 = vpop.f32.mrf.mxu0
    %2093 = vdwg.mxu0
    %v2094 = vsel %vm1842, %v2091, -inf
    %2095 = vmax.xlane.f32.xlu0 %v2094
    %v2096 = vpop.xlane.xlu0 %2095
    %v2097 = vsub.f32 %v2091, %v2096
    %v2098 = vmul.f32 %v2097, 1.442695
    %v2099 = vpow.pop %v2098
    %v2100 = vsel %vm1842, %v2099, 0.0
    %2101 = vadd.xlane.f32.xlu0 %v2100
    %v2102 = vpop.xlane.xlu0 %2101
    %v2103 = vrcp.pop %v2102
    %v2104 = vmul.f32 %v2099, %v2103
    %v2105 = vpack.c.bf16 %v2104, %v2104
    %v2107 = vunpack.c.h.b16 %v1823
    %v2108 = vpack.c.b16 %v2107, %v2107
    %v2110 = vsel %vm1842, %v2105, 0
    %v2113 = vsel %vm1858, %v2108, 0
    %2115 = vmatpush.bf16.msra.mxu0 0
    %2116 = vmatpush.bf16.msra.mxu0 0
    %2117 = vmatpush.bf16.msra.mxu0 0
    %2118 = vmatpush.bf16.msra.mxu0 0
    %2119 = vmatpush.bf16.msra.mxu0 0
    %2120 = vmatpush.bf16.msra.mxu0 0
    %2121 = vmatpush.bf16.msra.mxu0 0
    %2122 = vmatpush.bf16.msra.mxu0 %v2113
    %2123 = vmatmul.bf16.gmra.mxu0 %v2110
    %v2124 = vpop.f32.mrf.mxu0
    %v2125 = vadd.f32 0.0, %v2124
    %v2126 = vpop.f32.mrf.mxu0
    %2127 = vdwg.mxu0
    %2128 = vmatpush.bf16.xpose.msra.mxu0 0
    %2129 = vmatpush.bf16.xpose.msra.mxu0 0
    %2130 = vmatpush.bf16.xpose.msra.mxu0 0
    %2131 = vmatpush.bf16.xpose.msra.mxu0 0
    %2132 = vmatpush.bf16.xpose.msra.mxu0 0
    %2133 = vmatpush.bf16.xpose.msra.mxu0 0
    %2134 = vmatpush.bf16.xpose.msra.mxu0 0
    %2135 = vmatpush.bf16.xpose.msra.mxu0 %v1816
    %2136 = vmatmul.bf16.gmra.mxu0 %v1808
    %v2137 = vpop.f32.mrf.mxu0
    %v2138 = vadd.f32 0.0, %v2137
    %v2139 = vpop.f32.mrf.mxu0
    %2140 = vdwg.mxu0
    %v2141 = vsel %vm1842, %v2138, -inf
    %2142 = vmax.xlane.f32.xlu0 %v2141
    %v2143 = vpop.xlane.xlu0 %2142
    %v2144 = vsub.f32 %v2138, %v2143
    %v2145 = vmul.f32 %v2144, 1.442695
    %v2146 = vpow.pop %v2145
    %v2147 = vsel %vm1842, %v2146, 0.0
    %2148 = vadd.xlane.f32.xlu0 %v2147
    %v2149 = vpop.xlane.xlu0 %2148
    %v2150 = vrcp.pop %v2149
    %v2151 = vmul.f32 %v2146, %v2150
    %v2152 = vpack.c.bf16 %v2151, %v2151
    %v2154 = vsel %vm1842, %v2152, 0
    %v2157 = vsel %vm1858, %v1824, 0
    %2159 = vmatpush.bf16.msra.mxu0 0
    %2160 = vmatpush.bf16.msra.mxu0 0
    %2161 = vmatpush.bf16.msra.mxu0 0
    %2162 = vmatpush.bf16.msra.mxu0 0
    %2163 = vmatpush.bf16.msra.mxu0 0
    %2164 = vmatpush.bf16.msra.mxu0 0
    %2165 = vmatpush.bf16.msra.mxu0 0
    %2166 = vmatpush.bf16.msra.mxu0 %v2157
    %2167 = vmatmul.bf16.gmra.mxu0 %v2154
    %v2168 = vpop.f32.mrf.mxu0
    %v2169 = vadd.f32 0.0, %v2168
    %v2170 = vpop.f32.mrf.mxu0
    %2171 = vdwg.mxu0
    %v2173 = vunpack.c.h.b16 %v1808
    %v2174 = vpack.c.b16 %v2173, %v2173
    %v2177 = vunpack.c.h.b16 %v1816
    %v2178 = vpack.c.b16 %v2177, %v2177
    %2180 = vmatpush.bf16.xpose.msra.mxu0 0
    %2181 = vmatpush.bf16.xpose.msra.mxu0 0
    %2182 = vmatpush.bf16.xpose.msra.mxu0 0
    %2183 = vmatpush.bf16.xpose.msra.mxu0 0
    %2184 = vmatpush.bf16.xpose.msra.mxu0 0
    %2185 = vmatpush.bf16.xpose.msra.mxu0 0
    %2186 = vmatpush.bf16.xpose.msra.mxu0 0
    %2187 = vmatpush.bf16.xpose.msra.mxu0 %v2178
    %2188 = vmatmul.bf16.gmra.mxu0 %v2174
    %v2189 = vpop.f32.mrf.mxu0
    %v2190 = vadd.f32 0.0, %v2189
    %v2191 = vpop.f32.mrf.mxu0
    %2192 = vdwg.mxu0
    %v2193 = vsel %vm1842, %v2190, -inf
    %2194 = vmax.xlane.f32.xlu0 %v2193
    %v2195 = vpop.xlane.xlu0 %2194
    %v2196 = vsub.f32 %v2190, %v2195
    %v2197 = vmul.f32 %v2196, 1.442695
    %v2198 = vpow.pop %v2197
    %v2199 = vsel %vm1842, %v2198, 0.0
    %2200 = vadd.xlane.f32.xlu0 %v2199
    %v2201 = vpop.xlane.xlu0 %2200
    %v2202 = vrcp.pop %v2201
    %v2203 = vmul.f32 %v2198, %v2202
    %v2204 = vpack.c.bf16 %v2203, %v2203
    %v2206 = vunpack.c.h.b16 %v1824
    %v2207 = vpack.c.b16 %v2206, %v2206
    %v2209 = vsel %vm1842, %v2204, 0
    %v2212 = vsel %vm1858, %v2207, 0
    %2214 = vmatpush.bf16.msra.mxu0 0
    %2215 = vmatpush.bf16.msra.mxu0 0
    %2216 = vmatpush.bf16.msra.mxu0 0
    %2217 = vmatpush.bf16.msra.mxu0 0
    %2218 = vmatpush.bf16.msra.mxu0 0
    %2219 = vmatpush.bf16.msra.mxu0 0
    %2220 = vmatpush.bf16.msra.mxu0 0
    %2221 = vmatpush.bf16.msra.mxu0 %v2212
    %2222 = vmatmul.bf16.gmra.mxu0 %v2209
    %v2223 = vpop.f32.mrf.mxu0
    %v2224 = vadd.f32 0.0, %v2223
    %v2225 = vpop.f32.mrf.mxu0
    %2226 = vdwg.mxu0
    %2227 = vmatpush.bf16.xpose.msra.mxu0 0
    %2228 = vmatpush.bf16.xpose.msra.mxu0 0
    %2229 = vmatpush.bf16.xpose.msra.mxu0 0
    %2230 = vmatpush.bf16.xpose.msra.mxu0 0
    %2231 = vmatpush.bf16.xpose.msra.mxu0 0
    %2232 = vmatpush.bf16.xpose.msra.mxu0 0
    %2233 = vmatpush.bf16.xpose.msra.mxu0 0
    %2234 = vmatpush.bf16.xpose.msra.mxu0 %v1817
    %2235 = vmatmul.bf16.gmra.mxu0 %v1809
    %v2236 = vpop.f32.mrf.mxu0
    %v2237 = vadd.f32 0.0, %v2236
    %v2238 = vpop.f32.mrf.mxu0
    %2239 = vdwg.mxu0
    %v2240 = vsel %vm1842, %v2237, -inf
    %2241 = vmax.xlane.f32.xlu0 %v2240
    %v2242 = vpop.xlane.xlu0 %2241
    %v2243 = vsub.f32 %v2237, %v2242
    %v2244 = vmul.f32 %v2243, 1.442695
    %v2245 = vpow.pop %v2244
    %v2246 = vsel %vm1842, %v2245, 0.0
    %2247 = vadd.xlane.f32.xlu0 %v2246
    %v2248 = vpop.xlane.xlu0 %2247
    %v2249 = vrcp.pop %v2248
    %v2250 = vmul.f32 %v2245, %v2249
    %v2251 = vpack.c.bf16 %v2250, %v2250
    %v2253 = vsel %vm1842, %v2251, 0
    %v2256 = vsel %vm1858, %v1825, 0
    %2258 = vmatpush.bf16.msra.mxu0 0
    %2259 = vmatpush.bf16.msra.mxu0 0
    %2260 = vmatpush.bf16.msra.mxu0 0
    %2261 = vmatpush.bf16.msra.mxu0 0
    %2262 = vmatpush.bf16.msra.mxu0 0
    %2263 = vmatpush.bf16.msra.mxu0 0
    %2264 = vmatpush.bf16.msra.mxu0 0
    %2265 = vmatpush.bf16.msra.mxu0 %v2256
    %2266 = vmatmul.bf16.gmra.mxu0 %v2253
    %v2267 = vpop.f32.mrf.mxu0
    %v2268 = vadd.f32 0.0, %v2267
    %v2269 = vpop.f32.mrf.mxu0
    %2270 = vdwg.mxu0
    %v2272 = vunpack.c.h.b16 %v1809
    %v2273 = vpack.c.b16 %v2272, %v2272
    %v2276 = vunpack.c.h.b16 %v1817
    %v2277 = vpack.c.b16 %v2276, %v2276
    %2279 = vmatpush.bf16.xpose.msra.mxu0 0
    %2280 = vmatpush.bf16.xpose.msra.mxu0 0
    %2281 = vmatpush.bf16.xpose.msra.mxu0 0
    %2282 = vmatpush.bf16.xpose.msra.mxu0 0
    %2283 = vmatpush.bf16.xpose.msra.mxu0 0
    %2284 = vmatpush.bf16.xpose.msra.mxu0 0
    %2285 = vmatpush.bf16.xpose.msra.mxu0 0
    %2286 = vmatpush.bf16.xpose.msra.mxu0 %v2277
    %2287 = vmatmul.bf16.gmra.mxu0 %v2273
    %v2288 = vpop.f32.mrf.mxu0
    %v2289 = vadd.f32 0.0, %v2288
    %v2290 = vpop.f32.mrf.mxu0
    %2291 = vdwg.mxu0
    %v2292 = vsel %vm1842, %v2289, -inf
    %2293 = vmax.xlane.f32.xlu0 %v2292
    %v2294 = vpop.xlane.xlu0 %2293
    %v2295 = vsub.f32 %v2289, %v2294
    %v2296 = vmul.f32 %v2295, 1.442695
    %v2297 = vpow.pop %v2296
    %v2298 = vsel %vm1842, %v2297, 0.0
    %2299 = vadd.xlane.f32.xlu0 %v2298
    %v2300 = vpop.xlane.xlu0 %2299
    %v2301 = vrcp.pop %v2300
    %v2302 = vmul.f32 %v2297, %v2301
    %v2303 = vpack.c.bf16 %v2302, %v2302
    %v2305 = vunpack.c.h.b16 %v1825
    %v2306 = vpack.c.b16 %v2305, %v2305
    %v2308 = vsel %vm1842, %v2303, 0
    %v2311 = vsel %vm1858, %v2306, 0
    %2313 = vmatpush.bf16.msra.mxu0 0
    %2314 = vmatpush.bf16.msra.mxu0 0
    %2315 = vmatpush.bf16.msra.mxu0 0
    %2316 = vmatpush.bf16.msra.mxu0 0
    %2317 = vmatpush.bf16.msra.mxu0 0
    %2318 = vmatpush.bf16.msra.mxu0 0
    %2319 = vmatpush.bf16.msra.mxu0 0
    %2320 = vmatpush.bf16.msra.mxu0 %v2311
    %2321 = vmatmul.bf16.gmra.mxu0 %v2308
    %v2322 = vpop.f32.mrf.mxu0
    %v2323 = vadd.f32 0.0, %v2322
    %v2324 = vpop.f32.mrf.mxu0
    %2325 = vdwg.mxu0
    %2326 = vmatpush.bf16.xpose.msra.mxu0 0
    %2327 = vmatpush.bf16.xpose.msra.mxu0 0
    %2328 = vmatpush.bf16.xpose.msra.mxu0 0
    %2329 = vmatpush.bf16.xpose.msra.mxu0 0
    %2330 = vmatpush.bf16.xpose.msra.mxu0 0
    %2331 = vmatpush.bf16.xpose.msra.mxu0 0
    %2332 = vmatpush.bf16.xpose.msra.mxu0 0
    %2333 = vmatpush.bf16.xpose.msra.mxu0 %v1818
    %2334 = vmatmul.bf16.gmra.mxu0 %v1810
    %v2335 = vpop.f32.mrf.mxu0
    %v2336 = vadd.f32 0.0, %v2335
    %v2337 = vpop.f32.mrf.mxu0
    %2338 = vdwg.mxu0
    %v2339 = vsel %vm1842, %v2336, -inf
    %2340 = vmax.xlane.f32.xlu0 %v2339
    %v2341 = vpop.xlane.xlu0 %2340
    %v2342 = vsub.f32 %v2336, %v2341
    %v2343 = vmul.f32 %v2342, 1.442695
    %v2344 = vpow.pop %v2343
    %v2345 = vsel %vm1842, %v2344, 0.0
    %2346 = vadd.xlane.f32.xlu0 %v2345
    %v2347 = vpop.xlane.xlu0 %2346
    %v2348 = vrcp.pop %v2347
    %v2349 = vmul.f32 %v2344, %v2348
    %v2350 = vpack.c.bf16 %v2349, %v2349
    %v2352 = vsel %vm1842, %v2350, 0
    %v2355 = vsel %vm1858, %v1826, 0
    %2357 = vmatpush.bf16.msra.mxu0 0
    %2358 = vmatpush.bf16.msra.mxu0 0
    %2359 = vmatpush.bf16.msra.mxu0 0
    %2360 = vmatpush.bf16.msra.mxu0 0
    %2361 = vmatpush.bf16.msra.mxu0 0
    %2362 = vmatpush.bf16.msra.mxu0 0
    %2363 = vmatpush.bf16.msra.mxu0 0
    %2364 = vmatpush.bf16.msra.mxu0 %v2355
    %2365 = vmatmul.bf16.gmra.mxu0 %v2352
    %v2366 = vpop.f32.mrf.mxu0
    %v2367 = vadd.f32 0.0, %v2366
    %v2368 = vpop.f32.mrf.mxu0
    %2369 = vdwg.mxu0
    %v2371 = vunpack.c.h.b16 %v1810
    %v2372 = vpack.c.b16 %v2371, %v2371
    %v2375 = vunpack.c.h.b16 %v1818
    %v2376 = vpack.c.b16 %v2375, %v2375
    %2378 = vmatpush.bf16.xpose.msra.mxu0 0
    %2379 = vmatpush.bf16.xpose.msra.mxu0 0
    %2380 = vmatpush.bf16.xpose.msra.mxu0 0
    %2381 = vmatpush.bf16.xpose.msra.mxu0 0
    %2382 = vmatpush.bf16.xpose.msra.mxu0 0
    %2383 = vmatpush.bf16.xpose.msra.mxu0 0
    %2384 = vmatpush.bf16.xpose.msra.mxu0 0
    %2385 = vmatpush.bf16.xpose.msra.mxu0 %v2376
    %2386 = vmatmul.bf16.gmra.mxu0 %v2372
    %v2387 = vpop.f32.mrf.mxu0
    %v2388 = vadd.f32 0.0, %v2387
    %v2389 = vpop.f32.mrf.mxu0
    %2390 = vdwg.mxu0
    %v2391 = vsel %vm1842, %v2388, -inf
    %2392 = vmax.xlane.f32.xlu0 %v2391
    %v2393 = vpop.xlane.xlu0 %2392
    %v2394 = vsub.f32 %v2388, %v2393
    %v2395 = vmul.f32 %v2394, 1.442695
    %v2396 = vpow.pop %v2395
    %v2397 = vsel %vm1842, %v2396, 0.0
    %2398 = vadd.xlane.f32.xlu0 %v2397
    %v2399 = vpop.xlane.xlu0 %2398
    %v2400 = vrcp.pop %v2399
    %v2401 = vmul.f32 %v2396, %v2400
    %v2402 = vpack.c.bf16 %v2401, %v2401
    %v2404 = vunpack.c.h.b16 %v1826
    %v2405 = vpack.c.b16 %v2404, %v2404
    %v2407 = vsel %vm1842, %v2402, 0
    %v2410 = vsel %vm1858, %v2405, 0
    %2412 = vmatpush.bf16.msra.mxu0 0
    %2413 = vmatpush.bf16.msra.mxu0 0
    %2414 = vmatpush.bf16.msra.mxu0 0
    %2415 = vmatpush.bf16.msra.mxu0 0
    %2416 = vmatpush.bf16.msra.mxu0 0
    %2417 = vmatpush.bf16.msra.mxu0 0
    %2418 = vmatpush.bf16.msra.mxu0 0
    %2419 = vmatpush.bf16.msra.mxu0 %v2410
    %2420 = vmatmul.bf16.gmra.mxu0 %v2407
    %v2421 = vpop.f32.mrf.mxu0
    %v2422 = vadd.f32 0.0, %v2421
    %v2423 = vpop.f32.mrf.mxu0
    %2424 = vdwg.mxu0
    %2425 = vmatpush.bf16.xpose.msra.mxu0 0
    %2426 = vmatpush.bf16.xpose.msra.mxu0 0
    %2427 = vmatpush.bf16.xpose.msra.mxu0 0
    %2428 = vmatpush.bf16.xpose.msra.mxu0 0
    %2429 = vmatpush.bf16.xpose.msra.mxu0 0
    %2430 = vmatpush.bf16.xpose.msra.mxu0 0
    %2431 = vmatpush.bf16.xpose.msra.mxu0 0
    %2432 = vmatpush.bf16.xpose.msra.mxu0 %v1819
    %2433 = vmatmul.bf16.gmra.mxu0 %v1811
    %v2434 = vpop.f32.mrf.mxu0
    %v2435 = vadd.f32 0.0, %v2434
    %v2436 = vpop.f32.mrf.mxu0
    %2437 = vdwg.mxu0
    %v2438 = vsel %vm1842, %v2435, -inf
    %2439 = vmax.xlane.f32.xlu0 %v2438
    %v2440 = vpop.xlane.xlu0 %2439
    %v2441 = vsub.f32 %v2435, %v2440
    %v2442 = vmul.f32 %v2441, 1.442695
    %v2443 = vpow.pop %v2442
    %v2444 = vsel %vm1842, %v2443, 0.0
    %2445 = vadd.xlane.f32.xlu0 %v2444
    %v2446 = vpop.xlane.xlu0 %2445
    %v2447 = vrcp.pop %v2446
    %v2448 = vmul.f32 %v2443, %v2447
    %v2449 = vpack.c.bf16 %v2448, %v2448
    %v2451 = vsel %vm1842, %v2449, 0
    %v2454 = vsel %vm1858, %v1827, 0
    %2456 = vmatpush.bf16.msra.mxu0 0
    %2457 = vmatpush.bf16.msra.mxu0 0
    %2458 = vmatpush.bf16.msra.mxu0 0
    %2459 = vmatpush.bf16.msra.mxu0 0
    %2460 = vmatpush.bf16.msra.mxu0 0
    %2461 = vmatpush.bf16.msra.mxu0 0
    %2462 = vmatpush.bf16.msra.mxu0 0
    %2463 = vmatpush.bf16.msra.mxu0 %v2454
    %2464 = vmatmul.bf16.gmra.mxu0 %v2451
    %v2465 = vpop.f32.mrf.mxu0
    %v2466 = vadd.f32 0.0, %v2465
    %v2467 = vpop.f32.mrf.mxu0
    %2468 = vdwg.mxu0
    %v2470 = vunpack.c.h.b16 %v1811
    %v2471 = vpack.c.b16 %v2470, %v2470
    %v2474 = vunpack.c.h.b16 %v1819
    %v2475 = vpack.c.b16 %v2474, %v2474
    %2477 = vmatpush.bf16.xpose.msra.mxu0 0
    %2478 = vmatpush.bf16.xpose.msra.mxu0 0
    %2479 = vmatpush.bf16.xpose.msra.mxu0 0
    %2480 = vmatpush.bf16.xpose.msra.mxu0 0
    %2481 = vmatpush.bf16.xpose.msra.mxu0 0
    %2482 = vmatpush.bf16.xpose.msra.mxu0 0
    %2483 = vmatpush.bf16.xpose.msra.mxu0 0
    %2484 = vmatpush.bf16.xpose.msra.mxu0 %v2475
    %2485 = vmatmul.bf16.gmra.mxu0 %v2471
    %v2486 = vpop.f32.mrf.mxu0
    %v2487 = vadd.f32 0.0, %v2486
    %v2488 = vpop.f32.mrf.mxu0
    %2489 = vdwg.mxu0
    %v2490 = vsel %vm1842, %v2487, -inf
    %2491 = vmax.xlane.f32.xlu0 %v2490
    %v2492 = vpop.xlane.xlu0 %2491
    %v2493 = vsub.f32 %v2487, %v2492
    %v2494 = vmul.f32 %v2493, 1.442695
    %v2495 = vpow.pop %v2494
    %v2496 = vsel %vm1842, %v2495, 0.0
    %2497 = vadd.xlane.f32.xlu0 %v2496
    %v2498 = vpop.xlane.xlu0 %2497
    %v2499 = vrcp.pop %v2498
    %v2500 = vmul.f32 %v2495, %v2499
    %v2501 = vpack.c.bf16 %v2500, %v2500
    %v2503 = vunpack.c.h.b16 %v1827
    %v2504 = vpack.c.b16 %v2503, %v2503
    %v2506 = vsel %vm1842, %v2501, 0
    %v2509 = vsel %vm1858, %v2504, 0
    %2511 = vmatpush.bf16.msra.mxu0 0
    %2512 = vmatpush.bf16.msra.mxu0 0
    %2513 = vmatpush.bf16.msra.mxu0 0
    %2514 = vmatpush.bf16.msra.mxu0 0
    %2515 = vmatpush.bf16.msra.mxu0 0
    %2516 = vmatpush.bf16.msra.mxu0 0
    %2517 = vmatpush.bf16.msra.mxu0 0
    %2518 = vmatpush.bf16.msra.mxu0 %v2509
    %2519 = vmatmul.bf16.gmra.mxu0 %v2506
    %v2520 = vpop.f32.mrf.mxu0
    %v2521 = vadd.f32 0.0, %v2520
    %v2522 = vpop.f32.mrf.mxu0
    %2523 = vdwg.mxu0
    %2524 = vmatpush.bf16.xpose.msra.mxu0 0
    %2525 = vmatpush.bf16.xpose.msra.mxu0 0
    %2526 = vmatpush.bf16.xpose.msra.mxu0 0
    %2527 = vmatpush.bf16.xpose.msra.mxu0 0
    %2528 = vmatpush.bf16.xpose.msra.mxu0 0
    %2529 = vmatpush.bf16.xpose.msra.mxu0 0
    %2530 = vmatpush.bf16.xpose.msra.mxu0 0
    %2531 = vmatpush.bf16.xpose.msra.mxu0 %v1820
    %2532 = vmatmul.bf16.gmra.mxu0 %v1812
    %v2533 = vpop.f32.mrf.mxu0
    %v2534 = vadd.f32 0.0, %v2533
    %v2535 = vpop.f32.mrf.mxu0
    %2536 = vdwg.mxu0
    %v2537 = vsel %vm1842, %v2534, -inf
    %2538 = vmax.xlane.f32.xlu0 %v2537
    %v2539 = vpop.xlane.xlu0 %2538
    %v2540 = vsub.f32 %v2534, %v2539
    %v2541 = vmul.f32 %v2540, 1.442695
    %v2542 = vpow.pop %v2541
    %v2543 = vsel %vm1842, %v2542, 0.0
    %2544 = vadd.xlane.f32.xlu0 %v2543
    %v2545 = vpop.xlane.xlu0 %2544
    %v2546 = vrcp.pop %v2545
    %v2547 = vmul.f32 %v2542, %v2546
    %v2548 = vpack.c.bf16 %v2547, %v2547
    %v2550 = vsel %vm1842, %v2548, 0
    %v2553 = vsel %vm1858, %v1828, 0
    %2555 = vmatpush.bf16.msra.mxu0 0
    %2556 = vmatpush.bf16.msra.mxu0 0
    %2557 = vmatpush.bf16.msra.mxu0 0
    %2558 = vmatpush.bf16.msra.mxu0 0
    %2559 = vmatpush.bf16.msra.mxu0 0
    %2560 = vmatpush.bf16.msra.mxu0 0
    %2561 = vmatpush.bf16.msra.mxu0 0
    %2562 = vmatpush.bf16.msra.mxu0 %v2553
    %2563 = vmatmul.bf16.gmra.mxu0 %v2550
    %v2564 = vpop.f32.mrf.mxu0
    %v2565 = vadd.f32 0.0, %v2564
    %v2566 = vpop.f32.mrf.mxu0
    %2567 = vdwg.mxu0
    %v2569 = vunpack.c.h.b16 %v1812
    %v2570 = vpack.c.b16 %v2569, %v2569
    %v2573 = vunpack.c.h.b16 %v1820
    %v2574 = vpack.c.b16 %v2573, %v2573
    %2576 = vmatpush.bf16.xpose.msra.mxu0 0
    %2577 = vmatpush.bf16.xpose.msra.mxu0 0
    %2578 = vmatpush.bf16.xpose.msra.mxu0 0
    %2579 = vmatpush.bf16.xpose.msra.mxu0 0
    %2580 = vmatpush.bf16.xpose.msra.mxu0 0
    %2581 = vmatpush.bf16.xpose.msra.mxu0 0
    %2582 = vmatpush.bf16.xpose.msra.mxu0 0
    %2583 = vmatpush.bf16.xpose.msra.mxu0 %v2574
    %2584 = vmatmul.bf16.gmra.mxu0 %v2570
    %v2585 = vpop.f32.mrf.mxu0
    %v2586 = vadd.f32 0.0, %v2585
    %v2587 = vpop.f32.mrf.mxu0
    %2588 = vdwg.mxu0
    %v2589 = vsel %vm1842, %v2586, -inf
    %2590 = vmax.xlane.f32.xlu0 %v2589
    %v2591 = vpop.xlane.xlu0 %2590
    %v2592 = vsub.f32 %v2586, %v2591
    %v2593 = vmul.f32 %v2592, 1.442695
    %v2594 = vpow.pop %v2593
    %v2595 = vsel %vm1842, %v2594, 0.0
    %2596 = vadd.xlane.f32.xlu0 %v2595
    %v2597 = vpop.xlane.xlu0 %2596
    %v2598 = vrcp.pop %v2597
    %v2599 = vmul.f32 %v2594, %v2598
    %v2600 = vpack.c.bf16 %v2599, %v2599
    %v2602 = vunpack.c.h.b16 %v1828
    %v2603 = vpack.c.b16 %v2602, %v2602
    %v2605 = vsel %vm1842, %v2600, 0
    %v2608 = vsel %vm1858, %v2603, 0
    %2610 = vmatpush.bf16.msra.mxu0 0
    %2611 = vmatpush.bf16.msra.mxu0 0
    %2612 = vmatpush.bf16.msra.mxu0 0
    %2613 = vmatpush.bf16.msra.mxu0 0
    %2614 = vmatpush.bf16.msra.mxu0 0
    %2615 = vmatpush.bf16.msra.mxu0 0
    %2616 = vmatpush.bf16.msra.mxu0 0
    %2617 = vmatpush.bf16.msra.mxu0 %v2608
    %2618 = vmatmul.bf16.gmra.mxu0 %v2605
    %v2619 = vpop.f32.mrf.mxu0
    %v2620 = vadd.f32 0.0, %v2619
    %v2621 = vpop.f32.mrf.mxu0
    %2622 = vdwg.mxu0
    %v2623 = vpack.c.bf16 %v2268, %v1872
    %v2624 = vpack.c.bf16 %v2323, %v1927
    %v2625 = vpack.c.bf16 %v2367, %v1971
    %v2626 = vpack.c.bf16 %v2422, %v2026
    %v2627 = vpack.c.bf16 %v2466, %v2070
    %v2628 = vpack.c.bf16 %v2521, %v2125
    %v2629 = vpack.c.bf16 %v2565, %v2169
    %v2630 = vpack.c.bf16 %v2620, %v2224
    %v2759 = vunpack.c.l.b16 %v330
    %v2760 = vunpack.c.l.b16 %v331
    %v2761 = vunpack.c.l.b16 %v332
    %v2762 = vunpack.c.l.b16 %v333
    %v2763 = vunpack.c.l.b16 %v334
    %v2764 = vunpack.c.l.b16 %v335
    %v2765 = vunpack.c.l.b16 %v336
    %v2766 = vunpack.c.l.b16 %v337
    %v2767 = vunpack.c.l.b16 %v338
    %v2768 = vunpack.c.l.b16 %v339
    %v2769 = vunpack.c.l.b16 %v340
    %v2770 = vunpack.c.l.b16 %v341
    %v2771 = vunpack.c.l.b16 %v342
    %v2772 = vunpack.c.l.b16 %v343
    %v2773 = vunpack.c.l.b16 %v344
    %v2774 = vunpack.c.l.b16 %v345
    %v2775 = vunpack.c.l.b16 %v346
    %v2776 = vunpack.c.l.b16 %v347
    %v2777 = vunpack.c.l.b16 %v348
    %v2778 = vunpack.c.l.b16 %v349
    %v2779 = vunpack.c.l.b16 %v350
    %v2780 = vunpack.c.l.b16 %v351
    %v2781 = vunpack.c.l.b16 %v352
    %v2782 = vunpack.c.l.b16 %v353
    %v2783 = vunpack.c.l.b16 %v354
    %v2784 = vunpack.c.l.b16 %v355
    %v2785 = vunpack.c.l.b16 %v356
    %v2786 = vunpack.c.l.b16 %v357
    %v2787 = vunpack.c.l.b16 %v358
    %v2788 = vunpack.c.l.b16 %v359
    %v2789 = vunpack.c.l.b16 %v360
    %v2790 = vunpack.c.l.b16 %v361
    %v2791 = vunpack.c.l.b16 %v362
    %v2792 = vunpack.c.l.b16 %v363
    %v2793 = vunpack.c.l.b16 %v364
    %v2794 = vunpack.c.l.b16 %v365
    %v2795 = vunpack.c.l.b16 %v366
    %v2796 = vunpack.c.l.b16 %v367
    %v2797 = vunpack.c.l.b16 %v368
    %v2798 = vunpack.c.l.b16 %v369
    %v2799 = vunpack.c.l.b16 %v370
    %v2800 = vunpack.c.l.b16 %v371
    %v2801 = vunpack.c.l.b16 %v372
    %v2802 = vunpack.c.l.b16 %v373
    %v2803 = vunpack.c.l.b16 %v374
    %v2804 = vunpack.c.l.b16 %v375
    %v2805 = vunpack.c.l.b16 %v376
    %v2806 = vunpack.c.l.b16 %v377
    %v2807 = vunpack.c.l.b16 %v378
    %v2808 = vunpack.c.l.b16 %v379
    %v2809 = vunpack.c.l.b16 %v380
    %v2810 = vunpack.c.l.b16 %v381
    %v2811 = vunpack.c.l.b16 %v382
    %v2812 = vunpack.c.l.b16 %v383
    %v2813 = vunpack.c.l.b16 %v384
    %v2814 = vunpack.c.l.b16 %v385
    %v2815 = vunpack.c.l.b16 %v386
    %v2816 = vunpack.c.l.b16 %v387
    %v2817 = vunpack.c.l.b16 %v388
    %v2818 = vunpack.c.l.b16 %v389
    %v2819 = vunpack.c.l.b16 %v390
    %v2820 = vunpack.c.l.b16 %v391
    %v2821 = vunpack.c.l.b16 %v392
    %v2822 = vunpack.c.l.b16 %v393
    %v2823 = vunpack.c.l.b16 %v394
    %v2824 = vunpack.c.l.b16 %v395
    %v2825 = vunpack.c.l.b16 %v396
    %v2826 = vunpack.c.l.b16 %v397
    %v2827 = vunpack.c.l.b16 %v398
    %v2828 = vunpack.c.l.b16 %v399
    %v2829 = vunpack.c.l.b16 %v400
    %v2830 = vunpack.c.l.b16 %v401
    %v2831 = vunpack.c.l.b16 %v402
    %v2832 = vunpack.c.l.b16 %v403
    %v2833 = vunpack.c.l.b16 %v404
    %v2834 = vunpack.c.l.b16 %v405
    %v2835 = vunpack.c.l.b16 %v406
    %v2836 = vunpack.c.l.b16 %v407
    %v2837 = vunpack.c.l.b16 %v408
    %v2838 = vunpack.c.l.b16 %v409
    %v2839 = vunpack.c.l.b16 %v410
    %v2840 = vunpack.c.l.b16 %v411
    %v2841 = vunpack.c.l.b16 %v412
    %v2842 = vunpack.c.l.b16 %v413
    %v2843 = vunpack.c.l.b16 %v414
    %v2844 = vunpack.c.l.b16 %v415
    %v2845 = vunpack.c.l.b16 %v416
    %v2846 = vunpack.c.l.b16 %v417
    %v2847 = vunpack.c.l.b16 %v418
    %v2848 = vunpack.c.l.b16 %v419
    %v2849 = vunpack.c.l.b16 %v420
    %v2850 = vunpack.c.l.b16 %v421
    %v2851 = vunpack.c.l.b16 %v422
    %v2852 = vunpack.c.l.b16 %v423
    %v2853 = vunpack.c.l.b16 %v424
    %v2854 = vunpack.c.l.b16 %v425
    %v2855 = vunpack.c.l.b16 %v426
    %v2856 = vunpack.c.l.b16 %v427
    %v2857 = vunpack.c.l.b16 %v428
    %v2858 = vunpack.c.l.b16 %v429
    %v2859 = vunpack.c.l.b16 %v430
    %v2860 = vunpack.c.l.b16 %v431
    %v2861 = vunpack.c.l.b16 %v432
    %v2862 = vunpack.c.l.b16 %v433
    %v2863 = vunpack.c.l.b16 %v434
    %v2864 = vunpack.c.l.b16 %v435
    %v2865 = vunpack.c.l.b16 %v436
    %v2866 = vunpack.c.l.b16 %v437
    %v2867 = vunpack.c.l.b16 %v438
    %v2868 = vunpack.c.l.b16 %v439
    %v2869 = vunpack.c.l.b16 %v440
    %v2870 = vunpack.c.l.b16 %v441
    %v2871 = vunpack.c.l.b16 %v442
    %v2872 = vunpack.c.l.b16 %v443
    %v2873 = vunpack.c.l.b16 %v444
    %v2874 = vunpack.c.l.b16 %v445
    %v2875 = vunpack.c.l.b16 %v446
    %v2876 = vunpack.c.l.b16 %v447
    %v2877 = vunpack.c.l.b16 %v448
    %v2878 = vunpack.c.l.b16 %v449
    %v2879 = vunpack.c.l.b16 %v450
    %v2880 = vunpack.c.l.b16 %v451
    %v2881 = vunpack.c.l.b16 %v452
    %v2882 = vunpack.c.l.b16 %v453
    %v2883 = vunpack.c.l.b16 %v454
    %v2884 = vunpack.c.l.b16 %v455
    %v2885 = vunpack.c.l.b16 %v456
    %v2886 = vunpack.c.l.b16 %v457
    %v2887 = vpack.c.b16 %v2760, %v2759
    %v2888 = vpack.c.b16 %v2762, %v2761
    %v2889 = vpack.c.b16 %v2764, %v2763
    %v2890 = vpack.c.b16 %v2766, %v2765
    %v2891 = vpack.c.b16 %v2768, %v2767
    %v2892 = vpack.c.b16 %v2770, %v2769
    %v2893 = vpack.c.b16 %v2772, %v2771
    %v2894 = vpack.c.b16 %v2774, %v2773
    %v2895 = vpack.c.b16 %v2776, %v2775
    %v2896 = vpack.c.b16 %v2778, %v2777
    %v2897 = vpack.c.b16 %v2780, %v2779
    %v2898 = vpack.c.b16 %v2782, %v2781
    %v2899 = vpack.c.b16 %v2784, %v2783
    %v2900 = vpack.c.b16 %v2786, %v2785
    %v2901 = vpack.c.b16 %v2788, %v2787
    %v2902 = vpack.c.b16 %v2790, %v2789
    %v2903 = vpack.c.b16 %v2792, %v2791
    %v2904 = vpack.c.b16 %v2794, %v2793
    %v2905 = vpack.c.b16 %v2796, %v2795
    %v2906 = vpack.c.b16 %v2798, %v2797
    %v2907 = vpack.c.b16 %v2800, %v2799
    %v2908 = vpack.c.b16 %v2802, %v2801
    %v2909 = vpack.c.b16 %v2804, %v2803
    %v2910 = vpack.c.b16 %v2806, %v2805
    %v2911 = vpack.c.b16 %v2808, %v2807
    %v2912 = vpack.c.b16 %v2810, %v2809
    %v2913 = vpack.c.b16 %v2812, %v2811
    %v2914 = vpack.c.b16 %v2814, %v2813
    %v2915 = vpack.c.b16 %v2816, %v2815
    %v2916 = vpack.c.b16 %v2818, %v2817
    %v2917 = vpack.c.b16 %v2820, %v2819
    %v2918 = vpack.c.b16 %v2822, %v2821
    %v2919 = vpack.c.b16 %v2824, %v2823
    %v2920 = vpack.c.b16 %v2826, %v2825
    %v2921 = vpack.c.b16 %v2828, %v2827
    %v2922 = vpack.c.b16 %v2830, %v2829
    %v2923 = vpack.c.b16 %v2832, %v2831
    %v2924 = vpack.c.b16 %v2834, %v2833
    %v2925 = vpack.c.b16 %v2836, %v2835
    %v2926 = vpack.c.b16 %v2838, %v2837
    %v2927 = vpack.c.b16 %v2840, %v2839
    %v2928 = vpack.c.b16 %v2842, %v2841
    %v2929 = vpack.c.b16 %v2844, %v2843
    %v2930 = vpack.c.b16 %v2846, %v2845
    %v2931 = vpack.c.b16 %v2848, %v2847
    %v2932 = vpack.c.b16 %v2850, %v2849
    %v2933 = vpack.c.b16 %v2852, %v2851
    %v2934 = vpack.c.b16 %v2854, %v2853
    %v2935 = vpack.c.b16 %v2856, %v2855
    %v2936 = vpack.c.b16 %v2858, %v2857
    %v2937 = vpack.c.b16 %v2860, %v2859
    %v2938 = vpack.c.b16 %v2862, %v2861
    %v2939 = vpack.c.b16 %v2864, %v2863
    %v2940 = vpack.c.b16 %v2866, %v2865
    %v2941 = vpack.c.b16 %v2868, %v2867
    %v2942 = vpack.c.b16 %v2870, %v2869
    %v2943 = vpack.c.b16 %v2872, %v2871
    %v2944 = vpack.c.b16 %v2874, %v2873
    %v2945 = vpack.c.b16 %v2876, %v2875
    %v2946 = vpack.c.b16 %v2878, %v2877
    %v2947 = vpack.c.b16 %v2880, %v2879
    %v2948 = vpack.c.b16 %v2882, %v2881
    %v2949 = vpack.c.b16 %v2884, %v2883
    %v2950 = vpack.c.b16 %v2886, %v2885
    %3015 = vmatpush.bf16.msra.mxu0 %v2894
    %3016 = vmatpush.bf16.msra.mxu0 %v2893
    %3017 = vmatpush.bf16.msra.mxu0 %v2892
    %3018 = vmatpush.bf16.msra.mxu0 %v2891
    %3019 = vmatpush.bf16.msra.mxu0 %v2890
    %3020 = vmatpush.bf16.msra.mxu0 %v2889
    %3021 = vmatpush.bf16.msra.mxu0 %v2888
    %3022 = vmatpush.bf16.msra.mxu0 %v2887
    %3023 = vmatmul.bf16.gmra.mxu0 %v2623
    %v3024 = vpop.f32.mrf.mxu0
    %v3025 = vadd.f32 %v135, %v3024
    %v3026 = vpop.f32.mrf.mxu0
    %v3027 = vadd.f32 %v136, %v3026
    %3028 = vdwg.mxu0
    %3029 = vmatpush.bf16.msra.mxu0 %v2902
    %3030 = vmatpush.bf16.msra.mxu0 %v2901
    %3031 = vmatpush.bf16.msra.mxu0 %v2900
    %3032 = vmatpush.bf16.msra.mxu0 %v2899
    %3033 = vmatpush.bf16.msra.mxu0 %v2898
    %3034 = vmatpush.bf16.msra.mxu0 %v2897
    %3035 = vmatpush.bf16.msra.mxu0 %v2896
    %3036 = vmatpush.bf16.msra.mxu0 %v2895
    %3037 = vmatmul.bf16.gmra.mxu0 %v2624
    %v3038 = vpop.f32.mrf.mxu0
    %v3039 = vadd.f32 %v3025, %v3038
    %v3040 = vpop.f32.mrf.mxu0
    %v3041 = vadd.f32 %v3027, %v3040
    %3042 = vdwg.mxu0
    %3043 = vmatpush.bf16.msra.mxu0 %v2910
    %3044 = vmatpush.bf16.msra.mxu0 %v2909
    %3045 = vmatpush.bf16.msra.mxu0 %v2908
    %3046 = vmatpush.bf16.msra.mxu0 %v2907
    %3047 = vmatpush.bf16.msra.mxu0 %v2906
    %3048 = vmatpush.bf16.msra.mxu0 %v2905
    %3049 = vmatpush.bf16.msra.mxu0 %v2904
    %3050 = vmatpush.bf16.msra.mxu0 %v2903
    %3051 = vmatmul.bf16.gmra.mxu0 %v2625
    %v3052 = vpop.f32.mrf.mxu0
    %v3053 = vadd.f32 %v3039, %v3052
    %v3054 = vpop.f32.mrf.mxu0
    %v3055 = vadd.f32 %v3041, %v3054
    %3056 = vdwg.mxu0
    %3057 = vmatpush.bf16.msra.mxu0 %v2918
    %3058 = vmatpush.bf16.msra.mxu0 %v2917
    %3059 = vmatpush.bf16.msra.mxu0 %v2916
    %3060 = vmatpush.bf16.msra.mxu0 %v2915
    %3061 = vmatpush.bf16.msra.mxu0 %v2914
    %3062 = vmatpush.bf16.msra.mxu0 %v2913
    %3063 = vmatpush.bf16.msra.mxu0 %v2912
    %3064 = vmatpush.bf16.msra.mxu0 %v2911
    %3065 = vmatmul.bf16.gmra.mxu0 %v2626
    %v3066 = vpop.f32.mrf.mxu0
    %v3067 = vadd.f32 %v3053, %v3066
    %v3068 = vpop.f32.mrf.mxu0
    %v3069 = vadd.f32 %v3055, %v3068
    %3070 = vdwg.mxu0
    %3071 = vmatpush.bf16.msra.mxu0 %v2926
    %3072 = vmatpush.bf16.msra.mxu0 %v2925
    %3073 = vmatpush.bf16.msra.mxu0 %v2924
    %3074 = vmatpush.bf16.msra.mxu0 %v2923
    %3075 = vmatpush.bf16.msra.mxu0 %v2922
    %3076 = vmatpush.bf16.msra.mxu0 %v2921
    %3077 = vmatpush.bf16.msra.mxu0 %v2920
    %3078 = vmatpush.bf16.msra.mxu0 %v2919
    %3079 = vmatmul.bf16.gmra.mxu0 %v2627
    %v3080 = vpop.f32.mrf.mxu0
    %v3081 = vadd.f32 %v3067, %v3080
    %v3082 = vpop.f32.mrf.mxu0
    %v3083 = vadd.f32 %v3069, %v3082
    %3084 = vdwg.mxu0
    %3085 = vmatpush.bf16.msra.mxu0 %v2934
    %3086 = vmatpush.bf16.msra.mxu0 %v2933
    %3087 = vmatpush.bf16.msra.mxu0 %v2932
    %3088 = vmatpush.bf16.msra.mxu0 %v2931
    %3089 = vmatpush.bf16.msra.mxu0 %v2930
    %3090 = vmatpush.bf16.msra.mxu0 %v2929
    %3091 = vmatpush.bf16.msra.mxu0 %v2928
    %3092 = vmatpush.bf16.msra.mxu0 %v2927
    %3093 = vmatmul.bf16.gmra.mxu0 %v2628
    %v3094 = vpop.f32.mrf.mxu0
    %v3095 = vadd.f32 %v3081, %v3094
    %v3096 = vpop.f32.mrf.mxu0
    %v3097 = vadd.f32 %v3083, %v3096
    %3098 = vdwg.mxu0
    %3099 = vmatpush.bf16.msra.mxu0 %v2942
    %3100 = vmatpush.bf16.msra.mxu0 %v2941
    %3101 = vmatpush.bf16.msra.mxu0 %v2940
    %3102 = vmatpush.bf16.msra.mxu0 %v2939
    %3103 = vmatpush.bf16.msra.mxu0 %v2938
    %3104 = vmatpush.bf16.msra.mxu0 %v2937
    %3105 = vmatpush.bf16.msra.mxu0 %v2936
    %3106 = vmatpush.bf16.msra.mxu0 %v2935
    %3107 = vmatmul.bf16.gmra.mxu0 %v2629
    %v3108 = vpop.f32.mrf.mxu0
    %v3109 = vadd.f32 %v3095, %v3108
    %v3110 = vpop.f32.mrf.mxu0
    %v3111 = vadd.f32 %v3097, %v3110
    %3112 = vdwg.mxu0
    %3113 = vmatpush.bf16.msra.mxu0 %v2950
    %3114 = vmatpush.bf16.msra.mxu0 %v2949
    %3115 = vmatpush.bf16.msra.mxu0 %v2948
    %3116 = vmatpush.bf16.msra.mxu0 %v2947
    %3117 = vmatpush.bf16.msra.mxu0 %v2946
    %3118 = vmatpush.bf16.msra.mxu0 %v2945
    %3119 = vmatpush.bf16.msra.mxu0 %v2944
    %3120 = vmatpush.bf16.msra.mxu0 %v2943
    %3121 = vmatmul.bf16.gmra.mxu0 %v2630
    %v3122 = vpop.f32.mrf.mxu0
    %v3123 = vadd.f32 %v3109, %v3122
    %v3124 = vpop.f32.mrf.mxu0
    %v3125 = vadd.f32 %v3111, %v3124
    %3126 = vdwg.mxu0
    %v3127 = vld [vmem:[#allocation5 + $0x1] sm:$0x1]
    %v3128 = vld [vmem:[#allocation11] sm:$0xf]
    %v3129 = vld [vmem:[#allocation11 + $0x4] sm:$0xf]
    %v3130 = vld [vmem:[#allocation11 + $0x8] sm:$0xf]
    %v3131 = vld [vmem:[#allocation11 + $0xc] sm:$0xf]
    %v3132 = vld [vmem:[#allocation11 + $0x10] sm:$0xf]
    %v3133 = vld [vmem:[#allocation11 + $0x14] sm:$0xf]
    %v3134 = vld [vmem:[#allocation11 + $0x18] sm:$0xf]
    %v3135 = vld [vmem:[#allocation11 + $0x1c] sm:$0xf]
    %v3136 = vld [vmem:[#allocation11 + $0x20] sm:$0xf]
    %v3137 = vld [vmem:[#allocation11 + $0x24] sm:$0xf]
    %v3138 = vld [vmem:[#allocation11 + $0x28] sm:$0xf]
    %v3139 = vld [vmem:[#allocation11 + $0x2c] sm:$0xf]
    %v3140 = vld [vmem:[#allocation11 + $0x30] sm:$0xf]
    %v3141 = vld [vmem:[#allocation11 + $0x34] sm:$0xf]
    %v3142 = vld [vmem:[#allocation11 + $0x38] sm:$0xf]
    %v3143 = vld [vmem:[#allocation11 + $0x3c] sm:$0xf]
    %v3144 = vld [vmem:[#allocation7] sm:$0x1]
    %v3145 = vld [vmem:[#allocation13] sm:$0xf]
    %v3146 = vld [vmem:[#allocation13 + $0x4] sm:$0xf]
    %v3147 = vld [vmem:[#allocation13 + $0x8] sm:$0xf]
    %v3148 = vld [vmem:[#allocation13 + $0xc] sm:$0xf]
    %v3149 = vld [vmem:[#allocation13 + $0x10] sm:$0xf]
    %v3150 = vld [vmem:[#allocation13 + $0x14] sm:$0xf]
    %v3151 = vld [vmem:[#allocation13 + $0x18] sm:$0xf]
    %v3152 = vld [vmem:[#allocation13 + $0x1c] sm:$0xf]
    %v3153 = vld [vmem:[#allocation13 + $0x20] sm:$0xf]
    %v3154 = vld [vmem:[#allocation13 + $0x24] sm:$0xf]
    %v3155 = vld [vmem:[#allocation13 + $0x28] sm:$0xf]
    %v3156 = vld [vmem:[#allocation13 + $0x2c] sm:$0xf]
    %v3157 = vld [vmem:[#allocation13 + $0x30] sm:$0xf]
    %v3158 = vld [vmem:[#allocation13 + $0x34] sm:$0xf]
    %v3159 = vld [vmem:[#allocation13 + $0x38] sm:$0xf]
    %v3160 = vld [vmem:[#allocation13 + $0x3c] sm:$0xf]
    %v3161 = vld [vmem:[#allocation5 + $0x2] sm:$0x1]
    %3162 = vadd.xlane.f32.xlu0 %v3123
    %v3163 = vpop.xlane.xlu0 %3162
    %3164 = vadd.xlane.f32.xlu0 %v3125
    %v3165 = vpop.xlane.xlu0 %3164
    %v3166 = vmul.f32 %v3163, 0.0625
    %v3167 = vmul.f32 %v3165, 0.0625
    %v3168 = vmul.f32 %v3123, %v3123
    %v3169 = vmul.f32 %v3125, %v3125
    %3170 = vadd.xlane.f32.xlu0 %v3168
    %v3171 = vpop.xlane.xlu0 %3170
    %3172 = vadd.xlane.f32.xlu0 %v3169
    %v3173 = vpop.xlane.xlu0 %3172
    %v3174 = vmul.f32 %v3171, 0.0625
    %v3175 = vmul.f32 %v3173, 0.0625
    %v3176 = vmul.f32 %v3166, %v3166
    %v3177 = vmul.f32 %v3167, %v3167
    %v3178 = vsub.f32 %v3174, %v3176
    %v3179 = vsub.f32 %v3175, %v3177
    %v3180 = vmax.f32 %v3178, 0.0
    %v3181 = vmax.f32 %v3179, 0.0
    %v3182 = vsub.f32 %v3123, %v3166
    %v3183 = vsub.f32 %v3125, %v3167
    %v3184 = vadd.f32 %v3180, 1e-05
    %v3185 = vadd.f32 %v3181, 1e-05
    %v3186 = vrsqrt.pop %v3184
    %v3187 = vmul.f32 %v3186, %v3184
    %v3188 = vmul.f32 %v3187, %v3186
    %v3189 = vmul.f32 0.5, %v3188
    %v3190 = vsub.f32 1.5, %v3189
    %v3191 = vmul.f32 %v3186, %v3190
    %vm3192 = vweird.f32 %v3184
    %vm3193 = vweird.f32 %v3186
    %vm3194 = vmor %vm3192, %vm3193
    %v3195 = vsel %vm3194, %v3186, %v3191
    %v3196 = vrsqrt.pop %v3185
    %v3197 = vmul.f32 %v3196, %v3185
    %v3198 = vmul.f32 %v3197, %v3196
    %v3199 = vmul.f32 0.5, %v3198
    %v3200 = vsub.f32 1.5, %v3199
    %v3201 = vmul.f32 %v3196, %v3200
    %vm3202 = vweird.f32 %v3185
    %vm3203 = vweird.f32 %v3196
    %vm3204 = vmor %vm3202, %vm3203
    %v3205 = vsel %vm3204, %v3196, %v3201
    %v3206 = vmul.f32 %v3182, %v3195
    %v3207 = vmul.f32 %v3183, %v3205
    %v3208 = vadd.f32 %v3127, 1.0
    %v3209 = vperm.slane %v3208, 0
    %v3210 = vmul.f32 %v3206, %v3209
    %v3211 = vmul.f32 %v3207, %v3209
    %v3212 = vpack.c.bf16 %v3211, %v3210
    %v3213 = vperm.slane %v3144, 0
    %v3230 = vunpack.c.l.b16 %v3128
    %v3231 = vunpack.c.l.b16 %v3129
    %v3232 = vunpack.c.l.b16 %v3130
    %v3233 = vunpack.c.l.b16 %v3131
    %v3234 = vunpack.c.l.b16 %v3132
    %v3235 = vunpack.c.l.b16 %v3133
    %v3236 = vunpack.c.l.b16 %v3134
    %v3237 = vunpack.c.l.b16 %v3135
    %v3238 = vunpack.c.l.b16 %v3136
    %v3239 = vunpack.c.l.b16 %v3137
    %v3240 = vunpack.c.l.b16 %v3138
    %v3241 = vunpack.c.l.b16 %v3139
    %v3242 = vunpack.c.l.b16 %v3140
    %v3243 = vunpack.c.l.b16 %v3141
    %v3244 = vunpack.c.l.b16 %v3142
    %v3245 = vunpack.c.l.b16 %v3143
    %v3246 = vpack.c.b16 %v3231, %v3230
    %v3247 = vpack.c.b16 %v3233, %v3232
    %v3248 = vpack.c.b16 %v3235, %v3234
    %v3249 = vpack.c.b16 %v3237, %v3236
    %v3250 = vpack.c.b16 %v3239, %v3238
    %v3251 = vpack.c.b16 %v3241, %v3240
    %v3252 = vpack.c.b16 %v3243, %v3242
    %v3253 = vpack.c.b16 %v3245, %v3244
    %3262 = vmatpush.bf16.msra.mxu0 %v3253
    %3263 = vmatpush.bf16.msra.mxu0 %v3252
    %3264 = vmatpush.bf16.msra.mxu0 %v3251
    %3265 = vmatpush.bf16.msra.mxu0 %v3250
    %3266 = vmatpush.bf16.msra.mxu0 %v3249
    %3267 = vmatpush.bf16.msra.mxu0 %v3248
    %3268 = vmatpush.bf16.msra.mxu0 %v3247
    %3269 = vmatpush.bf16.msra.mxu0 %v3246
    %3270 = vmatmul.bf16.gmra.mxu0 %v3212
    %v3271 = vpop.f32.mrf.mxu0
    %v3272 = vadd.f32 %v3213, %v3271
    %v3273 = vpop.f32.mrf.mxu0
    %v3274 = vadd.f32 %v3213, %v3273
    %3275 = vdwg.mxu0
    %v3276 = vmul.f32 %v3272, 0.5
    %v3277 = vmul.f32 %v3274, 0.5
    %v3278 = vmul.f32 %v3272, 0.70710677
    %v3279 = vmul.f32 %v3274, 0.70710677
    %v3280 = vand.u32 2147483647, %v3278
    %v3281 = vand.u32 2147483647, %v3279
    %v3282 = vmul.f32 %v3280, 0.3275911
    %v3283 = vmul.f32 %v3281, 0.3275911
    %v3284 = vadd.f32 %v3282, 1.0
    %v3285 = vadd.f32 %v3283, 1.0
    %v3286 = vrcp.pop %v3284
    %v3287 = vmul.f32 %v3284, %v3286
    %v3288 = vsub.f32 1.0, %v3287
    %v3289 = vmul.f32 %v3286, %v3288
    %v3290 = vadd.f32 %v3286, %v3289
    %vm3291 = vweird.f32 %v3284
    %vm3292 = vweird.f32 %v3286
    %vm3293 = vmor %vm3291, %vm3292
    %v3294 = vsel %vm3293, %v3286, %v3290
    %v3295 = vand.u32 2147483647, %v3284
    %vm3296 = vcmp.eq.f32.partialorder %v3295, 8.507059e+37
    %v3297 = vand.u32 %v3284, 2147483648
    %v3298 = vor.u32 1.1754944e-38, %v3297
    %v3299 = vsel %vm3296, %v3298, %v3294
    %v3300 = vmul.f32 1.0, %v3299
    %v3301 = vrcp.pop %v3285
    %v3302 = vmul.f32 %v3285, %v3301
    %v3303 = vsub.f32 1.0, %v3302
    %v3304 = vmul.f32 %v3301, %v3303
    %v3305 = vadd.f32 %v3301, %v3304
    %vm3306 = vweird.f32 %v3285
    %vm3307 = vweird.f32 %v3301
    %vm3308 = vmor %vm3306, %vm3307
    %v3309 = vsel %vm3308, %v3301, %v3305
    %v3310 = vand.u32 2147483647, %v3285
    %vm3311 = vcmp.eq.f32.partialorder %v3310, 8.507059e+37
    %v3312 = vand.u32 %v3285, 2147483648
    %v3313 = vor.u32 1.1754944e-38, %v3312
    %v3314 = vsel %vm3311, %v3313, %v3309
    %v3315 = vmul.f32 1.0, %v3314
    %v3316 = vmul.f32 %v3300, 1.0614054
    %v3317 = vmul.f32 %v3315, 1.0614054
    %v3318 = vadd.f32 %v3316, -1.4531521
    %v3319 = vadd.f32 %v3317, -1.4531521
    %v3320 = vmul.f32 %v3318, %v3300
    %v3321 = vmul.f32 %v3319, %v3315
    %v3322 = vadd.f32 %v3320, 1.4214138
    %v3323 = vadd.f32 %v3321, 1.4214138
    %v3324 = vmul.f32 %v3322, %v3300
    %v3325 = vmul.f32 %v3323, %v3315
    %v3326 = vadd.f32 %v3324, -0.28449672
    %v3327 = vadd.f32 %v3325, -0.28449672
    %v3328 = vmul.f32 %v3326, %v3300
    %v3329 = vmul.f32 %v3327, %v3315
    %v3330 = vadd.f32 %v3328, 0.2548296
    %v3331 = vadd.f32 %v3329, 0.2548296
    %v3332 = vmul.f32 %v3330, %v3300
    %v3333 = vmul.f32 %v3331, %v3315
    %v3334 = vsub.f32 0.0, %v3280
    %v3335 = vsub.f32 0.0, %v3281
    %v3336 = vmul.f32 %v3334, %v3280
    %v3337 = vmul.f32 %v3335, %v3281
    %v3338 = vmul.f32 %v3336, 1.442695
    %v3339 = vpow.pop %v3338
    %v3340 = vmul.f32 %v3337, 1.442695
    %v3341 = vpow.pop %v3340
    %v3342 = vmul.f32 %v3332, %v3339
    %v3343 = vmul.f32 %v3333, %v3341
    %v3344 = vsub.f32 1.0, %v3342
    %v3345 = vsub.f32 1.0, %v3343
    %vm3346 = vcmp.ge.f32.partialorder %v3278, 0.0
    %vm3347 = vcmp.ge.f32.partialorder %v3279, 0.0
    %v3348 = vsub.f32 0.0, %v3344
    %v3349 = vsub.f32 0.0, %v3345
    %v3350 = vsel %vm3346, %v3344, %v3348
    %v3351 = vsel %vm3347, %v3345, %v3349
    %v3352 = vadd.f32 %v3350, 1.0
    %v3353 = vadd.f32 %v3351, 1.0
    %v3354 = vmul.f32 %v3276, %v3352
    %v3355 = vmul.f32 %v3277, %v3353
    %v3356 = vpack.c.bf16 %v3355, %v3354
    %v3357 = vperm.slane %v3161, 0
    %v3374 = vunpack.c.l.b16 %v3145
    %v3375 = vunpack.c.l.b16 %v3146
    %v3376 = vunpack.c.l.b16 %v3147
    %v3377 = vunpack.c.l.b16 %v3148
    %v3378 = vunpack.c.l.b16 %v3149
    %v3379 = vunpack.c.l.b16 %v3150
    %v3380 = vunpack.c.l.b16 %v3151
    %v3381 = vunpack.c.l.b16 %v3152
    %v3382 = vunpack.c.l.b16 %v3153
    %v3383 = vunpack.c.l.b16 %v3154
    %v3384 = vunpack.c.l.b16 %v3155
    %v3385 = vunpack.c.l.b16 %v3156
    %v3386 = vunpack.c.l.b16 %v3157
    %v3387 = vunpack.c.l.b16 %v3158
    %v3388 = vunpack.c.l.b16 %v3159
    %v3389 = vunpack.c.l.b16 %v3160
    %v3390 = vpack.c.b16 %v3375, %v3374
    %v3391 = vpack.c.b16 %v3377, %v3376
    %v3392 = vpack.c.b16 %v3379, %v3378
    %v3393 = vpack.c.b16 %v3381, %v3380
    %v3394 = vpack.c.b16 %v3383, %v3382
    %v3395 = vpack.c.b16 %v3385, %v3384
    %v3396 = vpack.c.b16 %v3387, %v3386
    %v3397 = vpack.c.b16 %v3389, %v3388
    %3406 = vmatpush.bf16.msra.mxu0 %v3397
    %3407 = vmatpush.bf16.msra.mxu0 %v3396
    %3408 = vmatpush.bf16.msra.mxu0 %v3395
    %3409 = vmatpush.bf16.msra.mxu0 %v3394
    %3410 = vmatpush.bf16.msra.mxu0 %v3393
    %3411 = vmatpush.bf16.msra.mxu0 %v3392
    %3412 = vmatpush.bf16.msra.mxu0 %v3391
    %3413 = vmatpush.bf16.msra.mxu0 %v3390
    %3414 = vmatmul.bf16.gmra.mxu0 %v3356
    %v3415 = vpop.f32.mrf.mxu0
    %v3416 = vadd.f32 %v3357, %v3415
    %v3417 = vpop.f32.mrf.mxu0
    %v3418 = vadd.f32 %v3357, %v3417
    %3419 = vdwg.mxu0
    %v3420 = vadd.f32 %v3416, %v3123
    %v3421 = vadd.f32 %v3418, %v3125
    %v3422 = vld [vmem:[#allocation5 + $0x3] sm:$0x1]
    %s3423 = scalar_lea.vmem [#allocation8], 1536
    %v3424 = vld [vmem:[%s3423] sm:$0xff]
    %v3425 = vld [vmem:[%s3423 + $0x8] sm:$0xff]
    %v3426 = vld [vmem:[%s3423 + $0x10] sm:$0xff]
    %v3427 = vld [vmem:[%s3423 + $0x18] sm:$0xff]
    %v3428 = vld [vmem:[%s3423 + $0x20] sm:$0xff]
    %v3429 = vld [vmem:[%s3423 + $0x28] sm:$0xff]
    %v3430 = vld [vmem:[%s3423 + $0x30] sm:$0xff]
    %v3431 = vld [vmem:[%s3423 + $0x38] sm:$0xff]
    %v3432 = vld [vmem:[%s3423 + $0x40] sm:$0xff]
    %v3433 = vld [vmem:[%s3423 + $0x48] sm:$0xff]
    %v3434 = vld [vmem:[%s3423 + $0x50] sm:$0xff]
    %v3435 = vld [vmem:[%s3423 + $0x58] sm:$0xff]
    %v3436 = vld [vmem:[%s3423 + $0x60] sm:$0xff]
    %v3437 = vld [vmem:[%s3423 + $0x68] sm:$0xff]
    %v3438 = vld [vmem:[%s3423 + $0x70] sm:$0xff]
    %v3439 = vld [vmem:[%s3423 + $0x78] sm:$0xff]
    %v3440 = vld [vmem:[%s3423 + $0x80] sm:$0xff]
    %v3441 = vld [vmem:[%s3423 + $0x88] sm:$0xff]
    %v3442 = vld [vmem:[%s3423 + $0x90] sm:$0xff]
    %v3443 = vld [vmem:[%s3423 + $0x98] sm:$0xff]
    %v3444 = vld [vmem:[%s3423 + $0xa0] sm:$0xff]
    %v3445 = vld [vmem:[%s3423 + $0xa8] sm:$0xff]
    %v3446 = vld [vmem:[%s3423 + $0xb0] sm:$0xff]
    %v3447 = vld [vmem:[%s3423 + $0xb8] sm:$0xff]
    %v3448 = vld [vmem:[%s3423 + $0xc0] sm:$0xff]
    %v3449 = vld [vmem:[%s3423 + $0xc8] sm:$0xff]
    %v3450 = vld [vmem:[%s3423 + $0xd0] sm:$0xff]
    %v3451 = vld [vmem:[%s3423 + $0xd8] sm:$0xff]
    %v3452 = vld [vmem:[%s3423 + $0xe0] sm:$0xff]
    %v3453 = vld [vmem:[%s3423 + $0xe8] sm:$0xff]
    %v3454 = vld [vmem:[%s3423 + $0xf0] sm:$0xff]
    %v3455 = vld [vmem:[%s3423 + $0xf8] sm:$0xff]
    %v3456 = vld [vmem:[%s3423 + $0x100] sm:$0xff]
    %v3457 = vld [vmem:[%s3423 + $0x108] sm:$0xff]
    %v3458 = vld [vmem:[%s3423 + $0x110] sm:$0xff]
    %v3459 = vld [vmem:[%s3423 + $0x118] sm:$0xff]
    %v3460 = vld [vmem:[%s3423 + $0x120] sm:$0xff]
    %v3461 = vld [vmem:[%s3423 + $0x128] sm:$0xff]
    %v3462 = vld [vmem:[%s3423 + $0x130] sm:$0xff]
    %v3463 = vld [vmem:[%s3423 + $0x138] sm:$0xff]
    %v3464 = vld [vmem:[%s3423 + $0x140] sm:$0xff]
    %v3465 = vld [vmem:[%s3423 + $0x148] sm:$0xff]
    %v3466 = vld [vmem:[%s3423 + $0x150] sm:$0xff]
    %v3467 = vld [vmem:[%s3423 + $0x158] sm:$0xff]
    %v3468 = vld [vmem:[%s3423 + $0x160] sm:$0xff]
    %v3469 = vld [vmem:[%s3423 + $0x168] sm:$0xff]
    %v3470 = vld [vmem:[%s3423 + $0x170] sm:$0xff]
    %v3471 = vld [vmem:[%s3423 + $0x178] sm:$0xff]
    %v3472 = vld [vmem:[%s3423 + $0x180] sm:$0xff]
    %v3473 = vld [vmem:[%s3423 + $0x188] sm:$0xff]
    %v3474 = vld [vmem:[%s3423 + $0x190] sm:$0xff]
    %v3475 = vld [vmem:[%s3423 + $0x198] sm:$0xff]
    %v3476 = vld [vmem:[%s3423 + $0x1a0] sm:$0xff]
    %v3477 = vld [vmem:[%s3423 + $0x1a8] sm:$0xff]
    %v3478 = vld [vmem:[%s3423 + $0x1b0] sm:$0xff]
    %v3479 = vld [vmem:[%s3423 + $0x1b8] sm:$0xff]
    %v3480 = vld [vmem:[%s3423 + $0x1c0] sm:$0xff]
    %v3481 = vld [vmem:[%s3423 + $0x1c8] sm:$0xff]
    %v3482 = vld [vmem:[%s3423 + $0x1d0] sm:$0xff]
    %v3483 = vld [vmem:[%s3423 + $0x1d8] sm:$0xff]
    %v3484 = vld [vmem:[%s3423 + $0x1e0] sm:$0xff]
    %v3485 = vld [vmem:[%s3423 + $0x1e8] sm:$0xff]
    %v3486 = vld [vmem:[%s3423 + $0x1f0] sm:$0xff]
    %v3487 = vld [vmem:[%s3423 + $0x1f8] sm:$0xff]
    %v3488 = vld [vmem:[%s3423 + $0x200] sm:$0xff]
    %v3489 = vld [vmem:[%s3423 + $0x208] sm:$0xff]
    %v3490 = vld [vmem:[%s3423 + $0x210] sm:$0xff]
    %v3491 = vld [vmem:[%s3423 + $0x218] sm:$0xff]
    %v3492 = vld [vmem:[%s3423 + $0x220] sm:$0xff]
    %v3493 = vld [vmem:[%s3423 + $0x228] sm:$0xff]
    %v3494 = vld [vmem:[%s3423 + $0x230] sm:$0xff]
    %v3495 = vld [vmem:[%s3423 + $0x238] sm:$0xff]
    %v3496 = vld [vmem:[%s3423 + $0x240] sm:$0xff]
    %v3497 = vld [vmem:[%s3423 + $0x248] sm:$0xff]
    %v3498 = vld [vmem:[%s3423 + $0x250] sm:$0xff]
    %v3499 = vld [vmem:[%s3423 + $0x258] sm:$0xff]
    %v3500 = vld [vmem:[%s3423 + $0x260] sm:$0xff]
    %v3501 = vld [vmem:[%s3423 + $0x268] sm:$0xff]
    %v3502 = vld [vmem:[%s3423 + $0x270] sm:$0xff]
    %v3503 = vld [vmem:[%s3423 + $0x278] sm:$0xff]
    %v3504 = vld [vmem:[%s3423 + $0x280] sm:$0xff]
    %v3505 = vld [vmem:[%s3423 + $0x288] sm:$0xff]
    %v3506 = vld [vmem:[%s3423 + $0x290] sm:$0xff]
    %v3507 = vld [vmem:[%s3423 + $0x298] sm:$0xff]
    %v3508 = vld [vmem:[%s3423 + $0x2a0] sm:$0xff]
    %v3509 = vld [vmem:[%s3423 + $0x2a8] sm:$0xff]
    %v3510 = vld [vmem:[%s3423 + $0x2b0] sm:$0xff]
    %v3511 = vld [vmem:[%s3423 + $0x2b8] sm:$0xff]
    %v3512 = vld [vmem:[%s3423 + $0x2c0] sm:$0xff]
    %v3513 = vld [vmem:[%s3423 + $0x2c8] sm:$0xff]
    %v3514 = vld [vmem:[%s3423 + $0x2d0] sm:$0xff]
    %v3515 = vld [vmem:[%s3423 + $0x2d8] sm:$0xff]
    %v3516 = vld [vmem:[%s3423 + $0x2e0] sm:$0xff]
    %v3517 = vld [vmem:[%s3423 + $0x2e8] sm:$0xff]
    %v3518 = vld [vmem:[%s3423 + $0x2f0] sm:$0xff]
    %v3519 = vld [vmem:[%s3423 + $0x2f8] sm:$0xff]
    %v3520 = vld [vmem:[%s3423 + $0x300] sm:$0xff]
    %v3521 = vld [vmem:[%s3423 + $0x308] sm:$0xff]
    %v3522 = vld [vmem:[%s3423 + $0x310] sm:$0xff]
    %v3523 = vld [vmem:[%s3423 + $0x318] sm:$0xff]
    %v3524 = vld [vmem:[%s3423 + $0x320] sm:$0xff]
    %v3525 = vld [vmem:[%s3423 + $0x328] sm:$0xff]
    %v3526 = vld [vmem:[%s3423 + $0x330] sm:$0xff]
    %v3527 = vld [vmem:[%s3423 + $0x338] sm:$0xff]
    %v3528 = vld [vmem:[%s3423 + $0x340] sm:$0xff]
    %v3529 = vld [vmem:[%s3423 + $0x348] sm:$0xff]
    %v3530 = vld [vmem:[%s3423 + $0x350] sm:$0xff]
    %v3531 = vld [vmem:[%s3423 + $0x358] sm:$0xff]
    %v3532 = vld [vmem:[%s3423 + $0x360] sm:$0xff]
    %v3533 = vld [vmem:[%s3423 + $0x368] sm:$0xff]
    %v3534 = vld [vmem:[%s3423 + $0x370] sm:$0xff]
    %v3535 = vld [vmem:[%s3423 + $0x378] sm:$0xff]
    %v3536 = vld [vmem:[%s3423 + $0x380] sm:$0xff]
    %v3537 = vld [vmem:[%s3423 + $0x388] sm:$0xff]
    %v3538 = vld [vmem:[%s3423 + $0x390] sm:$0xff]
    %v3539 = vld [vmem:[%s3423 + $0x398] sm:$0xff]
    %v3540 = vld [vmem:[%s3423 + $0x3a0] sm:$0xff]
    %v3541 = vld [vmem:[%s3423 + $0x3a8] sm:$0xff]
    %v3542 = vld [vmem:[%s3423 + $0x3b0] sm:$0xff]
    %v3543 = vld [vmem:[%s3423 + $0x3b8] sm:$0xff]
    %v3544 = vld [vmem:[%s3423 + $0x3c0] sm:$0xff]
    %v3545 = vld [vmem:[%s3423 + $0x3c8] sm:$0xff]
    %v3546 = vld [vmem:[%s3423 + $0x3d0] sm:$0xff]
    %v3547 = vld [vmem:[%s3423 + $0x3d8] sm:$0xff]
    %v3548 = vld [vmem:[%s3423 + $0x3e0] sm:$0xff]
    %v3549 = vld [vmem:[%s3423 + $0x3e8] sm:$0xff]
    %v3550 = vld [vmem:[%s3423 + $0x3f0] sm:$0xff]
    %v3551 = vld [vmem:[%s3423 + $0x3f8] sm:$0xff]
    %v3552 = vld [vmem:[%s3423 + $0x400] sm:$0xff]
    %v3553 = vld [vmem:[%s3423 + $0x408] sm:$0xff]
    %v3554 = vld [vmem:[%s3423 + $0x410] sm:$0xff]
    %v3555 = vld [vmem:[%s3423 + $0x418] sm:$0xff]
    %v3556 = vld [vmem:[%s3423 + $0x420] sm:$0xff]
    %v3557 = vld [vmem:[%s3423 + $0x428] sm:$0xff]
    %v3558 = vld [vmem:[%s3423 + $0x430] sm:$0xff]
    %v3559 = vld [vmem:[%s3423 + $0x438] sm:$0xff]
    %v3560 = vld [vmem:[%s3423 + $0x440] sm:$0xff]
    %v3561 = vld [vmem:[%s3423 + $0x448] sm:$0xff]
    %v3562 = vld [vmem:[%s3423 + $0x450] sm:$0xff]
    %v3563 = vld [vmem:[%s3423 + $0x458] sm:$0xff]
    %v3564 = vld [vmem:[%s3423 + $0x460] sm:$0xff]
    %v3565 = vld [vmem:[%s3423 + $0x468] sm:$0xff]
    %v3566 = vld [vmem:[%s3423 + $0x470] sm:$0xff]
    %v3567 = vld [vmem:[%s3423 + $0x478] sm:$0xff]
    %v3568 = vld [vmem:[%s3423 + $0x480] sm:$0xff]
    %v3569 = vld [vmem:[%s3423 + $0x488] sm:$0xff]
    %v3570 = vld [vmem:[%s3423 + $0x490] sm:$0xff]
    %v3571 = vld [vmem:[%s3423 + $0x498] sm:$0xff]
    %v3572 = vld [vmem:[%s3423 + $0x4a0] sm:$0xff]
    %v3573 = vld [vmem:[%s3423 + $0x4a8] sm:$0xff]
    %v3574 = vld [vmem:[%s3423 + $0x4b0] sm:$0xff]
    %v3575 = vld [vmem:[%s3423 + $0x4b8] sm:$0xff]
    %v3576 = vld [vmem:[%s3423 + $0x4c0] sm:$0xff]
    %v3577 = vld [vmem:[%s3423 + $0x4c8] sm:$0xff]
    %v3578 = vld [vmem:[%s3423 + $0x4d0] sm:$0xff]
    %v3579 = vld [vmem:[%s3423 + $0x4d8] sm:$0xff]
    %v3580 = vld [vmem:[%s3423 + $0x4e0] sm:$0xff]
    %v3581 = vld [vmem:[%s3423 + $0x4e8] sm:$0xff]
    %v3582 = vld [vmem:[%s3423 + $0x4f0] sm:$0xff]
    %v3583 = vld [vmem:[%s3423 + $0x4f8] sm:$0xff]
    %v3584 = vld [vmem:[%s3423 + $0x500] sm:$0xff]
    %v3585 = vld [vmem:[%s3423 + $0x508] sm:$0xff]
    %v3586 = vld [vmem:[%s3423 + $0x510] sm:$0xff]
    %v3587 = vld [vmem:[%s3423 + $0x518] sm:$0xff]
    %v3588 = vld [vmem:[%s3423 + $0x520] sm:$0xff]
    %v3589 = vld [vmem:[%s3423 + $0x528] sm:$0xff]
    %v3590 = vld [vmem:[%s3423 + $0x530] sm:$0xff]
    %v3591 = vld [vmem:[%s3423 + $0x538] sm:$0xff]
    %v3592 = vld [vmem:[%s3423 + $0x540] sm:$0xff]
    %v3593 = vld [vmem:[%s3423 + $0x548] sm:$0xff]
    %v3594 = vld [vmem:[%s3423 + $0x550] sm:$0xff]
    %v3595 = vld [vmem:[%s3423 + $0x558] sm:$0xff]
    %v3596 = vld [vmem:[%s3423 + $0x560] sm:$0xff]
    %v3597 = vld [vmem:[%s3423 + $0x568] sm:$0xff]
    %v3598 = vld [vmem:[%s3423 + $0x570] sm:$0xff]
    %v3599 = vld [vmem:[%s3423 + $0x578] sm:$0xff]
    %v3600 = vld [vmem:[%s3423 + $0x580] sm:$0xff]
    %v3601 = vld [vmem:[%s3423 + $0x588] sm:$0xff]
    %v3602 = vld [vmem:[%s3423 + $0x590] sm:$0xff]
    %v3603 = vld [vmem:[%s3423 + $0x598] sm:$0xff]
    %v3604 = vld [vmem:[%s3423 + $0x5a0] sm:$0xff]
    %v3605 = vld [vmem:[%s3423 + $0x5a8] sm:$0xff]
    %v3606 = vld [vmem:[%s3423 + $0x5b0] sm:$0xff]
    %v3607 = vld [vmem:[%s3423 + $0x5b8] sm:$0xff]
    %v3608 = vld [vmem:[%s3423 + $0x5c0] sm:$0xff]
    %v3609 = vld [vmem:[%s3423 + $0x5c8] sm:$0xff]
    %v3610 = vld [vmem:[%s3423 + $0x5d0] sm:$0xff]
    %v3611 = vld [vmem:[%s3423 + $0x5d8] sm:$0xff]
    %v3612 = vld [vmem:[%s3423 + $0x5e0] sm:$0xff]
    %v3613 = vld [vmem:[%s3423 + $0x5e8] sm:$0xff]
    %v3614 = vld [vmem:[%s3423 + $0x5f0] sm:$0xff]
    %v3615 = vld [vmem:[%s3423 + $0x5f8] sm:$0xff]
    %s3616 = scalar_lea.vmem [#allocation10], 512
    %v3617 = vld [vmem:[%s3616] sm:$0xf]
    %v3618 = vld [vmem:[%s3616 + $0x4] sm:$0xf]
    %v3619 = vld [vmem:[%s3616 + $0x8] sm:$0xf]
    %v3620 = vld [vmem:[%s3616 + $0xc] sm:$0xf]
    %v3621 = vld [vmem:[%s3616 + $0x10] sm:$0xf]
    %v3622 = vld [vmem:[%s3616 + $0x14] sm:$0xf]
    %v3623 = vld [vmem:[%s3616 + $0x18] sm:$0xf]
    %v3624 = vld [vmem:[%s3616 + $0x1c] sm:$0xf]
    %v3625 = vld [vmem:[%s3616 + $0x20] sm:$0xf]
    %v3626 = vld [vmem:[%s3616 + $0x24] sm:$0xf]
    %v3627 = vld [vmem:[%s3616 + $0x28] sm:$0xf]
    %v3628 = vld [vmem:[%s3616 + $0x2c] sm:$0xf]
    %v3629 = vld [vmem:[%s3616 + $0x30] sm:$0xf]
    %v3630 = vld [vmem:[%s3616 + $0x34] sm:$0xf]
    %v3631 = vld [vmem:[%s3616 + $0x38] sm:$0xf]
    %v3632 = vld [vmem:[%s3616 + $0x3c] sm:$0xf]
    %v3633 = vld [vmem:[%s3616 + $0x40] sm:$0xf]
    %v3634 = vld [vmem:[%s3616 + $0x44] sm:$0xf]
    %v3635 = vld [vmem:[%s3616 + $0x48] sm:$0xf]
    %v3636 = vld [vmem:[%s3616 + $0x4c] sm:$0xf]
    %v3637 = vld [vmem:[%s3616 + $0x50] sm:$0xf]
    %v3638 = vld [vmem:[%s3616 + $0x54] sm:$0xf]
    %v3639 = vld [vmem:[%s3616 + $0x58] sm:$0xf]
    %v3640 = vld [vmem:[%s3616 + $0x5c] sm:$0xf]
    %v3641 = vld [vmem:[%s3616 + $0x60] sm:$0xf]
    %v3642 = vld [vmem:[%s3616 + $0x64] sm:$0xf]
    %v3643 = vld [vmem:[%s3616 + $0x68] sm:$0xf]
    %v3644 = vld [vmem:[%s3616 + $0x6c] sm:$0xf]
    %v3645 = vld [vmem:[%s3616 + $0x70] sm:$0xf]
    %v3646 = vld [vmem:[%s3616 + $0x74] sm:$0xf]
    %v3647 = vld [vmem:[%s3616 + $0x78] sm:$0xf]
    %v3648 = vld [vmem:[%s3616 + $0x7c] sm:$0xf]
    %v3649 = vld [vmem:[%s3616 + $0x80] sm:$0xf]
    %v3650 = vld [vmem:[%s3616 + $0x84] sm:$0xf]
    %v3651 = vld [vmem:[%s3616 + $0x88] sm:$0xf]
    %v3652 = vld [vmem:[%s3616 + $0x8c] sm:$0xf]
    %v3653 = vld [vmem:[%s3616 + $0x90] sm:$0xf]
    %v3654 = vld [vmem:[%s3616 + $0x94] sm:$0xf]
    %v3655 = vld [vmem:[%s3616 + $0x98] sm:$0xf]
    %v3656 = vld [vmem:[%s3616 + $0x9c] sm:$0xf]
    %v3657 = vld [vmem:[%s3616 + $0xa0] sm:$0xf]
    %v3658 = vld [vmem:[%s3616 + $0xa4] sm:$0xf]
    %v3659 = vld [vmem:[%s3616 + $0xa8] sm:$0xf]
    %v3660 = vld [vmem:[%s3616 + $0xac] sm:$0xf]
    %v3661 = vld [vmem:[%s3616 + $0xb0] sm:$0xf]
    %v3662 = vld [vmem:[%s3616 + $0xb4] sm:$0xf]
    %v3663 = vld [vmem:[%s3616 + $0xb8] sm:$0xf]
    %v3664 = vld [vmem:[%s3616 + $0xbc] sm:$0xf]
    %v3665 = vld [vmem:[%s3616 + $0xc0] sm:$0xf]
    %v3666 = vld [vmem:[%s3616 + $0xc4] sm:$0xf]
    %v3667 = vld [vmem:[%s3616 + $0xc8] sm:$0xf]
    %v3668 = vld [vmem:[%s3616 + $0xcc] sm:$0xf]
    %v3669 = vld [vmem:[%s3616 + $0xd0] sm:$0xf]
    %v3670 = vld [vmem:[%s3616 + $0xd4] sm:$0xf]
    %v3671 = vld [vmem:[%s3616 + $0xd8] sm:$0xf]
    %v3672 = vld [vmem:[%s3616 + $0xdc] sm:$0xf]
    %v3673 = vld [vmem:[%s3616 + $0xe0] sm:$0xf]
    %v3674 = vld [vmem:[%s3616 + $0xe4] sm:$0xf]
    %v3675 = vld [vmem:[%s3616 + $0xe8] sm:$0xf]
    %v3676 = vld [vmem:[%s3616 + $0xec] sm:$0xf]
    %v3677 = vld [vmem:[%s3616 + $0xf0] sm:$0xf]
    %v3678 = vld [vmem:[%s3616 + $0xf4] sm:$0xf]
    %v3679 = vld [vmem:[%s3616 + $0xf8] sm:$0xf]
    %v3680 = vld [vmem:[%s3616 + $0xfc] sm:$0xf]
    %v3681 = vld [vmem:[%s3616 + $0x100] sm:$0xf]
    %v3682 = vld [vmem:[%s3616 + $0x104] sm:$0xf]
    %v3683 = vld [vmem:[%s3616 + $0x108] sm:$0xf]
    %v3684 = vld [vmem:[%s3616 + $0x10c] sm:$0xf]
    %v3685 = vld [vmem:[%s3616 + $0x110] sm:$0xf]
    %v3686 = vld [vmem:[%s3616 + $0x114] sm:$0xf]
    %v3687 = vld [vmem:[%s3616 + $0x118] sm:$0xf]
    %v3688 = vld [vmem:[%s3616 + $0x11c] sm:$0xf]
    %v3689 = vld [vmem:[%s3616 + $0x120] sm:$0xf]
    %v3690 = vld [vmem:[%s3616 + $0x124] sm:$0xf]
    %v3691 = vld [vmem:[%s3616 + $0x128] sm:$0xf]
    %v3692 = vld [vmem:[%s3616 + $0x12c] sm:$0xf]
    %v3693 = vld [vmem:[%s3616 + $0x130] sm:$0xf]
    %v3694 = vld [vmem:[%s3616 + $0x134] sm:$0xf]
    %v3695 = vld [vmem:[%s3616 + $0x138] sm:$0xf]
    %v3696 = vld [vmem:[%s3616 + $0x13c] sm:$0xf]
    %v3697 = vld [vmem:[%s3616 + $0x140] sm:$0xf]
    %v3698 = vld [vmem:[%s3616 + $0x144] sm:$0xf]
    %v3699 = vld [vmem:[%s3616 + $0x148] sm:$0xf]
    %v3700 = vld [vmem:[%s3616 + $0x14c] sm:$0xf]
    %v3701 = vld [vmem:[%s3616 + $0x150] sm:$0xf]
    %v3702 = vld [vmem:[%s3616 + $0x154] sm:$0xf]
    %v3703 = vld [vmem:[%s3616 + $0x158] sm:$0xf]
    %v3704 = vld [vmem:[%s3616 + $0x15c] sm:$0xf]
    %v3705 = vld [vmem:[%s3616 + $0x160] sm:$0xf]
    %v3706 = vld [vmem:[%s3616 + $0x164] sm:$0xf]
    %v3707 = vld [vmem:[%s3616 + $0x168] sm:$0xf]
    %v3708 = vld [vmem:[%s3616 + $0x16c] sm:$0xf]
    %v3709 = vld [vmem:[%s3616 + $0x170] sm:$0xf]
    %v3710 = vld [vmem:[%s3616 + $0x174] sm:$0xf]
    %v3711 = vld [vmem:[%s3616 + $0x178] sm:$0xf]
    %v3712 = vld [vmem:[%s3616 + $0x17c] sm:$0xf]
    %v3713 = vld [vmem:[%s3616 + $0x180] sm:$0xf]
    %v3714 = vld [vmem:[%s3616 + $0x184] sm:$0xf]
    %v3715 = vld [vmem:[%s3616 + $0x188] sm:$0xf]
    %v3716 = vld [vmem:[%s3616 + $0x18c] sm:$0xf]
    %v3717 = vld [vmem:[%s3616 + $0x190] sm:$0xf]
    %v3718 = vld [vmem:[%s3616 + $0x194] sm:$0xf]
    %v3719 = vld [vmem:[%s3616 + $0x198] sm:$0xf]
    %v3720 = vld [vmem:[%s3616 + $0x19c] sm:$0xf]
    %v3721 = vld [vmem:[%s3616 + $0x1a0] sm:$0xf]
    %v3722 = vld [vmem:[%s3616 + $0x1a4] sm:$0xf]
    %v3723 = vld [vmem:[%s3616 + $0x1a8] sm:$0xf]
    %v3724 = vld [vmem:[%s3616 + $0x1ac] sm:$0xf]
    %v3725 = vld [vmem:[%s3616 + $0x1b0] sm:$0xf]
    %v3726 = vld [vmem:[%s3616 + $0x1b4] sm:$0xf]
    %v3727 = vld [vmem:[%s3616 + $0x1b8] sm:$0xf]
    %v3728 = vld [vmem:[%s3616 + $0x1bc] sm:$0xf]
    %v3729 = vld [vmem:[%s3616 + $0x1c0] sm:$0xf]
    %v3730 = vld [vmem:[%s3616 + $0x1c4] sm:$0xf]
    %v3731 = vld [vmem:[%s3616 + $0x1c8] sm:$0xf]
    %v3732 = vld [vmem:[%s3616 + $0x1cc] sm:$0xf]
    %v3733 = vld [vmem:[%s3616 + $0x1d0] sm:$0xf]
    %v3734 = vld [vmem:[%s3616 + $0x1d4] sm:$0xf]
    %v3735 = vld [vmem:[%s3616 + $0x1d8] sm:$0xf]
    %v3736 = vld [vmem:[%s3616 + $0x1dc] sm:$0xf]
    %v3737 = vld [vmem:[%s3616 + $0x1e0] sm:$0xf]
    %v3738 = vld [vmem:[%s3616 + $0x1e4] sm:$0xf]
    %v3739 = vld [vmem:[%s3616 + $0x1e8] sm:$0xf]
    %v3740 = vld [vmem:[%s3616 + $0x1ec] sm:$0xf]
    %v3741 = vld [vmem:[%s3616 + $0x1f0] sm:$0xf]
    %v3742 = vld [vmem:[%s3616 + $0x1f4] sm:$0xf]
    %v3743 = vld [vmem:[%s3616 + $0x1f8] sm:$0xf]
    %v3744 = vld [vmem:[%s3616 + $0x1fc] sm:$0xf]
    %3745 = vadd.xlane.f32.xlu0 %v3420
    %v3746 = vpop.xlane.xlu0 %3745
    %3747 = vadd.xlane.f32.xlu0 %v3421
    %v3748 = vpop.xlane.xlu0 %3747
    %v3749 = vmul.f32 %v3746, 0.0625
    %v3750 = vmul.f32 %v3748, 0.0625
    %v3751 = vmul.f32 %v3420, %v3420
    %v3752 = vmul.f32 %v3421, %v3421
    %3753 = vadd.xlane.f32.xlu0 %v3751
    %v3754 = vpop.xlane.xlu0 %3753
    %3755 = vadd.xlane.f32.xlu0 %v3752
    %v3756 = vpop.xlane.xlu0 %3755
    %v3757 = vmul.f32 %v3754, 0.0625
    %v3758 = vmul.f32 %v3756, 0.0625
    %v3759 = vmul.f32 %v3749, %v3749
    %v3760 = vmul.f32 %v3750, %v3750
    %v3761 = vsub.f32 %v3757, %v3759
    %v3762 = vsub.f32 %v3758, %v3760
    %v3763 = vmax.f32 %v3761, 0.0
    %v3764 = vmax.f32 %v3762, 0.0
    %v3765 = vsub.f32 %v3420, %v3749
    %v3766 = vsub.f32 %v3421, %v3750
    %v3767 = vadd.f32 %v3763, 1e-05
    %v3768 = vadd.f32 %v3764, 1e-05
    %v3769 = vrsqrt.pop %v3767
    %v3770 = vmul.f32 %v3769, %v3767
    %v3771 = vmul.f32 %v3770, %v3769
    %v3772 = vmul.f32 0.5, %v3771
    %v3773 = vsub.f32 1.5, %v3772
    %v3774 = vmul.f32 %v3769, %v3773
    %vm3775 = vweird.f32 %v3767
    %vm3776 = vweird.f32 %v3769
    %vm3777 = vmor %vm3775, %vm3776
    %v3778 = vsel %vm3777, %v3769, %v3774
    %v3779 = vrsqrt.pop %v3768
    %v3780 = vmul.f32 %v3779, %v3768
    %v3781 = vmul.f32 %v3780, %v3779
    %v3782 = vmul.f32 0.5, %v3781
    %v3783 = vsub.f32 1.5, %v3782
    %v3784 = vmul.f32 %v3779, %v3783
    %vm3785 = vweird.f32 %v3768
    %vm3786 = vweird.f32 %v3779
    %vm3787 = vmor %vm3785, %vm3786
    %v3788 = vsel %vm3787, %v3779, %v3784
    %v3789 = vmul.f32 %v3765, %v3778
    %v3790 = vmul.f32 %v3766, %v3788
    %v3791 = vadd.f32 %v3422, 1.0
    %v3792 = vperm.slane %v3791, 0
    %v3793 = vmul.f32 %v3789, %v3792
    %v3794 = vmul.f32 %v3790, %v3792
    %v3795 = vpack.c.bf16 %v3794, %v3793
    %v3988 = vunpack.c.l.b16 %v3424
    %v3989 = vunpack.c.h.b16 %v3424
    %v3990 = vunpack.c.l.b16 %v3425
    %v3991 = vunpack.c.h.b16 %v3425
    %v3992 = vunpack.c.l.b16 %v3426
    %v3993 = vunpack.c.h.b16 %v3426
    %v3994 = vunpack.c.l.b16 %v3427
    %v3995 = vunpack.c.h.b16 %v3427
    %v3996 = vunpack.c.l.b16 %v3428
    %v3997 = vunpack.c.h.b16 %v3428
    %v3998 = vunpack.c.l.b16 %v3429
    %v3999 = vunpack.c.h.b16 %v3429
    %v4000 = vunpack.c.l.b16 %v3430
    %v4001 = vunpack.c.h.b16 %v3430
    %v4002 = vunpack.c.l.b16 %v3431
    %v4003 = vunpack.c.h.b16 %v3431
    %v4004 = vunpack.c.l.b16 %v3432
    %v4005 = vunpack.c.h.b16 %v3432
    %v4006 = vunpack.c.l.b16 %v3433
    %v4007 = vunpack.c.h.b16 %v3433
    %v4008 = vunpack.c.l.b16 %v3434
    %v4009 = vunpack.c.h.b16 %v3434
    %v4010 = vunpack.c.l.b16 %v3435
    %v4011 = vunpack.c.h.b16 %v3435
    %v4012 = vunpack.c.l.b16 %v3436
    %v4013 = vunpack.c.h.b16 %v3436
    %v4014 = vunpack.c.l.b16 %v3437
    %v4015 = vunpack.c.h.b16 %v3437
    %v4016 = vunpack.c.l.b16 %v3438
    %v4017 = vunpack.c.h.b16 %v3438
    %v4018 = vunpack.c.l.b16 %v3439
    %v4019 = vunpack.c.h.b16 %v3439
    %v4020 = vunpack.c.l.b16 %v3440
    %v4021 = vunpack.c.h.b16 %v3440
    %v4022 = vunpack.c.l.b16 %v3441
    %v4023 = vunpack.c.h.b16 %v3441
    %v4024 = vunpack.c.l.b16 %v3442
    %v4025 = vunpack.c.h.b16 %v3442
    %v4026 = vunpack.c.l.b16 %v3443
    %v4027 = vunpack.c.h.b16 %v3443
    %v4028 = vunpack.c.l.b16 %v3444
    %v4029 = vunpack.c.h.b16 %v3444
    %v4030 = vunpack.c.l.b16 %v3445
    %v4031 = vunpack.c.h.b16 %v3445
    %v4032 = vunpack.c.l.b16 %v3446
    %v4033 = vunpack.c.h.b16 %v3446
    %v4034 = vunpack.c.l.b16 %v3447
    %v4035 = vunpack.c.h.b16 %v3447
    %v4036 = vunpack.c.l.b16 %v3448
    %v4037 = vunpack.c.h.b16 %v3448
    %v4038 = vunpack.c.l.b16 %v3449
    %v4039 = vunpack.c.h.b16 %v3449
    %v4040 = vunpack.c.l.b16 %v3450
    %v4041 = vunpack.c.h.b16 %v3450
    %v4042 = vunpack.c.l.b16 %v3451
    %v4043 = vunpack.c.h.b16 %v3451
    %v4044 = vunpack.c.l.b16 %v3452
    %v4045 = vunpack.c.h.b16 %v3452
    %v4046 = vunpack.c.l.b16 %v3453
    %v4047 = vunpack.c.h.b16 %v3453
    %v4048 = vunpack.c.l.b16 %v3454
    %v4049 = vunpack.c.h.b16 %v3454
    %v4050 = vunpack.c.l.b16 %v3455
    %v4051 = vunpack.c.h.b16 %v3455
    %v4052 = vunpack.c.l.b16 %v3456
    %v4053 = vunpack.c.h.b16 %v3456
    %v4054 = vunpack.c.l.b16 %v3457
    %v4055 = vunpack.c.h.b16 %v3457
    %v4056 = vunpack.c.l.b16 %v3458
    %v4057 = vunpack.c.h.b16 %v3458
    %v4058 = vunpack.c.l.b16 %v3459
    %v4059 = vunpack.c.h.b16 %v3459
    %v4060 = vunpack.c.l.b16 %v3460
    %v4061 = vunpack.c.h.b16 %v3460
    %v4062 = vunpack.c.l.b16 %v3461
    %v4063 = vunpack.c.h.b16 %v3461
    %v4064 = vunpack.c.l.b16 %v3462
    %v4065 = vunpack.c.h.b16 %v3462
    %v4066 = vunpack.c.l.b16 %v3463
    %v4067 = vunpack.c.h.b16 %v3463
    %v4068 = vunpack.c.l.b16 %v3464
    %v4069 = vunpack.c.h.b16 %v3464
    %v4070 = vunpack.c.l.b16 %v3465
    %v4071 = vunpack.c.h.b16 %v3465
    %v4072 = vunpack.c.l.b16 %v3466
    %v4073 = vunpack.c.h.b16 %v3466
    %v4074 = vunpack.c.l.b16 %v3467
    %v4075 = vunpack.c.h.b16 %v3467
    %v4076 = vunpack.c.l.b16 %v3468
    %v4077 = vunpack.c.h.b16 %v3468
    %v4078 = vunpack.c.l.b16 %v3469
    %v4079 = vunpack.c.h.b16 %v3469
    %v4080 = vunpack.c.l.b16 %v3470
    %v4081 = vunpack.c.h.b16 %v3470
    %v4082 = vunpack.c.l.b16 %v3471
    %v4083 = vunpack.c.h.b16 %v3471
    %v4084 = vunpack.c.l.b16 %v3472
    %v4085 = vunpack.c.h.b16 %v3472
    %v4086 = vunpack.c.l.b16 %v3473
    %v4087 = vunpack.c.h.b16 %v3473
    %v4088 = vunpack.c.l.b16 %v3474
    %v4089 = vunpack.c.h.b16 %v3474
    %v4090 = vunpack.c.l.b16 %v3475
    %v4091 = vunpack.c.h.b16 %v3475
    %v4092 = vunpack.c.l.b16 %v3476
    %v4093 = vunpack.c.h.b16 %v3476
    %v4094 = vunpack.c.l.b16 %v3477
    %v4095 = vunpack.c.h.b16 %v3477
    %v4096 = vunpack.c.l.b16 %v3478
    %v4097 = vunpack.c.h.b16 %v3478
    %v4098 = vunpack.c.l.b16 %v3479
    %v4099 = vunpack.c.h.b16 %v3479
    %v4100 = vunpack.c.l.b16 %v3480
    %v4101 = vunpack.c.h.b16 %v3480
    %v4102 = vunpack.c.l.b16 %v3481
    %v4103 = vunpack.c.h.b16 %v3481
    %v4104 = vunpack.c.l.b16 %v3482
    %v4105 = vunpack.c.h.b16 %v3482
    %v4106 = vunpack.c.l.b16 %v3483
    %v4107 = vunpack.c.h.b16 %v3483
    %v4108 = vunpack.c.l.b16 %v3484
    %v4109 = vunpack.c.h.b16 %v3484
    %v4110 = vunpack.c.l.b16 %v3485
    %v4111 = vunpack.c.h.b16 %v3485
    %v4112 = vunpack.c.l.b16 %v3486
    %v4113 = vunpack.c.h.b16 %v3486
    %v4114 = vunpack.c.l.b16 %v3487
    %v4115 = vunpack.c.h.b16 %v3487
    %v4116 = vunpack.c.l.b16 %v3488
    %v4117 = vunpack.c.h.b16 %v3488
    %v4118 = vunpack.c.l.b16 %v3489
    %v4119 = vunpack.c.h.b16 %v3489
    %v4120 = vunpack.c.l.b16 %v3490
    %v4121 = vunpack.c.h.b16 %v3490
    %v4122 = vunpack.c.l.b16 %v3491
    %v4123 = vunpack.c.h.b16 %v3491
    %v4124 = vunpack.c.l.b16 %v3492
    %v4125 = vunpack.c.h.b16 %v3492
    %v4126 = vunpack.c.l.b16 %v3493
    %v4127 = vunpack.c.h.b16 %v3493
    %v4128 = vunpack.c.l.b16 %v3494
    %v4129 = vunpack.c.h.b16 %v3494
    %v4130 = vunpack.c.l.b16 %v3495
    %v4131 = vunpack.c.h.b16 %v3495
    %v4132 = vunpack.c.l.b16 %v3496
    %v4133 = vunpack.c.h.b16 %v3496
    %v4134 = vunpack.c.l.b16 %v3497
    %v4135 = vunpack.c.h.b16 %v3497
    %v4136 = vunpack.c.l.b16 %v3498
    %v4137 = vunpack.c.h.b16 %v3498
    %v4138 = vunpack.c.l.b16 %v3499
    %v4139 = vunpack.c.h.b16 %v3499
    %v4140 = vunpack.c.l.b16 %v3500
    %v4141 = vunpack.c.h.b16 %v3500
    %v4142 = vunpack.c.l.b16 %v3501
    %v4143 = vunpack.c.h.b16 %v3501
    %v4144 = vunpack.c.l.b16 %v3502
    %v4145 = vunpack.c.h.b16 %v3502
    %v4146 = vunpack.c.l.b16 %v3503
    %v4147 = vunpack.c.h.b16 %v3503
    %v4148 = vunpack.c.l.b16 %v3504
    %v4149 = vunpack.c.h.b16 %v3504
    %v4150 = vunpack.c.l.b16 %v3505
    %v4151 = vunpack.c.h.b16 %v3505
    %v4152 = vunpack.c.l.b16 %v3506
    %v4153 = vunpack.c.h.b16 %v3506
    %v4154 = vunpack.c.l.b16 %v3507
    %v4155 = vunpack.c.h.b16 %v3507
    %v4156 = vunpack.c.l.b16 %v3508
    %v4157 = vunpack.c.h.b16 %v3508
    %v4158 = vunpack.c.l.b16 %v3509
    %v4159 = vunpack.c.h.b16 %v3509
    %v4160 = vunpack.c.l.b16 %v3510
    %v4161 = vunpack.c.h.b16 %v3510
    %v4162 = vunpack.c.l.b16 %v3511
    %v4163 = vunpack.c.h.b16 %v3511
    %v4164 = vunpack.c.l.b16 %v3512
    %v4165 = vunpack.c.h.b16 %v3512
    %v4166 = vunpack.c.l.b16 %v3513
    %v4167 = vunpack.c.h.b16 %v3513
    %v4168 = vunpack.c.l.b16 %v3514
    %v4169 = vunpack.c.h.b16 %v3514
    %v4170 = vunpack.c.l.b16 %v3515
    %v4171 = vunpack.c.h.b16 %v3515
    %v4172 = vunpack.c.l.b16 %v3516
    %v4173 = vunpack.c.h.b16 %v3516
    %v4174 = vunpack.c.l.b16 %v3517
    %v4175 = vunpack.c.h.b16 %v3517
    %v4176 = vunpack.c.l.b16 %v3518
    %v4177 = vunpack.c.h.b16 %v3518
    %v4178 = vunpack.c.l.b16 %v3519
    %v4179 = vunpack.c.h.b16 %v3519
    %v4180 = vunpack.c.l.b16 %v3520
    %v4181 = vunpack.c.h.b16 %v3520
    %v4182 = vunpack.c.l.b16 %v3521
    %v4183 = vunpack.c.h.b16 %v3521
    %v4184 = vunpack.c.l.b16 %v3522
    %v4185 = vunpack.c.h.b16 %v3522
    %v4186 = vunpack.c.l.b16 %v3523
    %v4187 = vunpack.c.h.b16 %v3523
    %v4188 = vunpack.c.l.b16 %v3524
    %v4189 = vunpack.c.h.b16 %v3524
    %v4190 = vunpack.c.l.b16 %v3525
    %v4191 = vunpack.c.h.b16 %v3525
    %v4192 = vunpack.c.l.b16 %v3526
    %v4193 = vunpack.c.h.b16 %v3526
    %v4194 = vunpack.c.l.b16 %v3527
    %v4195 = vunpack.c.h.b16 %v3527
    %v4196 = vunpack.c.l.b16 %v3528
    %v4197 = vunpack.c.h.b16 %v3528
    %v4198 = vunpack.c.l.b16 %v3529
    %v4199 = vunpack.c.h.b16 %v3529
    %v4200 = vunpack.c.l.b16 %v3530
    %v4201 = vunpack.c.h.b16 %v3530
    %v4202 = vunpack.c.l.b16 %v3531
    %v4203 = vunpack.c.h.b16 %v3531
    %v4204 = vunpack.c.l.b16 %v3532
    %v4205 = vunpack.c.h.b16 %v3532
    %v4206 = vunpack.c.l.b16 %v3533
    %v4207 = vunpack.c.h.b16 %v3533
    %v4208 = vunpack.c.l.b16 %v3534
    %v4209 = vunpack.c.h.b16 %v3534
    %v4210 = vunpack.c.l.b16 %v3535
    %v4211 = vunpack.c.h.b16 %v3535
    %v4212 = vunpack.c.l.b16 %v3536
    %v4213 = vunpack.c.h.b16 %v3536
    %v4214 = vunpack.c.l.b16 %v3537
    %v4215 = vunpack.c.h.b16 %v3537
    %v4216 = vunpack.c.l.b16 %v3538
    %v4217 = vunpack.c.h.b16 %v3538
    %v4218 = vunpack.c.l.b16 %v3539
    %v4219 = vunpack.c.h.b16 %v3539
    %v4220 = vunpack.c.l.b16 %v3540
    %v4221 = vunpack.c.h.b16 %v3540
    %v4222 = vunpack.c.l.b16 %v3541
    %v4223 = vunpack.c.h.b16 %v3541
    %v4224 = vunpack.c.l.b16 %v3542
    %v4225 = vunpack.c.h.b16 %v3542
    %v4226 = vunpack.c.l.b16 %v3543
    %v4227 = vunpack.c.h.b16 %v3543
    %v4228 = vunpack.c.l.b16 %v3544
    %v4229 = vunpack.c.h.b16 %v3544
    %v4230 = vunpack.c.l.b16 %v3545
    %v4231 = vunpack.c.h.b16 %v3545
    %v4232 = vunpack.c.l.b16 %v3546
    %v4233 = vunpack.c.h.b16 %v3546
    %v4234 = vunpack.c.l.b16 %v3547
    %v4235 = vunpack.c.h.b16 %v3547
    %v4236 = vunpack.c.l.b16 %v3548
    %v4237 = vunpack.c.h.b16 %v3548
    %v4238 = vunpack.c.l.b16 %v3549
    %v4239 = vunpack.c.h.b16 %v3549
    %v4240 = vunpack.c.l.b16 %v3550
    %v4241 = vunpack.c.h.b16 %v3550
    %v4242 = vunpack.c.l.b16 %v3551
    %v4243 = vunpack.c.h.b16 %v3551
    %v4244 = vunpack.c.l.b16 %v3552
    %v4245 = vunpack.c.h.b16 %v3552
    %v4246 = vunpack.c.l.b16 %v3553
    %v4247 = vunpack.c.h.b16 %v3553
    %v4248 = vunpack.c.l.b16 %v3554
    %v4249 = vunpack.c.h.b16 %v3554
    %v4250 = vunpack.c.l.b16 %v3555
    %v4251 = vunpack.c.h.b16 %v3555
    %v4252 = vunpack.c.l.b16 %v3556
    %v4253 = vunpack.c.h.b16 %v3556
    %v4254 = vunpack.c.l.b16 %v3557
    %v4255 = vunpack.c.h.b16 %v3557
    %v4256 = vunpack.c.l.b16 %v3558
    %v4257 = vunpack.c.h.b16 %v3558
    %v4258 = vunpack.c.l.b16 %v3559
    %v4259 = vunpack.c.h.b16 %v3559
    %v4260 = vunpack.c.l.b16 %v3560
    %v4261 = vunpack.c.h.b16 %v3560
    %v4262 = vunpack.c.l.b16 %v3561
    %v4263 = vunpack.c.h.b16 %v3561
    %v4264 = vunpack.c.l.b16 %v3562
    %v4265 = vunpack.c.h.b16 %v3562
    %v4266 = vunpack.c.l.b16 %v3563
    %v4267 = vunpack.c.h.b16 %v3563
    %v4268 = vunpack.c.l.b16 %v3564
    %v4269 = vunpack.c.h.b16 %v3564
    %v4270 = vunpack.c.l.b16 %v3565
    %v4271 = vunpack.c.h.b16 %v3565
    %v4272 = vunpack.c.l.b16 %v3566
    %v4273 = vunpack.c.h.b16 %v3566
    %v4274 = vunpack.c.l.b16 %v3567
    %v4275 = vunpack.c.h.b16 %v3567
    %v4276 = vunpack.c.l.b16 %v3568
    %v4277 = vunpack.c.h.b16 %v3568
    %v4278 = vunpack.c.l.b16 %v3569
    %v4279 = vunpack.c.h.b16 %v3569
    %v4280 = vunpack.c.l.b16 %v3570
    %v4281 = vunpack.c.h.b16 %v3570
    %v4282 = vunpack.c.l.b16 %v3571
    %v4283 = vunpack.c.h.b16 %v3571
    %v4284 = vunpack.c.l.b16 %v3572
    %v4285 = vunpack.c.h.b16 %v3572
    %v4286 = vunpack.c.l.b16 %v3573
    %v4287 = vunpack.c.h.b16 %v3573
    %v4288 = vunpack.c.l.b16 %v3574
    %v4289 = vunpack.c.h.b16 %v3574
    %v4290 = vunpack.c.l.b16 %v3575
    %v4291 = vunpack.c.h.b16 %v3575
    %v4292 = vunpack.c.l.b16 %v3576
    %v4293 = vunpack.c.h.b16 %v3576
    %v4294 = vunpack.c.l.b16 %v3577
    %v4295 = vunpack.c.h.b16 %v3577
    %v4296 = vunpack.c.l.b16 %v3578
    %v4297 = vunpack.c.h.b16 %v3578
    %v4298 = vunpack.c.l.b16 %v3579
    %v4299 = vunpack.c.h.b16 %v3579
    %v4300 = vunpack.c.l.b16 %v3580
    %v4301 = vunpack.c.h.b16 %v3580
    %v4302 = vunpack.c.l.b16 %v3581
    %v4303 = vunpack.c.h.b16 %v3581
    %v4304 = vunpack.c.l.b16 %v3582
    %v4305 = vunpack.c.h.b16 %v3582
    %v4306 = vunpack.c.l.b16 %v3583
    %v4307 = vunpack.c.h.b16 %v3583
    %v4308 = vunpack.c.l.b16 %v3584
    %v4309 = vunpack.c.h.b16 %v3584
    %v4310 = vunpack.c.l.b16 %v3585
    %v4311 = vunpack.c.h.b16 %v3585
    %v4312 = vunpack.c.l.b16 %v3586
    %v4313 = vunpack.c.h.b16 %v3586
    %v4314 = vunpack.c.l.b16 %v3587
    %v4315 = vunpack.c.h.b16 %v3587
    %v4316 = vunpack.c.l.b16 %v3588
    %v4317 = vunpack.c.h.b16 %v3588
    %v4318 = vunpack.c.l.b16 %v3589
    %v4319 = vunpack.c.h.b16 %v3589
    %v4320 = vunpack.c.l.b16 %v3590
    %v4321 = vunpack.c.h.b16 %v3590
    %v4322 = vunpack.c.l.b16 %v3591
    %v4323 = vunpack.c.h.b16 %v3591
    %v4324 = vunpack.c.l.b16 %v3592
    %v4325 = vunpack.c.h.b16 %v3592
    %v4326 = vunpack.c.l.b16 %v3593
    %v4327 = vunpack.c.h.b16 %v3593
    %v4328 = vunpack.c.l.b16 %v3594
    %v4329 = vunpack.c.h.b16 %v3594
    %v4330 = vunpack.c.l.b16 %v3595
    %v4331 = vunpack.c.h.b16 %v3595
    %v4332 = vunpack.c.l.b16 %v3596
    %v4333 = vunpack.c.h.b16 %v3596
    %v4334 = vunpack.c.l.b16 %v3597
    %v4335 = vunpack.c.h.b16 %v3597
    %v4336 = vunpack.c.l.b16 %v3598
    %v4337 = vunpack.c.h.b16 %v3598
    %v4338 = vunpack.c.l.b16 %v3599
    %v4339 = vunpack.c.h.b16 %v3599
    %v4340 = vunpack.c.l.b16 %v3600
    %v4341 = vunpack.c.h.b16 %v3600
    %v4342 = vunpack.c.l.b16 %v3601
    %v4343 = vunpack.c.h.b16 %v3601
    %v4344 = vunpack.c.l.b16 %v3602
    %v4345 = vunpack.c.h.b16 %v3602
    %v4346 = vunpack.c.l.b16 %v3603
    %v4347 = vunpack.c.h.b16 %v3603
    %v4348 = vunpack.c.l.b16 %v3604
    %v4349 = vunpack.c.h.b16 %v3604
    %v4350 = vunpack.c.l.b16 %v3605
    %v4351 = vunpack.c.h.b16 %v3605
    %v4352 = vunpack.c.l.b16 %v3606
    %v4353 = vunpack.c.h.b16 %v3606
    %v4354 = vunpack.c.l.b16 %v3607
    %v4355 = vunpack.c.h.b16 %v3607
    %v4356 = vunpack.c.l.b16 %v3608
    %v4357 = vunpack.c.h.b16 %v3608
    %v4358 = vunpack.c.l.b16 %v3609
    %v4359 = vunpack.c.h.b16 %v3609
    %v4360 = vunpack.c.l.b16 %v3610
    %v4361 = vunpack.c.h.b16 %v3610
    %v4362 = vunpack.c.l.b16 %v3611
    %v4363 = vunpack.c.h.b16 %v3611
    %v4364 = vunpack.c.l.b16 %v3612
    %v4365 = vunpack.c.h.b16 %v3612
    %v4366 = vunpack.c.l.b16 %v3613
    %v4367 = vunpack.c.h.b16 %v3613
    %v4368 = vunpack.c.l.b16 %v3614
    %v4369 = vunpack.c.h.b16 %v3614
    %v4370 = vunpack.c.l.b16 %v3615
    %v4371 = vunpack.c.h.b16 %v3615
    %v4372 = vpack.c.b16 %v4012, %v3988
    %v4373 = vpack.c.b16 %v4013, %v3989
    %v4374 = vpack.c.b16 %v4014, %v3990
    %v4375 = vpack.c.b16 %v4015, %v3991
    %v4376 = vpack.c.b16 %v4016, %v3992
    %v4377 = vpack.c.b16 %v4017, %v3993
    %v4378 = vpack.c.b16 %v4018, %v3994
    %v4379 = vpack.c.b16 %v4019, %v3995
    %v4380 = vpack.c.b16 %v4020, %v3996
    %v4381 = vpack.c.b16 %v4021, %v3997
    %v4382 = vpack.c.b16 %v4022, %v3998
    %v4383 = vpack.c.b16 %v4023, %v3999
    %v4384 = vpack.c.b16 %v4024, %v4000
    %v4385 = vpack.c.b16 %v4025, %v4001
    %v4386 = vpack.c.b16 %v4026, %v4002
    %v4387 = vpack.c.b16 %v4027, %v4003
    %v4388 = vpack.c.b16 %v4028, %v4004
    %v4389 = vpack.c.b16 %v4029, %v4005
    %v4390 = vpack.c.b16 %v4030, %v4006
    %v4391 = vpack.c.b16 %v4031, %v4007
    %v4392 = vpack.c.b16 %v4032, %v4008
    %v4393 = vpack.c.b16 %v4033, %v4009
    %v4394 = vpack.c.b16 %v4034, %v4010
    %v4395 = vpack.c.b16 %v4035, %v4011
    %v4396 = vpack.c.b16 %v4060, %v4036
    %v4397 = vpack.c.b16 %v4061, %v4037
    %v4398 = vpack.c.b16 %v4062, %v4038
    %v4399 = vpack.c.b16 %v4063, %v4039
    %v4400 = vpack.c.b16 %v4064, %v4040
    %v4401 = vpack.c.b16 %v4065, %v4041
    %v4402 = vpack.c.b16 %v4066, %v4042
    %v4403 = vpack.c.b16 %v4067, %v4043
    %v4404 = vpack.c.b16 %v4068, %v4044
    %v4405 = vpack.c.b16 %v4069, %v4045
    %v4406 = vpack.c.b16 %v4070, %v4046
    %v4407 = vpack.c.b16 %v4071, %v4047
    %v4408 = vpack.c.b16 %v4072, %v4048
    %v4409 = vpack.c.b16 %v4073, %v4049
    %v4410 = vpack.c.b16 %v4074, %v4050
    %v4411 = vpack.c.b16 %v4075, %v4051
    %v4412 = vpack.c.b16 %v4076, %v4052
    %v4413 = vpack.c.b16 %v4077, %v4053
    %v4414 = vpack.c.b16 %v4078, %v4054
    %v4415 = vpack.c.b16 %v4079, %v4055
    %v4416 = vpack.c.b16 %v4080, %v4056
    %v4417 = vpack.c.b16 %v4081, %v4057
    %v4418 = vpack.c.b16 %v4082, %v4058
    %v4419 = vpack.c.b16 %v4083, %v4059
    %v4420 = vpack.c.b16 %v4108, %v4084
    %v4421 = vpack.c.b16 %v4109, %v4085
    %v4422 = vpack.c.b16 %v4110, %v4086
    %v4423 = vpack.c.b16 %v4111, %v4087
    %v4424 = vpack.c.b16 %v4112, %v4088
    %v4425 = vpack.c.b16 %v4113, %v4089
    %v4426 = vpack.c.b16 %v4114, %v4090
    %v4427 = vpack.c.b16 %v4115, %v4091
    %v4428 = vpack.c.b16 %v4116, %v4092
    %v4429 = vpack.c.b16 %v4117, %v4093
    %v4430 = vpack.c.b16 %v4118, %v4094
    %v4431 = vpack.c.b16 %v4119, %v4095
    %v4432 = vpack.c.b16 %v4120, %v4096
    %v4433 = vpack.c.b16 %v4121, %v4097
    %v4434 = vpack.c.b16 %v4122, %v4098
    %v4435 = vpack.c.b16 %v4123, %v4099
    %v4436 = vpack.c.b16 %v4124, %v4100
    %v4437 = vpack.c.b16 %v4125, %v4101
    %v4438 = vpack.c.b16 %v4126, %v4102
    %v4439 = vpack.c.b16 %v4127, %v4103
    %v4440 = vpack.c.b16 %v4128, %v4104
    %v4441 = vpack.c.b16 %v4129, %v4105
    %v4442 = vpack.c.b16 %v4130, %v4106
    %v4443 = vpack.c.b16 %v4131, %v4107
    %v4444 = vpack.c.b16 %v4156, %v4132
    %v4445 = vpack.c.b16 %v4157, %v4133
    %v4446 = vpack.c.b16 %v4158, %v4134
    %v4447 = vpack.c.b16 %v4159, %v4135
    %v4448 = vpack.c.b16 %v4160, %v4136
    %v4449 = vpack.c.b16 %v4161, %v4137
    %v4450 = vpack.c.b16 %v4162, %v4138
    %v4451 = vpack.c.b16 %v4163, %v4139
    %v4452 = vpack.c.b16 %v4164, %v4140
    %v4453 = vpack.c.b16 %v4165, %v4141
    %v4454 = vpack.c.b16 %v4166, %v4142
    %v4455 = vpack.c.b16 %v4167, %v4143
    %v4456 = vpack.c.b16 %v4168, %v4144
    %v4457 = vpack.c.b16 %v4169, %v4145
    %v4458 = vpack.c.b16 %v4170, %v4146
    %v4459 = vpack.c.b16 %v4171, %v4147
    %v4460 = vpack.c.b16 %v4172, %v4148
    %v4461 = vpack.c.b16 %v4173, %v4149
    %v4462 = vpack.c.b16 %v4174, %v4150
    %v4463 = vpack.c.b16 %v4175, %v4151
    %v4464 = vpack.c.b16 %v4176, %v4152
    %v4465 = vpack.c.b16 %v4177, %v4153
    %v4466 = vpack.c.b16 %v4178, %v4154
    %v4467 = vpack.c.b16 %v4179, %v4155
    %v4468 = vpack.c.b16 %v4204, %v4180
    %v4469 = vpack.c.b16 %v4205, %v4181
    %v4470 = vpack.c.b16 %v4206, %v4182
    %v4471 = vpack.c.b16 %v4207, %v4183
    %v4472 = vpack.c.b16 %v4208, %v4184
    %v4473 = vpack.c.b16 %v4209, %v4185
    %v4474 = vpack.c.b16 %v4210, %v4186
    %v4475 = vpack.c.b16 %v4211, %v4187
    %v4476 = vpack.c.b16 %v4212, %v4188
    %v4477 = vpack.c.b16 %v4213, %v4189
    %v4478 = vpack.c.b16 %v4214, %v4190
    %v4479 = vpack.c.b16 %v4215, %v4191
    %v4480 = vpack.c.b16 %v4216, %v4192
    %v4481 = vpack.c.b16 %v4217, %v4193
    %v4482 = vpack.c.b16 %v4218, %v4194
    %v4483 = vpack.c.b16 %v4219, %v4195
    %v4484 = vpack.c.b16 %v4220, %v4196
    %v4485 = vpack.c.b16 %v4221, %v4197
    %v4486 = vpack.c.b16 %v4222, %v4198
    %v4487 = vpack.c.b16 %v4223, %v4199
    %v4488 = vpack.c.b16 %v4224, %v4200
    %v4489 = vpack.c.b16 %v4225, %v4201
    %v4490 = vpack.c.b16 %v4226, %v4202
    %v4491 = vpack.c.b16 %v4227, %v4203
    %v4492 = vpack.c.b16 %v4252, %v4228
    %v4493 = vpack.c.b16 %v4253, %v4229
    %v4494 = vpack.c.b16 %v4254, %v4230
    %v4495 = vpack.c.b16 %v4255, %v4231
    %v4496 = vpack.c.b16 %v4256, %v4232
    %v4497 = vpack.c.b16 %v4257, %v4233
    %v4498 = vpack.c.b16 %v4258, %v4234
    %v4499 = vpack.c.b16 %v4259, %v4235
    %v4500 = vpack.c.b16 %v4260, %v4236
    %v4501 = vpack.c.b16 %v4261, %v4237
    %v4502 = vpack.c.b16 %v4262, %v4238
    %v4503 = vpack.c.b16 %v4263, %v4239
    %v4504 = vpack.c.b16 %v4264, %v4240
    %v4505 = vpack.c.b16 %v4265, %v4241
    %v4506 = vpack.c.b16 %v4266, %v4242
    %v4507 = vpack.c.b16 %v4267, %v4243
    %v4508 = vpack.c.b16 %v4268, %v4244
    %v4509 = vpack.c.b16 %v4269, %v4245
    %v4510 = vpack.c.b16 %v4270, %v4246
    %v4511 = vpack.c.b16 %v4271, %v4247
    %v4512 = vpack.c.b16 %v4272, %v4248
    %v4513 = vpack.c.b16 %v4273, %v4249
    %v4514 = vpack.c.b16 %v4274, %v4250
    %v4515 = vpack.c.b16 %v4275, %v4251
    %v4516 = vpack.c.b16 %v4300, %v4276
    %v4517 = vpack.c.b16 %v4301, %v4277
    %v4518 = vpack.c.b16 %v4302, %v4278
    %v4519 = vpack.c.b16 %v4303, %v4279
    %v4520 = vpack.c.b16 %v4304, %v4280
    %v4521 = vpack.c.b16 %v4305, %v4281
    %v4522 = vpack.c.b16 %v4306, %v4282
    %v4523 = vpack.c.b16 %v4307, %v4283
    %v4524 = vpack.c.b16 %v4308, %v4284
    %v4525 = vpack.c.b16 %v4309, %v4285
    %v4526 = vpack.c.b16 %v4310, %v4286
    %v4527 = vpack.c.b16 %v4311, %v4287
    %v4528 = vpack.c.b16 %v4312, %v4288
    %v4529 = vpack.c.b16 %v4313, %v4289
    %v4530 = vpack.c.b16 %v4314, %v4290
    %v4531 = vpack.c.b16 %v4315, %v4291
    %v4532 = vpack.c.b16 %v4316, %v4292
    %v4533 = vpack.c.b16 %v4317, %v4293
    %v4534 = vpack.c.b16 %v4318, %v4294
    %v4535 = vpack.c.b16 %v4319, %v4295
    %v4536 = vpack.c.b16 %v4320, %v4296
    %v4537 = vpack.c.b16 %v4321, %v4297
    %v4538 = vpack.c.b16 %v4322, %v4298
    %v4539 = vpack.c.b16 %v4323, %v4299
    %v4540 = vpack.c.b16 %v4348, %v4324
    %v4541 = vpack.c.b16 %v4349, %v4325
    %v4542 = vpack.c.b16 %v4350, %v4326
    %v4543 = vpack.c.b16 %v4351, %v4327
    %v4544 = vpack.c.b16 %v4352, %v4328
    %v4545 = vpack.c.b16 %v4353, %v4329
    %v4546 = vpack.c.b16 %v4354, %v4330
    %v4547 = vpack.c.b16 %v4355, %v4331
    %v4548 = vpack.c.b16 %v4356, %v4332
    %v4549 = vpack.c.b16 %v4357, %v4333
    %v4550 = vpack.c.b16 %v4358, %v4334
    %v4551 = vpack.c.b16 %v4359, %v4335
    %v4552 = vpack.c.b16 %v4360, %v4336
    %v4553 = vpack.c.b16 %v4361, %v4337
    %v4554 = vpack.c.b16 %v4362, %v4338
    %v4555 = vpack.c.b16 %v4363, %v4339
    %v4556 = vpack.c.b16 %v4364, %v4340
    %v4557 = vpack.c.b16 %v4365, %v4341
    %v4558 = vpack.c.b16 %v4366, %v4342
    %v4559 = vpack.c.b16 %v4367, %v4343
    %v4560 = vpack.c.b16 %v4368, %v4344
    %v4561 = vpack.c.b16 %v4369, %v4345
    %v4562 = vpack.c.b16 %v4370, %v4346
    %v4563 = vpack.c.b16 %v4371, %v4347
    %4756 = vmatpush.bf16.msra.mxu0 %v4540
    %4757 = vmatpush.bf16.msra.mxu0 %v4516
    %4758 = vmatpush.bf16.msra.mxu0 %v4492
    %4759 = vmatpush.bf16.msra.mxu0 %v4468
    %4760 = vmatpush.bf16.msra.mxu0 %v4444
    %4761 = vmatpush.bf16.msra.mxu0 %v4420
    %4762 = vmatpush.bf16.msra.mxu0 %v4396
    %4763 = vmatpush.bf16.msra.mxu0 %v4372
    %4764 = vmatmul.bf16.gmra.mxu0 %v3795
    %v4765 = vpop.f32.mrf.mxu0
    %v4766 = vadd.f32 0.0, %v4765
    %v4767 = vpop.f32.mrf.mxu0
    %v4768 = vadd.f32 0.0, %v4767
    %4769 = vdwg.mxu0
    %4770 = vmatpush.bf16.msra.mxu0 %v4541
    %4771 = vmatpush.bf16.msra.mxu0 %v4517
    %4772 = vmatpush.bf16.msra.mxu0 %v4493
    %4773 = vmatpush.bf16.msra.mxu0 %v4469
    %4774 = vmatpush.bf16.msra.mxu0 %v4445
    %4775 = vmatpush.bf16.msra.mxu0 %v4421
    %4776 = vmatpush.bf16.msra.mxu0 %v4397
    %4777 = vmatpush.bf16.msra.mxu0 %v4373
    %4778 = vmatmul.bf16.gmra.mxu0 %v3795
    %v4779 = vpop.f32.mrf.mxu0
    %v4780 = vadd.f32 0.0, %v4779
    %v4781 = vpop.f32.mrf.mxu0
    %v4782 = vadd.f32 0.0, %v4781
    %4783 = vdwg.mxu0
    %4784 = vmatpush.bf16.msra.mxu0 %v4542
    %4785 = vmatpush.bf16.msra.mxu0 %v4518
    %4786 = vmatpush.bf16.msra.mxu0 %v4494
    %4787 = vmatpush.bf16.msra.mxu0 %v4470
    %4788 = vmatpush.bf16.msra.mxu0 %v4446
    %4789 = vmatpush.bf16.msra.mxu0 %v4422
    %4790 = vmatpush.bf16.msra.mxu0 %v4398
    %4791 = vmatpush.bf16.msra.mxu0 %v4374
    %4792 = vmatmul.bf16.gmra.mxu0 %v3795
    %v4793 = vpop.f32.mrf.mxu0
    %v4794 = vadd.f32 0.0, %v4793
    %v4795 = vpop.f32.mrf.mxu0
    %v4796 = vadd.f32 0.0, %v4795
    %4797 = vdwg.mxu0
    %4798 = vmatpush.bf16.msra.mxu0 %v4543
    %4799 = vmatpush.bf16.msra.mxu0 %v4519
    %4800 = vmatpush.bf16.msra.mxu0 %v4495
    %4801 = vmatpush.bf16.msra.mxu0 %v4471
    %4802 = vmatpush.bf16.msra.mxu0 %v4447
    %4803 = vmatpush.bf16.msra.mxu0 %v4423
    %4804 = vmatpush.bf16.msra.mxu0 %v4399
    %4805 = vmatpush.bf16.msra.mxu0 %v4375
    %4806 = vmatmul.bf16.gmra.mxu0 %v3795
    %v4807 = vpop.f32.mrf.mxu0
    %v4808 = vadd.f32 0.0, %v4807
    %v4809 = vpop.f32.mrf.mxu0
    %v4810 = vadd.f32 0.0, %v4809
    %4811 = vdwg.mxu0
    %4812 = vmatpush.bf16.msra.mxu0 %v4544
    %4813 = vmatpush.bf16.msra.mxu0 %v4520
    %4814 = vmatpush.bf16.msra.mxu0 %v4496
    %4815 = vmatpush.bf16.msra.mxu0 %v4472
    %4816 = vmatpush.bf16.msra.mxu0 %v4448
    %4817 = vmatpush.bf16.msra.mxu0 %v4424
    %4818 = vmatpush.bf16.msra.mxu0 %v4400
    %4819 = vmatpush.bf16.msra.mxu0 %v4376
    %4820 = vmatmul.bf16.gmra.mxu0 %v3795
    %v4821 = vpop.f32.mrf.mxu0
    %v4822 = vadd.f32 0.0, %v4821
    %v4823 = vpop.f32.mrf.mxu0
    %v4824 = vadd.f32 0.0, %v4823
    %4825 = vdwg.mxu0
    %4826 = vmatpush.bf16.msra.mxu0 %v4545
    %4827 = vmatpush.bf16.msra.mxu0 %v4521
    %4828 = vmatpush.bf16.msra.mxu0 %v4497
    %4829 = vmatpush.bf16.msra.mxu0 %v4473
    %4830 = vmatpush.bf16.msra.mxu0 %v4449
    %4831 = vmatpush.bf16.msra.mxu0 %v4425
    %4832 = vmatpush.bf16.msra.mxu0 %v4401
    %4833 = vmatpush.bf16.msra.mxu0 %v4377
    %4834 = vmatmul.bf16.gmra.mxu0 %v3795
    %v4835 = vpop.f32.mrf.mxu0
    %v4836 = vadd.f32 0.0, %v4835
    %v4837 = vpop.f32.mrf.mxu0
    %v4838 = vadd.f32 0.0, %v4837
    %4839 = vdwg.mxu0
    %4840 = vmatpush.bf16.msra.mxu0 %v4546
    %4841 = vmatpush.bf16.msra.mxu0 %v4522
    %4842 = vmatpush.bf16.msra.mxu0 %v4498
    %4843 = vmatpush.bf16.msra.mxu0 %v4474
    %4844 = vmatpush.bf16.msra.mxu0 %v4450
    %4845 = vmatpush.bf16.msra.mxu0 %v4426
    %4846 = vmatpush.bf16.msra.mxu0 %v4402
    %4847 = vmatpush.bf16.msra.mxu0 %v4378
    %4848 = vmatmul.bf16.gmra.mxu0 %v3795
    %v4849 = vpop.f32.mrf.mxu0
    %v4850 = vadd.f32 0.0, %v4849
    %v4851 = vpop.f32.mrf.mxu0
    %v4852 = vadd.f32 0.0, %v4851
    %4853 = vdwg.mxu0
    %4854 = vmatpush.bf16.msra.mxu0 %v4547
    %4855 = vmatpush.bf16.msra.mxu0 %v4523
    %4856 = vmatpush.bf16.msra.mxu0 %v4499
    %4857 = vmatpush.bf16.msra.mxu0 %v4475
    %4858 = vmatpush.bf16.msra.mxu0 %v4451
    %4859 = vmatpush.bf16.msra.mxu0 %v4427
    %4860 = vmatpush.bf16.msra.mxu0 %v4403
    %4861 = vmatpush.bf16.msra.mxu0 %v4379
    %4862 = vmatmul.bf16.gmra.mxu0 %v3795
    %v4863 = vpop.f32.mrf.mxu0
    %v4864 = vadd.f32 0.0, %v4863
    %v4865 = vpop.f32.mrf.mxu0
    %v4866 = vadd.f32 0.0, %v4865
    %4867 = vdwg.mxu0
    %4868 = vmatpush.bf16.msra.mxu0 %v4548
    %4869 = vmatpush.bf16.msra.mxu0 %v4524
    %4870 = vmatpush.bf16.msra.mxu0 %v4500
    %4871 = vmatpush.bf16.msra.mxu0 %v4476
    %4872 = vmatpush.bf16.msra.mxu0 %v4452
    %4873 = vmatpush.bf16.msra.mxu0 %v4428
    %4874 = vmatpush.bf16.msra.mxu0 %v4404
    %4875 = vmatpush.bf16.msra.mxu0 %v4380
    %4876 = vmatmul.bf16.gmra.mxu0 %v3795
    %v4877 = vpop.f32.mrf.mxu0
    %v4878 = vadd.f32 0.0, %v4877
    %v4879 = vpop.f32.mrf.mxu0
    %v4880 = vadd.f32 0.0, %v4879
    %4881 = vdwg.mxu0
    %4882 = vmatpush.bf16.msra.mxu0 %v4549
    %4883 = vmatpush.bf16.msra.mxu0 %v4525
    %4884 = vmatpush.bf16.msra.mxu0 %v4501
    %4885 = vmatpush.bf16.msra.mxu0 %v4477
    %4886 = vmatpush.bf16.msra.mxu0 %v4453
    %4887 = vmatpush.bf16.msra.mxu0 %v4429
    %4888 = vmatpush.bf16.msra.mxu0 %v4405
    %4889 = vmatpush.bf16.msra.mxu0 %v4381
    %4890 = vmatmul.bf16.gmra.mxu0 %v3795
    %v4891 = vpop.f32.mrf.mxu0
    %v4892 = vadd.f32 0.0, %v4891
    %v4893 = vpop.f32.mrf.mxu0
    %v4894 = vadd.f32 0.0, %v4893
    %4895 = vdwg.mxu0
    %4896 = vmatpush.bf16.msra.mxu0 %v4550
    %4897 = vmatpush.bf16.msra.mxu0 %v4526
    %4898 = vmatpush.bf16.msra.mxu0 %v4502
    %4899 = vmatpush.bf16.msra.mxu0 %v4478
    %4900 = vmatpush.bf16.msra.mxu0 %v4454
    %4901 = vmatpush.bf16.msra.mxu0 %v4430
    %4902 = vmatpush.bf16.msra.mxu0 %v4406
    %4903 = vmatpush.bf16.msra.mxu0 %v4382
    %4904 = vmatmul.bf16.gmra.mxu0 %v3795
    %v4905 = vpop.f32.mrf.mxu0
    %v4906 = vadd.f32 0.0, %v4905
    %v4907 = vpop.f32.mrf.mxu0
    %v4908 = vadd.f32 0.0, %v4907
    %4909 = vdwg.mxu0
    %4910 = vmatpush.bf16.msra.mxu0 %v4551
    %4911 = vmatpush.bf16.msra.mxu0 %v4527
    %4912 = vmatpush.bf16.msra.mxu0 %v4503
    %4913 = vmatpush.bf16.msra.mxu0 %v4479
    %4914 = vmatpush.bf16.msra.mxu0 %v4455
    %4915 = vmatpush.bf16.msra.mxu0 %v4431
    %4916 = vmatpush.bf16.msra.mxu0 %v4407
    %4917 = vmatpush.bf16.msra.mxu0 %v4383
    %4918 = vmatmul.bf16.gmra.mxu0 %v3795
    %v4919 = vpop.f32.mrf.mxu0
    %v4920 = vadd.f32 0.0, %v4919
    %v4921 = vpop.f32.mrf.mxu0
    %v4922 = vadd.f32 0.0, %v4921
    %4923 = vdwg.mxu0
    %4924 = vmatpush.bf16.msra.mxu0 %v4552
    %4925 = vmatpush.bf16.msra.mxu0 %v4528
    %4926 = vmatpush.bf16.msra.mxu0 %v4504
    %4927 = vmatpush.bf16.msra.mxu0 %v4480
    %4928 = vmatpush.bf16.msra.mxu0 %v4456
    %4929 = vmatpush.bf16.msra.mxu0 %v4432
    %4930 = vmatpush.bf16.msra.mxu0 %v4408
    %4931 = vmatpush.bf16.msra.mxu0 %v4384
    %4932 = vmatmul.bf16.gmra.mxu0 %v3795
    %v4933 = vpop.f32.mrf.mxu0
    %v4934 = vadd.f32 0.0, %v4933
    %v4935 = vpop.f32.mrf.mxu0
    %v4936 = vadd.f32 0.0, %v4935
    %4937 = vdwg.mxu0
    %4938 = vmatpush.bf16.msra.mxu0 %v4553
    %4939 = vmatpush.bf16.msra.mxu0 %v4529
    %4940 = vmatpush.bf16.msra.mxu0 %v4505
    %4941 = vmatpush.bf16.msra.mxu0 %v4481
    %4942 = vmatpush.bf16.msra.mxu0 %v4457
    %4943 = vmatpush.bf16.msra.mxu0 %v4433
    %4944 = vmatpush.bf16.msra.mxu0 %v4409
    %4945 = vmatpush.bf16.msra.mxu0 %v4385
    %4946 = vmatmul.bf16.gmra.mxu0 %v3795
    %v4947 = vpop.f32.mrf.mxu0
    %v4948 = vadd.f32 0.0, %v4947
    %v4949 = vpop.f32.mrf.mxu0
    %v4950 = vadd.f32 0.0, %v4949
    %4951 = vdwg.mxu0
    %4952 = vmatpush.bf16.msra.mxu0 %v4554
    %4953 = vmatpush.bf16.msra.mxu0 %v4530
    %4954 = vmatpush.bf16.msra.mxu0 %v4506
    %4955 = vmatpush.bf16.msra.mxu0 %v4482
    %4956 = vmatpush.bf16.msra.mxu0 %v4458
    %4957 = vmatpush.bf16.msra.mxu0 %v4434
    %4958 = vmatpush.bf16.msra.mxu0 %v4410
    %4959 = vmatpush.bf16.msra.mxu0 %v4386
    %4960 = vmatmul.bf16.gmra.mxu0 %v3795
    %v4961 = vpop.f32.mrf.mxu0
    %v4962 = vadd.f32 0.0, %v4961
    %v4963 = vpop.f32.mrf.mxu0
    %v4964 = vadd.f32 0.0, %v4963
    %4965 = vdwg.mxu0
    %4966 = vmatpush.bf16.msra.mxu0 %v4555
    %4967 = vmatpush.bf16.msra.mxu0 %v4531
    %4968 = vmatpush.bf16.msra.mxu0 %v4507
    %4969 = vmatpush.bf16.msra.mxu0 %v4483
    %4970 = vmatpush.bf16.msra.mxu0 %v4459
    %4971 = vmatpush.bf16.msra.mxu0 %v4435
    %4972 = vmatpush.bf16.msra.mxu0 %v4411
    %4973 = vmatpush.bf16.msra.mxu0 %v4387
    %4974 = vmatmul.bf16.gmra.mxu0 %v3795
    %v4975 = vpop.f32.mrf.mxu0
    %v4976 = vadd.f32 0.0, %v4975
    %v4977 = vpop.f32.mrf.mxu0
    %v4978 = vadd.f32 0.0, %v4977
    %4979 = vdwg.mxu0
    %4980 = vmatpush.bf16.msra.mxu0 %v4556
    %4981 = vmatpush.bf16.msra.mxu0 %v4532
    %4982 = vmatpush.bf16.msra.mxu0 %v4508
    %4983 = vmatpush.bf16.msra.mxu0 %v4484
    %4984 = vmatpush.bf16.msra.mxu0 %v4460
    %4985 = vmatpush.bf16.msra.mxu0 %v4436
    %4986 = vmatpush.bf16.msra.mxu0 %v4412
    %4987 = vmatpush.bf16.msra.mxu0 %v4388
    %4988 = vmatmul.bf16.gmra.mxu0 %v3795
    %v4989 = vpop.f32.mrf.mxu0
    %v4990 = vadd.f32 0.0, %v4989
    %v4991 = vpop.f32.mrf.mxu0
    %v4992 = vadd.f32 0.0, %v4991
    %4993 = vdwg.mxu0
    %4994 = vmatpush.bf16.msra.mxu0 %v4557
    %4995 = vmatpush.bf16.msra.mxu0 %v4533
    %4996 = vmatpush.bf16.msra.mxu0 %v4509
    %4997 = vmatpush.bf16.msra.mxu0 %v4485
    %4998 = vmatpush.bf16.msra.mxu0 %v4461
    %4999 = vmatpush.bf16.msra.mxu0 %v4437
    %5000 = vmatpush.bf16.msra.mxu0 %v4413
    %5001 = vmatpush.bf16.msra.mxu0 %v4389
    %5002 = vmatmul.bf16.gmra.mxu0 %v3795
    %v5003 = vpop.f32.mrf.mxu0
    %v5004 = vadd.f32 0.0, %v5003
    %v5005 = vpop.f32.mrf.mxu0
    %v5006 = vadd.f32 0.0, %v5005
    %5007 = vdwg.mxu0
    %5008 = vmatpush.bf16.msra.mxu0 %v4558
    %5009 = vmatpush.bf16.msra.mxu0 %v4534
    %5010 = vmatpush.bf16.msra.mxu0 %v4510
    %5011 = vmatpush.bf16.msra.mxu0 %v4486
    %5012 = vmatpush.bf16.msra.mxu0 %v4462
    %5013 = vmatpush.bf16.msra.mxu0 %v4438
    %5014 = vmatpush.bf16.msra.mxu0 %v4414
    %5015 = vmatpush.bf16.msra.mxu0 %v4390
    %5016 = vmatmul.bf16.gmra.mxu0 %v3795
    %v5017 = vpop.f32.mrf.mxu0
    %v5018 = vadd.f32 0.0, %v5017
    %v5019 = vpop.f32.mrf.mxu0
    %v5020 = vadd.f32 0.0, %v5019
    %5021 = vdwg.mxu0
    %5022 = vmatpush.bf16.msra.mxu0 %v4559
    %5023 = vmatpush.bf16.msra.mxu0 %v4535
    %5024 = vmatpush.bf16.msra.mxu0 %v4511
    %5025 = vmatpush.bf16.msra.mxu0 %v4487
    %5026 = vmatpush.bf16.msra.mxu0 %v4463
    %5027 = vmatpush.bf16.msra.mxu0 %v4439
    %5028 = vmatpush.bf16.msra.mxu0 %v4415
    %5029 = vmatpush.bf16.msra.mxu0 %v4391
    %5030 = vmatmul.bf16.gmra.mxu0 %v3795
    %v5031 = vpop.f32.mrf.mxu0
    %v5032 = vadd.f32 0.0, %v5031
    %v5033 = vpop.f32.mrf.mxu0
    %v5034 = vadd.f32 0.0, %v5033
    %5035 = vdwg.mxu0
    %5036 = vmatpush.bf16.msra.mxu0 %v4560
    %5037 = vmatpush.bf16.msra.mxu0 %v4536
    %5038 = vmatpush.bf16.msra.mxu0 %v4512
    %5039 = vmatpush.bf16.msra.mxu0 %v4488
    %5040 = vmatpush.bf16.msra.mxu0 %v4464
    %5041 = vmatpush.bf16.msra.mxu0 %v4440
    %5042 = vmatpush.bf16.msra.mxu0 %v4416
    %5043 = vmatpush.bf16.msra.mxu0 %v4392
    %5044 = vmatmul.bf16.gmra.mxu0 %v3795
    %v5045 = vpop.f32.mrf.mxu0
    %v5046 = vadd.f32 0.0, %v5045
    %v5047 = vpop.f32.mrf.mxu0
    %v5048 = vadd.f32 0.0, %v5047
    %5049 = vdwg.mxu0
    %5050 = vmatpush.bf16.msra.mxu0 %v4561
    %5051 = vmatpush.bf16.msra.mxu0 %v4537
    %5052 = vmatpush.bf16.msra.mxu0 %v4513
    %5053 = vmatpush.bf16.msra.mxu0 %v4489
    %5054 = vmatpush.bf16.msra.mxu0 %v4465
    %5055 = vmatpush.bf16.msra.mxu0 %v4441
    %5056 = vmatpush.bf16.msra.mxu0 %v4417
    %5057 = vmatpush.bf16.msra.mxu0 %v4393
    %5058 = vmatmul.bf16.gmra.mxu0 %v3795
    %v5059 = vpop.f32.mrf.mxu0
    %v5060 = vadd.f32 0.0, %v5059
    %v5061 = vpop.f32.mrf.mxu0
    %v5062 = vadd.f32 0.0, %v5061
    %5063 = vdwg.mxu0
    %5064 = vmatpush.bf16.msra.mxu0 %v4562
    %5065 = vmatpush.bf16.msra.mxu0 %v4538
    %5066 = vmatpush.bf16.msra.mxu0 %v4514
    %5067 = vmatpush.bf16.msra.mxu0 %v4490
    %5068 = vmatpush.bf16.msra.mxu0 %v4466
    %5069 = vmatpush.bf16.msra.mxu0 %v4442
    %5070 = vmatpush.bf16.msra.mxu0 %v4418
    %5071 = vmatpush.bf16.msra.mxu0 %v4394
    %5072 = vmatmul.bf16.gmra.mxu0 %v3795
    %v5073 = vpop.f32.mrf.mxu0
    %v5074 = vadd.f32 0.0, %v5073
    %v5075 = vpop.f32.mrf.mxu0
    %v5076 = vadd.f32 0.0, %v5075
    %5077 = vdwg.mxu0
    %5078 = vmatpush.bf16.msra.mxu0 %v4563
    %5079 = vmatpush.bf16.msra.mxu0 %v4539
    %5080 = vmatpush.bf16.msra.mxu0 %v4515
    %5081 = vmatpush.bf16.msra.mxu0 %v4491
    %5082 = vmatpush.bf16.msra.mxu0 %v4467
    %5083 = vmatpush.bf16.msra.mxu0 %v4443
    %5084 = vmatpush.bf16.msra.mxu0 %v4419
    %5085 = vmatpush.bf16.msra.mxu0 %v4395
    %5086 = vmatmul.bf16.gmra.mxu0 %v3795
    %v5087 = vpop.f32.mrf.mxu0
    %v5088 = vadd.f32 0.0, %v5087
    %v5089 = vpop.f32.mrf.mxu0
    %v5090 = vadd.f32 0.0, %v5089
    %5091 = vdwg.mxu0
    %v5092 = vpack.c.bf16 %v4780, %v4766
    %v5093 = vpack.c.bf16 %v4808, %v4794
    %v5094 = vpack.c.bf16 %v4836, %v4822
    %v5095 = vpack.c.bf16 %v4864, %v4850
    %v5096 = vpack.c.bf16 %v4782, %v4768
    %v5097 = vpack.c.bf16 %v4810, %v4796
    %v5098 = vpack.c.bf16 %v4838, %v4824
    %v5099 = vpack.c.bf16 %v4866, %v4852
    %v5100 = vpack.c.bf16 %v4892, %v4878
    %v5101 = vpack.c.bf16 %v4920, %v4906
    %v5102 = vpack.c.bf16 %v4948, %v4934
    %v5103 = vpack.c.bf16 %v4976, %v4962
    %v5104 = vpack.c.bf16 %v4894, %v4880
    %v5105 = vpack.c.bf16 %v4922, %v4908
    %v5106 = vpack.c.bf16 %v4950, %v4936
    %v5107 = vpack.c.bf16 %v4978, %v4964
    %v5108 = vpack.c.bf16 %v5004, %v4990
    %v5109 = vpack.c.bf16 %v5032, %v5018
    %v5110 = vpack.c.bf16 %v5060, %v5046
    %v5111 = vpack.c.bf16 %v5088, %v5074
    %v5112 = vpack.c.bf16 %v5006, %v4992
    %v5113 = vpack.c.bf16 %v5034, %v5020
    %v5114 = vpack.c.bf16 %v5062, %v5048
    %v5115 = vpack.c.bf16 %v5090, %v5076
    %5116 = vmatpush.bf16.xpose.msra.mxu0 0
    %5117 = vmatpush.bf16.xpose.msra.mxu0 0
    %5118 = vmatpush.bf16.xpose.msra.mxu0 0
    %5119 = vmatpush.bf16.xpose.msra.mxu0 0
    %5120 = vmatpush.bf16.xpose.msra.mxu0 0
    %5121 = vmatpush.bf16.xpose.msra.mxu0 0
    %5122 = vmatpush.bf16.xpose.msra.mxu0 0
    %5123 = vmatpush.bf16.xpose.msra.mxu0 %v5100
    %5124 = vmatmul.bf16.gmra.mxu0 %v5092
    %v5125 = vpop.f32.mrf.mxu0
    %v5126 = vadd.f32 0.0, %v5125
    %v5127 = vpop.f32.mrf.mxu0
    %5128 = vdwg.mxu0
    %v5129 = vsel %vm1842, %v5126, -inf
    %5130 = vmax.xlane.f32.xlu0 %v5129
    %v5131 = vpop.xlane.xlu0 %5130
    %v5132 = vsub.f32 %v5126, %v5131
    %v5133 = vmul.f32 %v5132, 1.442695
    %v5134 = vpow.pop %v5133
    %v5135 = vsel %vm1842, %v5134, 0.0
    %5136 = vadd.xlane.f32.xlu0 %v5135
    %v5137 = vpop.xlane.xlu0 %5136
    %v5138 = vrcp.pop %v5137
    %v5139 = vmul.f32 %v5134, %v5138
    %v5140 = vpack.c.bf16 %v5139, %v5139
    %v5142 = vsel %vm1842, %v5140, 0
    %v5145 = vsel %vm1858, %v5108, 0
    %5147 = vmatpush.bf16.msra.mxu0 0
    %5148 = vmatpush.bf16.msra.mxu0 0
    %5149 = vmatpush.bf16.msra.mxu0 0
    %5150 = vmatpush.bf16.msra.mxu0 0
    %5151 = vmatpush.bf16.msra.mxu0 0
    %5152 = vmatpush.bf16.msra.mxu0 0
    %5153 = vmatpush.bf16.msra.mxu0 0
    %5154 = vmatpush.bf16.msra.mxu0 %v5145
    %5155 = vmatmul.bf16.gmra.mxu0 %v5142
    %v5156 = vpop.f32.mrf.mxu0
    %v5157 = vadd.f32 0.0, %v5156
    %v5158 = vpop.f32.mrf.mxu0
    %5159 = vdwg.mxu0
    %v5161 = vunpack.c.h.b16 %v5092
    %v5162 = vpack.c.b16 %v5161, %v5161
    %v5165 = vunpack.c.h.b16 %v5100
    %v5166 = vpack.c.b16 %v5165, %v5165
    %5168 = vmatpush.bf16.xpose.msra.mxu0 0
    %5169 = vmatpush.bf16.xpose.msra.mxu0 0
    %5170 = vmatpush.bf16.xpose.msra.mxu0 0
    %5171 = vmatpush.bf16.xpose.msra.mxu0 0
    %5172 = vmatpush.bf16.xpose.msra.mxu0 0
    %5173 = vmatpush.bf16.xpose.msra.mxu0 0
    %5174 = vmatpush.bf16.xpose.msra.mxu0 0
    %5175 = vmatpush.bf16.xpose.msra.mxu0 %v5166
    %5176 = vmatmul.bf16.gmra.mxu0 %v5162
    %v5177 = vpop.f32.mrf.mxu0
    %v5178 = vadd.f32 0.0, %v5177
    %v5179 = vpop.f32.mrf.mxu0
    %5180 = vdwg.mxu0
    %v5181 = vsel %vm1842, %v5178, -inf
    %5182 = vmax.xlane.f32.xlu0 %v5181
    %v5183 = vpop.xlane.xlu0 %5182
    %v5184 = vsub.f32 %v5178, %v5183
    %v5185 = vmul.f32 %v5184, 1.442695
    %v5186 = vpow.pop %v5185
    %v5187 = vsel %vm1842, %v5186, 0.0
    %5188 = vadd.xlane.f32.xlu0 %v5187
    %v5189 = vpop.xlane.xlu0 %5188
    %v5190 = vrcp.pop %v5189
    %v5191 = vmul.f32 %v5186, %v5190
    %v5192 = vpack.c.bf16 %v5191, %v5191
    %v5194 = vunpack.c.h.b16 %v5108
    %v5195 = vpack.c.b16 %v5194, %v5194
    %v5197 = vsel %vm1842, %v5192, 0
    %v5200 = vsel %vm1858, %v5195, 0
    %5202 = vmatpush.bf16.msra.mxu0 0
    %5203 = vmatpush.bf16.msra.mxu0 0
    %5204 = vmatpush.bf16.msra.mxu0 0
    %5205 = vmatpush.bf16.msra.mxu0 0
    %5206 = vmatpush.bf16.msra.mxu0 0
    %5207 = vmatpush.bf16.msra.mxu0 0
    %5208 = vmatpush.bf16.msra.mxu0 0
    %5209 = vmatpush.bf16.msra.mxu0 %v5200
    %5210 = vmatmul.bf16.gmra.mxu0 %v5197
    %v5211 = vpop.f32.mrf.mxu0
    %v5212 = vadd.f32 0.0, %v5211
    %v5213 = vpop.f32.mrf.mxu0
    %5214 = vdwg.mxu0
    %5215 = vmatpush.bf16.xpose.msra.mxu0 0
    %5216 = vmatpush.bf16.xpose.msra.mxu0 0
    %5217 = vmatpush.bf16.xpose.msra.mxu0 0
    %5218 = vmatpush.bf16.xpose.msra.mxu0 0
    %5219 = vmatpush.bf16.xpose.msra.mxu0 0
    %5220 = vmatpush.bf16.xpose.msra.mxu0 0
    %5221 = vmatpush.bf16.xpose.msra.mxu0 0
    %5222 = vmatpush.bf16.xpose.msra.mxu0 %v5101
    %5223 = vmatmul.bf16.gmra.mxu0 %v5093
    %v5224 = vpop.f32.mrf.mxu0
    %v5225 = vadd.f32 0.0, %v5224
    %v5226 = vpop.f32.mrf.mxu0
    %5227 = vdwg.mxu0
    %v5228 = vsel %vm1842, %v5225, -inf
    %5229 = vmax.xlane.f32.xlu0 %v5228
    %v5230 = vpop.xlane.xlu0 %5229
    %v5231 = vsub.f32 %v5225, %v5230
    %v5232 = vmul.f32 %v5231, 1.442695
    %v5233 = vpow.pop %v5232
    %v5234 = vsel %vm1842, %v5233, 0.0
    %5235 = vadd.xlane.f32.xlu0 %v5234
    %v5236 = vpop.xlane.xlu0 %5235
    %v5237 = vrcp.pop %v5236
    %v5238 = vmul.f32 %v5233, %v5237
    %v5239 = vpack.c.bf16 %v5238, %v5238
    %v5241 = vsel %vm1842, %v5239, 0
    %v5244 = vsel %vm1858, %v5109, 0
    %5246 = vmatpush.bf16.msra.mxu0 0
    %5247 = vmatpush.bf16.msra.mxu0 0
    %5248 = vmatpush.bf16.msra.mxu0 0
    %5249 = vmatpush.bf16.msra.mxu0 0
    %5250 = vmatpush.bf16.msra.mxu0 0
    %5251 = vmatpush.bf16.msra.mxu0 0
    %5252 = vmatpush.bf16.msra.mxu0 0
    %5253 = vmatpush.bf16.msra.mxu0 %v5244
    %5254 = vmatmul.bf16.gmra.mxu0 %v5241
    %v5255 = vpop.f32.mrf.mxu0
    %v5256 = vadd.f32 0.0, %v5255
    %v5257 = vpop.f32.mrf.mxu0
    %5258 = vdwg.mxu0
    %v5260 = vunpack.c.h.b16 %v5093
    %v5261 = vpack.c.b16 %v5260, %v5260
    %v5264 = vunpack.c.h.b16 %v5101
    %v5265 = vpack.c.b16 %v5264, %v5264
    %5267 = vmatpush.bf16.xpose.msra.mxu0 0
    %5268 = vmatpush.bf16.xpose.msra.mxu0 0
    %5269 = vmatpush.bf16.xpose.msra.mxu0 0
    %5270 = vmatpush.bf16.xpose.msra.mxu0 0
    %5271 = vmatpush.bf16.xpose.msra.mxu0 0
    %5272 = vmatpush.bf16.xpose.msra.mxu0 0
    %5273 = vmatpush.bf16.xpose.msra.mxu0 0
    %5274 = vmatpush.bf16.xpose.msra.mxu0 %v5265
    %5275 = vmatmul.bf16.gmra.mxu0 %v5261
    %v5276 = vpop.f32.mrf.mxu0
    %v5277 = vadd.f32 0.0, %v5276
    %v5278 = vpop.f32.mrf.mxu0
    %5279 = vdwg.mxu0
    %v5280 = vsel %vm1842, %v5277, -inf
    %5281 = vmax.xlane.f32.xlu0 %v5280
    %v5282 = vpop.xlane.xlu0 %5281
    %v5283 = vsub.f32 %v5277, %v5282
    %v5284 = vmul.f32 %v5283, 1.442695
    %v5285 = vpow.pop %v5284
    %v5286 = vsel %vm1842, %v5285, 0.0
    %5287 = vadd.xlane.f32.xlu0 %v5286
    %v5288 = vpop.xlane.xlu0 %5287
    %v5289 = vrcp.pop %v5288
    %v5290 = vmul.f32 %v5285, %v5289
    %v5291 = vpack.c.bf16 %v5290, %v5290
    %v5293 = vunpack.c.h.b16 %v5109
    %v5294 = vpack.c.b16 %v5293, %v5293
    %v5296 = vsel %vm1842, %v5291, 0
    %v5299 = vsel %vm1858, %v5294, 0
    %5301 = vmatpush.bf16.msra.mxu0 0
    %5302 = vmatpush.bf16.msra.mxu0 0
    %5303 = vmatpush.bf16.msra.mxu0 0
    %5304 = vmatpush.bf16.msra.mxu0 0
    %5305 = vmatpush.bf16.msra.mxu0 0
    %5306 = vmatpush.bf16.msra.mxu0 0
    %5307 = vmatpush.bf16.msra.mxu0 0
    %5308 = vmatpush.bf16.msra.mxu0 %v5299
    %5309 = vmatmul.bf16.gmra.mxu0 %v5296
    %v5310 = vpop.f32.mrf.mxu0
    %v5311 = vadd.f32 0.0, %v5310
    %v5312 = vpop.f32.mrf.mxu0
    %5313 = vdwg.mxu0
    %5314 = vmatpush.bf16.xpose.msra.mxu0 0
    %5315 = vmatpush.bf16.xpose.msra.mxu0 0
    %5316 = vmatpush.bf16.xpose.msra.mxu0 0
    %5317 = vmatpush.bf16.xpose.msra.mxu0 0
    %5318 = vmatpush.bf16.xpose.msra.mxu0 0
    %5319 = vmatpush.bf16.xpose.msra.mxu0 0
    %5320 = vmatpush.bf16.xpose.msra.mxu0 0
    %5321 = vmatpush.bf16.xpose.msra.mxu0 %v5102
    %5322 = vmatmul.bf16.gmra.mxu0 %v5094
    %v5323 = vpop.f32.mrf.mxu0
    %v5324 = vadd.f32 0.0, %v5323
    %v5325 = vpop.f32.mrf.mxu0
    %5326 = vdwg.mxu0
    %v5327 = vsel %vm1842, %v5324, -inf
    %5328 = vmax.xlane.f32.xlu0 %v5327
    %v5329 = vpop.xlane.xlu0 %5328
    %v5330 = vsub.f32 %v5324, %v5329
    %v5331 = vmul.f32 %v5330, 1.442695
    %v5332 = vpow.pop %v5331
    %v5333 = vsel %vm1842, %v5332, 0.0
    %5334 = vadd.xlane.f32.xlu0 %v5333
    %v5335 = vpop.xlane.xlu0 %5334
    %v5336 = vrcp.pop %v5335
    %v5337 = vmul.f32 %v5332, %v5336
    %v5338 = vpack.c.bf16 %v5337, %v5337
    %v5340 = vsel %vm1842, %v5338, 0
    %v5343 = vsel %vm1858, %v5110, 0
    %5345 = vmatpush.bf16.msra.mxu0 0
    %5346 = vmatpush.bf16.msra.mxu0 0
    %5347 = vmatpush.bf16.msra.mxu0 0
    %5348 = vmatpush.bf16.msra.mxu0 0
    %5349 = vmatpush.bf16.msra.mxu0 0
    %5350 = vmatpush.bf16.msra.mxu0 0
    %5351 = vmatpush.bf16.msra.mxu0 0
    %5352 = vmatpush.bf16.msra.mxu0 %v5343
    %5353 = vmatmul.bf16.gmra.mxu0 %v5340
    %v5354 = vpop.f32.mrf.mxu0
    %v5355 = vadd.f32 0.0, %v5354
    %v5356 = vpop.f32.mrf.mxu0
    %5357 = vdwg.mxu0
    %v5359 = vunpack.c.h.b16 %v5094
    %v5360 = vpack.c.b16 %v5359, %v5359
    %v5363 = vunpack.c.h.b16 %v5102
    %v5364 = vpack.c.b16 %v5363, %v5363
    %5366 = vmatpush.bf16.xpose.msra.mxu0 0
    %5367 = vmatpush.bf16.xpose.msra.mxu0 0
    %5368 = vmatpush.bf16.xpose.msra.mxu0 0
    %5369 = vmatpush.bf16.xpose.msra.mxu0 0
    %5370 = vmatpush.bf16.xpose.msra.mxu0 0
    %5371 = vmatpush.bf16.xpose.msra.mxu0 0
    %5372 = vmatpush.bf16.xpose.msra.mxu0 0
    %5373 = vmatpush.bf16.xpose.msra.mxu0 %v5364
    %5374 = vmatmul.bf16.gmra.mxu0 %v5360
    %v5375 = vpop.f32.mrf.mxu0
    %v5376 = vadd.f32 0.0, %v5375
    %v5377 = vpop.f32.mrf.mxu0
    %5378 = vdwg.mxu0
    %v5379 = vsel %vm1842, %v5376, -inf
    %5380 = vmax.xlane.f32.xlu0 %v5379
    %v5381 = vpop.xlane.xlu0 %5380
    %v5382 = vsub.f32 %v5376, %v5381
    %v5383 = vmul.f32 %v5382, 1.442695
    %v5384 = vpow.pop %v5383
    %v5385 = vsel %vm1842, %v5384, 0.0
    %5386 = vadd.xlane.f32.xlu0 %v5385
    %v5387 = vpop.xlane.xlu0 %5386
    %v5388 = vrcp.pop %v5387
    %v5389 = vmul.f32 %v5384, %v5388
    %v5390 = vpack.c.bf16 %v5389, %v5389
    %v5392 = vunpack.c.h.b16 %v5110
    %v5393 = vpack.c.b16 %v5392, %v5392
    %v5395 = vsel %vm1842, %v5390, 0
    %v5398 = vsel %vm1858, %v5393, 0
    %5400 = vmatpush.bf16.msra.mxu0 0
    %5401 = vmatpush.bf16.msra.mxu0 0
    %5402 = vmatpush.bf16.msra.mxu0 0
    %5403 = vmatpush.bf16.msra.mxu0 0
    %5404 = vmatpush.bf16.msra.mxu0 0
    %5405 = vmatpush.bf16.msra.mxu0 0
    %5406 = vmatpush.bf16.msra.mxu0 0
    %5407 = vmatpush.bf16.msra.mxu0 %v5398
    %5408 = vmatmul.bf16.gmra.mxu0 %v5395
    %v5409 = vpop.f32.mrf.mxu0
    %v5410 = vadd.f32 0.0, %v5409
    %v5411 = vpop.f32.mrf.mxu0
    %5412 = vdwg.mxu0
    %5413 = vmatpush.bf16.xpose.msra.mxu0 0
    %5414 = vmatpush.bf16.xpose.msra.mxu0 0
    %5415 = vmatpush.bf16.xpose.msra.mxu0 0
    %5416 = vmatpush.bf16.xpose.msra.mxu0 0
    %5417 = vmatpush.bf16.xpose.msra.mxu0 0
    %5418 = vmatpush.bf16.xpose.msra.mxu0 0
    %5419 = vmatpush.bf16.xpose.msra.mxu0 0
    %5420 = vmatpush.bf16.xpose.msra.mxu0 %v5103
    %5421 = vmatmul.bf16.gmra.mxu0 %v5095
    %v5422 = vpop.f32.mrf.mxu0
    %v5423 = vadd.f32 0.0, %v5422
    %v5424 = vpop.f32.mrf.mxu0
    %5425 = vdwg.mxu0
    %v5426 = vsel %vm1842, %v5423, -inf
    %5427 = vmax.xlane.f32.xlu0 %v5426
    %v5428 = vpop.xlane.xlu0 %5427
    %v5429 = vsub.f32 %v5423, %v5428
    %v5430 = vmul.f32 %v5429, 1.442695
    %v5431 = vpow.pop %v5430
    %v5432 = vsel %vm1842, %v5431, 0.0
    %5433 = vadd.xlane.f32.xlu0 %v5432
    %v5434 = vpop.xlane.xlu0 %5433
    %v5435 = vrcp.pop %v5434
    %v5436 = vmul.f32 %v5431, %v5435
    %v5437 = vpack.c.bf16 %v5436, %v5436
    %v5439 = vsel %vm1842, %v5437, 0
    %v5442 = vsel %vm1858, %v5111, 0
    %5444 = vmatpush.bf16.msra.mxu0 0
    %5445 = vmatpush.bf16.msra.mxu0 0
    %5446 = vmatpush.bf16.msra.mxu0 0
    %5447 = vmatpush.bf16.msra.mxu0 0
    %5448 = vmatpush.bf16.msra.mxu0 0
    %5449 = vmatpush.bf16.msra.mxu0 0
    %5450 = vmatpush.bf16.msra.mxu0 0
    %5451 = vmatpush.bf16.msra.mxu0 %v5442
    %5452 = vmatmul.bf16.gmra.mxu0 %v5439
    %v5453 = vpop.f32.mrf.mxu0
    %v5454 = vadd.f32 0.0, %v5453
    %v5455 = vpop.f32.mrf.mxu0
    %5456 = vdwg.mxu0
    %v5458 = vunpack.c.h.b16 %v5095
    %v5459 = vpack.c.b16 %v5458, %v5458
    %v5462 = vunpack.c.h.b16 %v5103
    %v5463 = vpack.c.b16 %v5462, %v5462
    %5465 = vmatpush.bf16.xpose.msra.mxu0 0
    %5466 = vmatpush.bf16.xpose.msra.mxu0 0
    %5467 = vmatpush.bf16.xpose.msra.mxu0 0
    %5468 = vmatpush.bf16.xpose.msra.mxu0 0
    %5469 = vmatpush.bf16.xpose.msra.mxu0 0
    %5470 = vmatpush.bf16.xpose.msra.mxu0 0
    %5471 = vmatpush.bf16.xpose.msra.mxu0 0
    %5472 = vmatpush.bf16.xpose.msra.mxu0 %v5463
    %5473 = vmatmul.bf16.gmra.mxu0 %v5459
    %v5474 = vpop.f32.mrf.mxu0
    %v5475 = vadd.f32 0.0, %v5474
    %v5476 = vpop.f32.mrf.mxu0
    %5477 = vdwg.mxu0
    %v5478 = vsel %vm1842, %v5475, -inf
    %5479 = vmax.xlane.f32.xlu0 %v5478
    %v5480 = vpop.xlane.xlu0 %5479
    %v5481 = vsub.f32 %v5475, %v5480
    %v5482 = vmul.f32 %v5481, 1.442695
    %v5483 = vpow.pop %v5482
    %v5484 = vsel %vm1842, %v5483, 0.0
    %5485 = vadd.xlane.f32.xlu0 %v5484
    %v5486 = vpop.xlane.xlu0 %5485
    %v5487 = vrcp.pop %v5486
    %v5488 = vmul.f32 %v5483, %v5487
    %v5489 = vpack.c.bf16 %v5488, %v5488
    %v5491 = vunpack.c.h.b16 %v5111
    %v5492 = vpack.c.b16 %v5491, %v5491
    %v5494 = vsel %vm1842, %v5489, 0
    %v5497 = vsel %vm1858, %v5492, 0
    %5499 = vmatpush.bf16.msra.mxu0 0
    %5500 = vmatpush.bf16.msra.mxu0 0
    %5501 = vmatpush.bf16.msra.mxu0 0
    %5502 = vmatpush.bf16.msra.mxu0 0
    %5503 = vmatpush.bf16.msra.mxu0 0
    %5504 = vmatpush.bf16.msra.mxu0 0
    %5505 = vmatpush.bf16.msra.mxu0 0
    %5506 = vmatpush.bf16.msra.mxu0 %v5497
    %5507 = vmatmul.bf16.gmra.mxu0 %v5494
    %v5508 = vpop.f32.mrf.mxu0
    %v5509 = vadd.f32 0.0, %v5508
    %v5510 = vpop.f32.mrf.mxu0
    %5511 = vdwg.mxu0
    %5512 = vmatpush.bf16.xpose.msra.mxu0 0
    %5513 = vmatpush.bf16.xpose.msra.mxu0 0
    %5514 = vmatpush.bf16.xpose.msra.mxu0 0
    %5515 = vmatpush.bf16.xpose.msra.mxu0 0
    %5516 = vmatpush.bf16.xpose.msra.mxu0 0
    %5517 = vmatpush.bf16.xpose.msra.mxu0 0
    %5518 = vmatpush.bf16.xpose.msra.mxu0 0
    %5519 = vmatpush.bf16.xpose.msra.mxu0 %v5104
    %5520 = vmatmul.bf16.gmra.mxu0 %v5096
    %v5521 = vpop.f32.mrf.mxu0
    %v5522 = vadd.f32 0.0, %v5521
    %v5523 = vpop.f32.mrf.mxu0
    %5524 = vdwg.mxu0
    %v5525 = vsel %vm1842, %v5522, -inf
    %5526 = vmax.xlane.f32.xlu0 %v5525
    %v5527 = vpop.xlane.xlu0 %5526
    %v5528 = vsub.f32 %v5522, %v5527
    %v5529 = vmul.f32 %v5528, 1.442695
    %v5530 = vpow.pop %v5529
    %v5531 = vsel %vm1842, %v5530, 0.0
    %5532 = vadd.xlane.f32.xlu0 %v5531
    %v5533 = vpop.xlane.xlu0 %5532
    %v5534 = vrcp.pop %v5533
    %v5535 = vmul.f32 %v5530, %v5534
    %v5536 = vpack.c.bf16 %v5535, %v5535
    %v5538 = vsel %vm1842, %v5536, 0
    %v5541 = vsel %vm1858, %v5112, 0
    %5543 = vmatpush.bf16.msra.mxu0 0
    %5544 = vmatpush.bf16.msra.mxu0 0
    %5545 = vmatpush.bf16.msra.mxu0 0
    %5546 = vmatpush.bf16.msra.mxu0 0
    %5547 = vmatpush.bf16.msra.mxu0 0
    %5548 = vmatpush.bf16.msra.mxu0 0
    %5549 = vmatpush.bf16.msra.mxu0 0
    %5550 = vmatpush.bf16.msra.mxu0 %v5541
    %5551 = vmatmul.bf16.gmra.mxu0 %v5538
    %v5552 = vpop.f32.mrf.mxu0
    %v5553 = vadd.f32 0.0, %v5552
    %v5554 = vpop.f32.mrf.mxu0
    %5555 = vdwg.mxu0
    %v5557 = vunpack.c.h.b16 %v5096
    %v5558 = vpack.c.b16 %v5557, %v5557
    %v5561 = vunpack.c.h.b16 %v5104
    %v5562 = vpack.c.b16 %v5561, %v5561
    %5564 = vmatpush.bf16.xpose.msra.mxu0 0
    %5565 = vmatpush.bf16.xpose.msra.mxu0 0
    %5566 = vmatpush.bf16.xpose.msra.mxu0 0
    %5567 = vmatpush.bf16.xpose.msra.mxu0 0
    %5568 = vmatpush.bf16.xpose.msra.mxu0 0
    %5569 = vmatpush.bf16.xpose.msra.mxu0 0
    %5570 = vmatpush.bf16.xpose.msra.mxu0 0
    %5571 = vmatpush.bf16.xpose.msra.mxu0 %v5562
    %5572 = vmatmul.bf16.gmra.mxu0 %v5558
    %v5573 = vpop.f32.mrf.mxu0
    %v5574 = vadd.f32 0.0, %v5573
    %v5575 = vpop.f32.mrf.mxu0
    %5576 = vdwg.mxu0
    %v5577 = vsel %vm1842, %v5574, -inf
    %5578 = vmax.xlane.f32.xlu0 %v5577
    %v5579 = vpop.xlane.xlu0 %5578
    %v5580 = vsub.f32 %v5574, %v5579
    %v5581 = vmul.f32 %v5580, 1.442695
    %v5582 = vpow.pop %v5581
    %v5583 = vsel %vm1842, %v5582, 0.0
    %5584 = vadd.xlane.f32.xlu0 %v5583
    %v5585 = vpop.xlane.xlu0 %5584
    %v5586 = vrcp.pop %v5585
    %v5587 = vmul.f32 %v5582, %v5586
    %v5588 = vpack.c.bf16 %v5587, %v5587
    %v5590 = vunpack.c.h.b16 %v5112
    %v5591 = vpack.c.b16 %v5590, %v5590
    %v5593 = vsel %vm1842, %v5588, 0
    %v5596 = vsel %vm1858, %v5591, 0
    %5598 = vmatpush.bf16.msra.mxu0 0
    %5599 = vmatpush.bf16.msra.mxu0 0
    %5600 = vmatpush.bf16.msra.mxu0 0
    %5601 = vmatpush.bf16.msra.mxu0 0
    %5602 = vmatpush.bf16.msra.mxu0 0
    %5603 = vmatpush.bf16.msra.mxu0 0
    %5604 = vmatpush.bf16.msra.mxu0 0
    %5605 = vmatpush.bf16.msra.mxu0 %v5596
    %5606 = vmatmul.bf16.gmra.mxu0 %v5593
    %v5607 = vpop.f32.mrf.mxu0
    %v5608 = vadd.f32 0.0, %v5607
    %v5609 = vpop.f32.mrf.mxu0
    %5610 = vdwg.mxu0
    %5611 = vmatpush.bf16.xpose.msra.mxu0 0
    %5612 = vmatpush.bf16.xpose.msra.mxu0 0
    %5613 = vmatpush.bf16.xpose.msra.mxu0 0
    %5614 = vmatpush.bf16.xpose.msra.mxu0 0
    %5615 = vmatpush.bf16.xpose.msra.mxu0 0
    %5616 = vmatpush.bf16.xpose.msra.mxu0 0
    %5617 = vmatpush.bf16.xpose.msra.mxu0 0
    %5618 = vmatpush.bf16.xpose.msra.mxu0 %v5105
    %5619 = vmatmul.bf16.gmra.mxu0 %v5097
    %v5620 = vpop.f32.mrf.mxu0
    %v5621 = vadd.f32 0.0, %v5620
    %v5622 = vpop.f32.mrf.mxu0
    %5623 = vdwg.mxu0
    %v5624 = vsel %vm1842, %v5621, -inf
    %5625 = vmax.xlane.f32.xlu0 %v5624
    %v5626 = vpop.xlane.xlu0 %5625
    %v5627 = vsub.f32 %v5621, %v5626
    %v5628 = vmul.f32 %v5627, 1.442695
    %v5629 = vpow.pop %v5628
    %v5630 = vsel %vm1842, %v5629, 0.0
    %5631 = vadd.xlane.f32.xlu0 %v5630
    %v5632 = vpop.xlane.xlu0 %5631
    %v5633 = vrcp.pop %v5632
    %v5634 = vmul.f32 %v5629, %v5633
    %v5635 = vpack.c.bf16 %v5634, %v5634
    %v5637 = vsel %vm1842, %v5635, 0
    %v5640 = vsel %vm1858, %v5113, 0
    %5642 = vmatpush.bf16.msra.mxu0 0
    %5643 = vmatpush.bf16.msra.mxu0 0
    %5644 = vmatpush.bf16.msra.mxu0 0
    %5645 = vmatpush.bf16.msra.mxu0 0
    %5646 = vmatpush.bf16.msra.mxu0 0
    %5647 = vmatpush.bf16.msra.mxu0 0
    %5648 = vmatpush.bf16.msra.mxu0 0
    %5649 = vmatpush.bf16.msra.mxu0 %v5640
    %5650 = vmatmul.bf16.gmra.mxu0 %v5637
    %v5651 = vpop.f32.mrf.mxu0
    %v5652 = vadd.f32 0.0, %v5651
    %v5653 = vpop.f32.mrf.mxu0
    %5654 = vdwg.mxu0
    %v5656 = vunpack.c.h.b16 %v5097
    %v5657 = vpack.c.b16 %v5656, %v5656
    %v5660 = vunpack.c.h.b16 %v5105
    %v5661 = vpack.c.b16 %v5660, %v5660
    %5663 = vmatpush.bf16.xpose.msra.mxu0 0
    %5664 = vmatpush.bf16.xpose.msra.mxu0 0
    %5665 = vmatpush.bf16.xpose.msra.mxu0 0
    %5666 = vmatpush.bf16.xpose.msra.mxu0 0
    %5667 = vmatpush.bf16.xpose.msra.mxu0 0
    %5668 = vmatpush.bf16.xpose.msra.mxu0 0
    %5669 = vmatpush.bf16.xpose.msra.mxu0 0
    %5670 = vmatpush.bf16.xpose.msra.mxu0 %v5661
    %5671 = vmatmul.bf16.gmra.mxu0 %v5657
    %v5672 = vpop.f32.mrf.mxu0
    %v5673 = vadd.f32 0.0, %v5672
    %v5674 = vpop.f32.mrf.mxu0
    %5675 = vdwg.mxu0
    %v5676 = vsel %vm1842, %v5673, -inf
    %5677 = vmax.xlane.f32.xlu0 %v5676
    %v5678 = vpop.xlane.xlu0 %5677
    %v5679 = vsub.f32 %v5673, %v5678
    %v5680 = vmul.f32 %v5679, 1.442695
    %v5681 = vpow.pop %v5680
    %v5682 = vsel %vm1842, %v5681, 0.0
    %5683 = vadd.xlane.f32.xlu0 %v5682
    %v5684 = vpop.xlane.xlu0 %5683
    %v5685 = vrcp.pop %v5684
    %v5686 = vmul.f32 %v5681, %v5685
    %v5687 = vpack.c.bf16 %v5686, %v5686
    %v5689 = vunpack.c.h.b16 %v5113
    %v5690 = vpack.c.b16 %v5689, %v5689
    %v5692 = vsel %vm1842, %v5687, 0
    %v5695 = vsel %vm1858, %v5690, 0
    %5697 = vmatpush.bf16.msra.mxu0 0
    %5698 = vmatpush.bf16.msra.mxu0 0
    %5699 = vmatpush.bf16.msra.mxu0 0
    %5700 = vmatpush.bf16.msra.mxu0 0
    %5701 = vmatpush.bf16.msra.mxu0 0
    %5702 = vmatpush.bf16.msra.mxu0 0
    %5703 = vmatpush.bf16.msra.mxu0 0
    %5704 = vmatpush.bf16.msra.mxu0 %v5695
    %5705 = vmatmul.bf16.gmra.mxu0 %v5692
    %v5706 = vpop.f32.mrf.mxu0
    %v5707 = vadd.f32 0.0, %v5706
    %v5708 = vpop.f32.mrf.mxu0
    %5709 = vdwg.mxu0
    %5710 = vmatpush.bf16.xpose.msra.mxu0 0
    %5711 = vmatpush.bf16.xpose.msra.mxu0 0
    %5712 = vmatpush.bf16.xpose.msra.mxu0 0
    %5713 = vmatpush.bf16.xpose.msra.mxu0 0
    %5714 = vmatpush.bf16.xpose.msra.mxu0 0
    %5715 = vmatpush.bf16.xpose.msra.mxu0 0
    %5716 = vmatpush.bf16.xpose.msra.mxu0 0
    %5717 = vmatpush.bf16.xpose.msra.mxu0 %v5106
    %5718 = vmatmul.bf16.gmra.mxu0 %v5098
    %v5719 = vpop.f32.mrf.mxu0
    %v5720 = vadd.f32 0.0, %v5719
    %v5721 = vpop.f32.mrf.mxu0
    %5722 = vdwg.mxu0
    %v5723 = vsel %vm1842, %v5720, -inf
    %5724 = vmax.xlane.f32.xlu0 %v5723
    %v5725 = vpop.xlane.xlu0 %5724
    %v5726 = vsub.f32 %v5720, %v5725
    %v5727 = vmul.f32 %v5726, 1.442695
    %v5728 = vpow.pop %v5727
    %v5729 = vsel %vm1842, %v5728, 0.0
    %5730 = vadd.xlane.f32.xlu0 %v5729
    %v5731 = vpop.xlane.xlu0 %5730
    %v5732 = vrcp.pop %v5731
    %v5733 = vmul.f32 %v5728, %v5732
    %v5734 = vpack.c.bf16 %v5733, %v5733
    %v5736 = vsel %vm1842, %v5734, 0
    %v5739 = vsel %vm1858, %v5114, 0
    %5741 = vmatpush.bf16.msra.mxu0 0
    %5742 = vmatpush.bf16.msra.mxu0 0
    %5743 = vmatpush.bf16.msra.mxu0 0
    %5744 = vmatpush.bf16.msra.mxu0 0
    %5745 = vmatpush.bf16.msra.mxu0 0
    %5746 = vmatpush.bf16.msra.mxu0 0
    %5747 = vmatpush.bf16.msra.mxu0 0
    %5748 = vmatpush.bf16.msra.mxu0 %v5739
    %5749 = vmatmul.bf16.gmra.mxu0 %v5736
    %v5750 = vpop.f32.mrf.mxu0
    %v5751 = vadd.f32 0.0, %v5750
    %v5752 = vpop.f32.mrf.mxu0
    %5753 = vdwg.mxu0
    %v5755 = vunpack.c.h.b16 %v5098
    %v5756 = vpack.c.b16 %v5755, %v5755
    %v5759 = vunpack.c.h.b16 %v5106
    %v5760 = vpack.c.b16 %v5759, %v5759
    %5762 = vmatpush.bf16.xpose.msra.mxu0 0
    %5763 = vmatpush.bf16.xpose.msra.mxu0 0
    %5764 = vmatpush.bf16.xpose.msra.mxu0 0
    %5765 = vmatpush.bf16.xpose.msra.mxu0 0
    %5766 = vmatpush.bf16.xpose.msra.mxu0 0
    %5767 = vmatpush.bf16.xpose.msra.mxu0 0
    %5768 = vmatpush.bf16.xpose.msra.mxu0 0
    %5769 = vmatpush.bf16.xpose.msra.mxu0 %v5760
    %5770 = vmatmul.bf16.gmra.mxu0 %v5756
    %v5771 = vpop.f32.mrf.mxu0
    %v5772 = vadd.f32 0.0, %v5771
    %v5773 = vpop.f32.mrf.mxu0
    %5774 = vdwg.mxu0
    %v5775 = vsel %vm1842, %v5772, -inf
    %5776 = vmax.xlane.f32.xlu0 %v5775
    %v5777 = vpop.xlane.xlu0 %5776
    %v5778 = vsub.f32 %v5772, %v5777
    %v5779 = vmul.f32 %v5778, 1.442695
    %v5780 = vpow.pop %v5779
    %v5781 = vsel %vm1842, %v5780, 0.0
    %5782 = vadd.xlane.f32.xlu0 %v5781
    %v5783 = vpop.xlane.xlu0 %5782
    %v5784 = vrcp.pop %v5783
    %v5785 = vmul.f32 %v5780, %v5784
    %v5786 = vpack.c.bf16 %v5785, %v5785
    %v5788 = vunpack.c.h.b16 %v5114
    %v5789 = vpack.c.b16 %v5788, %v5788
    %v5791 = vsel %vm1842, %v5786, 0
    %v5794 = vsel %vm1858, %v5789, 0
    %5796 = vmatpush.bf16.msra.mxu0 0
    %5797 = vmatpush.bf16.msra.mxu0 0
    %5798 = vmatpush.bf16.msra.mxu0 0
    %5799 = vmatpush.bf16.msra.mxu0 0
    %5800 = vmatpush.bf16.msra.mxu0 0
    %5801 = vmatpush.bf16.msra.mxu0 0
    %5802 = vmatpush.bf16.msra.mxu0 0
    %5803 = vmatpush.bf16.msra.mxu0 %v5794
    %5804 = vmatmul.bf16.gmra.mxu0 %v5791
    %v5805 = vpop.f32.mrf.mxu0
    %v5806 = vadd.f32 0.0, %v5805
    %v5807 = vpop.f32.mrf.mxu0
    %5808 = vdwg.mxu0
    %5809 = vmatpush.bf16.xpose.msra.mxu0 0
    %5810 = vmatpush.bf16.xpose.msra.mxu0 0
    %5811 = vmatpush.bf16.xpose.msra.mxu0 0
    %5812 = vmatpush.bf16.xpose.msra.mxu0 0
    %5813 = vmatpush.bf16.xpose.msra.mxu0 0
    %5814 = vmatpush.bf16.xpose.msra.mxu0 0
    %5815 = vmatpush.bf16.xpose.msra.mxu0 0
    %5816 = vmatpush.bf16.xpose.msra.mxu0 %v5107
    %5817 = vmatmul.bf16.gmra.mxu0 %v5099
    %v5818 = vpop.f32.mrf.mxu0
    %v5819 = vadd.f32 0.0, %v5818
    %v5820 = vpop.f32.mrf.mxu0
    %5821 = vdwg.mxu0
    %v5822 = vsel %vm1842, %v5819, -inf
    %5823 = vmax.xlane.f32.xlu0 %v5822
    %v5824 = vpop.xlane.xlu0 %5823
    %v5825 = vsub.f32 %v5819, %v5824
    %v5826 = vmul.f32 %v5825, 1.442695
    %v5827 = vpow.pop %v5826
    %v5828 = vsel %vm1842, %v5827, 0.0
    %5829 = vadd.xlane.f32.xlu0 %v5828
    %v5830 = vpop.xlane.xlu0 %5829
    %v5831 = vrcp.pop %v5830
    %v5832 = vmul.f32 %v5827, %v5831
    %v5833 = vpack.c.bf16 %v5832, %v5832
    %v5835 = vsel %vm1842, %v5833, 0
    %v5838 = vsel %vm1858, %v5115, 0
    %5840 = vmatpush.bf16.msra.mxu0 0
    %5841 = vmatpush.bf16.msra.mxu0 0
    %5842 = vmatpush.bf16.msra.mxu0 0
    %5843 = vmatpush.bf16.msra.mxu0 0
    %5844 = vmatpush.bf16.msra.mxu0 0
    %5845 = vmatpush.bf16.msra.mxu0 0
    %5846 = vmatpush.bf16.msra.mxu0 0
    %5847 = vmatpush.bf16.msra.mxu0 %v5838
    %5848 = vmatmul.bf16.gmra.mxu0 %v5835
    %v5849 = vpop.f32.mrf.mxu0
    %v5850 = vadd.f32 0.0, %v5849
    %v5851 = vpop.f32.mrf.mxu0
    %5852 = vdwg.mxu0
    %v5854 = vunpack.c.h.b16 %v5099
    %v5855 = vpack.c.b16 %v5854, %v5854
    %v5858 = vunpack.c.h.b16 %v5107
    %v5859 = vpack.c.b16 %v5858, %v5858
    %5861 = vmatpush.bf16.xpose.msra.mxu0 0
    %5862 = vmatpush.bf16.xpose.msra.mxu0 0
    %5863 = vmatpush.bf16.xpose.msra.mxu0 0
    %5864 = vmatpush.bf16.xpose.msra.mxu0 0
    %5865 = vmatpush.bf16.xpose.msra.mxu0 0
    %5866 = vmatpush.bf16.xpose.msra.mxu0 0
    %5867 = vmatpush.bf16.xpose.msra.mxu0 0
    %5868 = vmatpush.bf16.xpose.msra.mxu0 %v5859
    %5869 = vmatmul.bf16.gmra.mxu0 %v5855
    %v5870 = vpop.f32.mrf.mxu0
    %v5871 = vadd.f32 0.0, %v5870
    %v5872 = vpop.f32.mrf.mxu0
    %5873 = vdwg.mxu0
    %v5874 = vsel %vm1842, %v5871, -inf
    %5875 = vmax.xlane.f32.xlu0 %v5874
    %v5876 = vpop.xlane.xlu0 %5875
    %v5877 = vsub.f32 %v5871, %v5876
    %v5878 = vmul.f32 %v5877, 1.442695
    %v5879 = vpow.pop %v5878
    %v5880 = vsel %vm1842, %v5879, 0.0
    %5881 = vadd.xlane.f32.xlu0 %v5880
    %v5882 = vpop.xlane.xlu0 %5881
    %v5883 = vrcp.pop %v5882
    %v5884 = vmul.f32 %v5879, %v5883
    %v5885 = vpack.c.bf16 %v5884, %v5884
    %v5887 = vunpack.c.h.b16 %v5115
    %v5888 = vpack.c.b16 %v5887, %v5887
    %v5890 = vsel %vm1842, %v5885, 0
    %v5893 = vsel %vm1858, %v5888, 0
    %5895 = vmatpush.bf16.msra.mxu0 0
    %5896 = vmatpush.bf16.msra.mxu0 0
    %5897 = vmatpush.bf16.msra.mxu0 0
    %5898 = vmatpush.bf16.msra.mxu0 0
    %5899 = vmatpush.bf16.msra.mxu0 0
    %5900 = vmatpush.bf16.msra.mxu0 0
    %5901 = vmatpush.bf16.msra.mxu0 0
    %5902 = vmatpush.bf16.msra.mxu0 %v5893
    %5903 = vmatmul.bf16.gmra.mxu0 %v5890
    %v5904 = vpop.f32.mrf.mxu0
    %v5905 = vadd.f32 0.0, %v5904
    %v5906 = vpop.f32.mrf.mxu0
    %5907 = vdwg.mxu0
    %v5908 = vpack.c.bf16 %v5553, %v5157
    %v5909 = vpack.c.bf16 %v5608, %v5212
    %v5910 = vpack.c.bf16 %v5652, %v5256
    %v5911 = vpack.c.bf16 %v5707, %v5311
    %v5912 = vpack.c.bf16 %v5751, %v5355
    %v5913 = vpack.c.bf16 %v5806, %v5410
    %v5914 = vpack.c.bf16 %v5850, %v5454
    %v5915 = vpack.c.bf16 %v5905, %v5509
    %v6044 = vunpack.c.l.b16 %v3617
    %v6045 = vunpack.c.l.b16 %v3618
    %v6046 = vunpack.c.l.b16 %v3619
    %v6047 = vunpack.c.l.b16 %v3620
    %v6048 = vunpack.c.l.b16 %v3621
    %v6049 = vunpack.c.l.b16 %v3622
    %v6050 = vunpack.c.l.b16 %v3623
    %v6051 = vunpack.c.l.b16 %v3624
    %v6052 = vunpack.c.l.b16 %v3625
    %v6053 = vunpack.c.l.b16 %v3626
    %v6054 = vunpack.c.l.b16 %v3627
    %v6055 = vunpack.c.l.b16 %v3628
    %v6056 = vunpack.c.l.b16 %v3629
    %v6057 = vunpack.c.l.b16 %v3630
    %v6058 = vunpack.c.l.b16 %v3631
    %v6059 = vunpack.c.l.b16 %v3632
    %v6060 = vunpack.c.l.b16 %v3633
    %v6061 = vunpack.c.l.b16 %v3634
    %v6062 = vunpack.c.l.b16 %v3635
    %v6063 = vunpack.c.l.b16 %v3636
    %v6064 = vunpack.c.l.b16 %v3637
    %v6065 = vunpack.c.l.b16 %v3638
    %v6066 = vunpack.c.l.b16 %v3639
    %v6067 = vunpack.c.l.b16 %v3640
    %v6068 = vunpack.c.l.b16 %v3641
    %v6069 = vunpack.c.l.b16 %v3642
    %v6070 = vunpack.c.l.b16 %v3643
    %v6071 = vunpack.c.l.b16 %v3644
    %v6072 = vunpack.c.l.b16 %v3645
    %v6073 = vunpack.c.l.b16 %v3646
    %v6074 = vunpack.c.l.b16 %v3647
    %v6075 = vunpack.c.l.b16 %v3648
    %v6076 = vunpack.c.l.b16 %v3649
    %v6077 = vunpack.c.l.b16 %v3650
    %v6078 = vunpack.c.l.b16 %v3651
    %v6079 = vunpack.c.l.b16 %v3652
    %v6080 = vunpack.c.l.b16 %v3653
    %v6081 = vunpack.c.l.b16 %v3654
    %v6082 = vunpack.c.l.b16 %v3655
    %v6083 = vunpack.c.l.b16 %v3656
    %v6084 = vunpack.c.l.b16 %v3657
    %v6085 = vunpack.c.l.b16 %v3658
    %v6086 = vunpack.c.l.b16 %v3659
    %v6087 = vunpack.c.l.b16 %v3660
    %v6088 = vunpack.c.l.b16 %v3661
    %v6089 = vunpack.c.l.b16 %v3662
    %v6090 = vunpack.c.l.b16 %v3663
    %v6091 = vunpack.c.l.b16 %v3664
    %v6092 = vunpack.c.l.b16 %v3665
    %v6093 = vunpack.c.l.b16 %v3666
    %v6094 = vunpack.c.l.b16 %v3667
    %v6095 = vunpack.c.l.b16 %v3668
    %v6096 = vunpack.c.l.b16 %v3669
    %v6097 = vunpack.c.l.b16 %v3670
    %v6098 = vunpack.c.l.b16 %v3671
    %v6099 = vunpack.c.l.b16 %v3672
    %v6100 = vunpack.c.l.b16 %v3673
    %v6101 = vunpack.c.l.b16 %v3674
    %v6102 = vunpack.c.l.b16 %v3675
    %v6103 = vunpack.c.l.b16 %v3676
    %v6104 = vunpack.c.l.b16 %v3677
    %v6105 = vunpack.c.l.b16 %v3678
    %v6106 = vunpack.c.l.b16 %v3679
    %v6107 = vunpack.c.l.b16 %v3680
    %v6108 = vunpack.c.l.b16 %v3681
    %v6109 = vunpack.c.l.b16 %v3682
    %v6110 = vunpack.c.l.b16 %v3683
    %v6111 = vunpack.c.l.b16 %v3684
    %v6112 = vunpack.c.l.b16 %v3685
    %v6113 = vunpack.c.l.b16 %v3686
    %v6114 = vunpack.c.l.b16 %v3687
    %v6115 = vunpack.c.l.b16 %v3688
    %v6116 = vunpack.c.l.b16 %v3689
    %v6117 = vunpack.c.l.b16 %v3690
    %v6118 = vunpack.c.l.b16 %v3691
    %v6119 = vunpack.c.l.b16 %v3692
    %v6120 = vunpack.c.l.b16 %v3693
    %v6121 = vunpack.c.l.b16 %v3694
    %v6122 = vunpack.c.l.b16 %v3695
    %v6123 = vunpack.c.l.b16 %v3696
    %v6124 = vunpack.c.l.b16 %v3697
    %v6125 = vunpack.c.l.b16 %v3698
    %v6126 = vunpack.c.l.b16 %v3699
    %v6127 = vunpack.c.l.b16 %v3700
    %v6128 = vunpack.c.l.b16 %v3701
    %v6129 = vunpack.c.l.b16 %v3702
    %v6130 = vunpack.c.l.b16 %v3703
    %v6131 = vunpack.c.l.b16 %v3704
    %v6132 = vunpack.c.l.b16 %v3705
    %v6133 = vunpack.c.l.b16 %v3706
    %v6134 = vunpack.c.l.b16 %v3707
    %v6135 = vunpack.c.l.b16 %v3708
    %v6136 = vunpack.c.l.b16 %v3709
    %v6137 = vunpack.c.l.b16 %v3710
    %v6138 = vunpack.c.l.b16 %v3711
    %v6139 = vunpack.c.l.b16 %v3712
    %v6140 = vunpack.c.l.b16 %v3713
    %v6141 = vunpack.c.l.b16 %v3714
    %v6142 = vunpack.c.l.b16 %v3715
    %v6143 = vunpack.c.l.b16 %v3716
    %v6144 = vunpack.c.l.b16 %v3717
    %v6145 = vunpack.c.l.b16 %v3718
    %v6146 = vunpack.c.l.b16 %v3719
    %v6147 = vunpack.c.l.b16 %v3720
    %v6148 = vunpack.c.l.b16 %v3721
    %v6149 = vunpack.c.l.b16 %v3722
    %v6150 = vunpack.c.l.b16 %v3723
    %v6151 = vunpack.c.l.b16 %v3724
    %v6152 = vunpack.c.l.b16 %v3725
    %v6153 = vunpack.c.l.b16 %v3726
    %v6154 = vunpack.c.l.b16 %v3727
    %v6155 = vunpack.c.l.b16 %v3728
    %v6156 = vunpack.c.l.b16 %v3729
    %v6157 = vunpack.c.l.b16 %v3730
    %v6158 = vunpack.c.l.b16 %v3731
    %v6159 = vunpack.c.l.b16 %v3732
    %v6160 = vunpack.c.l.b16 %v3733
    %v6161 = vunpack.c.l.b16 %v3734
    %v6162 = vunpack.c.l.b16 %v3735
    %v6163 = vunpack.c.l.b16 %v3736
    %v6164 = vunpack.c.l.b16 %v3737
    %v6165 = vunpack.c.l.b16 %v3738
    %v6166 = vunpack.c.l.b16 %v3739
    %v6167 = vunpack.c.l.b16 %v3740
    %v6168 = vunpack.c.l.b16 %v3741
    %v6169 = vunpack.c.l.b16 %v3742
    %v6170 = vunpack.c.l.b16 %v3743
    %v6171 = vunpack.c.l.b16 %v3744
    %v6172 = vpack.c.b16 %v6045, %v6044
    %v6173 = vpack.c.b16 %v6047, %v6046
    %v6174 = vpack.c.b16 %v6049, %v6048
    %v6175 = vpack.c.b16 %v6051, %v6050
    %v6176 = vpack.c.b16 %v6053, %v6052
    %v6177 = vpack.c.b16 %v6055, %v6054
    %v6178 = vpack.c.b16 %v6057, %v6056
    %v6179 = vpack.c.b16 %v6059, %v6058
    %v6180 = vpack.c.b16 %v6061, %v6060
    %v6181 = vpack.c.b16 %v6063, %v6062
    %v6182 = vpack.c.b16 %v6065, %v6064
    %v6183 = vpack.c.b16 %v6067, %v6066
    %v6184 = vpack.c.b16 %v6069, %v6068
    %v6185 = vpack.c.b16 %v6071, %v6070
    %v6186 = vpack.c.b16 %v6073, %v6072
    %v6187 = vpack.c.b16 %v6075, %v6074
    %v6188 = vpack.c.b16 %v6077, %v6076
    %v6189 = vpack.c.b16 %v6079, %v6078
    %v6190 = vpack.c.b16 %v6081, %v6080
    %v6191 = vpack.c.b16 %v6083, %v6082
    %v6192 = vpack.c.b16 %v6085, %v6084
    %v6193 = vpack.c.b16 %v6087, %v6086
    %v6194 = vpack.c.b16 %v6089, %v6088
    %v6195 = vpack.c.b16 %v6091, %v6090
    %v6196 = vpack.c.b16 %v6093, %v6092
    %v6197 = vpack.c.b16 %v6095, %v6094
    %v6198 = vpack.c.b16 %v6097, %v6096
    %v6199 = vpack.c.b16 %v6099, %v6098
    %v6200 = vpack.c.b16 %v6101, %v6100
    %v6201 = vpack.c.b16 %v6103, %v6102
    %v6202 = vpack.c.b16 %v6105, %v6104
    %v6203 = vpack.c.b16 %v6107, %v6106
    %v6204 = vpack.c.b16 %v6109, %v6108
    %v6205 = vpack.c.b16 %v6111, %v6110
    %v6206 = vpack.c.b16 %v6113, %v6112
    %v6207 = vpack.c.b16 %v6115, %v6114
    %v6208 = vpack.c.b16 %v6117, %v6116
    %v6209 = vpack.c.b16 %v6119, %v6118
    %v6210 = vpack.c.b16 %v6121, %v6120
    %v6211 = vpack.c.b16 %v6123, %v6122
    %v6212 = vpack.c.b16 %v6125, %v6124
    %v6213 = vpack.c.b16 %v6127, %v6126
    %v6214 = vpack.c.b16 %v6129, %v6128
    %v6215 = vpack.c.b16 %v6131, %v6130
    %v6216 = vpack.c.b16 %v6133, %v6132
    %v6217 = vpack.c.b16 %v6135, %v6134
    %v6218 = vpack.c.b16 %v6137, %v6136
    %v6219 = vpack.c.b16 %v6139, %v6138
    %v6220 = vpack.c.b16 %v6141, %v6140
    %v6221 = vpack.c.b16 %v6143, %v6142
    %v6222 = vpack.c.b16 %v6145, %v6144
    %v6223 = vpack.c.b16 %v6147, %v6146
    %v6224 = vpack.c.b16 %v6149, %v6148
    %v6225 = vpack.c.b16 %v6151, %v6150
    %v6226 = vpack.c.b16 %v6153, %v6152
    %v6227 = vpack.c.b16 %v6155, %v6154
    %v6228 = vpack.c.b16 %v6157, %v6156
    %v6229 = vpack.c.b16 %v6159, %v6158
    %v6230 = vpack.c.b16 %v6161, %v6160
    %v6231 = vpack.c.b16 %v6163, %v6162
    %v6232 = vpack.c.b16 %v6165, %v6164
    %v6233 = vpack.c.b16 %v6167, %v6166
    %v6234 = vpack.c.b16 %v6169, %v6168
    %v6235 = vpack.c.b16 %v6171, %v6170
    %6300 = vmatpush.bf16.msra.mxu0 %v6179
    %6301 = vmatpush.bf16.msra.mxu0 %v6178
    %6302 = vmatpush.bf16.msra.mxu0 %v6177
    %6303 = vmatpush.bf16.msra.mxu0 %v6176
    %6304 = vmatpush.bf16.msra.mxu0 %v6175
    %6305 = vmatpush.bf16.msra.mxu0 %v6174
    %6306 = vmatpush.bf16.msra.mxu0 %v6173
    %6307 = vmatpush.bf16.msra.mxu0 %v6172
    %6308 = vmatmul.bf16.gmra.mxu0 %v5908
    %v6309 = vpop.f32.mrf.mxu0
    %v6310 = vadd.f32 %v3420, %v6309
    %v6311 = vpop.f32.mrf.mxu0
    %v6312 = vadd.f32 %v3421, %v6311
    %6313 = vdwg.mxu0
    %6314 = vmatpush.bf16.msra.mxu0 %v6187
    %6315 = vmatpush.bf16.msra.mxu0 %v6186
    %6316 = vmatpush.bf16.msra.mxu0 %v6185
    %6317 = vmatpush.bf16.msra.mxu0 %v6184
    %6318 = vmatpush.bf16.msra.mxu0 %v6183
    %6319 = vmatpush.bf16.msra.mxu0 %v6182
    %6320 = vmatpush.bf16.msra.mxu0 %v6181
    %6321 = vmatpush.bf16.msra.mxu0 %v6180
    %6322 = vmatmul.bf16.gmra.mxu0 %v5909
    %v6323 = vpop.f32.mrf.mxu0
    %v6324 = vadd.f32 %v6310, %v6323
    %v6325 = vpop.f32.mrf.mxu0
    %v6326 = vadd.f32 %v6312, %v6325
    %6327 = vdwg.mxu0
    %6328 = vmatpush.bf16.msra.mxu0 %v6195
    %6329 = vmatpush.bf16.msra.mxu0 %v6194
    %6330 = vmatpush.bf16.msra.mxu0 %v6193
    %6331 = vmatpush.bf16.msra.mxu0 %v6192
    %6332 = vmatpush.bf16.msra.mxu0 %v6191
    %6333 = vmatpush.bf16.msra.mxu0 %v6190
    %6334 = vmatpush.bf16.msra.mxu0 %v6189
    %6335 = vmatpush.bf16.msra.mxu0 %v6188
    %6336 = vmatmul.bf16.gmra.mxu0 %v5910
    %v6337 = vpop.f32.mrf.mxu0
    %v6338 = vadd.f32 %v6324, %v6337
    %v6339 = vpop.f32.mrf.mxu0
    %v6340 = vadd.f32 %v6326, %v6339
    %6341 = vdwg.mxu0
    %6342 = vmatpush.bf16.msra.mxu0 %v6203
    %6343 = vmatpush.bf16.msra.mxu0 %v6202
    %6344 = vmatpush.bf16.msra.mxu0 %v6201
    %6345 = vmatpush.bf16.msra.mxu0 %v6200
    %6346 = vmatpush.bf16.msra.mxu0 %v6199
    %6347 = vmatpush.bf16.msra.mxu0 %v6198
    %6348 = vmatpush.bf16.msra.mxu0 %v6197
    %6349 = vmatpush.bf16.msra.mxu0 %v6196
    %6350 = vmatmul.bf16.gmra.mxu0 %v5911
    %v6351 = vpop.f32.mrf.mxu0
    %v6352 = vadd.f32 %v6338, %v6351
    %v6353 = vpop.f32.mrf.mxu0
    %v6354 = vadd.f32 %v6340, %v6353
    %6355 = vdwg.mxu0
    %6356 = vmatpush.bf16.msra.mxu0 %v6211
    %6357 = vmatpush.bf16.msra.mxu0 %v6210
    %6358 = vmatpush.bf16.msra.mxu0 %v6209
    %6359 = vmatpush.bf16.msra.mxu0 %v6208
    %6360 = vmatpush.bf16.msra.mxu0 %v6207
    %6361 = vmatpush.bf16.msra.mxu0 %v6206
    %6362 = vmatpush.bf16.msra.mxu0 %v6205
    %6363 = vmatpush.bf16.msra.mxu0 %v6204
    %6364 = vmatmul.bf16.gmra.mxu0 %v5912
    %v6365 = vpop.f32.mrf.mxu0
    %v6366 = vadd.f32 %v6352, %v6365
    %v6367 = vpop.f32.mrf.mxu0
    %v6368 = vadd.f32 %v6354, %v6367
    %6369 = vdwg.mxu0
    %6370 = vmatpush.bf16.msra.mxu0 %v6219
    %6371 = vmatpush.bf16.msra.mxu0 %v6218
    %6372 = vmatpush.bf16.msra.mxu0 %v6217
    %6373 = vmatpush.bf16.msra.mxu0 %v6216
    %6374 = vmatpush.bf16.msra.mxu0 %v6215
    %6375 = vmatpush.bf16.msra.mxu0 %v6214
    %6376 = vmatpush.bf16.msra.mxu0 %v6213
    %6377 = vmatpush.bf16.msra.mxu0 %v6212
    %6378 = vmatmul.bf16.gmra.mxu0 %v5913
    %v6379 = vpop.f32.mrf.mxu0
    %v6380 = vadd.f32 %v6366, %v6379
    %v6381 = vpop.f32.mrf.mxu0
    %v6382 = vadd.f32 %v6368, %v6381
    %6383 = vdwg.mxu0
    %6384 = vmatpush.bf16.msra.mxu0 %v6227
    %6385 = vmatpush.bf16.msra.mxu0 %v6226
    %6386 = vmatpush.bf16.msra.mxu0 %v6225
    %6387 = vmatpush.bf16.msra.mxu0 %v6224
    %6388 = vmatpush.bf16.msra.mxu0 %v6223
    %6389 = vmatpush.bf16.msra.mxu0 %v6222
    %6390 = vmatpush.bf16.msra.mxu0 %v6221
    %6391 = vmatpush.bf16.msra.mxu0 %v6220
    %6392 = vmatmul.bf16.gmra.mxu0 %v5914
    %v6393 = vpop.f32.mrf.mxu0
    %v6394 = vadd.f32 %v6380, %v6393
    %v6395 = vpop.f32.mrf.mxu0
    %v6396 = vadd.f32 %v6382, %v6395
    %6397 = vdwg.mxu0
    %6398 = vmatpush.bf16.msra.mxu0 %v6235
    %6399 = vmatpush.bf16.msra.mxu0 %v6234
    %6400 = vmatpush.bf16.msra.mxu0 %v6233
    %6401 = vmatpush.bf16.msra.mxu0 %v6232
    %6402 = vmatpush.bf16.msra.mxu0 %v6231
    %6403 = vmatpush.bf16.msra.mxu0 %v6230
    %6404 = vmatpush.bf16.msra.mxu0 %v6229
    %6405 = vmatpush.bf16.msra.mxu0 %v6228
    %6406 = vmatmul.bf16.gmra.mxu0 %v5915
    %v6407 = vpop.f32.mrf.mxu0
    %v6408 = vadd.f32 %v6394, %v6407
    %v6409 = vpop.f32.mrf.mxu0
    %v6410 = vadd.f32 %v6396, %v6409
    %6411 = vdwg.mxu0
    %v6412 = vld [vmem:[#allocation5 + $0x4] sm:$0x1]
    %s6413 = scalar_lea.vmem [#allocation8], 3072
    %v6414 = vld [vmem:[%s6413] sm:$0xff]
    %v6415 = vld [vmem:[%s6413 + $0x8] sm:$0xff]
    %v6416 = vld [vmem:[%s6413 + $0x10] sm:$0xff]
    %v6417 = vld [vmem:[%s6413 + $0x18] sm:$0xff]
    %v6418 = vld [vmem:[%s6413 + $0x20] sm:$0xff]
    %v6419 = vld [vmem:[%s6413 + $0x28] sm:$0xff]
    %v6420 = vld [vmem:[%s6413 + $0x30] sm:$0xff]
    %v6421 = vld [vmem:[%s6413 + $0x38] sm:$0xff]
    %v6422 = vld [vmem:[%s6413 + $0x40] sm:$0xff]
    %v6423 = vld [vmem:[%s6413 + $0x48] sm:$0xff]
    %v6424 = vld [vmem:[%s6413 + $0x50] sm:$0xff]
    %v6425 = vld [vmem:[%s6413 + $0x58] sm:$0xff]
    %v6426 = vld [vmem:[%s6413 + $0x60] sm:$0xff]
    %v6427 = vld [vmem:[%s6413 + $0x68] sm:$0xff]
    %v6428 = vld [vmem:[%s6413 + $0x70] sm:$0xff]
    %v6429 = vld [vmem:[%s6413 + $0x78] sm:$0xff]
    %v6430 = vld [vmem:[%s6413 + $0x80] sm:$0xff]
    %v6431 = vld [vmem:[%s6413 + $0x88] sm:$0xff]
    %v6432 = vld [vmem:[%s6413 + $0x90] sm:$0xff]
    %v6433 = vld [vmem:[%s6413 + $0x98] sm:$0xff]
    %v6434 = vld [vmem:[%s6413 + $0xa0] sm:$0xff]
    %v6435 = vld [vmem:[%s6413 + $0xa8] sm:$0xff]
    %v6436 = vld [vmem:[%s6413 + $0xb0] sm:$0xff]
    %v6437 = vld [vmem:[%s6413 + $0xb8] sm:$0xff]
    %v6438 = vld [vmem:[%s6413 + $0xc0] sm:$0xff]
    %v6439 = vld [vmem:[%s6413 + $0xc8] sm:$0xff]
    %v6440 = vld [vmem:[%s6413 + $0xd0] sm:$0xff]
    %v6441 = vld [vmem:[%s6413 + $0xd8] sm:$0xff]
    %v6442 = vld [vmem:[%s6413 + $0xe0] sm:$0xff]
    %v6443 = vld [vmem:[%s6413 + $0xe8] sm:$0xff]
    %v6444 = vld [vmem:[%s6413 + $0xf0] sm:$0xff]
    %v6445 = vld [vmem:[%s6413 + $0xf8] sm:$0xff]
    %v6446 = vld [vmem:[%s6413 + $0x100] sm:$0xff]
    %v6447 = vld [vmem:[%s6413 + $0x108] sm:$0xff]
    %v6448 = vld [vmem:[%s6413 + $0x110] sm:$0xff]
    %v6449 = vld [vmem:[%s6413 + $0x118] sm:$0xff]
    %v6450 = vld [vmem:[%s6413 + $0x120] sm:$0xff]
    %v6451 = vld [vmem:[%s6413 + $0x128] sm:$0xff]
    %v6452 = vld [vmem:[%s6413 + $0x130] sm:$0xff]
    %v6453 = vld [vmem:[%s6413 + $0x138] sm:$0xff]
    %v6454 = vld [vmem:[%s6413 + $0x140] sm:$0xff]
    %v6455 = vld [vmem:[%s6413 + $0x148] sm:$0xff]
    %v6456 = vld [vmem:[%s6413 + $0x150] sm:$0xff]
    %v6457 = vld [vmem:[%s6413 + $0x158] sm:$0xff]
    %v6458 = vld [vmem:[%s6413 + $0x160] sm:$0xff]
    %v6459 = vld [vmem:[%s6413 + $0x168] sm:$0xff]
    %v6460 = vld [vmem:[%s6413 + $0x170] sm:$0xff]
    %v6461 = vld [vmem:[%s6413 + $0x178] sm:$0xff]
    %v6462 = vld [vmem:[%s6413 + $0x180] sm:$0xff]
    %v6463 = vld [vmem:[%s6413 + $0x188] sm:$0xff]
    %v6464 = vld [vmem:[%s6413 + $0x190] sm:$0xff]
    %v6465 = vld [vmem:[%s6413 + $0x198] sm:$0xff]
    %v6466 = vld [vmem:[%s6413 + $0x1a0] sm:$0xff]
    %v6467 = vld [vmem:[%s6413 + $0x1a8] sm:$0xff]
    %v6468 = vld [vmem:[%s6413 + $0x1b0] sm:$0xff]
    %v6469 = vld [vmem:[%s6413 + $0x1b8] sm:$0xff]
    %v6470 = vld [vmem:[%s6413 + $0x1c0] sm:$0xff]
    %v6471 = vld [vmem:[%s6413 + $0x1c8] sm:$0xff]
    %v6472 = vld [vmem:[%s6413 + $0x1d0] sm:$0xff]
    %v6473 = vld [vmem:[%s6413 + $0x1d8] sm:$0xff]
    %v6474 = vld [vmem:[%s6413 + $0x1e0] sm:$0xff]
    %v6475 = vld [vmem:[%s6413 + $0x1e8] sm:$0xff]
    %v6476 = vld [vmem:[%s6413 + $0x1f0] sm:$0xff]
    %v6477 = vld [vmem:[%s6413 + $0x1f8] sm:$0xff]
    %v6478 = vld [vmem:[%s6413 + $0x200] sm:$0xff]
    %v6479 = vld [vmem:[%s6413 + $0x208] sm:$0xff]
    %v6480 = vld [vmem:[%s6413 + $0x210] sm:$0xff]
    %v6481 = vld [vmem:[%s6413 + $0x218] sm:$0xff]
    %v6482 = vld [vmem:[%s6413 + $0x220] sm:$0xff]
    %v6483 = vld [vmem:[%s6413 + $0x228] sm:$0xff]
    %v6484 = vld [vmem:[%s6413 + $0x230] sm:$0xff]
    %v6485 = vld [vmem:[%s6413 + $0x238] sm:$0xff]
    %v6486 = vld [vmem:[%s6413 + $0x240] sm:$0xff]
    %v6487 = vld [vmem:[%s6413 + $0x248] sm:$0xff]
    %v6488 = vld [vmem:[%s6413 + $0x250] sm:$0xff]
    %v6489 = vld [vmem:[%s6413 + $0x258] sm:$0xff]
    %v6490 = vld [vmem:[%s6413 + $0x260] sm:$0xff]
    %v6491 = vld [vmem:[%s6413 + $0x268] sm:$0xff]
    %v6492 = vld [vmem:[%s6413 + $0x270] sm:$0xff]
    %v6493 = vld [vmem:[%s6413 + $0x278] sm:$0xff]
    %v6494 = vld [vmem:[%s6413 + $0x280] sm:$0xff]
    %v6495 = vld [vmem:[%s6413 + $0x288] sm:$0xff]
    %v6496 = vld [vmem:[%s6413 + $0x290] sm:$0xff]
    %v6497 = vld [vmem:[%s6413 + $0x298] sm:$0xff]
    %v6498 = vld [vmem:[%s6413 + $0x2a0] sm:$0xff]
    %v6499 = vld [vmem:[%s6413 + $0x2a8] sm:$0xff]
    %v6500 = vld [vmem:[%s6413 + $0x2b0] sm:$0xff]
    %v6501 = vld [vmem:[%s6413 + $0x2b8] sm:$0xff]
    %v6502 = vld [vmem:[%s6413 + $0x2c0] sm:$0xff]
    %v6503 = vld [vmem:[%s6413 + $0x2c8] sm:$0xff]
    %v6504 = vld [vmem:[%s6413 + $0x2d0] sm:$0xff]
    %v6505 = vld [vmem:[%s6413 + $0x2d8] sm:$0xff]
    %v6506 = vld [vmem:[%s6413 + $0x2e0] sm:$0xff]
    %v6507 = vld [vmem:[%s6413 + $0x2e8] sm:$0xff]
    %v6508 = vld [vmem:[%s6413 + $0x2f0] sm:$0xff]
    %v6509 = vld [vmem:[%s6413 + $0x2f8] sm:$0xff]
    %v6510 = vld [vmem:[%s6413 + $0x300] sm:$0xff]
    %v6511 = vld [vmem:[%s6413 + $0x308] sm:$0xff]
    %v6512 = vld [vmem:[%s6413 + $0x310] sm:$0xff]
    %v6513 = vld [vmem:[%s6413 + $0x318] sm:$0xff]
    %v6514 = vld [vmem:[%s6413 + $0x320] sm:$0xff]
    %v6515 = vld [vmem:[%s6413 + $0x328] sm:$0xff]
    %v6516 = vld [vmem:[%s6413 + $0x330] sm:$0xff]
    %v6517 = vld [vmem:[%s6413 + $0x338] sm:$0xff]
    %v6518 = vld [vmem:[%s6413 + $0x340] sm:$0xff]
    %v6519 = vld [vmem:[%s6413 + $0x348] sm:$0xff]
    %v6520 = vld [vmem:[%s6413 + $0x350] sm:$0xff]
    %v6521 = vld [vmem:[%s6413 + $0x358] sm:$0xff]
    %v6522 = vld [vmem:[%s6413 + $0x360] sm:$0xff]
    %v6523 = vld [vmem:[%s6413 + $0x368] sm:$0xff]
    %v6524 = vld [vmem:[%s6413 + $0x370] sm:$0xff]
    %v6525 = vld [vmem:[%s6413 + $0x378] sm:$0xff]
    %v6526 = vld [vmem:[%s6413 + $0x380] sm:$0xff]
    %v6527 = vld [vmem:[%s6413 + $0x388] sm:$0xff]
    %v6528 = vld [vmem:[%s6413 + $0x390] sm:$0xff]
    %v6529 = vld [vmem:[%s6413 + $0x398] sm:$0xff]
    %v6530 = vld [vmem:[%s6413 + $0x3a0] sm:$0xff]
    %v6531 = vld [vmem:[%s6413 + $0x3a8] sm:$0xff]
    %v6532 = vld [vmem:[%s6413 + $0x3b0] sm:$0xff]
    %v6533 = vld [vmem:[%s6413 + $0x3b8] sm:$0xff]
    %v6534 = vld [vmem:[%s6413 + $0x3c0] sm:$0xff]
    %v6535 = vld [vmem:[%s6413 + $0x3c8] sm:$0xff]
    %v6536 = vld [vmem:[%s6413 + $0x3d0] sm:$0xff]
    %v6537 = vld [vmem:[%s6413 + $0x3d8] sm:$0xff]
    %v6538 = vld [vmem:[%s6413 + $0x3e0] sm:$0xff]
    %v6539 = vld [vmem:[%s6413 + $0x3e8] sm:$0xff]
    %v6540 = vld [vmem:[%s6413 + $0x3f0] sm:$0xff]
    %v6541 = vld [vmem:[%s6413 + $0x3f8] sm:$0xff]
    %v6542 = vld [vmem:[%s6413 + $0x400] sm:$0xff]
    %v6543 = vld [vmem:[%s6413 + $0x408] sm:$0xff]
    %v6544 = vld [vmem:[%s6413 + $0x410] sm:$0xff]
    %v6545 = vld [vmem:[%s6413 + $0x418] sm:$0xff]
    %v6546 = vld [vmem:[%s6413 + $0x420] sm:$0xff]
    %v6547 = vld [vmem:[%s6413 + $0x428] sm:$0xff]
    %v6548 = vld [vmem:[%s6413 + $0x430] sm:$0xff]
    %v6549 = vld [vmem:[%s6413 + $0x438] sm:$0xff]
    %v6550 = vld [vmem:[%s6413 + $0x440] sm:$0xff]
    %v6551 = vld [vmem:[%s6413 + $0x448] sm:$0xff]
    %v6552 = vld [vmem:[%s6413 + $0x450] sm:$0xff]
    %v6553 = vld [vmem:[%s6413 + $0x458] sm:$0xff]
    %v6554 = vld [vmem:[%s6413 + $0x460] sm:$0xff]
    %v6555 = vld [vmem:[%s6413 + $0x468] sm:$0xff]
    %v6556 = vld [vmem:[%s6413 + $0x470] sm:$0xff]
    %v6557 = vld [vmem:[%s6413 + $0x478] sm:$0xff]
    %v6558 = vld [vmem:[%s6413 + $0x480] sm:$0xff]
    %v6559 = vld [vmem:[%s6413 + $0x488] sm:$0xff]
    %v6560 = vld [vmem:[%s6413 + $0x490] sm:$0xff]
    %v6561 = vld [vmem:[%s6413 + $0x498] sm:$0xff]
    %v6562 = vld [vmem:[%s6413 + $0x4a0] sm:$0xff]
    %v6563 = vld [vmem:[%s6413 + $0x4a8] sm:$0xff]
    %v6564 = vld [vmem:[%s6413 + $0x4b0] sm:$0xff]
    %v6565 = vld [vmem:[%s6413 + $0x4b8] sm:$0xff]
    %v6566 = vld [vmem:[%s6413 + $0x4c0] sm:$0xff]
    %v6567 = vld [vmem:[%s6413 + $0x4c8] sm:$0xff]
    %v6568 = vld [vmem:[%s6413 + $0x4d0] sm:$0xff]
    %v6569 = vld [vmem:[%s6413 + $0x4d8] sm:$0xff]
    %v6570 = vld [vmem:[%s6413 + $0x4e0] sm:$0xff]
    %v6571 = vld [vmem:[%s6413 + $0x4e8] sm:$0xff]
    %v6572 = vld [vmem:[%s6413 + $0x4f0] sm:$0xff]
    %v6573 = vld [vmem:[%s6413 + $0x4f8] sm:$0xff]
    %v6574 = vld [vmem:[%s6413 + $0x500] sm:$0xff]
    %v6575 = vld [vmem:[%s6413 + $0x508] sm:$0xff]
    %v6576 = vld [vmem:[%s6413 + $0x510] sm:$0xff]
    %v6577 = vld [vmem:[%s6413 + $0x518] sm:$0xff]
    %v6578 = vld [vmem:[%s6413 + $0x520] sm:$0xff]
    %v6579 = vld [vmem:[%s6413 + $0x528] sm:$0xff]
    %v6580 = vld [vmem:[%s6413 + $0x530] sm:$0xff]
    %v6581 = vld [vmem:[%s6413 + $0x538] sm:$0xff]
    %v6582 = vld [vmem:[%s6413 + $0x540] sm:$0xff]
    %v6583 = vld [vmem:[%s6413 + $0x548] sm:$0xff]
    %v6584 = vld [vmem:[%s6413 + $0x550] sm:$0xff]
    %v6585 = vld [vmem:[%s6413 + $0x558] sm:$0xff]
    %v6586 = vld [vmem:[%s6413 + $0x560] sm:$0xff]
    %v6587 = vld [vmem:[%s6413 + $0x568] sm:$0xff]
    %v6588 = vld [vmem:[%s6413 + $0x570] sm:$0xff]
    %v6589 = vld [vmem:[%s6413 + $0x578] sm:$0xff]
    %v6590 = vld [vmem:[%s6413 + $0x580] sm:$0xff]
    %v6591 = vld [vmem:[%s6413 + $0x588] sm:$0xff]
    %v6592 = vld [vmem:[%s6413 + $0x590] sm:$0xff]
    %v6593 = vld [vmem:[%s6413 + $0x598] sm:$0xff]
    %v6594 = vld [vmem:[%s6413 + $0x5a0] sm:$0xff]
    %v6595 = vld [vmem:[%s6413 + $0x5a8] sm:$0xff]
    %v6596 = vld [vmem:[%s6413 + $0x5b0] sm:$0xff]
    %v6597 = vld [vmem:[%s6413 + $0x5b8] sm:$0xff]
    %v6598 = vld [vmem:[%s6413 + $0x5c0] sm:$0xff]
    %v6599 = vld [vmem:[%s6413 + $0x5c8] sm:$0xff]
    %v6600 = vld [vmem:[%s6413 + $0x5d0] sm:$0xff]
    %v6601 = vld [vmem:[%s6413 + $0x5d8] sm:$0xff]
    %v6602 = vld [vmem:[%s6413 + $0x5e0] sm:$0xff]
    %v6603 = vld [vmem:[%s6413 + $0x5e8] sm:$0xff]
    %v6604 = vld [vmem:[%s6413 + $0x5f0] sm:$0xff]
    %v6605 = vld [vmem:[%s6413 + $0x5f8] sm:$0xff]
    %s6606 = scalar_lea.vmem [#allocation10], 1024
    %v6607 = vld [vmem:[%s6606] sm:$0xf]
    %v6608 = vld [vmem:[%s6606 + $0x4] sm:$0xf]
    %v6609 = vld [vmem:[%s6606 + $0x8] sm:$0xf]
    %v6610 = vld [vmem:[%s6606 + $0xc] sm:$0xf]
    %v6611 = vld [vmem:[%s6606 + $0x10] sm:$0xf]
    %v6612 = vld [vmem:[%s6606 + $0x14] sm:$0xf]
    %v6613 = vld [vmem:[%s6606 + $0x18] sm:$0xf]
    %v6614 = vld [vmem:[%s6606 + $0x1c] sm:$0xf]
    %v6615 = vld [vmem:[%s6606 + $0x20] sm:$0xf]
    %v6616 = vld [vmem:[%s6606 + $0x24] sm:$0xf]
    %v6617 = vld [vmem:[%s6606 + $0x28] sm:$0xf]
    %v6618 = vld [vmem:[%s6606 + $0x2c] sm:$0xf]
    %v6619 = vld [vmem:[%s6606 + $0x30] sm:$0xf]
    %v6620 = vld [vmem:[%s6606 + $0x34] sm:$0xf]
    %v6621 = vld [vmem:[%s6606 + $0x38] sm:$0xf]
    %v6622 = vld [vmem:[%s6606 + $0x3c] sm:$0xf]
    %v6623 = vld [vmem:[%s6606 + $0x40] sm:$0xf]
    %v6624 = vld [vmem:[%s6606 + $0x44] sm:$0xf]
    %v6625 = vld [vmem:[%s6606 + $0x48] sm:$0xf]
    %v6626 = vld [vmem:[%s6606 + $0x4c] sm:$0xf]
    %v6627 = vld [vmem:[%s6606 + $0x50] sm:$0xf]
    %v6628 = vld [vmem:[%s6606 + $0x54] sm:$0xf]
    %v6629 = vld [vmem:[%s6606 + $0x58] sm:$0xf]
    %v6630 = vld [vmem:[%s6606 + $0x5c] sm:$0xf]
    %v6631 = vld [vmem:[%s6606 + $0x60] sm:$0xf]
    %v6632 = vld [vmem:[%s6606 + $0x64] sm:$0xf]
    %v6633 = vld [vmem:[%s6606 + $0x68] sm:$0xf]
    %v6634 = vld [vmem:[%s6606 + $0x6c] sm:$0xf]
    %v6635 = vld [vmem:[%s6606 + $0x70] sm:$0xf]
    %v6636 = vld [vmem:[%s6606 + $0x74] sm:$0xf]
    %v6637 = vld [vmem:[%s6606 + $0x78] sm:$0xf]
    %v6638 = vld [vmem:[%s6606 + $0x7c] sm:$0xf]
    %v6639 = vld [vmem:[%s6606 + $0x80] sm:$0xf]
    %v6640 = vld [vmem:[%s6606 + $0x84] sm:$0xf]
    %v6641 = vld [vmem:[%s6606 + $0x88] sm:$0xf]
    %v6642 = vld [vmem:[%s6606 + $0x8c] sm:$0xf]
    %v6643 = vld [vmem:[%s6606 + $0x90] sm:$0xf]
    %v6644 = vld [vmem:[%s6606 + $0x94] sm:$0xf]
    %v6645 = vld [vmem:[%s6606 + $0x98] sm:$0xf]
    %v6646 = vld [vmem:[%s6606 + $0x9c] sm:$0xf]
    %v6647 = vld [vmem:[%s6606 + $0xa0] sm:$0xf]
    %v6648 = vld [vmem:[%s6606 + $0xa4] sm:$0xf]
    %v6649 = vld [vmem:[%s6606 + $0xa8] sm:$0xf]
    %v6650 = vld [vmem:[%s6606 + $0xac] sm:$0xf]
    %v6651 = vld [vmem:[%s6606 + $0xb0] sm:$0xf]
    %v6652 = vld [vmem:[%s6606 + $0xb4] sm:$0xf]
    %v6653 = vld [vmem:[%s6606 + $0xb8] sm:$0xf]
    %v6654 = vld [vmem:[%s6606 + $0xbc] sm:$0xf]
    %v6655 = vld [vmem:[%s6606 + $0xc0] sm:$0xf]
    %v6656 = vld [vmem:[%s6606 + $0xc4] sm:$0xf]
    %v6657 = vld [vmem:[%s6606 + $0xc8] sm:$0xf]
    %v6658 = vld [vmem:[%s6606 + $0xcc] sm:$0xf]
    %v6659 = vld [vmem:[%s6606 + $0xd0] sm:$0xf]
    %v6660 = vld [vmem:[%s6606 + $0xd4] sm:$0xf]
    %v6661 = vld [vmem:[%s6606 + $0xd8] sm:$0xf]
    %v6662 = vld [vmem:[%s6606 + $0xdc] sm:$0xf]
    %v6663 = vld [vmem:[%s6606 + $0xe0] sm:$0xf]
    %v6664 = vld [vmem:[%s6606 + $0xe4] sm:$0xf]
    %v6665 = vld [vmem:[%s6606 + $0xe8] sm:$0xf]
    %v6666 = vld [vmem:[%s6606 + $0xec] sm:$0xf]
    %v6667 = vld [vmem:[%s6606 + $0xf0] sm:$0xf]
    %v6668 = vld [vmem:[%s6606 + $0xf4] sm:$0xf]
    %v6669 = vld [vmem:[%s6606 + $0xf8] sm:$0xf]
    %v6670 = vld [vmem:[%s6606 + $0xfc] sm:$0xf]
    %v6671 = vld [vmem:[%s6606 + $0x100] sm:$0xf]
    %v6672 = vld [vmem:[%s6606 + $0x104] sm:$0xf]
    %v6673 = vld [vmem:[%s6606 + $0x108] sm:$0xf]
    %v6674 = vld [vmem:[%s6606 + $0x10c] sm:$0xf]
    %v6675 = vld [vmem:[%s6606 + $0x110] sm:$0xf]
    %v6676 = vld [vmem:[%s6606 + $0x114] sm:$0xf]
    %v6677 = vld [vmem:[%s6606 + $0x118] sm:$0xf]
    %v6678 = vld [vmem:[%s6606 + $0x11c] sm:$0xf]
    %v6679 = vld [vmem:[%s6606 + $0x120] sm:$0xf]
    %v6680 = vld [vmem:[%s6606 + $0x124] sm:$0xf]
    %v6681 = vld [vmem:[%s6606 + $0x128] sm:$0xf]
    %v6682 = vld [vmem:[%s6606 + $0x12c] sm:$0xf]
    %v6683 = vld [vmem:[%s6606 + $0x130] sm:$0xf]
    %v6684 = vld [vmem:[%s6606 + $0x134] sm:$0xf]
    %v6685 = vld [vmem:[%s6606 + $0x138] sm:$0xf]
    %v6686 = vld [vmem:[%s6606 + $0x13c] sm:$0xf]
    %v6687 = vld [vmem:[%s6606 + $0x140] sm:$0xf]
    %v6688 = vld [vmem:[%s6606 + $0x144] sm:$0xf]
    %v6689 = vld [vmem:[%s6606 + $0x148] sm:$0xf]
    %v6690 = vld [vmem:[%s6606 + $0x14c] sm:$0xf]
    %v6691 = vld [vmem:[%s6606 + $0x150] sm:$0xf]
    %v6692 = vld [vmem:[%s6606 + $0x154] sm:$0xf]
    %v6693 = vld [vmem:[%s6606 + $0x158] sm:$0xf]
    %v6694 = vld [vmem:[%s6606 + $0x15c] sm:$0xf]
    %v6695 = vld [vmem:[%s6606 + $0x160] sm:$0xf]
    %v6696 = vld [vmem:[%s6606 + $0x164] sm:$0xf]
    %v6697 = vld [vmem:[%s6606 + $0x168] sm:$0xf]
    %v6698 = vld [vmem:[%s6606 + $0x16c] sm:$0xf]
    %v6699 = vld [vmem:[%s6606 + $0x170] sm:$0xf]
    %v6700 = vld [vmem:[%s6606 + $0x174] sm:$0xf]
    %v6701 = vld [vmem:[%s6606 + $0x178] sm:$0xf]
    %v6702 = vld [vmem:[%s6606 + $0x17c] sm:$0xf]
    %v6703 = vld [vmem:[%s6606 + $0x180] sm:$0xf]
    %v6704 = vld [vmem:[%s6606 + $0x184] sm:$0xf]
    %v6705 = vld [vmem:[%s6606 + $0x188] sm:$0xf]
    %v6706 = vld [vmem:[%s6606 + $0x18c] sm:$0xf]
    %v6707 = vld [vmem:[%s6606 + $0x190] sm:$0xf]
    %v6708 = vld [vmem:[%s6606 + $0x194] sm:$0xf]
    %v6709 = vld [vmem:[%s6606 + $0x198] sm:$0xf]
    %v6710 = vld [vmem:[%s6606 + $0x19c] sm:$0xf]
    %v6711 = vld [vmem:[%s6606 + $0x1a0] sm:$0xf]
    %v6712 = vld [vmem:[%s6606 + $0x1a4] sm:$0xf]
    %v6713 = vld [vmem:[%s6606 + $0x1a8] sm:$0xf]
    %v6714 = vld [vmem:[%s6606 + $0x1ac] sm:$0xf]
    %v6715 = vld [vmem:[%s6606 + $0x1b0] sm:$0xf]
    %v6716 = vld [vmem:[%s6606 + $0x1b4] sm:$0xf]
    %v6717 = vld [vmem:[%s6606 + $0x1b8] sm:$0xf]
    %v6718 = vld [vmem:[%s6606 + $0x1bc] sm:$0xf]
    %v6719 = vld [vmem:[%s6606 + $0x1c0] sm:$0xf]
    %v6720 = vld [vmem:[%s6606 + $0x1c4] sm:$0xf]
    %v6721 = vld [vmem:[%s6606 + $0x1c8] sm:$0xf]
    %v6722 = vld [vmem:[%s6606 + $0x1cc] sm:$0xf]
    %v6723 = vld [vmem:[%s6606 + $0x1d0] sm:$0xf]
    %v6724 = vld [vmem:[%s6606 + $0x1d4] sm:$0xf]
    %v6725 = vld [vmem:[%s6606 + $0x1d8] sm:$0xf]
    %v6726 = vld [vmem:[%s6606 + $0x1dc] sm:$0xf]
    %v6727 = vld [vmem:[%s6606 + $0x1e0] sm:$0xf]
    %v6728 = vld [vmem:[%s6606 + $0x1e4] sm:$0xf]
    %v6729 = vld [vmem:[%s6606 + $0x1e8] sm:$0xf]
    %v6730 = vld [vmem:[%s6606 + $0x1ec] sm:$0xf]
    %v6731 = vld [vmem:[%s6606 + $0x1f0] sm:$0xf]
    %v6732 = vld [vmem:[%s6606 + $0x1f4] sm:$0xf]
    %v6733 = vld [vmem:[%s6606 + $0x1f8] sm:$0xf]
    %v6734 = vld [vmem:[%s6606 + $0x1fc] sm:$0xf]
    %6735 = vadd.xlane.f32.xlu0 %v6408
    %v6736 = vpop.xlane.xlu0 %6735
    %6737 = vadd.xlane.f32.xlu0 %v6410
    %v6738 = vpop.xlane.xlu0 %6737
    %v6739 = vmul.f32 %v6736, 0.0625
    %v6740 = vmul.f32 %v6738, 0.0625
    %v6741 = vmul.f32 %v6408, %v6408
    %v6742 = vmul.f32 %v6410, %v6410
    %6743 = vadd.xlane.f32.xlu0 %v6741
    %v6744 = vpop.xlane.xlu0 %6743
    %6745 = vadd.xlane.f32.xlu0 %v6742
    %v6746 = vpop.xlane.xlu0 %6745
    %v6747 = vmul.f32 %v6744, 0.0625
    %v6748 = vmul.f32 %v6746, 0.0625
    %v6749 = vmul.f32 %v6739, %v6739
    %v6750 = vmul.f32 %v6740, %v6740
    %v6751 = vsub.f32 %v6747, %v6749
    %v6752 = vsub.f32 %v6748, %v6750
    %v6753 = vmax.f32 %v6751, 0.0
    %v6754 = vmax.f32 %v6752, 0.0
    %v6755 = vsub.f32 %v6408, %v6739
    %v6756 = vsub.f32 %v6410, %v6740
    %v6757 = vadd.f32 %v6753, 1e-05
    %v6758 = vadd.f32 %v6754, 1e-05
    %v6759 = vrsqrt.pop %v6757
    %v6760 = vmul.f32 %v6759, %v6757
    %v6761 = vmul.f32 %v6760, %v6759
    %v6762 = vmul.f32 0.5, %v6761
    %v6763 = vsub.f32 1.5, %v6762
    %v6764 = vmul.f32 %v6759, %v6763
    %vm6765 = vweird.f32 %v6757
    %vm6766 = vweird.f32 %v6759
    %vm6767 = vmor %vm6765, %vm6766
    %v6768 = vsel %vm6767, %v6759, %v6764
    %v6769 = vrsqrt.pop %v6758
    %v6770 = vmul.f32 %v6769, %v6758
    %v6771 = vmul.f32 %v6770, %v6769
    %v6772 = vmul.f32 0.5, %v6771
    %v6773 = vsub.f32 1.5, %v6772
    %v6774 = vmul.f32 %v6769, %v6773
    %vm6775 = vweird.f32 %v6758
    %vm6776 = vweird.f32 %v6769
    %vm6777 = vmor %vm6775, %vm6776
    %v6778 = vsel %vm6777, %v6769, %v6774
    %v6779 = vmul.f32 %v6755, %v6768
    %v6780 = vmul.f32 %v6756, %v6778
    %v6781 = vadd.f32 %v6412, 1.0
    %v6782 = vperm.slane %v6781, 0
    %v6783 = vmul.f32 %v6779, %v6782
    %v6784 = vmul.f32 %v6780, %v6782
    %v6785 = vpack.c.bf16 %v6784, %v6783
    %v6978 = vunpack.c.l.b16 %v6414
    %v6979 = vunpack.c.h.b16 %v6414
    %v6980 = vunpack.c.l.b16 %v6415
    %v6981 = vunpack.c.h.b16 %v6415
    %v6982 = vunpack.c.l.b16 %v6416
    %v6983 = vunpack.c.h.b16 %v6416
    %v6984 = vunpack.c.l.b16 %v6417
    %v6985 = vunpack.c.h.b16 %v6417
    %v6986 = vunpack.c.l.b16 %v6418
    %v6987 = vunpack.c.h.b16 %v6418
    %v6988 = vunpack.c.l.b16 %v6419
    %v6989 = vunpack.c.h.b16 %v6419
    %v6990 = vunpack.c.l.b16 %v6420
    %v6991 = vunpack.c.h.b16 %v6420
    %v6992 = vunpack.c.l.b16 %v6421
    %v6993 = vunpack.c.h.b16 %v6421
    %v6994 = vunpack.c.l.b16 %v6422
    %v6995 = vunpack.c.h.b16 %v6422
    %v6996 = vunpack.c.l.b16 %v6423
    %v6997 = vunpack.c.h.b16 %v6423
    %v6998 = vunpack.c.l.b16 %v6424
    %v6999 = vunpack.c.h.b16 %v6424
    %v7000 = vunpack.c.l.b16 %v6425
    %v7001 = vunpack.c.h.b16 %v6425
    %v7002 = vunpack.c.l.b16 %v6426
    %v7003 = vunpack.c.h.b16 %v6426
    %v7004 = vunpack.c.l.b16 %v6427
    %v7005 = vunpack.c.h.b16 %v6427
    %v7006 = vunpack.c.l.b16 %v6428
    %v7007 = vunpack.c.h.b16 %v6428
    %v7008 = vunpack.c.l.b16 %v6429
    %v7009 = vunpack.c.h.b16 %v6429
    %v7010 = vunpack.c.l.b16 %v6430
    %v7011 = vunpack.c.h.b16 %v6430
    %v7012 = vunpack.c.l.b16 %v6431
    %v7013 = vunpack.c.h.b16 %v6431
    %v7014 = vunpack.c.l.b16 %v6432
    %v7015 = vunpack.c.h.b16 %v6432
    %v7016 = vunpack.c.l.b16 %v6433
    %v7017 = vunpack.c.h.b16 %v6433
    %v7018 = vunpack.c.l.b16 %v6434
    %v7019 = vunpack.c.h.b16 %v6434
    %v7020 = vunpack.c.l.b16 %v6435
    %v7021 = vunpack.c.h.b16 %v6435
    %v7022 = vunpack.c.l.b16 %v6436
    %v7023 = vunpack.c.h.b16 %v6436
    %v7024 = vunpack.c.l.b16 %v6437
    %v7025 = vunpack.c.h.b16 %v6437
    %v7026 = vunpack.c.l.b16 %v6438
    %v7027 = vunpack.c.h.b16 %v6438
    %v7028 = vunpack.c.l.b16 %v6439
    %v7029 = vunpack.c.h.b16 %v6439
    %v7030 = vunpack.c.l.b16 %v6440
    %v7031 = vunpack.c.h.b16 %v6440
    %v7032 = vunpack.c.l.b16 %v6441
    %v7033 = vunpack.c.h.b16 %v6441
    %v7034 = vunpack.c.l.b16 %v6442
    %v7035 = vunpack.c.h.b16 %v6442
    %v7036 = vunpack.c.l.b16 %v6443
    %v7037 = vunpack.c.h.b16 %v6443
    %v7038 = vunpack.c.l.b16 %v6444
    %v7039 = vunpack.c.h.b16 %v6444
    %v7040 = vunpack.c.l.b16 %v6445
    %v7041 = vunpack.c.h.b16 %v6445
    %v7042 = vunpack.c.l.b16 %v6446
    %v7043 = vunpack.c.h.b16 %v6446
    %v7044 = vunpack.c.l.b16 %v6447
    %v7045 = vunpack.c.h.b16 %v6447
    %v7046 = vunpack.c.l.b16 %v6448
    %v7047 = vunpack.c.h.b16 %v6448
    %v7048 = vunpack.c.l.b16 %v6449
    %v7049 = vunpack.c.h.b16 %v6449
    %v7050 = vunpack.c.l.b16 %v6450
    %v7051 = vunpack.c.h.b16 %v6450
    %v7052 = vunpack.c.l.b16 %v6451
    %v7053 = vunpack.c.h.b16 %v6451
    %v7054 = vunpack.c.l.b16 %v6452
    %v7055 = vunpack.c.h.b16 %v6452
    %v7056 = vunpack.c.l.b16 %v6453
    %v7057 = vunpack.c.h.b16 %v6453
    %v7058 = vunpack.c.l.b16 %v6454
    %v7059 = vunpack.c.h.b16 %v6454
    %v7060 = vunpack.c.l.b16 %v6455
    %v7061 = vunpack.c.h.b16 %v6455
    %v7062 = vunpack.c.l.b16 %v6456
    %v7063 = vunpack.c.h.b16 %v6456
    %v7064 = vunpack.c.l.b16 %v6457
    %v7065 = vunpack.c.h.b16 %v6457
    %v7066 = vunpack.c.l.b16 %v6458
    %v7067 = vunpack.c.h.b16 %v6458
    %v7068 = vunpack.c.l.b16 %v6459
    %v7069 = vunpack.c.h.b16 %v6459
    %v7070 = vunpack.c.l.b16 %v6460
    %v7071 = vunpack.c.h.b16 %v6460
    %v7072 = vunpack.c.l.b16 %v6461
    %v7073 = vunpack.c.h.b16 %v6461
    %v7074 = vunpack.c.l.b16 %v6462
    %v7075 = vunpack.c.h.b16 %v6462
    %v7076 = vunpack.c.l.b16 %v6463
    %v7077 = vunpack.c.h.b16 %v6463
    %v7078 = vunpack.c.l.b16 %v6464
    %v7079 = vunpack.c.h.b16 %v6464
    %v7080 = vunpack.c.l.b16 %v6465
    %v7081 = vunpack.c.h.b16 %v6465
    %v7082 = vunpack.c.l.b16 %v6466
    %v7083 = vunpack.c.h.b16 %v6466
    %v7084 = vunpack.c.l.b16 %v6467
    %v7085 = vunpack.c.h.b16 %v6467
    %v7086 = vunpack.c.l.b16 %v6468
    %v7087 = vunpack.c.h.b16 %v6468
    %v7088 = vunpack.c.l.b16 %v6469
    %v7089 = vunpack.c.h.b16 %v6469
    %v7090 = vunpack.c.l.b16 %v6470
    %v7091 = vunpack.c.h.b16 %v6470
    %v7092 = vunpack.c.l.b16 %v6471
    %v7093 = vunpack.c.h.b16 %v6471
    %v7094 = vunpack.c.l.b16 %v6472
    %v7095 = vunpack.c.h.b16 %v6472
    %v7096 = vunpack.c.l.b16 %v6473
    %v7097 = vunpack.c.h.b16 %v6473
    %v7098 = vunpack.c.l.b16 %v6474
    %v7099 = vunpack.c.h.b16 %v6474
    %v7100 = vunpack.c.l.b16 %v6475
    %v7101 = vunpack.c.h.b16 %v6475
    %v7102 = vunpack.c.l.b16 %v6476
    %v7103 = vunpack.c.h.b16 %v6476
    %v7104 = vunpack.c.l.b16 %v6477
    %v7105 = vunpack.c.h.b16 %v6477
    %v7106 = vunpack.c.l.b16 %v6478
    %v7107 = vunpack.c.h.b16 %v6478
    %v7108 = vunpack.c.l.b16 %v6479
    %v7109 = vunpack.c.h.b16 %v6479
    %v7110 = vunpack.c.l.b16 %v6480
    %v7111 = vunpack.c.h.b16 %v6480
    %v7112 = vunpack.c.l.b16 %v6481
    %v7113 = vunpack.c.h.b16 %v6481
    %v7114 = vunpack.c.l.b16 %v6482
    %v7115 = vunpack.c.h.b16 %v6482
    %v7116 = vunpack.c.l.b16 %v6483
    %v7117 = vunpack.c.h.b16 %v6483
    %v7118 = vunpack.c.l.b16 %v6484
    %v7119 = vunpack.c.h.b16 %v6484
    %v7120 = vunpack.c.l.b16 %v6485
    %v7121 = vunpack.c.h.b16 %v6485
    %v7122 = vunpack.c.l.b16 %v6486
    %v7123 = vunpack.c.h.b16 %v6486
    %v7124 = vunpack.c.l.b16 %v6487
    %v7125 = vunpack.c.h.b16 %v6487
    %v7126 = vunpack.c.l.b16 %v6488
    %v7127 = vunpack.c.h.b16 %v6488
    %v7128 = vunpack.c.l.b16 %v6489
    %v7129 = vunpack.c.h.b16 %v6489
    %v7130 = vunpack.c.l.b16 %v6490
    %v7131 = vunpack.c.h.b16 %v6490
    %v7132 = vunpack.c.l.b16 %v6491
    %v7133 = vunpack.c.h.b16 %v6491
    %v7134 = vunpack.c.l.b16 %v6492
    %v7135 = vunpack.c.h.b16 %v6492
    %v7136 = vunpack.c.l.b16 %v6493
    %v7137 = vunpack.c.h.b16 %v6493
    %v7138 = vunpack.c.l.b16 %v6494
    %v7139 = vunpack.c.h.b16 %v6494
    %v7140 = vunpack.c.l.b16 %v6495
    %v7141 = vunpack.c.h.b16 %v6495
    %v7142 = vunpack.c.l.b16 %v6496
    %v7143 = vunpack.c.h.b16 %v6496
    %v7144 = vunpack.c.l.b16 %v6497
    %v7145 = vunpack.c.h.b16 %v6497
    %v7146 = vunpack.c.l.b16 %v6498
    %v7147 = vunpack.c.h.b16 %v6498
    %v7148 = vunpack.c.l.b16 %v6499
    %v7149 = vunpack.c.h.b16 %v6499
    %v7150 = vunpack.c.l.b16 %v6500
    %v7151 = vunpack.c.h.b16 %v6500
    %v7152 = vunpack.c.l.b16 %v6501
    %v7153 = vunpack.c.h.b16 %v6501
    %v7154 = vunpack.c.l.b16 %v6502
    %v7155 = vunpack.c.h.b16 %v6502
    %v7156 = vunpack.c.l.b16 %v6503
    %v7157 = vunpack.c.h.b16 %v6503
    %v7158 = vunpack.c.l.b16 %v6504
    %v7159 = vunpack.c.h.b16 %v6504
    %v7160 = vunpack.c.l.b16 %v6505
    %v7161 = vunpack.c.h.b16 %v6505
    %v7162 = vunpack.c.l.b16 %v6506
    %v7163 = vunpack.c.h.b16 %v6506
    %v7164 = vunpack.c.l.b16 %v6507
    %v7165 = vunpack.c.h.b16 %v6507
    %v7166 = vunpack.c.l.b16 %v6508
    %v7167 = vunpack.c.h.b16 %v6508
    %v7168 = vunpack.c.l.b16 %v6509
    %v7169 = vunpack.c.h.b16 %v6509
    %v7170 = vunpack.c.l.b16 %v6510
    %v7171 = vunpack.c.h.b16 %v6510
    %v7172 = vunpack.c.l.b16 %v6511
    %v7173 = vunpack.c.h.b16 %v6511
    %v7174 = vunpack.c.l.b16 %v6512
    %v7175 = vunpack.c.h.b16 %v6512
    %v7176 = vunpack.c.l.b16 %v6513
    %v7177 = vunpack.c.h.b16 %v6513
    %v7178 = vunpack.c.l.b16 %v6514
    %v7179 = vunpack.c.h.b16 %v6514
    %v7180 = vunpack.c.l.b16 %v6515
    %v7181 = vunpack.c.h.b16 %v6515
    %v7182 = vunpack.c.l.b16 %v6516
    %v7183 = vunpack.c.h.b16 %v6516
    %v7184 = vunpack.c.l.b16 %v6517
    %v7185 = vunpack.c.h.b16 %v6517
    %v7186 = vunpack.c.l.b16 %v6518
    %v7187 = vunpack.c.h.b16 %v6518
    %v7188 = vunpack.c.l.b16 %v6519
    %v7189 = vunpack.c.h.b16 %v6519
    %v7190 = vunpack.c.l.b16 %v6520
    %v7191 = vunpack.c.h.b16 %v6520
    %v7192 = vunpack.c.l.b16 %v6521
    %v7193 = vunpack.c.h.b16 %v6521
    %v7194 = vunpack.c.l.b16 %v6522
    %v7195 = vunpack.c.h.b16 %v6522
    %v7196 = vunpack.c.l.b16 %v6523
    %v7197 = vunpack.c.h.b16 %v6523
    %v7198 = vunpack.c.l.b16 %v6524
    %v7199 = vunpack.c.h.b16 %v6524
    %v7200 = vunpack.c.l.b16 %v6525
    %v7201 = vunpack.c.h.b16 %v6525
    %v7202 = vunpack.c.l.b16 %v6526
    %v7203 = vunpack.c.h.b16 %v6526
    %v7204 = vunpack.c.l.b16 %v6527
    %v7205 = vunpack.c.h.b16 %v6527
    %v7206 = vunpack.c.l.b16 %v6528
    %v7207 = vunpack.c.h.b16 %v6528
    %v7208 = vunpack.c.l.b16 %v6529
    %v7209 = vunpack.c.h.b16 %v6529
    %v7210 = vunpack.c.l.b16 %v6530
    %v7211 = vunpack.c.h.b16 %v6530
    %v7212 = vunpack.c.l.b16 %v6531
    %v7213 = vunpack.c.h.b16 %v6531
    %v7214 = vunpack.c.l.b16 %v6532
    %v7215 = vunpack.c.h.b16 %v6532
    %v7216 = vunpack.c.l.b16 %v6533
    %v7217 = vunpack.c.h.b16 %v6533
    %v7218 = vunpack.c.l.b16 %v6534
    %v7219 = vunpack.c.h.b16 %v6534
    %v7220 = vunpack.c.l.b16 %v6535
    %v7221 = vunpack.c.h.b16 %v6535
    %v7222 = vunpack.c.l.b16 %v6536
    %v7223 = vunpack.c.h.b16 %v6536
    %v7224 = vunpack.c.l.b16 %v6537
    %v7225 = vunpack.c.h.b16 %v6537
    %v7226 = vunpack.c.l.b16 %v6538
    %v7227 = vunpack.c.h.b16 %v6538
    %v7228 = vunpack.c.l.b16 %v6539
    %v7229 = vunpack.c.h.b16 %v6539
    %v7230 = vunpack.c.l.b16 %v6540
    %v7231 = vunpack.c.h.b16 %v6540
    %v7232 = vunpack.c.l.b16 %v6541
    %v7233 = vunpack.c.h.b16 %v6541
    %v7234 = vunpack.c.l.b16 %v6542
    %v7235 = vunpack.c.h.b16 %v6542
    %v7236 = vunpack.c.l.b16 %v6543
    %v7237 = vunpack.c.h.b16 %v6543
    %v7238 = vunpack.c.l.b16 %v6544
    %v7239 = vunpack.c.h.b16 %v6544
    %v7240 = vunpack.c.l.b16 %v6545
    %v7241 = vunpack.c.h.b16 %v6545
    %v7242 = vunpack.c.l.b16 %v6546
    %v7243 = vunpack.c.h.b16 %v6546
    %v7244 = vunpack.c.l.b16 %v6547
    %v7245 = vunpack.c.h.b16 %v6547
    %v7246 = vunpack.c.l.b16 %v6548
    %v7247 = vunpack.c.h.b16 %v6548
    %v7248 = vunpack.c.l.b16 %v6549
    %v7249 = vunpack.c.h.b16 %v6549
    %v7250 = vunpack.c.l.b16 %v6550
    %v7251 = vunpack.c.h.b16 %v6550
    %v7252 = vunpack.c.l.b16 %v6551
    %v7253 = vunpack.c.h.b16 %v6551
    %v7254 = vunpack.c.l.b16 %v6552
    %v7255 = vunpack.c.h.b16 %v6552
    %v7256 = vunpack.c.l.b16 %v6553
    %v7257 = vunpack.c.h.b16 %v6553
    %v7258 = vunpack.c.l.b16 %v6554
    %v7259 = vunpack.c.h.b16 %v6554
    %v7260 = vunpack.c.l.b16 %v6555
    %v7261 = vunpack.c.h.b16 %v6555
    %v7262 = vunpack.c.l.b16 %v6556
    %v7263 = vunpack.c.h.b16 %v6556
    %v7264 = vunpack.c.l.b16 %v6557
    %v7265 = vunpack.c.h.b16 %v6557
    %v7266 = vunpack.c.l.b16 %v6558
    %v7267 = vunpack.c.h.b16 %v6558
    %v7268 = vunpack.c.l.b16 %v6559
    %v7269 = vunpack.c.h.b16 %v6559
    %v7270 = vunpack.c.l.b16 %v6560
    %v7271 = vunpack.c.h.b16 %v6560
    %v7272 = vunpack.c.l.b16 %v6561
    %v7273 = vunpack.c.h.b16 %v6561
    %v7274 = vunpack.c.l.b16 %v6562
    %v7275 = vunpack.c.h.b16 %v6562
    %v7276 = vunpack.c.l.b16 %v6563
    %v7277 = vunpack.c.h.b16 %v6563
    %v7278 = vunpack.c.l.b16 %v6564
    %v7279 = vunpack.c.h.b16 %v6564
    %v7280 = vunpack.c.l.b16 %v6565
    %v7281 = vunpack.c.h.b16 %v6565
    %v7282 = vunpack.c.l.b16 %v6566
    %v7283 = vunpack.c.h.b16 %v6566
    %v7284 = vunpack.c.l.b16 %v6567
    %v7285 = vunpack.c.h.b16 %v6567
    %v7286 = vunpack.c.l.b16 %v6568
    %v7287 = vunpack.c.h.b16 %v6568
    %v7288 = vunpack.c.l.b16 %v6569
    %v7289 = vunpack.c.h.b16 %v6569
    %v7290 = vunpack.c.l.b16 %v6570
    %v7291 = vunpack.c.h.b16 %v6570
    %v7292 = vunpack.c.l.b16 %v6571
    %v7293 = vunpack.c.h.b16 %v6571
    %v7294 = vunpack.c.l.b16 %v6572
    %v7295 = vunpack.c.h.b16 %v6572
    %v7296 = vunpack.c.l.b16 %v6573
    %v7297 = vunpack.c.h.b16 %v6573
    %v7298 = vunpack.c.l.b16 %v6574
    %v7299 = vunpack.c.h.b16 %v6574
    %v7300 = vunpack.c.l.b16 %v6575
    %v7301 = vunpack.c.h.b16 %v6575
    %v7302 = vunpack.c.l.b16 %v6576
    %v7303 = vunpack.c.h.b16 %v6576
    %v7304 = vunpack.c.l.b16 %v6577
    %v7305 = vunpack.c.h.b16 %v6577
    %v7306 = vunpack.c.l.b16 %v6578
    %v7307 = vunpack.c.h.b16 %v6578
    %v7308 = vunpack.c.l.b16 %v6579
    %v7309 = vunpack.c.h.b16 %v6579
    %v7310 = vunpack.c.l.b16 %v6580
    %v7311 = vunpack.c.h.b16 %v6580
    %v7312 = vunpack.c.l.b16 %v6581
    %v7313 = vunpack.c.h.b16 %v6581
    %v7314 = vunpack.c.l.b16 %v6582
    %v7315 = vunpack.c.h.b16 %v6582
    %v7316 = vunpack.c.l.b16 %v6583
    %v7317 = vunpack.c.h.b16 %v6583
    %v7318 = vunpack.c.l.b16 %v6584
    %v7319 = vunpack.c.h.b16 %v6584
    %v7320 = vunpack.c.l.b16 %v6585
    %v7321 = vunpack.c.h.b16 %v6585
    %v7322 = vunpack.c.l.b16 %v6586
    %v7323 = vunpack.c.h.b16 %v6586
    %v7324 = vunpack.c.l.b16 %v6587
    %v7325 = vunpack.c.h.b16 %v6587
    %v7326 = vunpack.c.l.b16 %v6588
    %v7327 = vunpack.c.h.b16 %v6588
    %v7328 = vunpack.c.l.b16 %v6589
    %v7329 = vunpack.c.h.b16 %v6589
    %v7330 = vunpack.c.l.b16 %v6590
    %v7331 = vunpack.c.h.b16 %v6590
    %v7332 = vunpack.c.l.b16 %v6591
    %v7333 = vunpack.c.h.b16 %v6591
    %v7334 = vunpack.c.l.b16 %v6592
    %v7335 = vunpack.c.h.b16 %v6592
    %v7336 = vunpack.c.l.b16 %v6593
    %v7337 = vunpack.c.h.b16 %v6593
    %v7338 = vunpack.c.l.b16 %v6594
    %v7339 = vunpack.c.h.b16 %v6594
    %v7340 = vunpack.c.l.b16 %v6595
    %v7341 = vunpack.c.h.b16 %v6595
    %v7342 = vunpack.c.l.b16 %v6596
    %v7343 = vunpack.c.h.b16 %v6596
    %v7344 = vunpack.c.l.b16 %v6597
    %v7345 = vunpack.c.h.b16 %v6597
    %v7346 = vunpack.c.l.b16 %v6598
    %v7347 = vunpack.c.h.b16 %v6598
    %v7348 = vunpack.c.l.b16 %v6599
    %v7349 = vunpack.c.h.b16 %v6599
    %v7350 = vunpack.c.l.b16 %v6600
    %v7351 = vunpack.c.h.b16 %v6600
    %v7352 = vunpack.c.l.b16 %v6601
    %v7353 = vunpack.c.h.b16 %v6601
    %v7354 = vunpack.c.l.b16 %v6602
    %v7355 = vunpack.c.h.b16 %v6602
    %v7356 = vunpack.c.l.b16 %v6603
    %v7357 = vunpack.c.h.b16 %v6603
    %v7358 = vunpack.c.l.b16 %v6604
    %v7359 = vunpack.c.h.b16 %v6604
    %v7360 = vunpack.c.l.b16 %v6605
    %v7361 = vunpack.c.h.b16 %v6605
    %v7362 = vpack.c.b16 %v7002, %v6978
    %v7363 = vpack.c.b16 %v7003, %v6979
    %v7364 = vpack.c.b16 %v7004, %v6980
    %v7365 = vpack.c.b16 %v7005, %v6981
    %v7366 = vpack.c.b16 %v7006, %v6982
    %v7367 = vpack.c.b16 %v7007, %v6983
    %v7368 = vpack.c.b16 %v7008, %v6984
    %v7369 = vpack.c.b16 %v7009, %v6985
    %v7370 = vpack.c.b16 %v7010, %v6986
    %v7371 = vpack.c.b16 %v7011, %v6987
    %v7372 = vpack.c.b16 %v7012, %v6988
    %v7373 = vpack.c.b16 %v7013, %v6989
    %v7374 = vpack.c.b16 %v7014, %v6990
    %v7375 = vpack.c.b16 %v7015, %v6991
    %v7376 = vpack.c.b16 %v7016, %v6992
    %v7377 = vpack.c.b16 %v7017, %v6993
    %v7378 = vpack.c.b16 %v7018, %v6994
    %v7379 = vpack.c.b16 %v7019, %v6995
    %v7380 = vpack.c.b16 %v7020, %v6996
    %v7381 = vpack.c.b16 %v7021, %v6997
    %v7382 = vpack.c.b16 %v7022, %v6998
    %v7383 = vpack.c.b16 %v7023, %v6999
    %v7384 = vpack.c.b16 %v7024, %v7000
    %v7385 = vpack.c.b16 %v7025, %v7001
    %v7386 = vpack.c.b16 %v7050, %v7026
    %v7387 = vpack.c.b16 %v7051, %v7027
    %v7388 = vpack.c.b16 %v7052, %v7028
    %v7389 = vpack.c.b16 %v7053, %v7029
    %v7390 = vpack.c.b16 %v7054, %v7030
    %v7391 = vpack.c.b16 %v7055, %v7031
    %v7392 = vpack.c.b16 %v7056, %v7032
    %v7393 = vpack.c.b16 %v7057, %v7033
    %v7394 = vpack.c.b16 %v7058, %v7034
    %v7395 = vpack.c.b16 %v7059, %v7035
    %v7396 = vpack.c.b16 %v7060, %v7036
    %v7397 = vpack.c.b16 %v7061, %v7037
    %v7398 = vpack.c.b16 %v7062, %v7038
    %v7399 = vpack.c.b16 %v7063, %v7039
    %v7400 = vpack.c.b16 %v7064, %v7040
    %v7401 = vpack.c.b16 %v7065, %v7041
    %v7402 = vpack.c.b16 %v7066, %v7042
    %v7403 = vpack.c.b16 %v7067, %v7043
    %v7404 = vpack.c.b16 %v7068, %v7044
    %v7405 = vpack.c.b16 %v7069, %v7045
    %v7406 = vpack.c.b16 %v7070, %v7046
    %v7407 = vpack.c.b16 %v7071, %v7047
    %v7408 = vpack.c.b16 %v7072, %v7048
    %v7409 = vpack.c.b16 %v7073, %v7049
    %v7410 = vpack.c.b16 %v7098, %v7074
    %v7411 = vpack.c.b16 %v7099, %v7075
    %v7412 = vpack.c.b16 %v7100, %v7076
    %v7413 = vpack.c.b16 %v7101, %v7077
    %v7414 = vpack.c.b16 %v7102, %v7078
    %v7415 = vpack.c.b16 %v7103, %v7079
    %v7416 = vpack.c.b16 %v7104, %v7080
    %v7417 = vpack.c.b16 %v7105, %v7081
    %v7418 = vpack.c.b16 %v7106, %v7082
    %v7419 = vpack.c.b16 %v7107, %v7083
    %v7420 = vpack.c.b16 %v7108, %v7084
    %v7421 = vpack.c.b16 %v7109, %v7085
    %v7422 = vpack.c.b16 %v7110, %v7086
    %v7423 = vpack.c.b16 %v7111, %v7087
    %v7424 = vpack.c.b16 %v7112, %v7088
    %v7425 = vpack.c.b16 %v7113, %v7089
    %v7426 = vpack.c.b16 %v7114, %v7090
    %v7427 = vpack.c.b16 %v7115, %v7091
    %v7428 = vpack.c.b16 %v7116, %v7092
    %v7429 = vpack.c.b16 %v7117, %v7093
    %v7430 = vpack.c.b16 %v7118, %v7094
    %v7431 = vpack.c.b16 %v7119, %v7095
    %v7432 = vpack.c.b16 %v7120, %v7096
    %v7433 = vpack.c.b16 %v7121, %v7097
    %v7434 = vpack.c.b16 %v7146, %v7122
    %v7435 = vpack.c.b16 %v7147, %v7123
    %v7436 = vpack.c.b16 %v7148, %v7124
    %v7437 = vpack.c.b16 %v7149, %v7125
    %v7438 = vpack.c.b16 %v7150, %v7126
    %v7439 = vpack.c.b16 %v7151, %v7127
    %v7440 = vpack.c.b16 %v7152, %v7128
    %v7441 = vpack.c.b16 %v7153, %v7129
    %v7442 = vpack.c.b16 %v7154, %v7130
    %v7443 = vpack.c.b16 %v7155, %v7131
    %v7444 = vpack.c.b16 %v7156, %v7132
    %v7445 = vpack.c.b16 %v7157, %v7133
    %v7446 = vpack.c.b16 %v7158, %v7134
    %v7447 = vpack.c.b16 %v7159, %v7135
    %v7448 = vpack.c.b16 %v7160, %v7136
    %v7449 = vpack.c.b16 %v7161, %v7137
    %v7450 = vpack.c.b16 %v7162, %v7138
    %v7451 = vpack.c.b16 %v7163, %v7139
    %v7452 = vpack.c.b16 %v7164, %v7140
    %v7453 = vpack.c.b16 %v7165, %v7141
    %v7454 = vpack.c.b16 %v7166, %v7142
    %v7455 = vpack.c.b16 %v7167, %v7143
    %v7456 = vpack.c.b16 %v7168, %v7144
    %v7457 = vpack.c.b16 %v7169, %v7145
    %v7458 = vpack.c.b16 %v7194, %v7170
    %v7459 = vpack.c.b16 %v7195, %v7171
    %v7460 = vpack.c.b16 %v7196, %v7172
    %v7461 = vpack.c.b16 %v7197, %v7173
    %v7462 = vpack.c.b16 %v7198, %v7174
    %v7463 = vpack.c.b16 %v7199, %v7175
    %v7464 = vpack.c.b16 %v7200, %v7176
    %v7465 = vpack.c.b16 %v7201, %v7177
    %v7466 = vpack.c.b16 %v7202, %v7178
    %v7467 = vpack.c.b16 %v7203, %v7179
    %v7468 = vpack.c.b16 %v7204, %v7180
    %v7469 = vpack.c.b16 %v7205, %v7181
    %v7470 = vpack.c.b16 %v7206, %v7182
    %v7471 = vpack.c.b16 %v7207, %v7183
    %v7472 = vpack.c.b16 %v7208, %v7184
    %v7473 = vpack.c.b16 %v7209, %v7185
    %v7474 = vpack.c.b16 %v7210, %v7186
    %v7475 = vpack.c.b16 %v7211, %v7187
    %v7476 = vpack.c.b16 %v7212, %v7188
    %v7477 = vpack.c.b16 %v7213, %v7189
    %v7478 = vpack.c.b16 %v7214, %v7190
    %v7479 = vpack.c.b16 %v7215, %v7191
    %v7480 = vpack.c.b16 %v7216, %v7192
    %v7481 = vpack.c.b16 %v7217, %v7193
    %v7482 = vpack.c.b16 %v7242, %v7218
    %v7483 = vpack.c.b16 %v7243, %v7219
    %v7484 = vpack.c.b16 %v7244, %v7220
    %v7485 = vpack.c.b16 %v7245, %v7221
    %v7486 = vpack.c.b16 %v7246, %v7222
    %v7487 = vpack.c.b16 %v7247, %v7223
    %v7488 = vpack.c.b16 %v7248, %v7224
    %v7489 = vpack.c.b16 %v7249, %v7225
    %v7490 = vpack.c.b16 %v7250, %v7226
    %v7491 = vpack.c.b16 %v7251, %v7227
    %v7492 = vpack.c.b16 %v7252, %v7228
    %v7493 = vpack.c.b16 %v7253, %v7229
    %v7494 = vpack.c.b16 %v7254, %v7230
    %v7495 = vpack.c.b16 %v7255, %v7231
    %v7496 = vpack.c.b16 %v7256, %v7232
    %v7497 = vpack.c.b16 %v7257, %v7233
    %v7498 = vpack.c.b16 %v7258, %v7234
    %v7499 = vpack.c.b16 %v7259, %v7235
    %v7500 = vpack.c.b16 %v7260, %v7236
    %v7501 = vpack.c.b16 %v7261, %v7237
    %v7502 = vpack.c.b16 %v7262, %v7238
    %v7503 = vpack.c.b16 %v7263, %v7239
    %v7504 = vpack.c.b16 %v7264, %v7240
    %v7505 = vpack.c.b16 %v7265, %v7241
    %v7506 = vpack.c.b16 %v7290, %v7266
    %v7507 = vpack.c.b16 %v7291, %v7267
    %v7508 = vpack.c.b16 %v7292, %v7268
    %v7509 = vpack.c.b16 %v7293, %v7269
    %v7510 = vpack.c.b16 %v7294, %v7270
    %v7511 = vpack.c.b16 %v7295, %v7271
    %v7512 = vpack.c.b16 %v7296, %v7272
    %v7513 = vpack.c.b16 %v7297, %v7273
    %v7514 = vpack.c.b16 %v7298, %v7274
    %v7515 = vpack.c.b16 %v7299, %v7275
    %v7516 = vpack.c.b16 %v7300, %v7276
    %v7517 = vpack.c.b16 %v7301, %v7277
    %v7518 = vpack.c.b16 %v7302, %v7278
    %v7519 = vpack.c.b16 %v7303, %v7279
    %v7520 = vpack.c.b16 %v7304, %v7280
    %v7521 = vpack.c.b16 %v7305, %v7281
    %v7522 = vpack.c.b16 %v7306, %v7282
    %v7523 = vpack.c.b16 %v7307, %v7283
    %v7524 = vpack.c.b16 %v7308, %v7284
    %v7525 = vpack.c.b16 %v7309, %v7285
    %v7526 = vpack.c.b16 %v7310, %v7286
    %v7527 = vpack.c.b16 %v7311, %v7287
    %v7528 = vpack.c.b16 %v7312, %v7288
    %v7529 = vpack.c.b16 %v7313, %v7289
    %v7530 = vpack.c.b16 %v7338, %v7314
    %v7531 = vpack.c.b16 %v7339, %v7315
    %v7532 = vpack.c.b16 %v7340, %v7316
    %v7533 = vpack.c.b16 %v7341, %v7317
    %v7534 = vpack.c.b16 %v7342, %v7318
    %v7535 = vpack.c.b16 %v7343, %v7319
    %v7536 = vpack.c.b16 %v7344, %v7320
    %v7537 = vpack.c.b16 %v7345, %v7321
    %v7538 = vpack.c.b16 %v7346, %v7322
    %v7539 = vpack.c.b16 %v7347, %v7323
    %v7540 = vpack.c.b16 %v7348, %v7324
    %v7541 = vpack.c.b16 %v7349, %v7325
    %v7542 = vpack.c.b16 %v7350, %v7326
    %v7543 = vpack.c.b16 %v7351, %v7327
    %v7544 = vpack.c.b16 %v7352, %v7328
    %v7545 = vpack.c.b16 %v7353, %v7329
    %v7546 = vpack.c.b16 %v7354, %v7330
    %v7547 = vpack.c.b16 %v7355, %v7331
    %v7548 = vpack.c.b16 %v7356, %v7332
    %v7549 = vpack.c.b16 %v7357, %v7333
    %v7550 = vpack.c.b16 %v7358, %v7334
    %v7551 = vpack.c.b16 %v7359, %v7335
    %v7552 = vpack.c.b16 %v7360, %v7336
    %v7553 = vpack.c.b16 %v7361, %v7337
    %7746 = vmatpush.bf16.msra.mxu0 %v7530
    %7747 = vmatpush.bf16.msra.mxu0 %v7506
    %7748 = vmatpush.bf16.msra.mxu0 %v7482
    %7749 = vmatpush.bf16.msra.mxu0 %v7458
    %7750 = vmatpush.bf16.msra.mxu0 %v7434
    %7751 = vmatpush.bf16.msra.mxu0 %v7410
    %7752 = vmatpush.bf16.msra.mxu0 %v7386
    %7753 = vmatpush.bf16.msra.mxu0 %v7362
    %7754 = vmatmul.bf16.gmra.mxu0 %v6785
    %v7755 = vpop.f32.mrf.mxu0
    %v7756 = vadd.f32 0.0, %v7755
    %v7757 = vpop.f32.mrf.mxu0
    %v7758 = vadd.f32 0.0, %v7757
    %7759 = vdwg.mxu0
    %7760 = vmatpush.bf16.msra.mxu0 %v7531
    %7761 = vmatpush.bf16.msra.mxu0 %v7507
    %7762 = vmatpush.bf16.msra.mxu0 %v7483
    %7763 = vmatpush.bf16.msra.mxu0 %v7459
    %7764 = vmatpush.bf16.msra.mxu0 %v7435
    %7765 = vmatpush.bf16.msra.mxu0 %v7411
    %7766 = vmatpush.bf16.msra.mxu0 %v7387
    %7767 = vmatpush.bf16.msra.mxu0 %v7363
    %7768 = vmatmul.bf16.gmra.mxu0 %v6785
    %v7769 = vpop.f32.mrf.mxu0
    %v7770 = vadd.f32 0.0, %v7769
    %v7771 = vpop.f32.mrf.mxu0
    %v7772 = vadd.f32 0.0, %v7771
    %7773 = vdwg.mxu0
    %7774 = vmatpush.bf16.msra.mxu0 %v7532
    %7775 = vmatpush.bf16.msra.mxu0 %v7508
    %7776 = vmatpush.bf16.msra.mxu0 %v7484
    %7777 = vmatpush.bf16.msra.mxu0 %v7460
    %7778 = vmatpush.bf16.msra.mxu0 %v7436
    %7779 = vmatpush.bf16.msra.mxu0 %v7412
    %7780 = vmatpush.bf16.msra.mxu0 %v7388
    %7781 = vmatpush.bf16.msra.mxu0 %v7364
    %7782 = vmatmul.bf16.gmra.mxu0 %v6785
    %v7783 = vpop.f32.mrf.mxu0
    %v7784 = vadd.f32 0.0, %v7783
    %v7785 = vpop.f32.mrf.mxu0
    %v7786 = vadd.f32 0.0, %v7785
    %7787 = vdwg.mxu0
    %7788 = vmatpush.bf16.msra.mxu0 %v7533
    %7789 = vmatpush.bf16.msra.mxu0 %v7509
    %7790 = vmatpush.bf16.msra.mxu0 %v7485
    %7791 = vmatpush.bf16.msra.mxu0 %v7461
    %7792 = vmatpush.bf16.msra.mxu0 %v7437
    %7793 = vmatpush.bf16.msra.mxu0 %v7413
    %7794 = vmatpush.bf16.msra.mxu0 %v7389
    %7795 = vmatpush.bf16.msra.mxu0 %v7365
    %7796 = vmatmul.bf16.gmra.mxu0 %v6785
    %v7797 = vpop.f32.mrf.mxu0
    %v7798 = vadd.f32 0.0, %v7797
    %v7799 = vpop.f32.mrf.mxu0
    %v7800 = vadd.f32 0.0, %v7799
    %7801 = vdwg.mxu0
    %7802 = vmatpush.bf16.msra.mxu0 %v7534
    %7803 = vmatpush.bf16.msra.mxu0 %v7510
    %7804 = vmatpush.bf16.msra.mxu0 %v7486
    %7805 = vmatpush.bf16.msra.mxu0 %v7462
    %7806 = vmatpush.bf16.msra.mxu0 %v7438
    %7807 = vmatpush.bf16.msra.mxu0 %v7414
    %7808 = vmatpush.bf16.msra.mxu0 %v7390
    %7809 = vmatpush.bf16.msra.mxu0 %v7366
    %7810 = vmatmul.bf16.gmra.mxu0 %v6785
    %v7811 = vpop.f32.mrf.mxu0
    %v7812 = vadd.f32 0.0, %v7811
    %v7813 = vpop.f32.mrf.mxu0
    %v7814 = vadd.f32 0.0, %v7813
    %7815 = vdwg.mxu0
    %7816 = vmatpush.bf16.msra.mxu0 %v7535
    %7817 = vmatpush.bf16.msra.mxu0 %v7511
    %7818 = vmatpush.bf16.msra.mxu0 %v7487
    %7819 = vmatpush.bf16.msra.mxu0 %v7463
    %7820 = vmatpush.bf16.msra.mxu0 %v7439
    %7821 = vmatpush.bf16.msra.mxu0 %v7415
    %7822 = vmatpush.bf16.msra.mxu0 %v7391
    %7823 = vmatpush.bf16.msra.mxu0 %v7367
    %7824 = vmatmul.bf16.gmra.mxu0 %v6785
    %v7825 = vpop.f32.mrf.mxu0
    %v7826 = vadd.f32 0.0, %v7825
    %v7827 = vpop.f32.mrf.mxu0
    %v7828 = vadd.f32 0.0, %v7827
    %7829 = vdwg.mxu0
    %7830 = vmatpush.bf16.msra.mxu0 %v7536
    %7831 = vmatpush.bf16.msra.mxu0 %v7512
    %7832 = vmatpush.bf16.msra.mxu0 %v7488
    %7833 = vmatpush.bf16.msra.mxu0 %v7464
    %7834 = vmatpush.bf16.msra.mxu0 %v7440
    %7835 = vmatpush.bf16.msra.mxu0 %v7416
    %7836 = vmatpush.bf16.msra.mxu0 %v7392
    %7837 = vmatpush.bf16.msra.mxu0 %v7368
    %7838 = vmatmul.bf16.gmra.mxu0 %v6785
    %v7839 = vpop.f32.mrf.mxu0
    %v7840 = vadd.f32 0.0, %v7839
    %v7841 = vpop.f32.mrf.mxu0
    %v7842 = vadd.f32 0.0, %v7841
    %7843 = vdwg.mxu0
    %7844 = vmatpush.bf16.msra.mxu0 %v7537
    %7845 = vmatpush.bf16.msra.mxu0 %v7513
    %7846 = vmatpush.bf16.msra.mxu0 %v7489
    %7847 = vmatpush.bf16.msra.mxu0 %v7465
    %7848 = vmatpush.bf16.msra.mxu0 %v7441
    %7849 = vmatpush.bf16.msra.mxu0 %v7417
    %7850 = vmatpush.bf16.msra.mxu0 %v7393
    %7851 = vmatpush.bf16.msra.mxu0 %v7369
    %7852 = vmatmul.bf16.gmra.mxu0 %v6785
    %v7853 = vpop.f32.mrf.mxu0
    %v7854 = vadd.f32 0.0, %v7853
    %v7855 = vpop.f32.mrf.mxu0
    %v7856 = vadd.f32 0.0, %v7855
    %7857 = vdwg.mxu0
    %7858 = vmatpush.bf16.msra.mxu0 %v7538
    %7859 = vmatpush.bf16.msra.mxu0 %v7514
    %7860 = vmatpush.bf16.msra.mxu0 %v7490
    %7861 = vmatpush.bf16.msra.mxu0 %v7466
    %7862 = vmatpush.bf16.msra.mxu0 %v7442
    %7863 = vmatpush.bf16.msra.mxu0 %v7418
    %7864 = vmatpush.bf16.msra.mxu0 %v7394
    %7865 = vmatpush.bf16.msra.mxu0 %v7370
    %7866 = vmatmul.bf16.gmra.mxu0 %v6785
    %v7867 = vpop.f32.mrf.mxu0
    %v7868 = vadd.f32 0.0, %v7867
    %v7869 = vpop.f32.mrf.mxu0
    %v7870 = vadd.f32 0.0, %v7869
    %7871 = vdwg.mxu0
    %7872 = vmatpush.bf16.msra.mxu0 %v7539
    %7873 = vmatpush.bf16.msra.mxu0 %v7515
    %7874 = vmatpush.bf16.msra.mxu0 %v7491
    %7875 = vmatpush.bf16.msra.mxu0 %v7467
    %7876 = vmatpush.bf16.msra.mxu0 %v7443
    %7877 = vmatpush.bf16.msra.mxu0 %v7419
    %7878 = vmatpush.bf16.msra.mxu0 %v7395
    %7879 = vmatpush.bf16.msra.mxu0 %v7371
    %7880 = vmatmul.bf16.gmra.mxu0 %v6785
    %v7881 = vpop.f32.mrf.mxu0
    %v7882 = vadd.f32 0.0, %v7881
    %v7883 = vpop.f32.mrf.mxu0
    %v7884 = vadd.f32 0.0, %v7883
    %7885 = vdwg.mxu0
    %7886 = vmatpush.bf16.msra.mxu0 %v7540
    %7887 = vmatpush.bf16.msra.mxu0 %v7516
    %7888 = vmatpush.bf16.msra.mxu0 %v7492
    %7889 = vmatpush.bf16.msra.mxu0 %v7468
    %7890 = vmatpush.bf16.msra.mxu0 %v7444
    %7891 = vmatpush.bf16.msra.mxu0 %v7420
    %7892 = vmatpush.bf16.msra.mxu0 %v7396
    %7893 = vmatpush.bf16.msra.mxu0 %v7372
    %7894 = vmatmul.bf16.gmra.mxu0 %v6785
    %v7895 = vpop.f32.mrf.mxu0
    %v7896 = vadd.f32 0.0, %v7895
    %v7897 = vpop.f32.mrf.mxu0
    %v7898 = vadd.f32 0.0, %v7897
    %7899 = vdwg.mxu0
    %7900 = vmatpush.bf16.msra.mxu0 %v7541
    %7901 = vmatpush.bf16.msra.mxu0 %v7517
    %7902 = vmatpush.bf16.msra.mxu0 %v7493
    %7903 = vmatpush.bf16.msra.mxu0 %v7469
    %7904 = vmatpush.bf16.msra.mxu0 %v7445
    %7905 = vmatpush.bf16.msra.mxu0 %v7421
    %7906 = vmatpush.bf16.msra.mxu0 %v7397
    %7907 = vmatpush.bf16.msra.mxu0 %v7373
    %7908 = vmatmul.bf16.gmra.mxu0 %v6785
    %v7909 = vpop.f32.mrf.mxu0
    %v7910 = vadd.f32 0.0, %v7909
    %v7911 = vpop.f32.mrf.mxu0
    %v7912 = vadd.f32 0.0, %v7911
    %7913 = vdwg.mxu0
    %7914 = vmatpush.bf16.msra.mxu0 %v7542
    %7915 = vmatpush.bf16.msra.mxu0 %v7518
    %7916 = vmatpush.bf16.msra.mxu0 %v7494
    %7917 = vmatpush.bf16.msra.mxu0 %v7470
    %7918 = vmatpush.bf16.msra.mxu0 %v7446
    %7919 = vmatpush.bf16.msra.mxu0 %v7422
    %7920 = vmatpush.bf16.msra.mxu0 %v7398
    %7921 = vmatpush.bf16.msra.mxu0 %v7374
    %7922 = vmatmul.bf16.gmra.mxu0 %v6785
    %v7923 = vpop.f32.mrf.mxu0
    %v7924 = vadd.f32 0.0, %v7923
    %v7925 = vpop.f32.mrf.mxu0
    %v7926 = vadd.f32 0.0, %v7925
    %7927 = vdwg.mxu0
    %7928 = vmatpush.bf16.msra.mxu0 %v7543
    %7929 = vmatpush.bf16.msra.mxu0 %v7519
    %7930 = vmatpush.bf16.msra.mxu0 %v7495
    %7931 = vmatpush.bf16.msra.mxu0 %v7471
    %7932 = vmatpush.bf16.msra.mxu0 %v7447
    %7933 = vmatpush.bf16.msra.mxu0 %v7423
    %7934 = vmatpush.bf16.msra.mxu0 %v7399
    %7935 = vmatpush.bf16.msra.mxu0 %v7375
    %7936 = vmatmul.bf16.gmra.mxu0 %v6785
    %v7937 = vpop.f32.mrf.mxu0
    %v7938 = vadd.f32 0.0, %v7937
    %v7939 = vpop.f32.mrf.mxu0
    %v7940 = vadd.f32 0.0, %v7939
    %7941 = vdwg.mxu0
    %7942 = vmatpush.bf16.msra.mxu0 %v7544
    %7943 = vmatpush.bf16.msra.mxu0 %v7520
    %7944 = vmatpush.bf16.msra.mxu0 %v7496
    %7945 = vmatpush.bf16.msra.mxu0 %v7472
    %7946 = vmatpush.bf16.msra.mxu0 %v7448
    %7947 = vmatpush.bf16.msra.mxu0 %v7424
    %7948 = vmatpush.bf16.msra.mxu0 %v7400
    %7949 = vmatpush.bf16.msra.mxu0 %v7376
    %7950 = vmatmul.bf16.gmra.mxu0 %v6785
    %v7951 = vpop.f32.mrf.mxu0
    %v7952 = vadd.f32 0.0, %v7951
    %v7953 = vpop.f32.mrf.mxu0
    %v7954 = vadd.f32 0.0, %v7953
    %7955 = vdwg.mxu0
    %7956 = vmatpush.bf16.msra.mxu0 %v7545
    %7957 = vmatpush.bf16.msra.mxu0 %v7521
    %7958 = vmatpush.bf16.msra.mxu0 %v7497
    %7959 = vmatpush.bf16.msra.mxu0 %v7473
    %7960 = vmatpush.bf16.msra.mxu0 %v7449
    %7961 = vmatpush.bf16.msra.mxu0 %v7425
    %7962 = vmatpush.bf16.msra.mxu0 %v7401
    %7963 = vmatpush.bf16.msra.mxu0 %v7377
    %7964 = vmatmul.bf16.gmra.mxu0 %v6785
    %v7965 = vpop.f32.mrf.mxu0
    %v7966 = vadd.f32 0.0, %v7965
    %v7967 = vpop.f32.mrf.mxu0
    %v7968 = vadd.f32 0.0, %v7967
    %7969 = vdwg.mxu0
    %7970 = vmatpush.bf16.msra.mxu0 %v7546
    %7971 = vmatpush.bf16.msra.mxu0 %v7522
    %7972 = vmatpush.bf16.msra.mxu0 %v7498
    %7973 = vmatpush.bf16.msra.mxu0 %v7474
    %7974 = vmatpush.bf16.msra.mxu0 %v7450
    %7975 = vmatpush.bf16.msra.mxu0 %v7426
    %7976 = vmatpush.bf16.msra.mxu0 %v7402
    %7977 = vmatpush.bf16.msra.mxu0 %v7378
    %7978 = vmatmul.bf16.gmra.mxu0 %v6785
    %v7979 = vpop.f32.mrf.mxu0
    %v7980 = vadd.f32 0.0, %v7979
    %v7981 = vpop.f32.mrf.mxu0
    %v7982 = vadd.f32 0.0, %v7981
    %7983 = vdwg.mxu0
    %7984 = vmatpush.bf16.msra.mxu0 %v7547
    %7985 = vmatpush.bf16.msra.mxu0 %v7523
    %7986 = vmatpush.bf16.msra.mxu0 %v7499
    %7987 = vmatpush.bf16.msra.mxu0 %v7475
    %7988 = vmatpush.bf16.msra.mxu0 %v7451
    %7989 = vmatpush.bf16.msra.mxu0 %v7427
    %7990 = vmatpush.bf16.msra.mxu0 %v7403
    %7991 = vmatpush.bf16.msra.mxu0 %v7379
    %7992 = vmatmul.bf16.gmra.mxu0 %v6785
    %v7993 = vpop.f32.mrf.mxu0
    %v7994 = vadd.f32 0.0, %v7993
    %v7995 = vpop.f32.mrf.mxu0
    %v7996 = vadd.f32 0.0, %v7995
    %7997 = vdwg.mxu0
    %7998 = vmatpush.bf16.msra.mxu0 %v7548
    %7999 = vmatpush.bf16.msra.mxu0 %v7524
    %8000 = vmatpush.bf16.msra.mxu0 %v7500
    %8001 = vmatpush.bf16.msra.mxu0 %v7476
    %8002 = vmatpush.bf16.msra.mxu0 %v7452
    %8003 = vmatpush.bf16.msra.mxu0 %v7428
    %8004 = vmatpush.bf16.msra.mxu0 %v7404
    %8005 = vmatpush.bf16.msra.mxu0 %v7380
    %8006 = vmatmul.bf16.gmra.mxu0 %v6785
    %v8007 = vpop.f32.mrf.mxu0
    %v8008 = vadd.f32 0.0, %v8007
    %v8009 = vpop.f32.mrf.mxu0
    %v8010 = vadd.f32 0.0, %v8009
    %8011 = vdwg.mxu0
    %8012 = vmatpush.bf16.msra.mxu0 %v7549
    %8013 = vmatpush.bf16.msra.mxu0 %v7525
    %8014 = vmatpush.bf16.msra.mxu0 %v7501
    %8015 = vmatpush.bf16.msra.mxu0 %v7477
    %8016 = vmatpush.bf16.msra.mxu0 %v7453
    %8017 = vmatpush.bf16.msra.mxu0 %v7429
    %8018 = vmatpush.bf16.msra.mxu0 %v7405
    %8019 = vmatpush.bf16.msra.mxu0 %v7381
    %8020 = vmatmul.bf16.gmra.mxu0 %v6785
    %v8021 = vpop.f32.mrf.mxu0
    %v8022 = vadd.f32 0.0, %v8021
    %v8023 = vpop.f32.mrf.mxu0
    %v8024 = vadd.f32 0.0, %v8023
    %8025 = vdwg.mxu0
    %8026 = vmatpush.bf16.msra.mxu0 %v7550
    %8027 = vmatpush.bf16.msra.mxu0 %v7526
    %8028 = vmatpush.bf16.msra.mxu0 %v7502
    %8029 = vmatpush.bf16.msra.mxu0 %v7478
    %8030 = vmatpush.bf16.msra.mxu0 %v7454
    %8031 = vmatpush.bf16.msra.mxu0 %v7430
    %8032 = vmatpush.bf16.msra.mxu0 %v7406
    %8033 = vmatpush.bf16.msra.mxu0 %v7382
    %8034 = vmatmul.bf16.gmra.mxu0 %v6785
    %v8035 = vpop.f32.mrf.mxu0
    %v8036 = vadd.f32 0.0, %v8035
    %v8037 = vpop.f32.mrf.mxu0
    %v8038 = vadd.f32 0.0, %v8037
    %8039 = vdwg.mxu0
    %8040 = vmatpush.bf16.msra.mxu0 %v7551
    %8041 = vmatpush.bf16.msra.mxu0 %v7527
    %8042 = vmatpush.bf16.msra.mxu0 %v7503
    %8043 = vmatpush.bf16.msra.mxu0 %v7479
    %8044 = vmatpush.bf16.msra.mxu0 %v7455
    %8045 = vmatpush.bf16.msra.mxu0 %v7431
    %8046 = vmatpush.bf16.msra.mxu0 %v7407
    %8047 = vmatpush.bf16.msra.mxu0 %v7383
    %8048 = vmatmul.bf16.gmra.mxu0 %v6785
    %v8049 = vpop.f32.mrf.mxu0
    %v8050 = vadd.f32 0.0, %v8049
    %v8051 = vpop.f32.mrf.mxu0
    %v8052 = vadd.f32 0.0, %v8051
    %8053 = vdwg.mxu0
    %8054 = vmatpush.bf16.msra.mxu0 %v7552
    %8055 = vmatpush.bf16.msra.mxu0 %v7528
    %8056 = vmatpush.bf16.msra.mxu0 %v7504
    %8057 = vmatpush.bf16.msra.mxu0 %v7480
    %8058 = vmatpush.bf16.msra.mxu0 %v7456
    %8059 = vmatpush.bf16.msra.mxu0 %v7432
    %8060 = vmatpush.bf16.msra.mxu0 %v7408
    %8061 = vmatpush.bf16.msra.mxu0 %v7384
    %8062 = vmatmul.bf16.gmra.mxu0 %v6785
    %v8063 = vpop.f32.mrf.mxu0
    %v8064 = vadd.f32 0.0, %v8063
    %v8065 = vpop.f32.mrf.mxu0
    %v8066 = vadd.f32 0.0, %v8065
    %8067 = vdwg.mxu0
    %8068 = vmatpush.bf16.msra.mxu0 %v7553
    %8069 = vmatpush.bf16.msra.mxu0 %v7529
    %8070 = vmatpush.bf16.msra.mxu0 %v7505
    %8071 = vmatpush.bf16.msra.mxu0 %v7481
    %8072 = vmatpush.bf16.msra.mxu0 %v7457
    %8073 = vmatpush.bf16.msra.mxu0 %v7433
    %8074 = vmatpush.bf16.msra.mxu0 %v7409
    %8075 = vmatpush.bf16.msra.mxu0 %v7385
    %8076 = vmatmul.bf16.gmra.mxu0 %v6785
    %v8077 = vpop.f32.mrf.mxu0
    %v8078 = vadd.f32 0.0, %v8077
    %v8079 = vpop.f32.mrf.mxu0
    %v8080 = vadd.f32 0.0, %v8079
    %8081 = vdwg.mxu0
    %v8082 = vpack.c.bf16 %v7770, %v7756
    %v8083 = vpack.c.bf16 %v7798, %v7784
    %v8084 = vpack.c.bf16 %v7826, %v7812
    %v8085 = vpack.c.bf16 %v7854, %v7840
    %v8086 = vpack.c.bf16 %v7772, %v7758
    %v8087 = vpack.c.bf16 %v7800, %v7786
    %v8088 = vpack.c.bf16 %v7828, %v7814
    %v8089 = vpack.c.bf16 %v7856, %v7842
    %v8090 = vpack.c.bf16 %v7882, %v7868
    %v8091 = vpack.c.bf16 %v7910, %v7896
    %v8092 = vpack.c.bf16 %v7938, %v7924
    %v8093 = vpack.c.bf16 %v7966, %v7952
    %v8094 = vpack.c.bf16 %v7884, %v7870
    %v8095 = vpack.c.bf16 %v7912, %v7898
    %v8096 = vpack.c.bf16 %v7940, %v7926
    %v8097 = vpack.c.bf16 %v7968, %v7954
    %v8098 = vpack.c.bf16 %v7994, %v7980
    %v8099 = vpack.c.bf16 %v8022, %v8008
    %v8100 = vpack.c.bf16 %v8050, %v8036
    %v8101 = vpack.c.bf16 %v8078, %v8064
    %v8102 = vpack.c.bf16 %v7996, %v7982
    %v8103 = vpack.c.bf16 %v8024, %v8010
    %v8104 = vpack.c.bf16 %v8052, %v8038
    %v8105 = vpack.c.bf16 %v8080, %v8066
    %8106 = vmatpush.bf16.xpose.msra.mxu0 0
    %8107 = vmatpush.bf16.xpose.msra.mxu0 0
    %8108 = vmatpush.bf16.xpose.msra.mxu0 0
    %8109 = vmatpush.bf16.xpose.msra.mxu0 0
    %8110 = vmatpush.bf16.xpose.msra.mxu0 0
    %8111 = vmatpush.bf16.xpose.msra.mxu0 0
    %8112 = vmatpush.bf16.xpose.msra.mxu0 0
    %8113 = vmatpush.bf16.xpose.msra.mxu0 %v8090
    %8114 = vmatmul.bf16.gmra.mxu0 %v8082
    %v8115 = vpop.f32.mrf.mxu0
    %v8116 = vadd.f32 0.0, %v8115
    %v8117 = vpop.f32.mrf.mxu0
    %8118 = vdwg.mxu0
    %v8119 = vsel %vm1842, %v8116, -inf
    %8120 = vmax.xlane.f32.xlu0 %v8119
    %v8121 = vpop.xlane.xlu0 %8120
    %v8122 = vsub.f32 %v8116, %v8121
    %v8123 = vmul.f32 %v8122, 1.442695
    %v8124 = vpow.pop %v8123
    %v8125 = vsel %vm1842, %v8124, 0.0
    %8126 = vadd.xlane.f32.xlu0 %v8125
    %v8127 = vpop.xlane.xlu0 %8126
    %v8128 = vrcp.pop %v8127
    %v8129 = vmul.f32 %v8124, %v8128
    %v8130 = vpack.c.bf16 %v8129, %v8129
    %v8132 = vsel %vm1842, %v8130, 0
    %v8135 = vsel %vm1858, %v8098, 0
    %8137 = vmatpush.bf16.msra.mxu0 0
    %8138 = vmatpush.bf16.msra.mxu0 0
    %8139 = vmatpush.bf16.msra.mxu0 0
    %8140 = vmatpush.bf16.msra.mxu0 0
    %8141 = vmatpush.bf16.msra.mxu0 0
    %8142 = vmatpush.bf16.msra.mxu0 0
    %8143 = vmatpush.bf16.msra.mxu0 0
    %8144 = vmatpush.bf16.msra.mxu0 %v8135
    %8145 = vmatmul.bf16.gmra.mxu0 %v8132
    %v8146 = vpop.f32.mrf.mxu0
    %v8147 = vadd.f32 0.0, %v8146
    %v8148 = vpop.f32.mrf.mxu0
    %8149 = vdwg.mxu0
    %v8151 = vunpack.c.h.b16 %v8082
    %v8152 = vpack.c.b16 %v8151, %v8151
    %v8155 = vunpack.c.h.b16 %v8090
    %v8156 = vpack.c.b16 %v8155, %v8155
    %8158 = vmatpush.bf16.xpose.msra.mxu0 0
    %8159 = vmatpush.bf16.xpose.msra.mxu0 0
    %8160 = vmatpush.bf16.xpose.msra.mxu0 0
    %8161 = vmatpush.bf16.xpose.msra.mxu0 0
    %8162 = vmatpush.bf16.xpose.msra.mxu0 0
    %8163 = vmatpush.bf16.xpose.msra.mxu0 0
    %8164 = vmatpush.bf16.xpose.msra.mxu0 0
    %8165 = vmatpush.bf16.xpose.msra.mxu0 %v8156
    %8166 = vmatmul.bf16.gmra.mxu0 %v8152
    %v8167 = vpop.f32.mrf.mxu0
    %v8168 = vadd.f32 0.0, %v8167
    %v8169 = vpop.f32.mrf.mxu0
    %8170 = vdwg.mxu0
    %v8171 = vsel %vm1842, %v8168, -inf
    %8172 = vmax.xlane.f32.xlu0 %v8171
    %v8173 = vpop.xlane.xlu0 %8172
    %v8174 = vsub.f32 %v8168, %v8173
    %v8175 = vmul.f32 %v8174, 1.442695
    %v8176 = vpow.pop %v8175
    %v8177 = vsel %vm1842, %v8176, 0.0
    %8178 = vadd.xlane.f32.xlu0 %v8177
    %v8179 = vpop.xlane.xlu0 %8178
    %v8180 = vrcp.pop %v8179
    %v8181 = vmul.f32 %v8176, %v8180
    %v8182 = vpack.c.bf16 %v8181, %v8181
    %v8184 = vunpack.c.h.b16 %v8098
    %v8185 = vpack.c.b16 %v8184, %v8184
    %v8187 = vsel %vm1842, %v8182, 0
    %v8190 = vsel %vm1858, %v8185, 0
    %8192 = vmatpush.bf16.msra.mxu0 0
    %8193 = vmatpush.bf16.msra.mxu0 0
    %8194 = vmatpush.bf16.msra.mxu0 0
    %8195 = vmatpush.bf16.msra.mxu0 0
    %8196 = vmatpush.bf16.msra.mxu0 0
    %8197 = vmatpush.bf16.msra.mxu0 0
    %8198 = vmatpush.bf16.msra.mxu0 0
    %8199 = vmatpush.bf16.msra.mxu0 %v8190
    %8200 = vmatmul.bf16.gmra.mxu0 %v8187
    %v8201 = vpop.f32.mrf.mxu0
    %v8202 = vadd.f32 0.0, %v8201
    %v8203 = vpop.f32.mrf.mxu0
    %8204 = vdwg.mxu0
    %8205 = vmatpush.bf16.xpose.msra.mxu0 0
    %8206 = vmatpush.bf16.xpose.msra.mxu0 0
    %8207 = vmatpush.bf16.xpose.msra.mxu0 0
    %8208 = vmatpush.bf16.xpose.msra.mxu0 0
    %8209 = vmatpush.bf16.xpose.msra.mxu0 0
    %8210 = vmatpush.bf16.xpose.msra.mxu0 0
    %8211 = vmatpush.bf16.xpose.msra.mxu0 0
    %8212 = vmatpush.bf16.xpose.msra.mxu0 %v8091
    %8213 = vmatmul.bf16.gmra.mxu0 %v8083
    %v8214 = vpop.f32.mrf.mxu0
    %v8215 = vadd.f32 0.0, %v8214
    %v8216 = vpop.f32.mrf.mxu0
    %8217 = vdwg.mxu0
    %v8218 = vsel %vm1842, %v8215, -inf
    %8219 = vmax.xlane.f32.xlu0 %v8218
    %v8220 = vpop.xlane.xlu0 %8219
    %v8221 = vsub.f32 %v8215, %v8220
    %v8222 = vmul.f32 %v8221, 1.442695
    %v8223 = vpow.pop %v8222
    %v8224 = vsel %vm1842, %v8223, 0.0
    %8225 = vadd.xlane.f32.xlu0 %v8224
    %v8226 = vpop.xlane.xlu0 %8225
    %v8227 = vrcp.pop %v8226
    %v8228 = vmul.f32 %v8223, %v8227
    %v8229 = vpack.c.bf16 %v8228, %v8228
    %v8231 = vsel %vm1842, %v8229, 0
    %v8234 = vsel %vm1858, %v8099, 0
    %8236 = vmatpush.bf16.msra.mxu0 0
    %8237 = vmatpush.bf16.msra.mxu0 0
    %8238 = vmatpush.bf16.msra.mxu0 0
    %8239 = vmatpush.bf16.msra.mxu0 0
    %8240 = vmatpush.bf16.msra.mxu0 0
    %8241 = vmatpush.bf16.msra.mxu0 0
    %8242 = vmatpush.bf16.msra.mxu0 0
    %8243 = vmatpush.bf16.msra.mxu0 %v8234
    %8244 = vmatmul.bf16.gmra.mxu0 %v8231
    %v8245 = vpop.f32.mrf.mxu0
    %v8246 = vadd.f32 0.0, %v8245
    %v8247 = vpop.f32.mrf.mxu0
    %8248 = vdwg.mxu0
    %v8250 = vunpack.c.h.b16 %v8083
    %v8251 = vpack.c.b16 %v8250, %v8250
    %v8254 = vunpack.c.h.b16 %v8091
    %v8255 = vpack.c.b16 %v8254, %v8254
    %8257 = vmatpush.bf16.xpose.msra.mxu0 0
    %8258 = vmatpush.bf16.xpose.msra.mxu0 0
    %8259 = vmatpush.bf16.xpose.msra.mxu0 0
    %8260 = vmatpush.bf16.xpose.msra.mxu0 0
    %8261 = vmatpush.bf16.xpose.msra.mxu0 0
    %8262 = vmatpush.bf16.xpose.msra.mxu0 0
    %8263 = vmatpush.bf16.xpose.msra.mxu0 0
    %8264 = vmatpush.bf16.xpose.msra.mxu0 %v8255
    %8265 = vmatmul.bf16.gmra.mxu0 %v8251
    %v8266 = vpop.f32.mrf.mxu0
    %v8267 = vadd.f32 0.0, %v8266
    %v8268 = vpop.f32.mrf.mxu0
    %8269 = vdwg.mxu0
    %v8270 = vsel %vm1842, %v8267, -inf
    %8271 = vmax.xlane.f32.xlu0 %v8270
    %v8272 = vpop.xlane.xlu0 %8271
    %v8273 = vsub.f32 %v8267, %v8272
    %v8274 = vmul.f32 %v8273, 1.442695
    %v8275 = vpow.pop %v8274
    %v8276 = vsel %vm1842, %v8275, 0.0
    %8277 = vadd.xlane.f32.xlu0 %v8276
    %v8278 = vpop.xlane.xlu0 %8277
    %v8279 = vrcp.pop %v8278
    %v8280 = vmul.f32 %v8275, %v8279
    %v8281 = vpack.c.bf16 %v8280, %v8280
    %v8283 = vunpack.c.h.b16 %v8099
    %v8284 = vpack.c.b16 %v8283, %v8283
    %v8286 = vsel %vm1842, %v8281, 0
    %v8289 = vsel %vm1858, %v8284, 0
    %8291 = vmatpush.bf16.msra.mxu0 0
    %8292 = vmatpush.bf16.msra.mxu0 0
    %8293 = vmatpush.bf16.msra.mxu0 0
    %8294 = vmatpush.bf16.msra.mxu0 0
    %8295 = vmatpush.bf16.msra.mxu0 0
    %8296 = vmatpush.bf16.msra.mxu0 0
    %8297 = vmatpush.bf16.msra.mxu0 0
    %8298 = vmatpush.bf16.msra.mxu0 %v8289
    %8299 = vmatmul.bf16.gmra.mxu0 %v8286
    %v8300 = vpop.f32.mrf.mxu0
    %v8301 = vadd.f32 0.0, %v8300
    %v8302 = vpop.f32.mrf.mxu0
    %8303 = vdwg.mxu0
    %8304 = vmatpush.bf16.xpose.msra.mxu0 0
    %8305 = vmatpush.bf16.xpose.msra.mxu0 0
    %8306 = vmatpush.bf16.xpose.msra.mxu0 0
    %8307 = vmatpush.bf16.xpose.msra.mxu0 0
    %8308 = vmatpush.bf16.xpose.msra.mxu0 0
    %8309 = vmatpush.bf16.xpose.msra.mxu0 0
    %8310 = vmatpush.bf16.xpose.msra.mxu0 0
    %8311 = vmatpush.bf16.xpose.msra.mxu0 %v8092
    %8312 = vmatmul.bf16.gmra.mxu0 %v8084
    %v8313 = vpop.f32.mrf.mxu0
    %v8314 = vadd.f32 0.0, %v8313
    %v8315 = vpop.f32.mrf.mxu0
    %8316 = vdwg.mxu0
    %v8317 = vsel %vm1842, %v8314, -inf
    %8318 = vmax.xlane.f32.xlu0 %v8317
    %v8319 = vpop.xlane.xlu0 %8318
    %v8320 = vsub.f32 %v8314, %v8319
    %v8321 = vmul.f32 %v8320, 1.442695
    %v8322 = vpow.pop %v8321
    %v8323 = vsel %vm1842, %v8322, 0.0
    %8324 = vadd.xlane.f32.xlu0 %v8323
    %v8325 = vpop.xlane.xlu0 %8324
    %v8326 = vrcp.pop %v8325
    %v8327 = vmul.f32 %v8322, %v8326
    %v8328 = vpack.c.bf16 %v8327, %v8327
    %v8330 = vsel %vm1842, %v8328, 0
    %v8333 = vsel %vm1858, %v8100, 0
    %8335 = vmatpush.bf16.msra.mxu0 0
    %8336 = vmatpush.bf16.msra.mxu0 0
    %8337 = vmatpush.bf16.msra.mxu0 0
    %8338 = vmatpush.bf16.msra.mxu0 0
    %8339 = vmatpush.bf16.msra.mxu0 0
    %8340 = vmatpush.bf16.msra.mxu0 0
    %8341 = vmatpush.bf16.msra.mxu0 0
    %8342 = vmatpush.bf16.msra.mxu0 %v8333
    %8343 = vmatmul.bf16.gmra.mxu0 %v8330
    %v8344 = vpop.f32.mrf.mxu0
    %v8345 = vadd.f32 0.0, %v8344
    %v8346 = vpop.f32.mrf.mxu0
    %8347 = vdwg.mxu0
    %v8349 = vunpack.c.h.b16 %v8084
    %v8350 = vpack.c.b16 %v8349, %v8349
    %v8353 = vunpack.c.h.b16 %v8092
    %v8354 = vpack.c.b16 %v8353, %v8353
    %8356 = vmatpush.bf16.xpose.msra.mxu0 0
    %8357 = vmatpush.bf16.xpose.msra.mxu0 0
    %8358 = vmatpush.bf16.xpose.msra.mxu0 0
    %8359 = vmatpush.bf16.xpose.msra.mxu0 0
    %8360 = vmatpush.bf16.xpose.msra.mxu0 0
    %8361 = vmatpush.bf16.xpose.msra.mxu0 0
    %8362 = vmatpush.bf16.xpose.msra.mxu0 0
    %8363 = vmatpush.bf16.xpose.msra.mxu0 %v8354
    %8364 = vmatmul.bf16.gmra.mxu0 %v8350
    %v8365 = vpop.f32.mrf.mxu0
    %v8366 = vadd.f32 0.0, %v8365
    %v8367 = vpop.f32.mrf.mxu0
    %8368 = vdwg.mxu0
    %v8369 = vsel %vm1842, %v8366, -inf
    %8370 = vmax.xlane.f32.xlu0 %v8369
    %v8371 = vpop.xlane.xlu0 %8370
    %v8372 = vsub.f32 %v8366, %v8371
    %v8373 = vmul.f32 %v8372, 1.442695
    %v8374 = vpow.pop %v8373
    %v8375 = vsel %vm1842, %v8374, 0.0
    %8376 = vadd.xlane.f32.xlu0 %v8375
    %v8377 = vpop.xlane.xlu0 %8376
    %v8378 = vrcp.pop %v8377
    %v8379 = vmul.f32 %v8374, %v8378
    %v8380 = vpack.c.bf16 %v8379, %v8379
    %v8382 = vunpack.c.h.b16 %v8100
    %v8383 = vpack.c.b16 %v8382, %v8382
    %v8385 = vsel %vm1842, %v8380, 0
    %v8388 = vsel %vm1858, %v8383, 0
    %8390 = vmatpush.bf16.msra.mxu0 0
    %8391 = vmatpush.bf16.msra.mxu0 0
    %8392 = vmatpush.bf16.msra.mxu0 0
    %8393 = vmatpush.bf16.msra.mxu0 0
    %8394 = vmatpush.bf16.msra.mxu0 0
    %8395 = vmatpush.bf16.msra.mxu0 0
    %8396 = vmatpush.bf16.msra.mxu0 0
    %8397 = vmatpush.bf16.msra.mxu0 %v8388
    %8398 = vmatmul.bf16.gmra.mxu0 %v8385
    %v8399 = vpop.f32.mrf.mxu0
    %v8400 = vadd.f32 0.0, %v8399
    %v8401 = vpop.f32.mrf.mxu0
    %8402 = vdwg.mxu0
    %8403 = vmatpush.bf16.xpose.msra.mxu0 0
    %8404 = vmatpush.bf16.xpose.msra.mxu0 0
    %8405 = vmatpush.bf16.xpose.msra.mxu0 0
    %8406 = vmatpush.bf16.xpose.msra.mxu0 0
    %8407 = vmatpush.bf16.xpose.msra.mxu0 0
    %8408 = vmatpush.bf16.xpose.msra.mxu0 0
    %8409 = vmatpush.bf16.xpose.msra.mxu0 0
    %8410 = vmatpush.bf16.xpose.msra.mxu0 %v8093
    %8411 = vmatmul.bf16.gmra.mxu0 %v8085
    %v8412 = vpop.f32.mrf.mxu0
    %v8413 = vadd.f32 0.0, %v8412
    %v8414 = vpop.f32.mrf.mxu0
    %8415 = vdwg.mxu0
    %v8416 = vsel %vm1842, %v8413, -inf
    %8417 = vmax.xlane.f32.xlu0 %v8416
    %v8418 = vpop.xlane.xlu0 %8417
    %v8419 = vsub.f32 %v8413, %v8418
    %v8420 = vmul.f32 %v8419, 1.442695
    %v8421 = vpow.pop %v8420
    %v8422 = vsel %vm1842, %v8421, 0.0
    %8423 = vadd.xlane.f32.xlu0 %v8422
    %v8424 = vpop.xlane.xlu0 %8423
    %v8425 = vrcp.pop %v8424
    %v8426 = vmul.f32 %v8421, %v8425
    %v8427 = vpack.c.bf16 %v8426, %v8426
    %v8429 = vsel %vm1842, %v8427, 0
    %v8432 = vsel %vm1858, %v8101, 0
    %8434 = vmatpush.bf16.msra.mxu0 0
    %8435 = vmatpush.bf16.msra.mxu0 0
    %8436 = vmatpush.bf16.msra.mxu0 0
    %8437 = vmatpush.bf16.msra.mxu0 0
    %8438 = vmatpush.bf16.msra.mxu0 0
    %8439 = vmatpush.bf16.msra.mxu0 0
    %8440 = vmatpush.bf16.msra.mxu0 0
    %8441 = vmatpush.bf16.msra.mxu0 %v8432
    %8442 = vmatmul.bf16.gmra.mxu0 %v8429
    %v8443 = vpop.f32.mrf.mxu0
    %v8444 = vadd.f32 0.0, %v8443
    %v8445 = vpop.f32.mrf.mxu0
    %8446 = vdwg.mxu0
    %v8448 = vunpack.c.h.b16 %v8085
    %v8449 = vpack.c.b16 %v8448, %v8448
    %v8452 = vunpack.c.h.b16 %v8093
    %v8453 = vpack.c.b16 %v8452, %v8452
    %8455 = vmatpush.bf16.xpose.msra.mxu0 0
    %8456 = vmatpush.bf16.xpose.msra.mxu0 0
    %8457 = vmatpush.bf16.xpose.msra.mxu0 0
    %8458 = vmatpush.bf16.xpose.msra.mxu0 0
    %8459 = vmatpush.bf16.xpose.msra.mxu0 0
    %8460 = vmatpush.bf16.xpose.msra.mxu0 0
    %8461 = vmatpush.bf16.xpose.msra.mxu0 0
    %8462 = vmatpush.bf16.xpose.msra.mxu0 %v8453
    %8463 = vmatmul.bf16.gmra.mxu0 %v8449
    %v8464 = vpop.f32.mrf.mxu0
    %v8465 = vadd.f32 0.0, %v8464
    %v8466 = vpop.f32.mrf.mxu0
    %8467 = vdwg.mxu0
    %v8468 = vsel %vm1842, %v8465, -inf
    %8469 = vmax.xlane.f32.xlu0 %v8468
    %v8470 = vpop.xlane.xlu0 %8469
    %v8471 = vsub.f32 %v8465, %v8470
    %v8472 = vmul.f32 %v8471, 1.442695
    %v8473 = vpow.pop %v8472
    %v8474 = vsel %vm1842, %v8473, 0.0
    %8475 = vadd.xlane.f32.xlu0 %v8474
    %v8476 = vpop.xlane.xlu0 %8475
    %v8477 = vrcp.pop %v8476
    %v8478 = vmul.f32 %v8473, %v8477
    %v8479 = vpack.c.bf16 %v8478, %v8478
    %v8481 = vunpack.c.h.b16 %v8101
    %v8482 = vpack.c.b16 %v8481, %v8481
    %v8484 = vsel %vm1842, %v8479, 0
    %v8487 = vsel %vm1858, %v8482, 0
    %8489 = vmatpush.bf16.msra.mxu0 0
    %8490 = vmatpush.bf16.msra.mxu0 0
    %8491 = vmatpush.bf16.msra.mxu0 0
    %8492 = vmatpush.bf16.msra.mxu0 0
    %8493 = vmatpush.bf16.msra.mxu0 0
    %8494 = vmatpush.bf16.msra.mxu0 0
    %8495 = vmatpush.bf16.msra.mxu0 0
    %8496 = vmatpush.bf16.msra.mxu0 %v8487
    %8497 = vmatmul.bf16.gmra.mxu0 %v8484
    %v8498 = vpop.f32.mrf.mxu0
    %v8499 = vadd.f32 0.0, %v8498
    %v8500 = vpop.f32.mrf.mxu0
    %8501 = vdwg.mxu0
    %8502 = vmatpush.bf16.xpose.msra.mxu0 0
    %8503 = vmatpush.bf16.xpose.msra.mxu0 0
    %8504 = vmatpush.bf16.xpose.msra.mxu0 0
    %8505 = vmatpush.bf16.xpose.msra.mxu0 0
    %8506 = vmatpush.bf16.xpose.msra.mxu0 0
    %8507 = vmatpush.bf16.xpose.msra.mxu0 0
    %8508 = vmatpush.bf16.xpose.msra.mxu0 0
    %8509 = vmatpush.bf16.xpose.msra.mxu0 %v8094
    %8510 = vmatmul.bf16.gmra.mxu0 %v8086
    %v8511 = vpop.f32.mrf.mxu0
    %v8512 = vadd.f32 0.0, %v8511
    %v8513 = vpop.f32.mrf.mxu0
    %8514 = vdwg.mxu0
    %v8515 = vsel %vm1842, %v8512, -inf
    %8516 = vmax.xlane.f32.xlu0 %v8515
    %v8517 = vpop.xlane.xlu0 %8516
    %v8518 = vsub.f32 %v8512, %v8517
    %v8519 = vmul.f32 %v8518, 1.442695
    %v8520 = vpow.pop %v8519
    %v8521 = vsel %vm1842, %v8520, 0.0
    %8522 = vadd.xlane.f32.xlu0 %v8521
    %v8523 = vpop.xlane.xlu0 %8522
    %v8524 = vrcp.pop %v8523
    %v8525 = vmul.f32 %v8520, %v8524
    %v8526 = vpack.c.bf16 %v8525, %v8525
    %v8528 = vsel %vm1842, %v8526, 0
    %v8531 = vsel %vm1858, %v8102, 0
    %8533 = vmatpush.bf16.msra.mxu0 0
    %8534 = vmatpush.bf16.msra.mxu0 0
    %8535 = vmatpush.bf16.msra.mxu0 0
    %8536 = vmatpush.bf16.msra.mxu0 0
    %8537 = vmatpush.bf16.msra.mxu0 0
    %8538 = vmatpush.bf16.msra.mxu0 0
    %8539 = vmatpush.bf16.msra.mxu0 0
    %8540 = vmatpush.bf16.msra.mxu0 %v8531
    %8541 = vmatmul.bf16.gmra.mxu0 %v8528
    %v8542 = vpop.f32.mrf.mxu0
    %v8543 = vadd.f32 0.0, %v8542
    %v8544 = vpop.f32.mrf.mxu0
    %8545 = vdwg.mxu0
    %v8547 = vunpack.c.h.b16 %v8086
    %v8548 = vpack.c.b16 %v8547, %v8547
    %v8551 = vunpack.c.h.b16 %v8094
    %v8552 = vpack.c.b16 %v8551, %v8551
    %8554 = vmatpush.bf16.xpose.msra.mxu0 0
    %8555 = vmatpush.bf16.xpose.msra.mxu0 0
    %8556 = vmatpush.bf16.xpose.msra.mxu0 0
    %8557 = vmatpush.bf16.xpose.msra.mxu0 0
    %8558 = vmatpush.bf16.xpose.msra.mxu0 0
    %8559 = vmatpush.bf16.xpose.msra.mxu0 0
    %8560 = vmatpush.bf16.xpose.msra.mxu0 0
    %8561 = vmatpush.bf16.xpose.msra.mxu0 %v8552
    %8562 = vmatmul.bf16.gmra.mxu0 %v8548
    %v8563 = vpop.f32.mrf.mxu0
    %v8564 = vadd.f32 0.0, %v8563
    %v8565 = vpop.f32.mrf.mxu0
    %8566 = vdwg.mxu0
    %v8567 = vsel %vm1842, %v8564, -inf
    %8568 = vmax.xlane.f32.xlu0 %v8567
    %v8569 = vpop.xlane.xlu0 %8568
    %v8570 = vsub.f32 %v8564, %v8569
    %v8571 = vmul.f32 %v8570, 1.442695
    %v8572 = vpow.pop %v8571
    %v8573 = vsel %vm1842, %v8572, 0.0
    %8574 = vadd.xlane.f32.xlu0 %v8573
    %v8575 = vpop.xlane.xlu0 %8574
    %v8576 = vrcp.pop %v8575
    %v8577 = vmul.f32 %v8572, %v8576
    %v8578 = vpack.c.bf16 %v8577, %v8577
    %v8580 = vunpack.c.h.b16 %v8102
    %v8581 = vpack.c.b16 %v8580, %v8580
    %v8583 = vsel %vm1842, %v8578, 0
    %v8586 = vsel %vm1858, %v8581, 0
    %8588 = vmatpush.bf16.msra.mxu0 0
    %8589 = vmatpush.bf16.msra.mxu0 0
    %8590 = vmatpush.bf16.msra.mxu0 0
    %8591 = vmatpush.bf16.msra.mxu0 0
    %8592 = vmatpush.bf16.msra.mxu0 0
    %8593 = vmatpush.bf16.msra.mxu0 0
    %8594 = vmatpush.bf16.msra.mxu0 0
    %8595 = vmatpush.bf16.msra.mxu0 %v8586
    %8596 = vmatmul.bf16.gmra.mxu0 %v8583
    %v8597 = vpop.f32.mrf.mxu0
    %v8598 = vadd.f32 0.0, %v8597
    %v8599 = vpop.f32.mrf.mxu0
    %8600 = vdwg.mxu0
    %8601 = vmatpush.bf16.xpose.msra.mxu0 0
    %8602 = vmatpush.bf16.xpose.msra.mxu0 0
    %8603 = vmatpush.bf16.xpose.msra.mxu0 0
    %8604 = vmatpush.bf16.xpose.msra.mxu0 0
    %8605 = vmatpush.bf16.xpose.msra.mxu0 0
    %8606 = vmatpush.bf16.xpose.msra.mxu0 0
    %8607 = vmatpush.bf16.xpose.msra.mxu0 0
    %8608 = vmatpush.bf16.xpose.msra.mxu0 %v8095
    %8609 = vmatmul.bf16.gmra.mxu0 %v8087
    %v8610 = vpop.f32.mrf.mxu0
    %v8611 = vadd.f32 0.0, %v8610
    %v8612 = vpop.f32.mrf.mxu0
    %8613 = vdwg.mxu0
    %v8614 = vsel %vm1842, %v8611, -inf
    %8615 = vmax.xlane.f32.xlu0 %v8614
    %v8616 = vpop.xlane.xlu0 %8615
    %v8617 = vsub.f32 %v8611, %v8616
    %v8618 = vmul.f32 %v8617, 1.442695
    %v8619 = vpow.pop %v8618
    %v8620 = vsel %vm1842, %v8619, 0.0
    %8621 = vadd.xlane.f32.xlu0 %v8620
    %v8622 = vpop.xlane.xlu0 %8621
    %v8623 = vrcp.pop %v8622
    %v8624 = vmul.f32 %v8619, %v8623
    %v8625 = vpack.c.bf16 %v8624, %v8624
    %v8627 = vsel %vm1842, %v8625, 0
    %v8630 = vsel %vm1858, %v8103, 0
    %8632 = vmatpush.bf16.msra.mxu0 0
    %8633 = vmatpush.bf16.msra.mxu0 0
    %8634 = vmatpush.bf16.msra.mxu0 0
    %8635 = vmatpush.bf16.msra.mxu0 0
    %8636 = vmatpush.bf16.msra.mxu0 0
    %8637 = vmatpush.bf16.msra.mxu0 0
    %8638 = vmatpush.bf16.msra.mxu0 0
    %8639 = vmatpush.bf16.msra.mxu0 %v8630
    %8640 = vmatmul.bf16.gmra.mxu0 %v8627
    %v8641 = vpop.f32.mrf.mxu0
    %v8642 = vadd.f32 0.0, %v8641
    %v8643 = vpop.f32.mrf.mxu0
    %8644 = vdwg.mxu0
    %v8646 = vunpack.c.h.b16 %v8087
    %v8647 = vpack.c.b16 %v8646, %v8646
    %v8650 = vunpack.c.h.b16 %v8095
    %v8651 = vpack.c.b16 %v8650, %v8650
    %8653 = vmatpush.bf16.xpose.msra.mxu0 0
    %8654 = vmatpush.bf16.xpose.msra.mxu0 0
    %8655 = vmatpush.bf16.xpose.msra.mxu0 0
    %8656 = vmatpush.bf16.xpose.msra.mxu0 0
    %8657 = vmatpush.bf16.xpose.msra.mxu0 0
    %8658 = vmatpush.bf16.xpose.msra.mxu0 0
    %8659 = vmatpush.bf16.xpose.msra.mxu0 0
    %8660 = vmatpush.bf16.xpose.msra.mxu0 %v8651
    %8661 = vmatmul.bf16.gmra.mxu0 %v8647
    %v8662 = vpop.f32.mrf.mxu0
    %v8663 = vadd.f32 0.0, %v8662
    %v8664 = vpop.f32.mrf.mxu0
    %8665 = vdwg.mxu0
    %v8666 = vsel %vm1842, %v8663, -inf
    %8667 = vmax.xlane.f32.xlu0 %v8666
    %v8668 = vpop.xlane.xlu0 %8667
    %v8669 = vsub.f32 %v8663, %v8668
    %v8670 = vmul.f32 %v8669, 1.442695
    %v8671 = vpow.pop %v8670
    %v8672 = vsel %vm1842, %v8671, 0.0
    %8673 = vadd.xlane.f32.xlu0 %v8672
    %v8674 = vpop.xlane.xlu0 %8673
    %v8675 = vrcp.pop %v8674
    %v8676 = vmul.f32 %v8671, %v8675
    %v8677 = vpack.c.bf16 %v8676, %v8676
    %v8679 = vunpack.c.h.b16 %v8103
    %v8680 = vpack.c.b16 %v8679, %v8679
    %v8682 = vsel %vm1842, %v8677, 0
    %v8685 = vsel %vm1858, %v8680, 0
    %8687 = vmatpush.bf16.msra.mxu0 0
    %8688 = vmatpush.bf16.msra.mxu0 0
    %8689 = vmatpush.bf16.msra.mxu0 0
    %8690 = vmatpush.bf16.msra.mxu0 0
    %8691 = vmatpush.bf16.msra.mxu0 0
    %8692 = vmatpush.bf16.msra.mxu0 0
    %8693 = vmatpush.bf16.msra.mxu0 0
    %8694 = vmatpush.bf16.msra.mxu0 %v8685
    %8695 = vmatmul.bf16.gmra.mxu0 %v8682
    %v8696 = vpop.f32.mrf.mxu0
    %v8697 = vadd.f32 0.0, %v8696
    %v8698 = vpop.f32.mrf.mxu0
    %8699 = vdwg.mxu0
    %8700 = vmatpush.bf16.xpose.msra.mxu0 0
    %8701 = vmatpush.bf16.xpose.msra.mxu0 0
    %8702 = vmatpush.bf16.xpose.msra.mxu0 0
    %8703 = vmatpush.bf16.xpose.msra.mxu0 0
    %8704 = vmatpush.bf16.xpose.msra.mxu0 0
    %8705 = vmatpush.bf16.xpose.msra.mxu0 0
    %8706 = vmatpush.bf16.xpose.msra.mxu0 0
    %8707 = vmatpush.bf16.xpose.msra.mxu0 %v8096
    %8708 = vmatmul.bf16.gmra.mxu0 %v8088
    %v8709 = vpop.f32.mrf.mxu0
    %v8710 = vadd.f32 0.0, %v8709
    %v8711 = vpop.f32.mrf.mxu0
    %8712 = vdwg.mxu0
    %v8713 = vsel %vm1842, %v8710, -inf
    %8714 = vmax.xlane.f32.xlu0 %v8713
    %v8715 = vpop.xlane.xlu0 %8714
    %v8716 = vsub.f32 %v8710, %v8715
    %v8717 = vmul.f32 %v8716, 1.442695
    %v8718 = vpow.pop %v8717
    %v8719 = vsel %vm1842, %v8718, 0.0
    %8720 = vadd.xlane.f32.xlu0 %v8719
    %v8721 = vpop.xlane.xlu0 %8720
    %v8722 = vrcp.pop %v8721
    %v8723 = vmul.f32 %v8718, %v8722
    %v8724 = vpack.c.bf16 %v8723, %v8723
    %v8726 = vsel %vm1842, %v8724, 0
    %v8729 = vsel %vm1858, %v8104, 0
    %8731 = vmatpush.bf16.msra.mxu0 0
    %8732 = vmatpush.bf16.msra.mxu0 0
    %8733 = vmatpush.bf16.msra.mxu0 0
    %8734 = vmatpush.bf16.msra.mxu0 0
    %8735 = vmatpush.bf16.msra.mxu0 0
    %8736 = vmatpush.bf16.msra.mxu0 0
    %8737 = vmatpush.bf16.msra.mxu0 0
    %8738 = vmatpush.bf16.msra.mxu0 %v8729
    %8739 = vmatmul.bf16.gmra.mxu0 %v8726
    %v8740 = vpop.f32.mrf.mxu0
    %v8741 = vadd.f32 0.0, %v8740
    %v8742 = vpop.f32.mrf.mxu0
    %8743 = vdwg.mxu0
    %v8745 = vunpack.c.h.b16 %v8088
    %v8746 = vpack.c.b16 %v8745, %v8745
    %v8749 = vunpack.c.h.b16 %v8096
    %v8750 = vpack.c.b16 %v8749, %v8749
    %8752 = vmatpush.bf16.xpose.msra.mxu0 0
    %8753 = vmatpush.bf16.xpose.msra.mxu0 0
    %8754 = vmatpush.bf16.xpose.msra.mxu0 0
    %8755 = vmatpush.bf16.xpose.msra.mxu0 0
    %8756 = vmatpush.bf16.xpose.msra.mxu0 0
    %8757 = vmatpush.bf16.xpose.msra.mxu0 0
    %8758 = vmatpush.bf16.xpose.msra.mxu0 0
    %8759 = vmatpush.bf16.xpose.msra.mxu0 %v8750
    %8760 = vmatmul.bf16.gmra.mxu0 %v8746
    %v8761 = vpop.f32.mrf.mxu0
    %v8762 = vadd.f32 0.0, %v8761
    %v8763 = vpop.f32.mrf.mxu0
    %8764 = vdwg.mxu0
    %v8765 = vsel %vm1842, %v8762, -inf
    %8766 = vmax.xlane.f32.xlu0 %v8765
    %v8767 = vpop.xlane.xlu0 %8766
    %v8768 = vsub.f32 %v8762, %v8767
    %v8769 = vmul.f32 %v8768, 1.442695
    %v8770 = vpow.pop %v8769
    %v8771 = vsel %vm1842, %v8770, 0.0
    %8772 = vadd.xlane.f32.xlu0 %v8771
    %v8773 = vpop.xlane.xlu0 %8772
    %v8774 = vrcp.pop %v8773
    %v8775 = vmul.f32 %v8770, %v8774
    %v8776 = vpack.c.bf16 %v8775, %v8775
    %v8778 = vunpack.c.h.b16 %v8104
    %v8779 = vpack.c.b16 %v8778, %v8778
    %v8781 = vsel %vm1842, %v8776, 0
    %v8784 = vsel %vm1858, %v8779, 0
    %8786 = vmatpush.bf16.msra.mxu0 0
    %8787 = vmatpush.bf16.msra.mxu0 0
    %8788 = vmatpush.bf16.msra.mxu0 0
    %8789 = vmatpush.bf16.msra.mxu0 0
    %8790 = vmatpush.bf16.msra.mxu0 0
    %8791 = vmatpush.bf16.msra.mxu0 0
    %8792 = vmatpush.bf16.msra.mxu0 0
    %8793 = vmatpush.bf16.msra.mxu0 %v8784
    %8794 = vmatmul.bf16.gmra.mxu0 %v8781
    %v8795 = vpop.f32.mrf.mxu0
    %v8796 = vadd.f32 0.0, %v8795
    %v8797 = vpop.f32.mrf.mxu0
    %8798 = vdwg.mxu0
    %8799 = vmatpush.bf16.xpose.msra.mxu0 0
    %8800 = vmatpush.bf16.xpose.msra.mxu0 0
    %8801 = vmatpush.bf16.xpose.msra.mxu0 0
    %8802 = vmatpush.bf16.xpose.msra.mxu0 0
    %8803 = vmatpush.bf16.xpose.msra.mxu0 0
    %8804 = vmatpush.bf16.xpose.msra.mxu0 0
    %8805 = vmatpush.bf16.xpose.msra.mxu0 0
    %8806 = vmatpush.bf16.xpose.msra.mxu0 %v8097
    %8807 = vmatmul.bf16.gmra.mxu0 %v8089
    %v8808 = vpop.f32.mrf.mxu0
    %v8809 = vadd.f32 0.0, %v8808
    %v8810 = vpop.f32.mrf.mxu0
    %8811 = vdwg.mxu0
    %v8812 = vsel %vm1842, %v8809, -inf
    %8813 = vmax.xlane.f32.xlu0 %v8812
    %v8814 = vpop.xlane.xlu0 %8813
    %v8815 = vsub.f32 %v8809, %v8814
    %v8816 = vmul.f32 %v8815, 1.442695
    %v8817 = vpow.pop %v8816
    %v8818 = vsel %vm1842, %v8817, 0.0
    %8819 = vadd.xlane.f32.xlu0 %v8818
    %v8820 = vpop.xlane.xlu0 %8819
    %v8821 = vrcp.pop %v8820
    %v8822 = vmul.f32 %v8817, %v8821
    %v8823 = vpack.c.bf16 %v8822, %v8822
    %v8825 = vsel %vm1842, %v8823, 0
    %v8828 = vsel %vm1858, %v8105, 0
    %8830 = vmatpush.bf16.msra.mxu0 0
    %8831 = vmatpush.bf16.msra.mxu0 0
    %8832 = vmatpush.bf16.msra.mxu0 0
    %8833 = vmatpush.bf16.msra.mxu0 0
    %8834 = vmatpush.bf16.msra.mxu0 0
    %8835 = vmatpush.bf16.msra.mxu0 0
    %8836 = vmatpush.bf16.msra.mxu0 0
    %8837 = vmatpush.bf16.msra.mxu0 %v8828
    %8838 = vmatmul.bf16.gmra.mxu0 %v8825
    %v8839 = vpop.f32.mrf.mxu0
    %v8840 = vadd.f32 0.0, %v8839
    %v8841 = vpop.f32.mrf.mxu0
    %8842 = vdwg.mxu0
    %v8844 = vunpack.c.h.b16 %v8089
    %v8845 = vpack.c.b16 %v8844, %v8844
    %v8848 = vunpack.c.h.b16 %v8097
    %v8849 = vpack.c.b16 %v8848, %v8848
    %8851 = vmatpush.bf16.xpose.msra.mxu0 0
    %8852 = vmatpush.bf16.xpose.msra.mxu0 0
    %8853 = vmatpush.bf16.xpose.msra.mxu0 0
    %8854 = vmatpush.bf16.xpose.msra.mxu0 0
    %8855 = vmatpush.bf16.xpose.msra.mxu0 0
    %8856 = vmatpush.bf16.xpose.msra.mxu0 0
    %8857 = vmatpush.bf16.xpose.msra.mxu0 0
    %8858 = vmatpush.bf16.xpose.msra.mxu0 %v8849
    %8859 = vmatmul.bf16.gmra.mxu0 %v8845
    %v8860 = vpop.f32.mrf.mxu0
    %v8861 = vadd.f32 0.0, %v8860
    %v8862 = vpop.f32.mrf.mxu0
    %8863 = vdwg.mxu0
    %v8864 = vsel %vm1842, %v8861, -inf
    %8865 = vmax.xlane.f32.xlu0 %v8864
    %v8866 = vpop.xlane.xlu0 %8865
    %v8867 = vsub.f32 %v8861, %v8866
    %v8868 = vmul.f32 %v8867, 1.442695
    %v8869 = vpow.pop %v8868
    %v8870 = vsel %vm1842, %v8869, 0.0
    %8871 = vadd.xlane.f32.xlu0 %v8870
    %v8872 = vpop.xlane.xlu0 %8871
    %v8873 = vrcp.pop %v8872
    %v8874 = vmul.f32 %v8869, %v8873
    %v8875 = vpack.c.bf16 %v8874, %v8874
    %v8877 = vunpack.c.h.b16 %v8105
    %v8878 = vpack.c.b16 %v8877, %v8877
    %v8880 = vsel %vm1842, %v8875, 0
    %v8883 = vsel %vm1858, %v8878, 0
    %8885 = vmatpush.bf16.msra.mxu0 0
    %8886 = vmatpush.bf16.msra.mxu0 0
    %8887 = vmatpush.bf16.msra.mxu0 0
    %8888 = vmatpush.bf16.msra.mxu0 0
    %8889 = vmatpush.bf16.msra.mxu0 0
    %8890 = vmatpush.bf16.msra.mxu0 0
    %8891 = vmatpush.bf16.msra.mxu0 0
    %8892 = vmatpush.bf16.msra.mxu0 %v8883
    %8893 = vmatmul.bf16.gmra.mxu0 %v8880
    %v8894 = vpop.f32.mrf.mxu0
    %v8895 = vadd.f32 0.0, %v8894
    %v8896 = vpop.f32.mrf.mxu0
    %8897 = vdwg.mxu0
    %v8898 = vpack.c.bf16 %v8543, %v8147
    %v8899 = vpack.c.bf16 %v8598, %v8202
    %v8900 = vpack.c.bf16 %v8642, %v8246
    %v8901 = vpack.c.bf16 %v8697, %v8301
    %v8902 = vpack.c.bf16 %v8741, %v8345
    %v8903 = vpack.c.bf16 %v8796, %v8400
    %v8904 = vpack.c.bf16 %v8840, %v8444
    %v8905 = vpack.c.bf16 %v8895, %v8499
    %v9034 = vunpack.c.l.b16 %v6607
    %v9035 = vunpack.c.l.b16 %v6608
    %v9036 = vunpack.c.l.b16 %v6609
    %v9037 = vunpack.c.l.b16 %v6610
    %v9038 = vunpack.c.l.b16 %v6611
    %v9039 = vunpack.c.l.b16 %v6612
    %v9040 = vunpack.c.l.b16 %v6613
    %v9041 = vunpack.c.l.b16 %v6614
    %v9042 = vunpack.c.l.b16 %v6615
    %v9043 = vunpack.c.l.b16 %v6616
    %v9044 = vunpack.c.l.b16 %v6617
    %v9045 = vunpack.c.l.b16 %v6618
    %v9046 = vunpack.c.l.b16 %v6619
    %v9047 = vunpack.c.l.b16 %v6620
    %v9048 = vunpack.c.l.b16 %v6621
    %v9049 = vunpack.c.l.b16 %v6622
    %v9050 = vunpack.c.l.b16 %v6623
    %v9051 = vunpack.c.l.b16 %v6624
    %v9052 = vunpack.c.l.b16 %v6625
    %v9053 = vunpack.c.l.b16 %v6626
    %v9054 = vunpack.c.l.b16 %v6627
    %v9055 = vunpack.c.l.b16 %v6628
    %v9056 = vunpack.c.l.b16 %v6629
    %v9057 = vunpack.c.l.b16 %v6630
    %v9058 = vunpack.c.l.b16 %v6631
    %v9059 = vunpack.c.l.b16 %v6632
    %v9060 = vunpack.c.l.b16 %v6633
    %v9061 = vunpack.c.l.b16 %v6634
    %v9062 = vunpack.c.l.b16 %v6635
    %v9063 = vunpack.c.l.b16 %v6636
    %v9064 = vunpack.c.l.b16 %v6637
    %v9065 = vunpack.c.l.b16 %v6638
    %v9066 = vunpack.c.l.b16 %v6639
    %v9067 = vunpack.c.l.b16 %v6640
    %v9068 = vunpack.c.l.b16 %v6641
    %v9069 = vunpack.c.l.b16 %v6642
    %v9070 = vunpack.c.l.b16 %v6643
    %v9071 = vunpack.c.l.b16 %v6644
    %v9072 = vunpack.c.l.b16 %v6645
    %v9073 = vunpack.c.l.b16 %v6646
    %v9074 = vunpack.c.l.b16 %v6647
    %v9075 = vunpack.c.l.b16 %v6648
    %v9076 = vunpack.c.l.b16 %v6649
    %v9077 = vunpack.c.l.b16 %v6650
    %v9078 = vunpack.c.l.b16 %v6651
    %v9079 = vunpack.c.l.b16 %v6652
    %v9080 = vunpack.c.l.b16 %v6653
    %v9081 = vunpack.c.l.b16 %v6654
    %v9082 = vunpack.c.l.b16 %v6655
    %v9083 = vunpack.c.l.b16 %v6656
    %v9084 = vunpack.c.l.b16 %v6657
    %v9085 = vunpack.c.l.b16 %v6658
    %v9086 = vunpack.c.l.b16 %v6659
    %v9087 = vunpack.c.l.b16 %v6660
    %v9088 = vunpack.c.l.b16 %v6661
    %v9089 = vunpack.c.l.b16 %v6662
    %v9090 = vunpack.c.l.b16 %v6663
    %v9091 = vunpack.c.l.b16 %v6664
    %v9092 = vunpack.c.l.b16 %v6665
    %v9093 = vunpack.c.l.b16 %v6666
    %v9094 = vunpack.c.l.b16 %v6667
    %v9095 = vunpack.c.l.b16 %v6668
    %v9096 = vunpack.c.l.b16 %v6669
    %v9097 = vunpack.c.l.b16 %v6670
    %v9098 = vunpack.c.l.b16 %v6671
    %v9099 = vunpack.c.l.b16 %v6672
    %v9100 = vunpack.c.l.b16 %v6673
    %v9101 = vunpack.c.l.b16 %v6674
    %v9102 = vunpack.c.l.b16 %v6675
    %v9103 = vunpack.c.l.b16 %v6676
    %v9104 = vunpack.c.l.b16 %v6677
    %v9105 = vunpack.c.l.b16 %v6678
    %v9106 = vunpack.c.l.b16 %v6679
    %v9107 = vunpack.c.l.b16 %v6680
    %v9108 = vunpack.c.l.b16 %v6681
    %v9109 = vunpack.c.l.b16 %v6682
    %v9110 = vunpack.c.l.b16 %v6683
    %v9111 = vunpack.c.l.b16 %v6684
    %v9112 = vunpack.c.l.b16 %v6685
    %v9113 = vunpack.c.l.b16 %v6686
    %v9114 = vunpack.c.l.b16 %v6687
    %v9115 = vunpack.c.l.b16 %v6688
    %v9116 = vunpack.c.l.b16 %v6689
    %v9117 = vunpack.c.l.b16 %v6690
    %v9118 = vunpack.c.l.b16 %v6691
    %v9119 = vunpack.c.l.b16 %v6692
    %v9120 = vunpack.c.l.b16 %v6693
    %v9121 = vunpack.c.l.b16 %v6694
    %v9122 = vunpack.c.l.b16 %v6695
    %v9123 = vunpack.c.l.b16 %v6696
    %v9124 = vunpack.c.l.b16 %v6697
    %v9125 = vunpack.c.l.b16 %v6698
    %v9126 = vunpack.c.l.b16 %v6699
    %v9127 = vunpack.c.l.b16 %v6700
    %v9128 = vunpack.c.l.b16 %v6701
    %v9129 = vunpack.c.l.b16 %v6702
    %v9130 = vunpack.c.l.b16 %v6703
    %v9131 = vunpack.c.l.b16 %v6704
    %v9132 = vunpack.c.l.b16 %v6705
    %v9133 = vunpack.c.l.b16 %v6706
    %v9134 = vunpack.c.l.b16 %v6707
    %v9135 = vunpack.c.l.b16 %v6708
    %v9136 = vunpack.c.l.b16 %v6709
    %v9137 = vunpack.c.l.b16 %v6710
    %v9138 = vunpack.c.l.b16 %v6711
    %v9139 = vunpack.c.l.b16 %v6712
    %v9140 = vunpack.c.l.b16 %v6713
    %v9141 = vunpack.c.l.b16 %v6714
    %v9142 = vunpack.c.l.b16 %v6715
    %v9143 = vunpack.c.l.b16 %v6716
    %v9144 = vunpack.c.l.b16 %v6717
    %v9145 = vunpack.c.l.b16 %v6718
    %v9146 = vunpack.c.l.b16 %v6719
    %v9147 = vunpack.c.l.b16 %v6720
    %v9148 = vunpack.c.l.b16 %v6721
    %v9149 = vunpack.c.l.b16 %v6722
    %v9150 = vunpack.c.l.b16 %v6723
    %v9151 = vunpack.c.l.b16 %v6724
    %v9152 = vunpack.c.l.b16 %v6725
    %v9153 = vunpack.c.l.b16 %v6726
    %v9154 = vunpack.c.l.b16 %v6727
    %v9155 = vunpack.c.l.b16 %v6728
    %v9156 = vunpack.c.l.b16 %v6729
    %v9157 = vunpack.c.l.b16 %v6730
    %v9158 = vunpack.c.l.b16 %v6731
    %v9159 = vunpack.c.l.b16 %v6732
    %v9160 = vunpack.c.l.b16 %v6733
    %v9161 = vunpack.c.l.b16 %v6734
    %v9162 = vpack.c.b16 %v9035, %v9034
    %v9163 = vpack.c.b16 %v9037, %v9036
    %v9164 = vpack.c.b16 %v9039, %v9038
    %v9165 = vpack.c.b16 %v9041, %v9040
    %v9166 = vpack.c.b16 %v9043, %v9042
    %v9167 = vpack.c.b16 %v9045, %v9044
    %v9168 = vpack.c.b16 %v9047, %v9046
    %v9169 = vpack.c.b16 %v9049, %v9048
    %v9170 = vpack.c.b16 %v9051, %v9050
    %v9171 = vpack.c.b16 %v9053, %v9052
    %v9172 = vpack.c.b16 %v9055, %v9054
    %v9173 = vpack.c.b16 %v9057, %v9056
    %v9174 = vpack.c.b16 %v9059, %v9058
    %v9175 = vpack.c.b16 %v9061, %v9060
    %v9176 = vpack.c.b16 %v9063, %v9062
    %v9177 = vpack.c.b16 %v9065, %v9064
    %v9178 = vpack.c.b16 %v9067, %v9066
    %v9179 = vpack.c.b16 %v9069, %v9068
    %v9180 = vpack.c.b16 %v9071, %v9070
    %v9181 = vpack.c.b16 %v9073, %v9072
    %v9182 = vpack.c.b16 %v9075, %v9074
    %v9183 = vpack.c.b16 %v9077, %v9076
    %v9184 = vpack.c.b16 %v9079, %v9078
    %v9185 = vpack.c.b16 %v9081, %v9080
    %v9186 = vpack.c.b16 %v9083, %v9082
    %v9187 = vpack.c.b16 %v9085, %v9084
    %v9188 = vpack.c.b16 %v9087, %v9086
    %v9189 = vpack.c.b16 %v9089, %v9088
    %v9190 = vpack.c.b16 %v9091, %v9090
    %v9191 = vpack.c.b16 %v9093, %v9092
    %v9192 = vpack.c.b16 %v9095, %v9094
    %v9193 = vpack.c.b16 %v9097, %v9096
    %v9194 = vpack.c.b16 %v9099, %v9098
    %v9195 = vpack.c.b16 %v9101, %v9100
    %v9196 = vpack.c.b16 %v9103, %v9102
    %v9197 = vpack.c.b16 %v9105, %v9104
    %v9198 = vpack.c.b16 %v9107, %v9106
    %v9199 = vpack.c.b16 %v9109, %v9108
    %v9200 = vpack.c.b16 %v9111, %v9110
    %v9201 = vpack.c.b16 %v9113, %v9112
    %v9202 = vpack.c.b16 %v9115, %v9114
    %v9203 = vpack.c.b16 %v9117, %v9116
    %v9204 = vpack.c.b16 %v9119, %v9118
    %v9205 = vpack.c.b16 %v9121, %v9120
    %v9206 = vpack.c.b16 %v9123, %v9122
    %v9207 = vpack.c.b16 %v9125, %v9124
    %v9208 = vpack.c.b16 %v9127, %v9126
    %v9209 = vpack.c.b16 %v9129, %v9128
    %v9210 = vpack.c.b16 %v9131, %v9130
    %v9211 = vpack.c.b16 %v9133, %v9132
    %v9212 = vpack.c.b16 %v9135, %v9134
    %v9213 = vpack.c.b16 %v9137, %v9136
    %v9214 = vpack.c.b16 %v9139, %v9138
    %v9215 = vpack.c.b16 %v9141, %v9140
    %v9216 = vpack.c.b16 %v9143, %v9142
    %v9217 = vpack.c.b16 %v9145, %v9144
    %v9218 = vpack.c.b16 %v9147, %v9146
    %v9219 = vpack.c.b16 %v9149, %v9148
    %v9220 = vpack.c.b16 %v9151, %v9150
    %v9221 = vpack.c.b16 %v9153, %v9152
    %v9222 = vpack.c.b16 %v9155, %v9154
    %v9223 = vpack.c.b16 %v9157, %v9156
    %v9224 = vpack.c.b16 %v9159, %v9158
    %v9225 = vpack.c.b16 %v9161, %v9160
    %9290 = vmatpush.bf16.msra.mxu0 %v9169
    %9291 = vmatpush.bf16.msra.mxu0 %v9168
    %9292 = vmatpush.bf16.msra.mxu0 %v9167
    %9293 = vmatpush.bf16.msra.mxu0 %v9166
    %9294 = vmatpush.bf16.msra.mxu0 %v9165
    %9295 = vmatpush.bf16.msra.mxu0 %v9164
    %9296 = vmatpush.bf16.msra.mxu0 %v9163
    %9297 = vmatpush.bf16.msra.mxu0 %v9162
    %9298 = vmatmul.bf16.gmra.mxu0 %v8898
    %v9299 = vpop.f32.mrf.mxu0
    %v9300 = vadd.f32 %v6408, %v9299
    %v9301 = vpop.f32.mrf.mxu0
    %v9302 = vadd.f32 %v6410, %v9301
    %9303 = vdwg.mxu0
    %9304 = vmatpush.bf16.msra.mxu0 %v9177
    %9305 = vmatpush.bf16.msra.mxu0 %v9176
    %9306 = vmatpush.bf16.msra.mxu0 %v9175
    %9307 = vmatpush.bf16.msra.mxu0 %v9174
    %9308 = vmatpush.bf16.msra.mxu0 %v9173
    %9309 = vmatpush.bf16.msra.mxu0 %v9172
    %9310 = vmatpush.bf16.msra.mxu0 %v9171
    %9311 = vmatpush.bf16.msra.mxu0 %v9170
    %9312 = vmatmul.bf16.gmra.mxu0 %v8899
    %v9313 = vpop.f32.mrf.mxu0
    %v9314 = vadd.f32 %v9300, %v9313
    %v9315 = vpop.f32.mrf.mxu0
    %v9316 = vadd.f32 %v9302, %v9315
    %9317 = vdwg.mxu0
    %9318 = vmatpush.bf16.msra.mxu0 %v9185
    %9319 = vmatpush.bf16.msra.mxu0 %v9184
    %9320 = vmatpush.bf16.msra.mxu0 %v9183
    %9321 = vmatpush.bf16.msra.mxu0 %v9182
    %9322 = vmatpush.bf16.msra.mxu0 %v9181
    %9323 = vmatpush.bf16.msra.mxu0 %v9180
    %9324 = vmatpush.bf16.msra.mxu0 %v9179
    %9325 = vmatpush.bf16.msra.mxu0 %v9178
    %9326 = vmatmul.bf16.gmra.mxu0 %v8900
    %v9327 = vpop.f32.mrf.mxu0
    %v9328 = vadd.f32 %v9314, %v9327
    %v9329 = vpop.f32.mrf.mxu0
    %v9330 = vadd.f32 %v9316, %v9329
    %9331 = vdwg.mxu0
    %9332 = vmatpush.bf16.msra.mxu0 %v9193
    %9333 = vmatpush.bf16.msra.mxu0 %v9192
    %9334 = vmatpush.bf16.msra.mxu0 %v9191
    %9335 = vmatpush.bf16.msra.mxu0 %v9190
    %9336 = vmatpush.bf16.msra.mxu0 %v9189
    %9337 = vmatpush.bf16.msra.mxu0 %v9188
    %9338 = vmatpush.bf16.msra.mxu0 %v9187
    %9339 = vmatpush.bf16.msra.mxu0 %v9186
    %9340 = vmatmul.bf16.gmra.mxu0 %v8901
    %v9341 = vpop.f32.mrf.mxu0
    %v9342 = vadd.f32 %v9328, %v9341
    %v9343 = vpop.f32.mrf.mxu0
    %v9344 = vadd.f32 %v9330, %v9343
    %9345 = vdwg.mxu0
    %9346 = vmatpush.bf16.msra.mxu0 %v9201
    %9347 = vmatpush.bf16.msra.mxu0 %v9200
    %9348 = vmatpush.bf16.msra.mxu0 %v9199
    %9349 = vmatpush.bf16.msra.mxu0 %v9198
    %9350 = vmatpush.bf16.msra.mxu0 %v9197
    %9351 = vmatpush.bf16.msra.mxu0 %v9196
    %9352 = vmatpush.bf16.msra.mxu0 %v9195
    %9353 = vmatpush.bf16.msra.mxu0 %v9194
    %9354 = vmatmul.bf16.gmra.mxu0 %v8902
    %v9355 = vpop.f32.mrf.mxu0
    %v9356 = vadd.f32 %v9342, %v9355
    %v9357 = vpop.f32.mrf.mxu0
    %v9358 = vadd.f32 %v9344, %v9357
    %9359 = vdwg.mxu0
    %9360 = vmatpush.bf16.msra.mxu0 %v9209
    %9361 = vmatpush.bf16.msra.mxu0 %v9208
    %9362 = vmatpush.bf16.msra.mxu0 %v9207
    %9363 = vmatpush.bf16.msra.mxu0 %v9206
    %9364 = vmatpush.bf16.msra.mxu0 %v9205
    %9365 = vmatpush.bf16.msra.mxu0 %v9204
    %9366 = vmatpush.bf16.msra.mxu0 %v9203
    %9367 = vmatpush.bf16.msra.mxu0 %v9202
    %9368 = vmatmul.bf16.gmra.mxu0 %v8903
    %v9369 = vpop.f32.mrf.mxu0
    %v9370 = vadd.f32 %v9356, %v9369
    %v9371 = vpop.f32.mrf.mxu0
    %v9372 = vadd.f32 %v9358, %v9371
    %9373 = vdwg.mxu0
    %9374 = vmatpush.bf16.msra.mxu0 %v9217
    %9375 = vmatpush.bf16.msra.mxu0 %v9216
    %9376 = vmatpush.bf16.msra.mxu0 %v9215
    %9377 = vmatpush.bf16.msra.mxu0 %v9214
    %9378 = vmatpush.bf16.msra.mxu0 %v9213
    %9379 = vmatpush.bf16.msra.mxu0 %v9212
    %9380 = vmatpush.bf16.msra.mxu0 %v9211
    %9381 = vmatpush.bf16.msra.mxu0 %v9210
    %9382 = vmatmul.bf16.gmra.mxu0 %v8904
    %v9383 = vpop.f32.mrf.mxu0
    %v9384 = vadd.f32 %v9370, %v9383
    %v9385 = vpop.f32.mrf.mxu0
    %v9386 = vadd.f32 %v9372, %v9385
    %9387 = vdwg.mxu0
    %9388 = vmatpush.bf16.msra.mxu0 %v9225
    %9389 = vmatpush.bf16.msra.mxu0 %v9224
    %9390 = vmatpush.bf16.msra.mxu0 %v9223
    %9391 = vmatpush.bf16.msra.mxu0 %v9222
    %9392 = vmatpush.bf16.msra.mxu0 %v9221
    %9393 = vmatpush.bf16.msra.mxu0 %v9220
    %9394 = vmatpush.bf16.msra.mxu0 %v9219
    %9395 = vmatpush.bf16.msra.mxu0 %v9218
    %9396 = vmatmul.bf16.gmra.mxu0 %v8905
    %v9397 = vpop.f32.mrf.mxu0
    %v9398 = vadd.f32 %v9384, %v9397
    %v9399 = vpop.f32.mrf.mxu0
    %v9400 = vadd.f32 %v9386, %v9399
    %9401 = vdwg.mxu0
    %v9402 = vld [vmem:[#allocation5 + $0x5] sm:$0x1]
    %9403 = vadd.xlane.f32.xlu0 %v9398
    %v9404 = vpop.xlane.xlu0 %9403
    %9405 = vadd.xlane.f32.xlu0 %v9400
    %v9406 = vpop.xlane.xlu0 %9405
    %v9407 = vmul.f32 %v9404, 0.0625
    %v9408 = vmul.f32 %v9406, 0.0625
    %v9409 = vmul.f32 %v9398, %v9398
    %v9410 = vmul.f32 %v9400, %v9400
    %9411 = vadd.xlane.f32.xlu0 %v9409
    %v9412 = vpop.xlane.xlu0 %9411
    %9413 = vadd.xlane.f32.xlu0 %v9410
    %v9414 = vpop.xlane.xlu0 %9413
    %v9415 = vmul.f32 %v9412, 0.0625
    %v9416 = vmul.f32 %v9414, 0.0625
    %v9417 = vmul.f32 %v9407, %v9407
    %v9418 = vmul.f32 %v9408, %v9408
    %v9419 = vsub.f32 %v9415, %v9417
    %v9420 = vsub.f32 %v9416, %v9418
    %v9421 = vmax.f32 %v9419, 0.0
    %v9422 = vmax.f32 %v9420, 0.0
    %v9423 = vsub.f32 %v9398, %v9407
    %v9424 = vsub.f32 %v9400, %v9408
    %v9425 = vadd.f32 %v9421, 1e-05
    %v9426 = vadd.f32 %v9422, 1e-05
    %v9427 = vrsqrt.pop %v9425
    %v9428 = vmul.f32 %v9427, %v9425
    %v9429 = vmul.f32 %v9428, %v9427
    %v9430 = vmul.f32 0.5, %v9429
    %v9431 = vsub.f32 1.5, %v9430
    %v9432 = vmul.f32 %v9427, %v9431
    %vm9433 = vweird.f32 %v9425
    %vm9434 = vweird.f32 %v9427
    %vm9435 = vmor %vm9433, %vm9434
    %v9436 = vsel %vm9435, %v9427, %v9432
    %v9437 = vrsqrt.pop %v9426
    %v9438 = vmul.f32 %v9437, %v9426
    %v9439 = vmul.f32 %v9438, %v9437
    %v9440 = vmul.f32 0.5, %v9439
    %v9441 = vsub.f32 1.5, %v9440
    %v9442 = vmul.f32 %v9437, %v9441
    %vm9443 = vweird.f32 %v9426
    %vm9444 = vweird.f32 %v9437
    %vm9445 = vmor %vm9443, %vm9444
    %v9446 = vsel %vm9445, %v9437, %v9442
    %v9447 = vmul.f32 %v9423, %v9436
    %v9448 = vmul.f32 %v9424, %v9446
    %v9449 = vadd.f32 %v9402, 1.0
    %v9450 = vperm.slane %v9449, 0
    %v9451 = vmul.f32 %v9447, %v9450
    %v9452 = vmul.f32 %v9448, %v9450
    %v9453 = vld [vmem:[#allocation5 + $0x6] sm:$0x1]
    %s9454 = scalar_lea.vmem [#allocation11], 64
    %v9455 = vld [vmem:[%s9454] sm:$0xf]
    %v9456 = vld [vmem:[%s9454 + $0x4] sm:$0xf]
    %v9457 = vld [vmem:[%s9454 + $0x8] sm:$0xf]
    %v9458 = vld [vmem:[%s9454 + $0xc] sm:$0xf]
    %v9459 = vld [vmem:[%s9454 + $0x10] sm:$0xf]
    %v9460 = vld [vmem:[%s9454 + $0x14] sm:$0xf]
    %v9461 = vld [vmem:[%s9454 + $0x18] sm:$0xf]
    %v9462 = vld [vmem:[%s9454 + $0x1c] sm:$0xf]
    %v9463 = vld [vmem:[%s9454 + $0x20] sm:$0xf]
    %v9464 = vld [vmem:[%s9454 + $0x24] sm:$0xf]
    %v9465 = vld [vmem:[%s9454 + $0x28] sm:$0xf]
    %v9466 = vld [vmem:[%s9454 + $0x2c] sm:$0xf]
    %v9467 = vld [vmem:[%s9454 + $0x30] sm:$0xf]
    %v9468 = vld [vmem:[%s9454 + $0x34] sm:$0xf]
    %v9469 = vld [vmem:[%s9454 + $0x38] sm:$0xf]
    %v9470 = vld [vmem:[%s9454 + $0x3c] sm:$0xf]
    %v9471 = vld [vmem:[#allocation7 + $0x1] sm:$0x1]
    %s9472 = scalar_lea.vmem [#allocation13], 64
    %v9473 = vld [vmem:[%s9472] sm:$0xf]
    %v9474 = vld [vmem:[%s9472 + $0x4] sm:$0xf]
    %v9475 = vld [vmem:[%s9472 + $0x8] sm:$0xf]
    %v9476 = vld [vmem:[%s9472 + $0xc] sm:$0xf]
    %v9477 = vld [vmem:[%s9472 + $0x10] sm:$0xf]
    %v9478 = vld [vmem:[%s9472 + $0x14] sm:$0xf]
    %v9479 = vld [vmem:[%s9472 + $0x18] sm:$0xf]
    %v9480 = vld [vmem:[%s9472 + $0x1c] sm:$0xf]
    %v9481 = vld [vmem:[%s9472 + $0x20] sm:$0xf]
    %v9482 = vld [vmem:[%s9472 + $0x24] sm:$0xf]
    %v9483 = vld [vmem:[%s9472 + $0x28] sm:$0xf]
    %v9484 = vld [vmem:[%s9472 + $0x2c] sm:$0xf]
    %v9485 = vld [vmem:[%s9472 + $0x30] sm:$0xf]
    %v9486 = vld [vmem:[%s9472 + $0x34] sm:$0xf]
    %v9487 = vld [vmem:[%s9472 + $0x38] sm:$0xf]
    %v9488 = vld [vmem:[%s9472 + $0x3c] sm:$0xf]
    %v9489 = vld [vmem:[#allocation5 + $0x7] sm:$0x1]
    %9490 = vadd.xlane.f32.xlu0 %v9451
    %v9491 = vpop.xlane.xlu0 %9490
    %9492 = vadd.xlane.f32.xlu0 %v9452
    %v9493 = vpop.xlane.xlu0 %9492
    %v9494 = vmul.f32 %v9491, 0.0625
    %v9495 = vmul.f32 %v9493, 0.0625
    %v9496 = vmul.f32 %v9451, %v9451
    %v9497 = vmul.f32 %v9452, %v9452
    %9498 = vadd.xlane.f32.xlu0 %v9496
    %v9499 = vpop.xlane.xlu0 %9498
    %9500 = vadd.xlane.f32.xlu0 %v9497
    %v9501 = vpop.xlane.xlu0 %9500
    %v9502 = vmul.f32 %v9499, 0.0625
    %v9503 = vmul.f32 %v9501, 0.0625
    %v9504 = vmul.f32 %v9494, %v9494
    %v9505 = vmul.f32 %v9495, %v9495
    %v9506 = vsub.f32 %v9502, %v9504
    %v9507 = vsub.f32 %v9503, %v9505
    %v9508 = vmax.f32 %v9506, 0.0
    %v9509 = vmax.f32 %v9507, 0.0
    %v9510 = vsub.f32 %v9451, %v9494
    %v9511 = vsub.f32 %v9452, %v9495
    %v9512 = vadd.f32 %v9508, 1e-05
    %v9513 = vadd.f32 %v9509, 1e-05
    %v9514 = vrsqrt.pop %v9512
    %v9515 = vmul.f32 %v9514, %v9512
    %v9516 = vmul.f32 %v9515, %v9514
    %v9517 = vmul.f32 0.5, %v9516
    %v9518 = vsub.f32 1.5, %v9517
    %v9519 = vmul.f32 %v9514, %v9518
    %vm9520 = vweird.f32 %v9512
    %vm9521 = vweird.f32 %v9514
    %vm9522 = vmor %vm9520, %vm9521
    %v9523 = vsel %vm9522, %v9514, %v9519
    %v9524 = vrsqrt.pop %v9513
    %v9525 = vmul.f32 %v9524, %v9513
    %v9526 = vmul.f32 %v9525, %v9524
    %v9527 = vmul.f32 0.5, %v9526
    %v9528 = vsub.f32 1.5, %v9527
    %v9529 = vmul.f32 %v9524, %v9528
    %vm9530 = vweird.f32 %v9513
    %vm9531 = vweird.f32 %v9524
    %vm9532 = vmor %vm9530, %vm9531
    %v9533 = vsel %vm9532, %v9524, %v9529
    %v9534 = vmul.f32 %v9510, %v9523
    %v9535 = vmul.f32 %v9511, %v9533
    %v9536 = vadd.f32 %v9453, 1.0
    %v9537 = vperm.slane %v9536, 0
    %v9538 = vmul.f32 %v9534, %v9537
    %v9539 = vmul.f32 %v9535, %v9537
    %v9540 = vpack.c.bf16 %v9539, %v9538
    %v9541 = vperm.slane %v9471, 0
    %v9558 = vunpack.c.l.b16 %v9455
    %v9559 = vunpack.c.l.b16 %v9456
    %v9560 = vunpack.c.l.b16 %v9457
    %v9561 = vunpack.c.l.b16 %v9458
    %v9562 = vunpack.c.l.b16 %v9459
    %v9563 = vunpack.c.l.b16 %v9460
    %v9564 = vunpack.c.l.b16 %v9461
    %v9565 = vunpack.c.l.b16 %v9462
    %v9566 = vunpack.c.l.b16 %v9463
    %v9567 = vunpack.c.l.b16 %v9464
    %v9568 = vunpack.c.l.b16 %v9465
    %v9569 = vunpack.c.l.b16 %v9466
    %v9570 = vunpack.c.l.b16 %v9467
    %v9571 = vunpack.c.l.b16 %v9468
    %v9572 = vunpack.c.l.b16 %v9469
    %v9573 = vunpack.c.l.b16 %v9470
    %v9574 = vpack.c.b16 %v9559, %v9558
    %v9575 = vpack.c.b16 %v9561, %v9560
    %v9576 = vpack.c.b16 %v9563, %v9562
    %v9577 = vpack.c.b16 %v9565, %v9564
    %v9578 = vpack.c.b16 %v9567, %v9566
    %v9579 = vpack.c.b16 %v9569, %v9568
    %v9580 = vpack.c.b16 %v9571, %v9570
    %v9581 = vpack.c.b16 %v9573, %v9572
    %9590 = vmatpush.bf16.msra.mxu0 %v9581
    %9591 = vmatpush.bf16.msra.mxu0 %v9580
    %9592 = vmatpush.bf16.msra.mxu0 %v9579
    %9593 = vmatpush.bf16.msra.mxu0 %v9578
    %9594 = vmatpush.bf16.msra.mxu0 %v9577
    %9595 = vmatpush.bf16.msra.mxu0 %v9576
    %9596 = vmatpush.bf16.msra.mxu0 %v9575
    %9597 = vmatpush.bf16.msra.mxu0 %v9574
    %9598 = vmatmul.bf16.gmra.mxu0 %v9540
    %v9599 = vpop.f32.mrf.mxu0
    %v9600 = vadd.f32 %v9541, %v9599
    %v9601 = vpop.f32.mrf.mxu0
    %v9602 = vadd.f32 %v9541, %v9601
    %9603 = vdwg.mxu0
    %v9604 = vmul.f32 %v9600, 0.5
    %v9605 = vmul.f32 %v9602, 0.5
    %v9606 = vmul.f32 %v9600, 0.70710677
    %v9607 = vmul.f32 %v9602, 0.70710677
    %v9608 = vand.u32 2147483647, %v9606
    %v9609 = vand.u32 2147483647, %v9607
    %v9610 = vmul.f32 %v9608, 0.3275911
    %v9611 = vmul.f32 %v9609, 0.3275911
    %v9612 = vadd.f32 %v9610, 1.0
    %v9613 = vadd.f32 %v9611, 1.0
    %v9614 = vrcp.pop %v9612
    %v9615 = vmul.f32 %v9612, %v9614
    %v9616 = vsub.f32 1.0, %v9615
    %v9617 = vmul.f32 %v9614, %v9616
    %v9618 = vadd.f32 %v9614, %v9617
    %vm9619 = vweird.f32 %v9612
    %vm9620 = vweird.f32 %v9614
    %vm9621 = vmor %vm9619, %vm9620
    %v9622 = vsel %vm9621, %v9614, %v9618
    %v9623 = vand.u32 2147483647, %v9612
    %vm9624 = vcmp.eq.f32.partialorder %v9623, 8.507059e+37
    %v9625 = vand.u32 %v9612, 2147483648
    %v9626 = vor.u32 1.1754944e-38, %v9625
    %v9627 = vsel %vm9624, %v9626, %v9622
    %v9628 = vmul.f32 1.0, %v9627
    %v9629 = vrcp.pop %v9613
    %v9630 = vmul.f32 %v9613, %v9629
    %v9631 = vsub.f32 1.0, %v9630
    %v9632 = vmul.f32 %v9629, %v9631
    %v9633 = vadd.f32 %v9629, %v9632
    %vm9634 = vweird.f32 %v9613
    %vm9635 = vweird.f32 %v9629
    %vm9636 = vmor %vm9634, %vm9635
    %v9637 = vsel %vm9636, %v9629, %v9633
    %v9638 = vand.u32 2147483647, %v9613
    %vm9639 = vcmp.eq.f32.partialorder %v9638, 8.507059e+37
    %v9640 = vand.u32 %v9613, 2147483648
    %v9641 = vor.u32 1.1754944e-38, %v9640
    %v9642 = vsel %vm9639, %v9641, %v9637
    %v9643 = vmul.f32 1.0, %v9642
    %v9644 = vmul.f32 %v9628, 1.0614054
    %v9645 = vmul.f32 %v9643, 1.0614054
    %v9646 = vadd.f32 %v9644, -1.4531521
    %v9647 = vadd.f32 %v9645, -1.4531521
    %v9648 = vmul.f32 %v9646, %v9628
    %v9649 = vmul.f32 %v9647, %v9643
    %v9650 = vadd.f32 %v9648, 1.4214138
    %v9651 = vadd.f32 %v9649, 1.4214138
    %v9652 = vmul.f32 %v9650, %v9628
    %v9653 = vmul.f32 %v9651, %v9643
    %v9654 = vadd.f32 %v9652, -0.28449672
    %v9655 = vadd.f32 %v9653, -0.28449672
    %v9656 = vmul.f32 %v9654, %v9628
    %v9657 = vmul.f32 %v9655, %v9643
    %v9658 = vadd.f32 %v9656, 0.2548296
    %v9659 = vadd.f32 %v9657, 0.2548296
    %v9660 = vmul.f32 %v9658, %v9628
    %v9661 = vmul.f32 %v9659, %v9643
    %v9662 = vsub.f32 0.0, %v9608
    %v9663 = vsub.f32 0.0, %v9609
    %v9664 = vmul.f32 %v9662, %v9608
    %v9665 = vmul.f32 %v9663, %v9609
    %v9666 = vmul.f32 %v9664, 1.442695
    %v9667 = vpow.pop %v9666
    %v9668 = vmul.f32 %v9665, 1.442695
    %v9669 = vpow.pop %v9668
    %v9670 = vmul.f32 %v9660, %v9667
    %v9671 = vmul.f32 %v9661, %v9669
    %v9672 = vsub.f32 1.0, %v9670
    %v9673 = vsub.f32 1.0, %v9671
    %vm9674 = vcmp.ge.f32.partialorder %v9606, 0.0
    %vm9675 = vcmp.ge.f32.partialorder %v9607, 0.0
    %v9676 = vsub.f32 0.0, %v9672
    %v9677 = vsub.f32 0.0, %v9673
    %v9678 = vsel %vm9674, %v9672, %v9676
    %v9679 = vsel %vm9675, %v9673, %v9677
    %v9680 = vadd.f32 %v9678, 1.0
    %v9681 = vadd.f32 %v9679, 1.0
    %v9682 = vmul.f32 %v9604, %v9680
    %v9683 = vmul.f32 %v9605, %v9681
    %v9684 = vpack.c.bf16 %v9683, %v9682
    %v9685 = vperm.slane %v9489, 0
    %v9702 = vunpack.c.l.b16 %v9473
    %v9703 = vunpack.c.l.b16 %v9474
    %v9704 = vunpack.c.l.b16 %v9475
    %v9705 = vunpack.c.l.b16 %v9476
    %v9706 = vunpack.c.l.b16 %v9477
    %v9707 = vunpack.c.l.b16 %v9478
    %v9708 = vunpack.c.l.b16 %v9479
    %v9709 = vunpack.c.l.b16 %v9480
    %v9710 = vunpack.c.l.b16 %v9481
    %v9711 = vunpack.c.l.b16 %v9482
    %v9712 = vunpack.c.l.b16 %v9483
    %v9713 = vunpack.c.l.b16 %v9484
    %v9714 = vunpack.c.l.b16 %v9485
    %v9715 = vunpack.c.l.b16 %v9486
    %v9716 = vunpack.c.l.b16 %v9487
    %v9717 = vunpack.c.l.b16 %v9488
    %v9718 = vpack.c.b16 %v9703, %v9702
    %v9719 = vpack.c.b16 %v9705, %v9704
    %v9720 = vpack.c.b16 %v9707, %v9706
    %v9721 = vpack.c.b16 %v9709, %v9708
    %v9722 = vpack.c.b16 %v9711, %v9710
    %v9723 = vpack.c.b16 %v9713, %v9712
    %v9724 = vpack.c.b16 %v9715, %v9714
    %v9725 = vpack.c.b16 %v9717, %v9716
    %9734 = vmatpush.bf16.msra.mxu0 %v9725
    %9735 = vmatpush.bf16.msra.mxu0 %v9724
    %9736 = vmatpush.bf16.msra.mxu0 %v9723
    %9737 = vmatpush.bf16.msra.mxu0 %v9722
    %9738 = vmatpush.bf16.msra.mxu0 %v9721
    %9739 = vmatpush.bf16.msra.mxu0 %v9720
    %9740 = vmatpush.bf16.msra.mxu0 %v9719
    %9741 = vmatpush.bf16.msra.mxu0 %v9718
    %9742 = vmatmul.bf16.gmra.mxu0 %v9684
    %v9743 = vpop.f32.mrf.mxu0
    %v9744 = vadd.f32 %v9685, %v9743
    %v9745 = vpop.f32.mrf.mxu0
    %v9746 = vadd.f32 %v9685, %v9745
    %9747 = vdwg.mxu0
    %v9748 = vadd.f32 %v9744, %v9451
    %v9749 = vadd.f32 %v9746, %v9452
    %9750 = vst [vmem:[#allocation14] sm:$0xff] %v9748
    %9751 = vst [vmem:[#allocation14 + $0x8] sm:$0xff] %v9749
    // Predicated region
    $region58: #{tpu_custom_call.1} parent=1 // pred_check
      _
    $region59: #{tpu_custom_call.1} parent=1 // pred_check_branch
      %9753 = sbr.rel (0) target = $region61
    $region60: #{tpu_custom_call.1} parent=1 // pred_region
      %9755 = vsyncadd [#allocation4], 0
      %s9756 = sshll.u32 [#allocation14], 4
      %s9757 = int_to_ptr.vmem [resolvable:$true] %s9756
      %s9758 = sshll.u32 %s7, 4
      %s9759 = int_to_ptr.hbm [resolvable:$true] %s9758
      %9764 = dma.vmem_to_hbm [thread:$0]  %s9757, 256, %s9759, [#allocation4], 128, 128, 8
    $region61: #{tpu_custom_call.1} parent=1 // pred_fallthru
      _
    // Predicated region
    $region62: #{tpu_custom_call.1} parent=1 // pred_check
      _
    $region63: #{tpu_custom_call.1} parent=1 // pred_check_branch
      %9766 = sbr.rel (0) target = $region65
    $region64: #{tpu_custom_call.1} parent=1 // pred_region
      %9768 = dma.done [#allocation4], 256
    $region65: #{tpu_custom_call.1} parent=1 // pred_fallthru
      _
    %9769 = vsyncpa [#allocation3], 1
    %9770 = vsyncpa [#allocation6], 1
    %9771 = vsyncpa [#allocation9], 1
    %9772 = vsyncpa [#allocation12], 1
    %9773 = vsyncpa [#allocation4], 1

</llo_original>
